<compile_context>
chip_gen: v6e
topology: v6e:2x2x1
jax: 0.10.0
libtpu: 0.0.40
codegen_flags: <defaults>
</compile_context>

<pallas_src>
import functools
import math

import jax
import jax.numpy as jnp
from jax.experimental import pallas as pl
from jax.experimental.pallas import tpu as pltpu

# ----------------------- mini-BERT configuration -----------------------------
VOCAB = 128
HIDDEN = 32
NUM_LAYERS = 2
NUM_HEADS = 4
HEAD_DIM = HIDDEN // NUM_HEADS
INTERMEDIATE = 64
MAX_POS = 64
TYPE_VOCAB = 2
NUM_GROUP_LABELS = 6   # len(Config.GROUP_LABELS)
NUM_SPAN_LABELS = 5    # len(Config.SPAN_LABELS)
LN_EPS = 1e-12
HEAD_PAD = 128         # lane-dense padded width for head / tail outputs

# static row offsets inside the packed weight blobs
M32_PER_LAYER = HIDDEN + INTERMEDIATE          # ao_w (32 rows) + ff2_w (64 rows)
V32_BASE = NUM_LAYERS * M32_PER_LAYER          # first vector row in the 32-blob
FF1B_BASE = NUM_LAYERS * HIDDEN                # first ff1 bias row in the 64-blob


# ------------------------------ fused kernel ----------------------------------
def _fused_bert_kernel(emb_ref, addm_ref, qkv_ref, w32_ref, w64_ref, w128_ref,
                       emis_ref, cls_ref, attn_ref, *, batch, seq):
    gelu_c = math.sqrt(2.0 / math.pi)

    def layernorm(x, g, b):
        mean = jnp.mean(x, axis=-1, keepdims=True)
        cen = x - mean
        var = jnp.mean(cen * cen, axis=-1, keepdims=True)
        return cen * jax.lax.rsqrt(var + LN_EPS) * g + b

    def vrow(ref, r):                       # one packed (1, width) vector row
        return ref[r:r + 1, :]

    addm = addm_ref[...]                    # (B, S) additive attention mask

    # --- embedding LayerNorm ---
    x = layernorm(emb_ref[...], vrow(w32_ref, V32_BASE), vrow(w32_ref, V32_BASE + 1))

    # --- transformer encoder layers (statically unrolled) ---
    for l in range(NUM_LAYERS):
        mb = l * M32_PER_LAYER              # matrix base in the 32-blob
        vb = V32_BASE + 2 + l * 6           # vector base in the 32-blob
        ao_b = vrow(w32_ref, vb + 0)        # (1, H) attention-output bias

        # ---- multi-head self-attention: head-major per-head weights, per-head
        #      context folded directly into the output projection, accumulated
        #      per batch and stored into the VMEM scratch (no concats) ----
        for b in range(batch):
            r0 = b * seq
            x_b = x[r0:r0 + seq, :]                         # (S, H) sublane slice
            mask_row = addm[b:b + 1, :]                     # (1, S) broadcast
            attn_b = ao_b                                   # start from output bias
            for h in range(NUM_HEADS):
                qwb = qkv_ref[(l * 3 + 0) * NUM_HEADS + h]  # (H+1, Dh), scale folded
                kwb = qkv_ref[(l * 3 + 1) * NUM_HEADS + h]
                vwb = qkv_ref[(l * 3 + 2) * NUM_HEADS + h]
                q = (jnp.dot(x_b, qwb[:HIDDEN, :], preferred_element_type=jnp.float32)
                     + qwb[HIDDEN:HIDDEN + 1, :])
                k = (jnp.dot(x_b, kwb[:HIDDEN, :], preferred_element_type=jnp.float32)
                     + kwb[HIDDEN:HIDDEN + 1, :])
                v = (jnp.dot(x_b, vwb[:HIDDEN, :], preferred_element_type=jnp.float32)
                     + vwb[HIDDEN:HIDDEN + 1, :])
                s = jax.lax.dot_general(q, k, (((1,), (1,)), ((), ())),
                                        preferred_element_type=jnp.float32) + mask_row
                s = s - jnp.max(s, axis=-1, keepdims=True)
                p = jnp.exp(s)
                p = p * pl.reciprocal(jnp.sum(p, axis=-1, keepdims=True), approx=True)
                pv = jnp.dot(p, v, preferred_element_type=jnp.float32)        # (S, Dh)
                wo_h = w32_ref[mb + h * HEAD_DIM: mb + (h + 1) * HEAD_DIM, :]  # (Dh, H)
                attn_b = attn_b + jnp.dot(pv, wo_h, preferred_element_type=jnp.float32)
            attn_ref[r0:r0 + seq, :] = attn_b               # VMEM scratch, aligned rows

        x = layernorm(attn_ref[...] + x, vrow(w32_ref, vb + 1), vrow(w32_ref, vb + 2))

        # ---- feed-forward ----
        ff1_w = w64_ref[l * HIDDEN:(l + 1) * HIDDEN, :]                  # (H, I)
        ff1_b = vrow(w64_ref, FF1B_BASE + l)                             # (1, I)
        h1 = jnp.dot(x, ff1_w, preferred_element_type=jnp.float32) + ff1_b
        # tanh-approximated GELU (HF "gelu_new")
        h1 = 0.5 * h1 * (1.0 + jnp.tanh(gelu_c * (h1 + 0.044715 * h1 * h1 * h1)))
        ff2_w = w32_ref[mb + HIDDEN: mb + HIDDEN + INTERMEDIATE, :]      # (I, H)
        h2 = jnp.dot(h1, ff2_w, preferred_element_type=jnp.float32) + vrow(w32_ref, vb + 3)
        x = layernorm(h2 + x, vrow(w32_ref, vb + 4), vrow(w32_ref, vb + 5))

    # --- fused tail: one 128-lane matmul = [pooler pre-projection | span head] ---
    tail_w = w128_ref[0:HIDDEN, :]                                       # (H, 128)
    tail_b = vrow(w128_ref, 2 * HIDDEN)                                  # (1, 128)
    tail = jnp.dot(x, tail_w, preferred_element_type=jnp.float32) + tail_b
    emis_ref[...] = tail                                                 # (B*S, 128)

    # --- pooler + fused group|hateful head; CLS rows picked via one-hot MXU matmul ---
    bidx = jax.lax.broadcasted_iota(jnp.int32, (batch, batch * seq), 0)
    tidx = jax.lax.broadcasted_iota(jnp.int32, (batch, batch * seq), 1)
    sel = (tidx == bidx * seq).astype(jnp.float32)                       # (B, B*S)
    cls_tail = jnp.dot(sel, tail, preferred_element_type=jnp.float32)    # (B, 128)
    pooled = jnp.tanh(cls_tail[:, :HIDDEN])                              # (B, H)
    head_w = w128_ref[HIDDEN:2 * HIDDEN, :]                              # (H, 128)
    head_b = vrow(w128_ref, 2 * HIDDEN + 1)
    cls_ref[...] = (jnp.dot(pooled, head_w, preferred_element_type=jnp.float32)
                    + head_b)


# ----------------------------- parameter setup --------------------------------
def init_params(key):
    def nrm(k, shape):
        return jax.random.normal(k, shape, dtype=jnp.float32) * 0.02

    keys = iter(jax.random.split(key, 64))
    p = {
        "word_emb": nrm(next(keys), (VOCAB, HIDDEN)),
        "pos_emb": nrm(next(keys), (MAX_POS, HIDDEN)),
        "type_emb": nrm(next(keys), (TYPE_VOCAB, HIDDEN)),
        "emb_ln_g": jnp.ones((1, HIDDEN), jnp.float32),
        "emb_ln_b": jnp.zeros((1, HIDDEN), jnp.float32),
        "layers": [],
        "pool_w": nrm(next(keys), (HIDDEN, HIDDEN)),
        "pool_b": jnp.zeros((1, HIDDEN), jnp.float32),
        "group_w": nrm(next(keys), (HIDDEN, NUM_GROUP_LABELS)),
        "group_b": jnp.zeros((1, NUM_GROUP_LABELS), jnp.float32),
        "hate_w": nrm(next(keys), (HIDDEN, 2)),
        "hate_b": jnp.zeros((1, 2), jnp.float32),
        "span_w": nrm(next(keys), (HIDDEN, NUM_SPAN_LABELS)),
        "span_b": jnp.zeros((1, NUM_SPAN_LABELS), jnp.float32),
    }
    for _ in range(NUM_LAYERS):
        lp = {
            "q_w": nrm(next(keys), (HIDDEN, HIDDEN)),
            "q_b": jnp.zeros((1, HIDDEN), jnp.float32),
            "k_w": nrm(next(keys), (HIDDEN, HIDDEN)),
            "k_b": jnp.zeros((1, HIDDEN), jnp.float32),
            "v_w": nrm(next(keys), (HIDDEN, HIDDEN)),
            "v_b": jnp.zeros((1, HIDDEN), jnp.float32),
            "ao_w": nrm(next(keys), (HIDDEN, HIDDEN)),
            "ao_b": jnp.zeros((1, HIDDEN), jnp.float32),
            "ln1_g": jnp.ones((1, HIDDEN), jnp.float32),
            "ln1_b": jnp.zeros((1, HIDDEN), jnp.float32),
            "ff1_w": nrm(next(keys), (HIDDEN, INTERMEDIATE)),
            "ff1_b": jnp.zeros((1, INTERMEDIATE), jnp.float32),
            "ff2_w": nrm(next(keys), (INTERMEDIATE, HIDDEN)),
            "ff2_b": jnp.zeros((1, HIDDEN), jnp.float32),
            "ln2_g": jnp.ones((1, HIDDEN), jnp.float32),
            "ln2_b": jnp.zeros((1, HIDDEN), jnp.float32),
        }
        p["layers"].append(lp)
    return p


# ------------------------------ model forward ---------------------------------
def hate_speech_detector_forward(params, input_ids, attention_mask,
                                 token_type_ids=None):
    B, S = input_ids.shape
    if token_type_ids is None:
        token_type_ids = jnp.zeros_like(input_ids)

    # embedding gather + add stays as XLA glue (tables are tiny); everything
    # downstream runs inside the single fused kernel.
    emb = (jnp.take(params["word_emb"], input_ids, axis=0)
           + params["pos_emb"][:S][None, :, :]
           + jnp.take(params["type_emb"], token_type_ids, axis=0))
    emb = emb.reshape(B * S, HIDDEN).astype(jnp.float32)

    # additive attention mask, (B, S) only — broadcast happens inside the kernel
    addm = (1.0 - attention_mask.astype(jnp.float32)) * -10000.0

    layers = params["layers"]
    scale = 1.0 / math.sqrt(HEAD_DIM)

    # --- head-major QKV blob: (L*3*NH, HIDDEN+1, HEAD_DIM), bias row appended,
    #     softmax scale folded into the Q weight and bias ---
    blocks = []
    for lp in layers:
        for t, (wn, bn) in enumerate((("q_w", "q_b"), ("k_w", "k_b"), ("v_w", "v_b"))):
            w = lp[wn]
            bvec = lp[bn]
            if t == 0:
                w = w * scale
                bvec = bvec * scale
            for h in range(NUM_HEADS):
                c0 = h * HEAD_DIM
                blocks.append(jnp.concatenate(
                    [w[:, c0:c0 + HEAD_DIM], bvec[:, c0:c0 + HEAD_DIM]], axis=0))
    qkv_hwb = jnp.stack(blocks)                                   # (L*3*NH, H+1, Dh)

    # --- 32-lane blob: per-layer [ao_w; ff2_w] matrices, then all 32-wide vectors ---
    rows32 = []
    for lp in layers:
        rows32 += [lp["ao_w"], lp["ff2_w"]]
    rows32 += [params["emb_ln_g"], params["emb_ln_b"]]
    for lp in layers:
        rows32 += [lp["ao_b"], lp["ln1_g"], lp["ln1_b"], lp["ff2_b"],
                   lp["ln2_g"], lp["ln2_b"]]
    w32 = jnp.concatenate(rows32, axis=0)                         # (L*96 + 2 + 6L, 32)

    # --- 64-lane blob: ff1_w matrices then ff1_b rows ---
    w64 = jnp.concatenate([lp["ff1_w"] for lp in layers]
                          + [lp["ff1_b"] for lp in layers], axis=0)

    # --- lane-dense 128 blob: fused (pooler|span) tail and (group|hateful) head ---
    tail_w = jnp.pad(jnp.concatenate([params["pool_w"], params["span_w"]], axis=1),
                     ((0, 0), (0, HEAD_PAD - HIDDEN - NUM_SPAN_LABELS)))
    head_w = jnp.pad(jnp.concatenate([params["group_w"], params["hate_w"]], axis=1),
                     ((0, 0), (0, HEAD_PAD - NUM_GROUP_LABELS - 2)))
    tail_b = jnp.pad(jnp.concatenate([params["pool_b"], params["span_b"]], axis=1),
                     ((0, 0), (0, HEAD_PAD - HIDDEN - NUM_SPAN_LABELS)))
    head_b = jnp.pad(jnp.concatenate([params["group_b"], params["hate_b"]], axis=1),
                     ((0, 0), (0, HEAD_PAD - NUM_GROUP_LABELS - 2)))
    w128 = jnp.concatenate([tail_w, head_w, tail_b, head_b], axis=0)   # (2H+2, 128)

    inputs = [emb, addm, qkv_hwb, w32, w64, w128]

    in_specs = [pl.BlockSpec(a.shape, lambda i, _nd=a.ndim: (0,) * _nd)
                for a in inputs]
    out_specs = (
        pl.BlockSpec((B * S, HEAD_PAD), lambda i: (0, 0)),
        pl.BlockSpec((B, HEAD_PAD), lambda i: (0, 0)),
    )
    out_shape = (
        jax.ShapeDtypeStruct((B * S, HEAD_PAD), jnp.float32),
        jax.ShapeDtypeStruct((B, HEAD_PAD), jnp.float32),
    )

    emis_pad, cls_pad = pl.pallas_call(
        functools.partial(_fused_bert_kernel, batch=B, seq=S),
        grid=(1,),
        in_specs=in_specs,
        out_specs=out_specs,
        out_shape=out_shape,
        scratch_shapes=[pltpu.VMEM((B * S, HIDDEN), jnp.float32)],
        compiler_params=pltpu.CompilerParams(dimension_semantics=("arbitrary",)),
    )(*inputs)

    # tail lanes 0:HIDDEN are the pooler pre-projection; span logits follow.
    emissions = emis_pad[:, HIDDEN:HIDDEN + NUM_SPAN_LABELS].reshape(
        B, S, NUM_SPAN_LABELS)
    group_logits = cls_pad[:, :NUM_GROUP_LABELS]
    hateful_logits = cls_pad[:, NUM_GROUP_LABELS:NUM_GROUP_LABELS + 2]

    # No group_labels / hateful_labels / labels supplied -> total_loss = 0
    total_loss = jnp.float32(0.0)
    return emissions, group_logits, hateful_logits, total_loss


# ----------------------------------- main --------------------------------------
if __name__ == "__main__":
    key = jax.random.PRNGKey(0)
    pkey, ikey = jax.random.split(key)

    params = init_params(pkey)

    B, S = 2, 8
    input_ids = jax.random.randint(ikey, (B, S), 0, VOCAB, dtype=jnp.int32)
    attention_mask = jnp.ones((B, S), dtype=jnp.int32)
    token_type_ids = jnp.zeros((B, S), dtype=jnp.int32)

    fwd = jax.jit(hate_speech_detector_forward)
    emissions, group_logits, hateful_logits, total_loss = fwd(
        params, input_ids, attention_mask, token_type_ids)

    jax.block_until_ready((emissions, group_logits, hateful_logits, total_loss))

    assert emissions.shape == (B, S, NUM_SPAN_LABELS)
    assert group_logits.shape == (B, NUM_GROUP_LABELS)
    assert hateful_logits.shape == (B, 2)
    print("KERNEL_OK")
</pallas_src>

<mosaic_0001>
module attributes {stable_mosaic.version = 11 : i64} {
  func.func @_fused_bert_kernel(%arg0: i32, %arg1: memref<16x32xf32, #tpu.memory_space<vmem>>, %arg2: memref<2x8xf32, #tpu.memory_space<vmem>>, %arg3: memref<24x33x8xf32, #tpu.memory_space<vmem>>, %arg4: memref<206x32xf32, #tpu.memory_space<vmem>>, %arg5: memref<66x64xf32, #tpu.memory_space<vmem>>, %arg6: memref<66x128xf32, #tpu.memory_space<vmem>>, %arg7: memref<16x128xf32, #tpu.memory_space<vmem>>, %arg8: memref<2x128xf32, #tpu.memory_space<vmem>>, %arg9: memref<16x32xf32, #tpu.memory_space<vmem>>) attributes {dimension_semantics = [#tpu.dimension_semantics<arbitrary>], iteration_bounds = array<i64: 1>, scalar_prefetch = 0 : i64, scratch_operands = 1 : i64, tpu.core_type = #tpu.core_type<tc>, window_params = [{pipeline_mode = #tpu.pipeline_mode<synchronous>, transform_indices = @transform_0, window_bounds = array<i64: 16, 32>}, {pipeline_mode = #tpu.pipeline_mode<synchronous>, transform_indices = @transform_1, window_bounds = array<i64: 2, 8>}, {pipeline_mode = #tpu.pipeline_mode<synchronous>, transform_indices = @transform_2, window_bounds = array<i64: 24, 33, 8>}, {pipeline_mode = #tpu.pipeline_mode<synchronous>, transform_indices = @transform_3, window_bounds = array<i64: 206, 32>}, {pipeline_mode = #tpu.pipeline_mode<synchronous>, transform_indices = @transform_4, window_bounds = array<i64: 66, 64>}, {pipeline_mode = #tpu.pipeline_mode<synchronous>, transform_indices = @transform_5, window_bounds = array<i64: 66, 128>}, {pipeline_mode = #tpu.pipeline_mode<synchronous>, transform_indices = @transform_6, window_bounds = array<i64: 16, 128>}, {pipeline_mode = #tpu.pipeline_mode<synchronous>, transform_indices = @transform_7, window_bounds = array<i64: 2, 128>}]} {
    %c0 = arith.constant 0 : index
    %c0_0 = arith.constant 0 : index
    %0 = vector.load %arg2[%c0, %c0_0] : memref<2x8xf32, #tpu.memory_space<vmem>>, vector<2x8xf32>
    %c0_1 = arith.constant 0 : index
    %c0_2 = arith.constant 0 : index
    %1 = vector.load %arg1[%c0_1, %c0_2] : memref<16x32xf32, #tpu.memory_space<vmem>>, vector<16x32xf32>
    %c192 = arith.constant 192 : index
    %c0_3 = arith.constant 0 : index
    %2 = vector.load %arg4[%c192, %c0_3] : memref<206x32xf32, #tpu.memory_space<vmem>>, vector<1x32xf32>
    %c193 = arith.constant 193 : index
    %c0_4 = arith.constant 0 : index
    %3 = vector.load %arg4[%c193, %c0_4] : memref<206x32xf32, #tpu.memory_space<vmem>>, vector<1x32xf32>
    %cst = arith.constant dense<0.000000e+00> : vector<16xf32>
    %4 = vector.multi_reduction <add>, %1, %cst [1] : vector<16x32xf32> to vector<16xf32>
    %5 = vector.shape_cast %4 : vector<16xf32> to vector<16x1xf32>
    %cst_5 = arith.constant 3.200000e+01 : f32
    %6 = vector.broadcast %cst_5 : f32 to vector<16x1xf32>
    %7 = arith.divf %5, %6 : vector<16x1xf32>
    %8 = vector.broadcast %7 : vector<16x1xf32> to vector<16x32xf32>
    %9 = arith.subf %1, %8 : vector<16x32xf32>
    %10 = arith.mulf %9, %9 : vector<16x32xf32>
    %cst_6 = arith.constant dense<0.000000e+00> : vector<16xf32>
    %11 = vector.multi_reduction <add>, %10, %cst_6 [1] : vector<16x32xf32> to vector<16xf32>
    %12 = vector.shape_cast %11 : vector<16xf32> to vector<16x1xf32>
    %cst_7 = arith.constant 3.200000e+01 : f32
    %13 = vector.broadcast %cst_7 : f32 to vector<16x1xf32>
    %14 = arith.divf %12, %13 : vector<16x1xf32>
    %cst_8 = arith.constant 9.99999996E-13 : f32
    %15 = vector.broadcast %cst_8 : f32 to vector<16x1xf32>
    %16 = arith.addf %14, %15 : vector<16x1xf32>
    %17 = math.rsqrt %16 : vector<16x1xf32>
    %18 = vector.broadcast %17 : vector<16x1xf32> to vector<16x32xf32>
    %19 = arith.mulf %9, %18 : vector<16x32xf32>
    %20 = vector.broadcast %2 : vector<1x32xf32> to vector<16x32xf32>
    %21 = arith.mulf %19, %20 : vector<16x32xf32>
    %22 = vector.broadcast %3 : vector<1x32xf32> to vector<16x32xf32>
    %23 = arith.addf %21, %22 : vector<16x32xf32>
    %c194 = arith.constant 194 : index
    %c0_9 = arith.constant 0 : index
    %24 = vector.load %arg4[%c194, %c0_9] : memref<206x32xf32, #tpu.memory_space<vmem>>, vector<1x32xf32>
    %25 = vector.extract_strided_slice %23 {offsets = [0, 0], sizes = [8, 32], strides = [1, 1]} : vector<16x32xf32> to vector<8x32xf32>
    %26 = vector.extract_strided_slice %0 {offsets = [0, 0], sizes = [1, 8], strides = [1, 1]} : vector<2x8xf32> to vector<1x8xf32>
    %c0_10 = arith.constant 0 : index
    %c0_11 = arith.constant 0 : index
    %c0_12 = arith.constant 0 : index
    %27 = vector.load %arg3[%c0_10, %c0_11, %c0_12] : memref<24x33x8xf32, #tpu.memory_space<vmem>>, vector<1x33x8xf32>
    %28 = vector.shape_cast %27 : vector<1x33x8xf32> to vector<33x8xf32>
    %c4 = arith.constant 4 : index
    %c0_13 = arith.constant 0 : index
    %c0_14 = arith.constant 0 : index
    %29 = vector.load %arg3[%c4, %c0_13, %c0_14] : memref<24x33x8xf32, #tpu.memory_space<vmem>>, vector<1x33x8xf32>
    %30 = vector.shape_cast %29 : vector<1x33x8xf32> to vector<33x8xf32>
    %c8 = arith.constant 8 : index
    %c0_15 = arith.constant 0 : index
    %c0_16 = arith.constant 0 : index
    %31 = vector.load %arg3[%c8, %c0_15, %c0_16] : memref<24x33x8xf32, #tpu.memory_space<vmem>>, vector<1x33x8xf32>
    %32 = vector.shape_cast %31 : vector<1x33x8xf32> to vector<33x8xf32>
    %33 = vector.extract_strided_slice %28 {offsets = [0, 0], sizes = [32, 8], strides = [1, 1]} : vector<33x8xf32> to vector<32x8xf32>
    %cst_17 = arith.constant dense<0.000000e+00> : vector<8x8xf32>
    %34 = tpu.matmul %25, %33, %cst_17 {dimension_numbers = #tpu.dot_dimension_numbers<[1], [0], [0], [1], [0, 0, 1, 1], [], []>} : vector<8x32xf32>, vector<32x8xf32>, vector<8x8xf32> -> vector<8x8xf32>
    %35 = vector.extract_strided_slice %28 {offsets = [32, 0], sizes = [1, 8], strides = [1, 1]} : vector<33x8xf32> to vector<1x8xf32>
    %36 = vector.broadcast %35 : vector<1x8xf32> to vector<8x8xf32>
    %37 = arith.addf %34, %36 : vector<8x8xf32>
    %38 = vector.extract_strided_slice %30 {offsets = [0, 0], sizes = [32, 8], strides = [1, 1]} : vector<33x8xf32> to vector<32x8xf32>
    %cst_18 = arith.constant dense<0.000000e+00> : vector<8x8xf32>
    %39 = tpu.matmul %25, %38, %cst_18 {dimension_numbers = #tpu.dot_dimension_numbers<[1], [0], [0], [1], [0, 0, 1, 1], [], []>} : vector<8x32xf32>, vector<32x8xf32>, vector<8x8xf32> -> vector<8x8xf32>
    %40 = vector.extract_strided_slice %30 {offsets = [32, 0], sizes = [1, 8], strides = [1, 1]} : vector<33x8xf32> to vector<1x8xf32>
    %41 = vector.broadcast %40 : vector<1x8xf32> to vector<8x8xf32>
    %42 = arith.addf %39, %41 : vector<8x8xf32>
    %43 = vector.extract_strided_slice %32 {offsets = [0, 0], sizes = [32, 8], strides = [1, 1]} : vector<33x8xf32> to vector<32x8xf32>
    %cst_19 = arith.constant dense<0.000000e+00> : vector<8x8xf32>
    %44 = tpu.matmul %25, %43, %cst_19 {dimension_numbers = #tpu.dot_dimension_numbers<[1], [0], [0], [1], [0, 0, 1, 1], [], []>} : vector<8x32xf32>, vector<32x8xf32>, vector<8x8xf32> -> vector<8x8xf32>
    %45 = vector.extract_strided_slice %32 {offsets = [32, 0], sizes = [1, 8], strides = [1, 1]} : vector<33x8xf32> to vector<1x8xf32>
    %46 = vector.broadcast %45 : vector<1x8xf32> to vector<8x8xf32>
    %47 = arith.addf %44, %46 : vector<8x8xf32>
    %cst_20 = arith.constant dense<0.000000e+00> : vector<8x8xf32>
    %48 = tpu.matmul %37, %42, %cst_20 {dimension_numbers = #tpu.dot_dimension_numbers<[1], [1], [0], [0], [0, 0, 1, 0], [], []>} : vector<8x8xf32>, vector<8x8xf32>, vector<8x8xf32> -> vector<8x8xf32>
    %49 = vector.broadcast %26 : vector<1x8xf32> to vector<8x8xf32>
    %50 = arith.addf %48, %49 : vector<8x8xf32>
    %cst_21 = arith.constant dense<0xFF800000> : vector<8xf32>
    %51 = vector.multi_reduction <maximumf>, %50, %cst_21 [1] : vector<8x8xf32> to vector<8xf32>
    %52 = vector.shape_cast %51 : vector<8xf32> to vector<8x1xf32>
    %53 = vector.broadcast %52 : vector<8x1xf32> to vector<8x8xf32>
    %54 = arith.subf %50, %53 : vector<8x8xf32>
    %55 = math.exp %54 : vector<8x8xf32>
    %cst_22 = arith.constant dense<0.000000e+00> : vector<8xf32>
    %56 = vector.multi_reduction <add>, %55, %cst_22 [1] : vector<8x8xf32> to vector<8xf32>
    %57 = vector.shape_cast %56 : vector<8xf32> to vector<8x1xf32>
    %58 = tpu.reciprocal %57 {approx = true} : vector<8x1xf32> -> vector<8x1xf32>
    %59 = vector.broadcast %58 : vector<8x1xf32> to vector<8x8xf32>
    %60 = arith.mulf %55, %59 : vector<8x8xf32>
    %cst_23 = arith.constant dense<0.000000e+00> : vector<8x8xf32>
    %61 = tpu.matmul %60, %47, %cst_23 {dimension_numbers = #tpu.dot_dimension_numbers<[1], [0], [0], [1], [0, 0, 1, 1], [], []>} : vector<8x8xf32>, vector<8x8xf32>, vector<8x8xf32> -> vector<8x8xf32>
    %c0_24 = arith.constant 0 : index
    %c0_25 = arith.constant 0 : index
    %62 = vector.load %arg4[%c0_24, %c0_25] : memref<206x32xf32, #tpu.memory_space<vmem>>, vector<8x32xf32>
    %cst_26 = arith.constant dense<0.000000e+00> : vector<8x32xf32>
    %63 = tpu.matmul %61, %62, %cst_26 {dimension_numbers = #tpu.dot_dimension_numbers<[1], [0], [0], [1], [0, 0, 1, 1], [], []>} : vector<8x8xf32>, vector<8x32xf32>, vector<8x32xf32> -> vector<8x32xf32>
    %64 = vector.broadcast %24 : vector<1x32xf32> to vector<8x32xf32>
    %65 = arith.addf %64, %63 : vector<8x32xf32>
    %c1 = arith.constant 1 : index
    %c0_27 = arith.constant 0 : index
    %c0_28 = arith.constant 0 : index
    %66 = vector.load %arg3[%c1, %c0_27, %c0_28] : memref<24x33x8xf32, #tpu.memory_space<vmem>>, vector<1x33x8xf32>
    %67 = vector.shape_cast %66 : vector<1x33x8xf32> to vector<33x8xf32>
    %c5 = arith.constant 5 : index
    %c0_29 = arith.constant 0 : index
    %c0_30 = arith.constant 0 : index
    %68 = vector.load %arg3[%c5, %c0_29, %c0_30] : memref<24x33x8xf32, #tpu.memory_space<vmem>>, vector<1x33x8xf32>
    %69 = vector.shape_cast %68 : vector<1x33x8xf32> to vector<33x8xf32>
    %c9 = arith.constant 9 : index
    %c0_31 = arith.constant 0 : index
    %c0_32 = arith.constant 0 : index
    %70 = vector.load %arg3[%c9, %c0_31, %c0_32] : memref<24x33x8xf32, #tpu.memory_space<vmem>>, vector<1x33x8xf32>
    %71 = vector.shape_cast %70 : vector<1x33x8xf32> to vector<33x8xf32>
    %72 = vector.extract_strided_slice %67 {offsets = [0, 0], sizes = [32, 8], strides = [1, 1]} : vector<33x8xf32> to vector<32x8xf32>
    %cst_33 = arith.constant dense<0.000000e+00> : vector<8x8xf32>
    %73 = tpu.matmul %25, %72, %cst_33 {dimension_numbers = #tpu.dot_dimension_numbers<[1], [0], [0], [1], [0, 0, 1, 1], [], []>} : vector<8x32xf32>, vector<32x8xf32>, vector<8x8xf32> -> vector<8x8xf32>
    %74 = vector.extract_strided_slice %67 {offsets = [32, 0], sizes = [1, 8], strides = [1, 1]} : vector<33x8xf32> to vector<1x8xf32>
    %75 = vector.broadcast %74 : vector<1x8xf32> to vector<8x8xf32>
    %76 = arith.addf %73, %75 : vector<8x8xf32>
    %77 = vector.extract_strided_slice %69 {offsets = [0, 0], sizes = [32, 8], strides = [1, 1]} : vector<33x8xf32> to vector<32x8xf32>
    %cst_34 = arith.constant dense<0.000000e+00> : vector<8x8xf32>
    %78 = tpu.matmul %25, %77, %cst_34 {dimension_numbers = #tpu.dot_dimension_numbers<[1], [0], [0], [1], [0, 0, 1, 1], [], []>} : vector<8x32xf32>, vector<32x8xf32>, vector<8x8xf32> -> vector<8x8xf32>
    %79 = vector.extract_strided_slice %69 {offsets = [32, 0], sizes = [1, 8], strides = [1, 1]} : vector<33x8xf32> to vector<1x8xf32>
    %80 = vector.broadcast %79 : vector<1x8xf32> to vector<8x8xf32>
    %81 = arith.addf %78, %80 : vector<8x8xf32>
    %82 = vector.extract_strided_slice %71 {offsets = [0, 0], sizes = [32, 8], strides = [1, 1]} : vector<33x8xf32> to vector<32x8xf32>
    %cst_35 = arith.constant dense<0.000000e+00> : vector<8x8xf32>
    %83 = tpu.matmul %25, %82, %cst_35 {dimension_numbers = #tpu.dot_dimension_numbers<[1], [0], [0], [1], [0, 0, 1, 1], [], []>} : vector<8x32xf32>, vector<32x8xf32>, vector<8x8xf32> -> vector<8x8xf32>
    %84 = vector.extract_strided_slice %71 {offsets = [32, 0], sizes = [1, 8], strides = [1, 1]} : vector<33x8xf32> to vector<1x8xf32>
    %85 = vector.broadcast %84 : vector<1x8xf32> to vector<8x8xf32>
    %86 = arith.addf %83, %85 : vector<8x8xf32>
    %cst_36 = arith.constant dense<0.000000e+00> : vector<8x8xf32>
    %87 = tpu.matmul %76, %81, %cst_36 {dimension_numbers = #tpu.dot_dimension_numbers<[1], [1], [0], [0], [0, 0, 1, 0], [], []>} : vector<8x8xf32>, vector<8x8xf32>, vector<8x8xf32> -> vector<8x8xf32>
    %88 = vector.broadcast %26 : vector<1x8xf32> to vector<8x8xf32>
    %89 = arith.addf %87, %88 : vector<8x8xf32>
    %cst_37 = arith.constant dense<0xFF800000> : vector<8xf32>
    %90 = vector.multi_reduction <maximumf>, %89, %cst_37 [1] : vector<8x8xf32> to vector<8xf32>
    %91 = vector.shape_cast %90 : vector<8xf32> to vector<8x1xf32>
    %92 = vector.broadcast %91 : vector<8x1xf32> to vector<8x8xf32>
    %93 = arith.subf %89, %92 : vector<8x8xf32>
    %94 = math.exp %93 : vector<8x8xf32>
    %cst_38 = arith.constant dense<0.000000e+00> : vector<8xf32>
    %95 = vector.multi_reduction <add>, %94, %cst_38 [1] : vector<8x8xf32> to vector<8xf32>
    %96 = vector.shape_cast %95 : vector<8xf32> to vector<8x1xf32>
    %97 = tpu.reciprocal %96 {approx = true} : vector<8x1xf32> -> vector<8x1xf32>
    %98 = vector.broadcast %97 : vector<8x1xf32> to vector<8x8xf32>
    %99 = arith.mulf %94, %98 : vector<8x8xf32>
    %cst_39 = arith.constant dense<0.000000e+00> : vector<8x8xf32>
    %100 = tpu.matmul %99, %86, %cst_39 {dimension_numbers = #tpu.dot_dimension_numbers<[1], [0], [0], [1], [0, 0, 1, 1], [], []>} : vector<8x8xf32>, vector<8x8xf32>, vector<8x8xf32> -> vector<8x8xf32>
    %c8_40 = arith.constant 8 : index
    %c0_41 = arith.constant 0 : index
    %101 = vector.load %arg4[%c8_40, %c0_41] : memref<206x32xf32, #tpu.memory_space<vmem>>, vector<8x32xf32>
    %cst_42 = arith.constant dense<0.000000e+00> : vector<8x32xf32>
    %102 = tpu.matmul %100, %101, %cst_42 {dimension_numbers = #tpu.dot_dimension_numbers<[1], [0], [0], [1], [0, 0, 1, 1], [], []>} : vector<8x8xf32>, vector<8x32xf32>, vector<8x32xf32> -> vector<8x32xf32>
    %103 = arith.addf %65, %102 : vector<8x32xf32>
    %c2 = arith.constant 2 : index
    %c0_43 = arith.constant 0 : index
    %c0_44 = arith.constant 0 : index
    %104 = vector.load %arg3[%c2, %c0_43, %c0_44] : memref<24x33x8xf32, #tpu.memory_space<vmem>>, vector<1x33x8xf32>
    %105 = vector.shape_cast %104 : vector<1x33x8xf32> to vector<33x8xf32>
    %c6 = arith.constant 6 : index
    %c0_45 = arith.constant 0 : index
    %c0_46 = arith.constant 0 : index
    %106 = vector.load %arg3[%c6, %c0_45, %c0_46] : memref<24x33x8xf32, #tpu.memory_space<vmem>>, vector<1x33x8xf32>
    %107 = vector.shape_cast %106 : vector<1x33x8xf32> to vector<33x8xf32>
    %c10 = arith.constant 10 : index
    %c0_47 = arith.constant 0 : index
    %c0_48 = arith.constant 0 : index
    %108 = vector.load %arg3[%c10, %c0_47, %c0_48] : memref<24x33x8xf32, #tpu.memory_space<vmem>>, vector<1x33x8xf32>
    %109 = vector.shape_cast %108 : vector<1x33x8xf32> to vector<33x8xf32>
    %110 = vector.extract_strided_slice %105 {offsets = [0, 0], sizes = [32, 8], strides = [1, 1]} : vector<33x8xf32> to vector<32x8xf32>
    %cst_49 = arith.constant dense<0.000000e+00> : vector<8x8xf32>
    %111 = tpu.matmul %25, %110, %cst_49 {dimension_numbers = #tpu.dot_dimension_numbers<[1], [0], [0], [1], [0, 0, 1, 1], [], []>} : vector<8x32xf32>, vector<32x8xf32>, vector<8x8xf32> -> vector<8x8xf32>
    %112 = vector.extract_strided_slice %105 {offsets = [32, 0], sizes = [1, 8], strides = [1, 1]} : vector<33x8xf32> to vector<1x8xf32>
    %113 = vector.broadcast %112 : vector<1x8xf32> to vector<8x8xf32>
    %114 = arith.addf %111, %113 : vector<8x8xf32>
    %115 = vector.extract_strided_slice %107 {offsets = [0, 0], sizes = [32, 8], strides = [1, 1]} : vector<33x8xf32> to vector<32x8xf32>
    %cst_50 = arith.constant dense<0.000000e+00> : vector<8x8xf32>
    %116 = tpu.matmul %25, %115, %cst_50 {dimension_numbers = #tpu.dot_dimension_numbers<[1], [0], [0], [1], [0, 0, 1, 1], [], []>} : vector<8x32xf32>, vector<32x8xf32>, vector<8x8xf32> -> vector<8x8xf32>
    %117 = vector.extract_strided_slice %107 {offsets = [32, 0], sizes = [1, 8], strides = [1, 1]} : vector<33x8xf32> to vector<1x8xf32>
    %118 = vector.broadcast %117 : vector<1x8xf32> to vector<8x8xf32>
    %119 = arith.addf %116, %118 : vector<8x8xf32>
    %120 = vector.extract_strided_slice %109 {offsets = [0, 0], sizes = [32, 8], strides = [1, 1]} : vector<33x8xf32> to vector<32x8xf32>
    %cst_51 = arith.constant dense<0.000000e+00> : vector<8x8xf32>
    %121 = tpu.matmul %25, %120, %cst_51 {dimension_numbers = #tpu.dot_dimension_numbers<[1], [0], [0], [1], [0, 0, 1, 1], [], []>} : vector<8x32xf32>, vector<32x8xf32>, vector<8x8xf32> -> vector<8x8xf32>
    %122 = vector.extract_strided_slice %109 {offsets = [32, 0], sizes = [1, 8], strides = [1, 1]} : vector<33x8xf32> to vector<1x8xf32>
    %123 = vector.broadcast %122 : vector<1x8xf32> to vector<8x8xf32>
    %124 = arith.addf %121, %123 : vector<8x8xf32>
    %cst_52 = arith.constant dense<0.000000e+00> : vector<8x8xf32>
    %125 = tpu.matmul %114, %119, %cst_52 {dimension_numbers = #tpu.dot_dimension_numbers<[1], [1], [0], [0], [0, 0, 1, 0], [], []>} : vector<8x8xf32>, vector<8x8xf32>, vector<8x8xf32> -> vector<8x8xf32>
    %126 = vector.broadcast %26 : vector<1x8xf32> to vector<8x8xf32>
    %127 = arith.addf %125, %126 : vector<8x8xf32>
    %cst_53 = arith.constant dense<0xFF800000> : vector<8xf32>
    %128 = vector.multi_reduction <maximumf>, %127, %cst_53 [1] : vector<8x8xf32> to vector<8xf32>
    %129 = vector.shape_cast %128 : vector<8xf32> to vector<8x1xf32>
    %130 = vector.broadcast %129 : vector<8x1xf32> to vector<8x8xf32>
    %131 = arith.subf %127, %130 : vector<8x8xf32>
    %132 = math.exp %131 : vector<8x8xf32>
    %cst_54 = arith.constant dense<0.000000e+00> : vector<8xf32>
    %133 = vector.multi_reduction <add>, %132, %cst_54 [1] : vector<8x8xf32> to vector<8xf32>
    %134 = vector.shape_cast %133 : vector<8xf32> to vector<8x1xf32>
    %135 = tpu.reciprocal %134 {approx = true} : vector<8x1xf32> -> vector<8x1xf32>
    %136 = vector.broadcast %135 : vector<8x1xf32> to vector<8x8xf32>
    %137 = arith.mulf %132, %136 : vector<8x8xf32>
    %cst_55 = arith.constant dense<0.000000e+00> : vector<8x8xf32>
    %138 = tpu.matmul %137, %124, %cst_55 {dimension_numbers = #tpu.dot_dimension_numbers<[1], [0], [0], [1], [0, 0, 1, 1], [], []>} : vector<8x8xf32>, vector<8x8xf32>, vector<8x8xf32> -> vector<8x8xf32>
    %c16 = arith.constant 16 : index
    %c0_56 = arith.constant 0 : index
    %139 = vector.load %arg4[%c16, %c0_56] : memref<206x32xf32, #tpu.memory_space<vmem>>, vector<8x32xf32>
    %cst_57 = arith.constant dense<0.000000e+00> : vector<8x32xf32>
    %140 = tpu.matmul %138, %139, %cst_57 {dimension_numbers = #tpu.dot_dimension_numbers<[1], [0], [0], [1], [0, 0, 1, 1], [], []>} : vector<8x8xf32>, vector<8x32xf32>, vector<8x32xf32> -> vector<8x32xf32>
    %141 = arith.addf %103, %140 : vector<8x32xf32>
    %c3 = arith.constant 3 : index
    %c0_58 = arith.constant 0 : index
    %c0_59 = arith.constant 0 : index
    %142 = vector.load %arg3[%c3, %c0_58, %c0_59] : memref<24x33x8xf32, #tpu.memory_space<vmem>>, vector<1x33x8xf32>
    %143 = vector.shape_cast %142 : vector<1x33x8xf32> to vector<33x8xf32>
    %c7 = arith.constant 7 : index
    %c0_60 = arith.constant 0 : index
    %c0_61 = arith.constant 0 : index
    %144 = vector.load %arg3[%c7, %c0_60, %c0_61] : memref<24x33x8xf32, #tpu.memory_space<vmem>>, vector<1x33x8xf32>
    %145 = vector.shape_cast %144 : vector<1x33x8xf32> to vector<33x8xf32>
    %c11 = arith.constant 11 : index
    %c0_62 = arith.constant 0 : index
    %c0_63 = arith.constant 0 : index
    %146 = vector.load %arg3[%c11, %c0_62, %c0_63] : memref<24x33x8xf32, #tpu.memory_space<vmem>>, vector<1x33x8xf32>
    %147 = vector.shape_cast %146 : vector<1x33x8xf32> to vector<33x8xf32>
    %148 = vector.extract_strided_slice %143 {offsets = [0, 0], sizes = [32, 8], strides = [1, 1]} : vector<33x8xf32> to vector<32x8xf32>
    %cst_64 = arith.constant dense<0.000000e+00> : vector<8x8xf32>
    %149 = tpu.matmul %25, %148, %cst_64 {dimension_numbers = #tpu.dot_dimension_numbers<[1], [0], [0], [1], [0, 0, 1, 1], [], []>} : vector<8x32xf32>, vector<32x8xf32>, vector<8x8xf32> -> vector<8x8xf32>
    %150 = vector.extract_strided_slice %143 {offsets = [32, 0], sizes = [1, 8], strides = [1, 1]} : vector<33x8xf32> to vector<1x8xf32>
    %151 = vector.broadcast %150 : vector<1x8xf32> to vector<8x8xf32>
    %152 = arith.addf %149, %151 : vector<8x8xf32>
    %153 = vector.extract_strided_slice %145 {offsets = [0, 0], sizes = [32, 8], strides = [1, 1]} : vector<33x8xf32> to vector<32x8xf32>
    %cst_65 = arith.constant dense<0.000000e+00> : vector<8x8xf32>
    %154 = tpu.matmul %25, %153, %cst_65 {dimension_numbers = #tpu.dot_dimension_numbers<[1], [0], [0], [1], [0, 0, 1, 1], [], []>} : vector<8x32xf32>, vector<32x8xf32>, vector<8x8xf32> -> vector<8x8xf32>
    %155 = vector.extract_strided_slice %145 {offsets = [32, 0], sizes = [1, 8], strides = [1, 1]} : vector<33x8xf32> to vector<1x8xf32>
    %156 = vector.broadcast %155 : vector<1x8xf32> to vector<8x8xf32>
    %157 = arith.addf %154, %156 : vector<8x8xf32>
    %158 = vector.extract_strided_slice %147 {offsets = [0, 0], sizes = [32, 8], strides = [1, 1]} : vector<33x8xf32> to vector<32x8xf32>
    %cst_66 = arith.constant dense<0.000000e+00> : vector<8x8xf32>
    %159 = tpu.matmul %25, %158, %cst_66 {dimension_numbers = #tpu.dot_dimension_numbers<[1], [0], [0], [1], [0, 0, 1, 1], [], []>} : vector<8x32xf32>, vector<32x8xf32>, vector<8x8xf32> -> vector<8x8xf32>
    %160 = vector.extract_strided_slice %147 {offsets = [32, 0], sizes = [1, 8], strides = [1, 1]} : vector<33x8xf32> to vector<1x8xf32>
    %161 = vector.broadcast %160 : vector<1x8xf32> to vector<8x8xf32>
    %162 = arith.addf %159, %161 : vector<8x8xf32>
    %cst_67 = arith.constant dense<0.000000e+00> : vector<8x8xf32>
    %163 = tpu.matmul %152, %157, %cst_67 {dimension_numbers = #tpu.dot_dimension_numbers<[1], [1], [0], [0], [0, 0, 1, 0], [], []>} : vector<8x8xf32>, vector<8x8xf32>, vector<8x8xf32> -> vector<8x8xf32>
    %164 = vector.broadcast %26 : vector<1x8xf32> to vector<8x8xf32>
    %165 = arith.addf %163, %164 : vector<8x8xf32>
    %cst_68 = arith.constant dense<0xFF800000> : vector<8xf32>
    %166 = vector.multi_reduction <maximumf>, %165, %cst_68 [1] : vector<8x8xf32> to vector<8xf32>
    %167 = vector.shape_cast %166 : vector<8xf32> to vector<8x1xf32>
    %168 = vector.broadcast %167 : vector<8x1xf32> to vector<8x8xf32>
    %169 = arith.subf %165, %168 : vector<8x8xf32>
    %170 = math.exp %169 : vector<8x8xf32>
    %cst_69 = arith.constant dense<0.000000e+00> : vector<8xf32>
    %171 = vector.multi_reduction <add>, %170, %cst_69 [1] : vector<8x8xf32> to vector<8xf32>
    %172 = vector.shape_cast %171 : vector<8xf32> to vector<8x1xf32>
    %173 = tpu.reciprocal %172 {approx = true} : vector<8x1xf32> -> vector<8x1xf32>
    %174 = vector.broadcast %173 : vector<8x1xf32> to vector<8x8xf32>
    %175 = arith.mulf %170, %174 : vector<8x8xf32>
    %cst_70 = arith.constant dense<0.000000e+00> : vector<8x8xf32>
    %176 = tpu.matmul %175, %162, %cst_70 {dimension_numbers = #tpu.dot_dimension_numbers<[1], [0], [0], [1], [0, 0, 1, 1], [], []>} : vector<8x8xf32>, vector<8x8xf32>, vector<8x8xf32> -> vector<8x8xf32>
    %c24 = arith.constant 24 : index
    %c0_71 = arith.constant 0 : index
    %177 = vector.load %arg4[%c24, %c0_71] : memref<206x32xf32, #tpu.memory_space<vmem>>, vector<8x32xf32>
    %cst_72 = arith.constant dense<0.000000e+00> : vector<8x32xf32>
    %178 = tpu.matmul %176, %177, %cst_72 {dimension_numbers = #tpu.dot_dimension_numbers<[1], [0], [0], [1], [0, 0, 1, 1], [], []>} : vector<8x8xf32>, vector<8x32xf32>, vector<8x32xf32> -> vector<8x32xf32>
    %179 = arith.addf %141, %178 : vector<8x32xf32>
    %c0_73 = arith.constant 0 : index
    %c0_74 = arith.constant 0 : index
    %180 = vector.load %arg9[%c0_73, %c0_74] : memref<16x32xf32, #tpu.memory_space<vmem>>, vector<8x32xf32>
    tpu.vector_store %arg9[%c0_73, %c0_74], %179 {strides = array<i32>} : memref<16x32xf32, #tpu.memory_space<vmem>>, vector<8x32xf32>,
    %181 = vector.extract_strided_slice %23 {offsets = [8, 0], sizes = [8, 32], strides = [1, 1]} : vector<16x32xf32> to vector<8x32xf32>
    %182 = vector.extract_strided_slice %0 {offsets = [1, 0], sizes = [1, 8], strides = [1, 1]} : vector<2x8xf32> to vector<1x8xf32>
    %c0_75 = arith.constant 0 : index
    %c0_76 = arith.constant 0 : index
    %c0_77 = arith.constant 0 : index
    %183 = vector.load %arg3[%c0_75, %c0_76, %c0_77] : memref<24x33x8xf32, #tpu.memory_space<vmem>>, vector<1x33x8xf32>
    %184 = vector.shape_cast %183 : vector<1x33x8xf32> to vector<33x8xf32>
    %c4_78 = arith.constant 4 : index
    %c0_79 = arith.constant 0 : index
    %c0_80 = arith.constant 0 : index
    %185 = vector.load %arg3[%c4_78, %c0_79, %c0_80] : memref<24x33x8xf32, #tpu.memory_space<vmem>>, vector<1x33x8xf32>
    %186 = vector.shape_cast %185 : vector<1x33x8xf32> to vector<33x8xf32>
    %c8_81 = arith.constant 8 : index
    %c0_82 = arith.constant 0 : index
    %c0_83 = arith.constant 0 : index
    %187 = vector.load %arg3[%c8_81, %c0_82, %c0_83] : memref<24x33x8xf32, #tpu.memory_space<vmem>>, vector<1x33x8xf32>
    %188 = vector.shape_cast %187 : vector<1x33x8xf32> to vector<33x8xf32>
    %189 = vector.extract_strided_slice %184 {offsets = [0, 0], sizes = [32, 8], strides = [1, 1]} : vector<33x8xf32> to vector<32x8xf32>
    %cst_84 = arith.constant dense<0.000000e+00> : vector<8x8xf32>
    %190 = tpu.matmul %181, %189, %cst_84 {dimension_numbers = #tpu.dot_dimension_numbers<[1], [0], [0], [1], [0, 0, 1, 1], [], []>} : vector<8x32xf32>, vector<32x8xf32>, vector<8x8xf32> -> vector<8x8xf32>
    %191 = vector.extract_strided_slice %184 {offsets = [32, 0], sizes = [1, 8], strides = [1, 1]} : vector<33x8xf32> to vector<1x8xf32>
    %192 = vector.broadcast %191 : vector<1x8xf32> to vector<8x8xf32>
    %193 = arith.addf %190, %192 : vector<8x8xf32>
    %194 = vector.extract_strided_slice %186 {offsets = [0, 0], sizes = [32, 8], strides = [1, 1]} : vector<33x8xf32> to vector<32x8xf32>
    %cst_85 = arith.constant dense<0.000000e+00> : vector<8x8xf32>
    %195 = tpu.matmul %181, %194, %cst_85 {dimension_numbers = #tpu.dot_dimension_numbers<[1], [0], [0], [1], [0, 0, 1, 1], [], []>} : vector<8x32xf32>, vector<32x8xf32>, vector<8x8xf32> -> vector<8x8xf32>
    %196 = vector.extract_strided_slice %186 {offsets = [32, 0], sizes = [1, 8], strides = [1, 1]} : vector<33x8xf32> to vector<1x8xf32>
    %197 = vector.broadcast %196 : vector<1x8xf32> to vector<8x8xf32>
    %198 = arith.addf %195, %197 : vector<8x8xf32>
    %199 = vector.extract_strided_slice %188 {offsets = [0, 0], sizes = [32, 8], strides = [1, 1]} : vector<33x8xf32> to vector<32x8xf32>
    %cst_86 = arith.constant dense<0.000000e+00> : vector<8x8xf32>
    %200 = tpu.matmul %181, %199, %cst_86 {dimension_numbers = #tpu.dot_dimension_numbers<[1], [0], [0], [1], [0, 0, 1, 1], [], []>} : vector<8x32xf32>, vector<32x8xf32>, vector<8x8xf32> -> vector<8x8xf32>
    %201 = vector.extract_strided_slice %188 {offsets = [32, 0], sizes = [1, 8], strides = [1, 1]} : vector<33x8xf32> to vector<1x8xf32>
    %202 = vector.broadcast %201 : vector<1x8xf32> to vector<8x8xf32>
    %203 = arith.addf %200, %202 : vector<8x8xf32>
    %cst_87 = arith.constant dense<0.000000e+00> : vector<8x8xf32>
    %204 = tpu.matmul %193, %198, %cst_87 {dimension_numbers = #tpu.dot_dimension_numbers<[1], [1], [0], [0], [0, 0, 1, 0], [], []>} : vector<8x8xf32>, vector<8x8xf32>, vector<8x8xf32> -> vector<8x8xf32>
    %205 = vector.broadcast %182 : vector<1x8xf32> to vector<8x8xf32>
    %206 = arith.addf %204, %205 : vector<8x8xf32>
    %cst_88 = arith.constant dense<0xFF800000> : vector<8xf32>
    %207 = vector.multi_reduction <maximumf>, %206, %cst_88 [1] : vector<8x8xf32> to vector<8xf32>
    %208 = vector.shape_cast %207 : vector<8xf32> to vector<8x1xf32>
    %209 = vector.broadcast %208 : vector<8x1xf32> to vector<8x8xf32>
    %210 = arith.subf %206, %209 : vector<8x8xf32>
    %211 = math.exp %210 : vector<8x8xf32>
    %cst_89 = arith.constant dense<0.000000e+00> : vector<8xf32>
    %212 = vector.multi_reduction <add>, %211, %cst_89 [1] : vector<8x8xf32> to vector<8xf32>
    %213 = vector.shape_cast %212 : vector<8xf32> to vector<8x1xf32>
    %214 = tpu.reciprocal %213 {approx = true} : vector<8x1xf32> -> vector<8x1xf32>
    %215 = vector.broadcast %214 : vector<8x1xf32> to vector<8x8xf32>
    %216 = arith.mulf %211, %215 : vector<8x8xf32>
    %cst_90 = arith.constant dense<0.000000e+00> : vector<8x8xf32>
    %217 = tpu.matmul %216, %203, %cst_90 {dimension_numbers = #tpu.dot_dimension_numbers<[1], [0], [0], [1], [0, 0, 1, 1], [], []>} : vector<8x8xf32>, vector<8x8xf32>, vector<8x8xf32> -> vector<8x8xf32>
    %c0_91 = arith.constant 0 : index
    %c0_92 = arith.constant 0 : index
    %218 = vector.load %arg4[%c0_91, %c0_92] : memref<206x32xf32, #tpu.memory_space<vmem>>, vector<8x32xf32>
    %cst_93 = arith.constant dense<0.000000e+00> : vector<8x32xf32>
    %219 = tpu.matmul %217, %218, %cst_93 {dimension_numbers = #tpu.dot_dimension_numbers<[1], [0], [0], [1], [0, 0, 1, 1], [], []>} : vector<8x8xf32>, vector<8x32xf32>, vector<8x32xf32> -> vector<8x32xf32>
    %220 = vector.broadcast %24 : vector<1x32xf32> to vector<8x32xf32>
    %221 = arith.addf %220, %219 : vector<8x32xf32>
    %c1_94 = arith.constant 1 : index
    %c0_95 = arith.constant 0 : index
    %c0_96 = arith.constant 0 : index
    %222 = vector.load %arg3[%c1_94, %c0_95, %c0_96] : memref<24x33x8xf32, #tpu.memory_space<vmem>>, vector<1x33x8xf32>
    %223 = vector.shape_cast %222 : vector<1x33x8xf32> to vector<33x8xf32>
    %c5_97 = arith.constant 5 : index
    %c0_98 = arith.constant 0 : index
    %c0_99 = arith.constant 0 : index
    %224 = vector.load %arg3[%c5_97, %c0_98, %c0_99] : memref<24x33x8xf32, #tpu.memory_space<vmem>>, vector<1x33x8xf32>
    %225 = vector.shape_cast %224 : vector<1x33x8xf32> to vector<33x8xf32>
    %c9_100 = arith.constant 9 : index
    %c0_101 = arith.constant 0 : index
    %c0_102 = arith.constant 0 : index
    %226 = vector.load %arg3[%c9_100, %c0_101, %c0_102] : memref<24x33x8xf32, #tpu.memory_space<vmem>>, vector<1x33x8xf32>
    %227 = vector.shape_cast %226 : vector<1x33x8xf32> to vector<33x8xf32>
    %228 = vector.extract_strided_slice %223 {offsets = [0, 0], sizes = [32, 8], strides = [1, 1]} : vector<33x8xf32> to vector<32x8xf32>
    %cst_103 = arith.constant dense<0.000000e+00> : vector<8x8xf32>
    %229 = tpu.matmul %181, %228, %cst_103 {dimension_numbers = #tpu.dot_dimension_numbers<[1], [0], [0], [1], [0, 0, 1, 1], [], []>} : vector<8x32xf32>, vector<32x8xf32>, vector<8x8xf32> -> vector<8x8xf32>
    %230 = vector.extract_strided_slice %223 {offsets = [32, 0], sizes = [1, 8], strides = [1, 1]} : vector<33x8xf32> to vector<1x8xf32>
    %231 = vector.broadcast %230 : vector<1x8xf32> to vector<8x8xf32>
    %232 = arith.addf %229, %231 : vector<8x8xf32>
    %233 = vector.extract_strided_slice %225 {offsets = [0, 0], sizes = [32, 8], strides = [1, 1]} : vector<33x8xf32> to vector<32x8xf32>
    %cst_104 = arith.constant dense<0.000000e+00> : vector<8x8xf32>
    %234 = tpu.matmul %181, %233, %cst_104 {dimension_numbers = #tpu.dot_dimension_numbers<[1], [0], [0], [1], [0, 0, 1, 1], [], []>} : vector<8x32xf32>, vector<32x8xf32>, vector<8x8xf32> -> vector<8x8xf32>
    %235 = vector.extract_strided_slice %225 {offsets = [32, 0], sizes = [1, 8], strides = [1, 1]} : vector<33x8xf32> to vector<1x8xf32>
    %236 = vector.broadcast %235 : vector<1x8xf32> to vector<8x8xf32>
    %237 = arith.addf %234, %236 : vector<8x8xf32>
    %238 = vector.extract_strided_slice %227 {offsets = [0, 0], sizes = [32, 8], strides = [1, 1]} : vector<33x8xf32> to vector<32x8xf32>
    %cst_105 = arith.constant dense<0.000000e+00> : vector<8x8xf32>
    %239 = tpu.matmul %181, %238, %cst_105 {dimension_numbers = #tpu.dot_dimension_numbers<[1], [0], [0], [1], [0, 0, 1, 1], [], []>} : vector<8x32xf32>, vector<32x8xf32>, vector<8x8xf32> -> vector<8x8xf32>
    %240 = vector.extract_strided_slice %227 {offsets = [32, 0], sizes = [1, 8], strides = [1, 1]} : vector<33x8xf32> to vector<1x8xf32>
    %241 = vector.broadcast %240 : vector<1x8xf32> to vector<8x8xf32>
    %242 = arith.addf %239, %241 : vector<8x8xf32>
    %cst_106 = arith.constant dense<0.000000e+00> : vector<8x8xf32>
    %243 = tpu.matmul %232, %237, %cst_106 {dimension_numbers = #tpu.dot_dimension_numbers<[1], [1], [0], [0], [0, 0, 1, 0], [], []>} : vector<8x8xf32>, vector<8x8xf32>, vector<8x8xf32> -> vector<8x8xf32>
    %244 = vector.broadcast %182 : vector<1x8xf32> to vector<8x8xf32>
    %245 = arith.addf %243, %244 : vector<8x8xf32>
    %cst_107 = arith.constant dense<0xFF800000> : vector<8xf32>
    %246 = vector.multi_reduction <maximumf>, %245, %cst_107 [1] : vector<8x8xf32> to vector<8xf32>
    %247 = vector.shape_cast %246 : vector<8xf32> to vector<8x1xf32>
    %248 = vector.broadcast %247 : vector<8x1xf32> to vector<8x8xf32>
    %249 = arith.subf %245, %248 : vector<8x8xf32>
    %250 = math.exp %249 : vector<8x8xf32>
    %cst_108 = arith.constant dense<0.000000e+00> : vector<8xf32>
    %251 = vector.multi_reduction <add>, %250, %cst_108 [1] : vector<8x8xf32> to vector<8xf32>
    %252 = vector.shape_cast %251 : vector<8xf32> to vector<8x1xf32>
    %253 = tpu.reciprocal %252 {approx = true} : vector<8x1xf32> -> vector<8x1xf32>
    %254 = vector.broadcast %253 : vector<8x1xf32> to vector<8x8xf32>
    %255 = arith.mulf %250, %254 : vector<8x8xf32>
    %cst_109 = arith.constant dense<0.000000e+00> : vector<8x8xf32>
    %256 = tpu.matmul %255, %242, %cst_109 {dimension_numbers = #tpu.dot_dimension_numbers<[1], [0], [0], [1], [0, 0, 1, 1], [], []>} : vector<8x8xf32>, vector<8x8xf32>, vector<8x8xf32> -> vector<8x8xf32>
    %c8_110 = arith.constant 8 : index
    %c0_111 = arith.constant 0 : index
    %257 = vector.load %arg4[%c8_110, %c0_111] : memref<206x32xf32, #tpu.memory_space<vmem>>, vector<8x32xf32>
    %cst_112 = arith.constant dense<0.000000e+00> : vector<8x32xf32>
    %258 = tpu.matmul %256, %257, %cst_112 {dimension_numbers = #tpu.dot_dimension_numbers<[1], [0], [0], [1], [0, 0, 1, 1], [], []>} : vector<8x8xf32>, vector<8x32xf32>, vector<8x32xf32> -> vector<8x32xf32>
    %259 = arith.addf %221, %258 : vector<8x32xf32>
    %c2_113 = arith.constant 2 : index
    %c0_114 = arith.constant 0 : index
    %c0_115 = arith.constant 0 : index
    %260 = vector.load %arg3[%c2_113, %c0_114, %c0_115] : memref<24x33x8xf32, #tpu.memory_space<vmem>>, vector<1x33x8xf32>
    %261 = vector.shape_cast %260 : vector<1x33x8xf32> to vector<33x8xf32>
    %c6_116 = arith.constant 6 : index
    %c0_117 = arith.constant 0 : index
    %c0_118 = arith.constant 0 : index
    %262 = vector.load %arg3[%c6_116, %c0_117, %c0_118] : memref<24x33x8xf32, #tpu.memory_space<vmem>>, vector<1x33x8xf32>
    %263 = vector.shape_cast %262 : vector<1x33x8xf32> to vector<33x8xf32>
    %c10_119 = arith.constant 10 : index
    %c0_120 = arith.constant 0 : index
    %c0_121 = arith.constant 0 : index
    %264 = vector.load %arg3[%c10_119, %c0_120, %c0_121] : memref<24x33x8xf32, #tpu.memory_space<vmem>>, vector<1x33x8xf32>
    %265 = vector.shape_cast %264 : vector<1x33x8xf32> to vector<33x8xf32>
    %266 = vector.extract_strided_slice %261 {offsets = [0, 0], sizes = [32, 8], strides = [1, 1]} : vector<33x8xf32> to vector<32x8xf32>
    %cst_122 = arith.constant dense<0.000000e+00> : vector<8x8xf32>
    %267 = tpu.matmul %181, %266, %cst_122 {dimension_numbers = #tpu.dot_dimension_numbers<[1], [0], [0], [1], [0, 0, 1, 1], [], []>} : vector<8x32xf32>, vector<32x8xf32>, vector<8x8xf32> -> vector<8x8xf32>
    %268 = vector.extract_strided_slice %261 {offsets = [32, 0], sizes = [1, 8], strides = [1, 1]} : vector<33x8xf32> to vector<1x8xf32>
    %269 = vector.broadcast %268 : vector<1x8xf32> to vector<8x8xf32>
    %270 = arith.addf %267, %269 : vector<8x8xf32>
    %271 = vector.extract_strided_slice %263 {offsets = [0, 0], sizes = [32, 8], strides = [1, 1]} : vector<33x8xf32> to vector<32x8xf32>
    %cst_123 = arith.constant dense<0.000000e+00> : vector<8x8xf32>
    %272 = tpu.matmul %181, %271, %cst_123 {dimension_numbers = #tpu.dot_dimension_numbers<[1], [0], [0], [1], [0, 0, 1, 1], [], []>} : vector<8x32xf32>, vector<32x8xf32>, vector<8x8xf32> -> vector<8x8xf32>
    %273 = vector.extract_strided_slice %263 {offsets = [32, 0], sizes = [1, 8], strides = [1, 1]} : vector<33x8xf32> to vector<1x8xf32>
    %274 = vector.broadcast %273 : vector<1x8xf32> to vector<8x8xf32>
    %275 = arith.addf %272, %274 : vector<8x8xf32>
    %276 = vector.extract_strided_slice %265 {offsets = [0, 0], sizes = [32, 8], strides = [1, 1]} : vector<33x8xf32> to vector<32x8xf32>
    %cst_124 = arith.constant dense<0.000000e+00> : vector<8x8xf32>
    %277 = tpu.matmul %181, %276, %cst_124 {dimension_numbers = #tpu.dot_dimension_numbers<[1], [0], [0], [1], [0, 0, 1, 1], [], []>} : vector<8x32xf32>, vector<32x8xf32>, vector<8x8xf32> -> vector<8x8xf32>
    %278 = vector.extract_strided_slice %265 {offsets = [32, 0], sizes = [1, 8], strides = [1, 1]} : vector<33x8xf32> to vector<1x8xf32>
    %279 = vector.broadcast %278 : vector<1x8xf32> to vector<8x8xf32>
    %280 = arith.addf %277, %279 : vector<8x8xf32>
    %cst_125 = arith.constant dense<0.000000e+00> : vector<8x8xf32>
    %281 = tpu.matmul %270, %275, %cst_125 {dimension_numbers = #tpu.dot_dimension_numbers<[1], [1], [0], [0], [0, 0, 1, 0], [], []>} : vector<8x8xf32>, vector<8x8xf32>, vector<8x8xf32> -> vector<8x8xf32>
    %282 = vector.broadcast %182 : vector<1x8xf32> to vector<8x8xf32>
    %283 = arith.addf %281, %282 : vector<8x8xf32>
    %cst_126 = arith.constant dense<0xFF800000> : vector<8xf32>
    %284 = vector.multi_reduction <maximumf>, %283, %cst_126 [1] : vector<8x8xf32> to vector<8xf32>
    %285 = vector.shape_cast %284 : vector<8xf32> to vector<8x1xf32>
    %286 = vector.broadcast %285 : vector<8x1xf32> to vector<8x8xf32>
    %287 = arith.subf %283, %286 : vector<8x8xf32>
    %288 = math.exp %287 : vector<8x8xf32>
    %cst_127 = arith.constant dense<0.000000e+00> : vector<8xf32>
    %289 = vector.multi_reduction <add>, %288, %cst_127 [1] : vector<8x8xf32> to vector<8xf32>
    %290 = vector.shape_cast %289 : vector<8xf32> to vector<8x1xf32>
    %291 = tpu.reciprocal %290 {approx = true} : vector<8x1xf32> -> vector<8x1xf32>
    %292 = vector.broadcast %291 : vector<8x1xf32> to vector<8x8xf32>
    %293 = arith.mulf %288, %292 : vector<8x8xf32>
    %cst_128 = arith.constant dense<0.000000e+00> : vector<8x8xf32>
    %294 = tpu.matmul %293, %280, %cst_128 {dimension_numbers = #tpu.dot_dimension_numbers<[1], [0], [0], [1], [0, 0, 1, 1], [], []>} : vector<8x8xf32>, vector<8x8xf32>, vector<8x8xf32> -> vector<8x8xf32>
    %c16_129 = arith.constant 16 : index
    %c0_130 = arith.constant 0 : index
    %295 = vector.load %arg4[%c16_129, %c0_130] : memref<206x32xf32, #tpu.memory_space<vmem>>, vector<8x32xf32>
    %cst_131 = arith.constant dense<0.000000e+00> : vector<8x32xf32>
    %296 = tpu.matmul %294, %295, %cst_131 {dimension_numbers = #tpu.dot_dimension_numbers<[1], [0], [0], [1], [0, 0, 1, 1], [], []>} : vector<8x8xf32>, vector<8x32xf32>, vector<8x32xf32> -> vector<8x32xf32>
    %297 = arith.addf %259, %296 : vector<8x32xf32>
    %c3_132 = arith.constant 3 : index
    %c0_133 = arith.constant 0 : index
    %c0_134 = arith.constant 0 : index
    %298 = vector.load %arg3[%c3_132, %c0_133, %c0_134] : memref<24x33x8xf32, #tpu.memory_space<vmem>>, vector<1x33x8xf32>
    %299 = vector.shape_cast %298 : vector<1x33x8xf32> to vector<33x8xf32>
    %c7_135 = arith.constant 7 : index
    %c0_136 = arith.constant 0 : index
    %c0_137 = arith.constant 0 : index
    %300 = vector.load %arg3[%c7_135, %c0_136, %c0_137] : memref<24x33x8xf32, #tpu.memory_space<vmem>>, vector<1x33x8xf32>
    %301 = vector.shape_cast %300 : vector<1x33x8xf32> to vector<33x8xf32>
    %c11_138 = arith.constant 11 : index
    %c0_139 = arith.constant 0 : index
    %c0_140 = arith.constant 0 : index
    %302 = vector.load %arg3[%c11_138, %c0_139, %c0_140] : memref<24x33x8xf32, #tpu.memory_space<vmem>>, vector<1x33x8xf32>
    %303 = vector.shape_cast %302 : vector<1x33x8xf32> to vector<33x8xf32>
    %304 = vector.extract_strided_slice %299 {offsets = [0, 0], sizes = [32, 8], strides = [1, 1]} : vector<33x8xf32> to vector<32x8xf32>
    %cst_141 = arith.constant dense<0.000000e+00> : vector<8x8xf32>
    %305 = tpu.matmul %181, %304, %cst_141 {dimension_numbers = #tpu.dot_dimension_numbers<[1], [0], [0], [1], [0, 0, 1, 1], [], []>} : vector<8x32xf32>, vector<32x8xf32>, vector<8x8xf32> -> vector<8x8xf32>
    %306 = vector.extract_strided_slice %299 {offsets = [32, 0], sizes = [1, 8], strides = [1, 1]} : vector<33x8xf32> to vector<1x8xf32>
    %307 = vector.broadcast %306 : vector<1x8xf32> to vector<8x8xf32>
    %308 = arith.addf %305, %307 : vector<8x8xf32>
    %309 = vector.extract_strided_slice %301 {offsets = [0, 0], sizes = [32, 8], strides = [1, 1]} : vector<33x8xf32> to vector<32x8xf32>
    %cst_142 = arith.constant dense<0.000000e+00> : vector<8x8xf32>
    %310 = tpu.matmul %181, %309, %cst_142 {dimension_numbers = #tpu.dot_dimension_numbers<[1], [0], [0], [1], [0, 0, 1, 1], [], []>} : vector<8x32xf32>, vector<32x8xf32>, vector<8x8xf32> -> vector<8x8xf32>
    %311 = vector.extract_strided_slice %301 {offsets = [32, 0], sizes = [1, 8], strides = [1, 1]} : vector<33x8xf32> to vector<1x8xf32>
    %312 = vector.broadcast %311 : vector<1x8xf32> to vector<8x8xf32>
    %313 = arith.addf %310, %312 : vector<8x8xf32>
    %314 = vector.extract_strided_slice %303 {offsets = [0, 0], sizes = [32, 8], strides = [1, 1]} : vector<33x8xf32> to vector<32x8xf32>
    %cst_143 = arith.constant dense<0.000000e+00> : vector<8x8xf32>
    %315 = tpu.matmul %181, %314, %cst_143 {dimension_numbers = #tpu.dot_dimension_numbers<[1], [0], [0], [1], [0, 0, 1, 1], [], []>} : vector<8x32xf32>, vector<32x8xf32>, vector<8x8xf32> -> vector<8x8xf32>
    %316 = vector.extract_strided_slice %303 {offsets = [32, 0], sizes = [1, 8], strides = [1, 1]} : vector<33x8xf32> to vector<1x8xf32>
    %317 = vector.broadcast %316 : vector<1x8xf32> to vector<8x8xf32>
    %318 = arith.addf %315, %317 : vector<8x8xf32>
    %cst_144 = arith.constant dense<0.000000e+00> : vector<8x8xf32>
    %319 = tpu.matmul %308, %313, %cst_144 {dimension_numbers = #tpu.dot_dimension_numbers<[1], [1], [0], [0], [0, 0, 1, 0], [], []>} : vector<8x8xf32>, vector<8x8xf32>, vector<8x8xf32> -> vector<8x8xf32>
    %320 = vector.broadcast %182 : vector<1x8xf32> to vector<8x8xf32>
    %321 = arith.addf %319, %320 : vector<8x8xf32>
    %cst_145 = arith.constant dense<0xFF800000> : vector<8xf32>
    %322 = vector.multi_reduction <maximumf>, %321, %cst_145 [1] : vector<8x8xf32> to vector<8xf32>
    %323 = vector.shape_cast %322 : vector<8xf32> to vector<8x1xf32>
    %324 = vector.broadcast %323 : vector<8x1xf32> to vector<8x8xf32>
    %325 = arith.subf %321, %324 : vector<8x8xf32>
    %326 = math.exp %325 : vector<8x8xf32>
    %cst_146 = arith.constant dense<0.000000e+00> : vector<8xf32>
    %327 = vector.multi_reduction <add>, %326, %cst_146 [1] : vector<8x8xf32> to vector<8xf32>
    %328 = vector.shape_cast %327 : vector<8xf32> to vector<8x1xf32>
    %329 = tpu.reciprocal %328 {approx = true} : vector<8x1xf32> -> vector<8x1xf32>
    %330 = vector.broadcast %329 : vector<8x1xf32> to vector<8x8xf32>
    %331 = arith.mulf %326, %330 : vector<8x8xf32>
    %cst_147 = arith.constant dense<0.000000e+00> : vector<8x8xf32>
    %332 = tpu.matmul %331, %318, %cst_147 {dimension_numbers = #tpu.dot_dimension_numbers<[1], [0], [0], [1], [0, 0, 1, 1], [], []>} : vector<8x8xf32>, vector<8x8xf32>, vector<8x8xf32> -> vector<8x8xf32>
    %c24_148 = arith.constant 24 : index
    %c0_149 = arith.constant 0 : index
    %333 = vector.load %arg4[%c24_148, %c0_149] : memref<206x32xf32, #tpu.memory_space<vmem>>, vector<8x32xf32>
    %cst_150 = arith.constant dense<0.000000e+00> : vector<8x32xf32>
    %334 = tpu.matmul %332, %333, %cst_150 {dimension_numbers = #tpu.dot_dimension_numbers<[1], [0], [0], [1], [0, 0, 1, 1], [], []>} : vector<8x8xf32>, vector<8x32xf32>, vector<8x32xf32> -> vector<8x32xf32>
    %335 = arith.addf %297, %334 : vector<8x32xf32>
    %c8_151 = arith.constant 8 : index
    %c0_152 = arith.constant 0 : index
    %336 = vector.load %arg9[%c8_151, %c0_152] : memref<16x32xf32, #tpu.memory_space<vmem>>, vector<8x32xf32>
    tpu.vector_store %arg9[%c8_151, %c0_152], %335 {strides = array<i32>} : memref<16x32xf32, #tpu.memory_space<vmem>>, vector<8x32xf32>,
    %c0_153 = arith.constant 0 : index
    %c0_154 = arith.constant 0 : index
    %337 = vector.load %arg9[%c0_153, %c0_154] : memref<16x32xf32, #tpu.memory_space<vmem>>, vector<16x32xf32>
    %338 = arith.addf %337, %23 : vector<16x32xf32>
    %c195 = arith.constant 195 : index
    %c0_155 = arith.constant 0 : index
    %339 = vector.load %arg4[%c195, %c0_155] : memref<206x32xf32, #tpu.memory_space<vmem>>, vector<1x32xf32>
    %c196 = arith.constant 196 : index
    %c0_156 = arith.constant 0 : index
    %340 = vector.load %arg4[%c196, %c0_156] : memref<206x32xf32, #tpu.memory_space<vmem>>, vector<1x32xf32>
    %cst_157 = arith.constant dense<0.000000e+00> : vector<16xf32>
    %341 = vector.multi_reduction <add>, %338, %cst_157 [1] : vector<16x32xf32> to vector<16xf32>
    %342 = vector.shape_cast %341 : vector<16xf32> to vector<16x1xf32>
    %cst_158 = arith.constant 3.200000e+01 : f32
    %343 = vector.broadcast %cst_158 : f32 to vector<16x1xf32>
    %344 = arith.divf %342, %343 : vector<16x1xf32>
    %345 = vector.broadcast %344 : vector<16x1xf32> to vector<16x32xf32>
    %346 = arith.subf %338, %345 : vector<16x32xf32>
    %347 = arith.mulf %346, %346 : vector<16x32xf32>
    %cst_159 = arith.constant dense<0.000000e+00> : vector<16xf32>
    %348 = vector.multi_reduction <add>, %347, %cst_159 [1] : vector<16x32xf32> to vector<16xf32>
    %349 = vector.shape_cast %348 : vector<16xf32> to vector<16x1xf32>
    %cst_160 = arith.constant 3.200000e+01 : f32
    %350 = vector.broadcast %cst_160 : f32 to vector<16x1xf32>
    %351 = arith.divf %349, %350 : vector<16x1xf32>
    %cst_161 = arith.constant 9.99999996E-13 : f32
    %352 = vector.broadcast %cst_161 : f32 to vector<16x1xf32>
    %353 = arith.addf %351, %352 : vector<16x1xf32>
    %354 = math.rsqrt %353 : vector<16x1xf32>
    %355 = vector.broadcast %354 : vector<16x1xf32> to vector<16x32xf32>
    %356 = arith.mulf %346, %355 : vector<16x32xf32>
    %357 = vector.broadcast %339 : vector<1x32xf32> to vector<16x32xf32>
    %358 = arith.mulf %356, %357 : vector<16x32xf32>
    %359 = vector.broadcast %340 : vector<1x32xf32> to vector<16x32xf32>
    %360 = arith.addf %358, %359 : vector<16x32xf32>
    %c0_162 = arith.constant 0 : index
    %c0_163 = arith.constant 0 : index
    %361 = vector.load %arg5[%c0_162, %c0_163] : memref<66x64xf32, #tpu.memory_space<vmem>>, vector<32x64xf32>
    %c64 = arith.constant 64 : index
    %c0_164 = arith.constant 0 : index
    %362 = vector.load %arg5[%c64, %c0_164] : memref<66x64xf32, #tpu.memory_space<vmem>>, vector<1x64xf32>
    %cst_165 = arith.constant dense<0.000000e+00> : vector<16x64xf32>
    %363 = tpu.matmul %360, %361, %cst_165 {dimension_numbers = #tpu.dot_dimension_numbers<[1], [0], [0], [1], [0, 0, 1, 1], [], []>} : vector<16x32xf32>, vector<32x64xf32>, vector<16x64xf32> -> vector<16x64xf32>
    %364 = vector.broadcast %362 : vector<1x64xf32> to vector<16x64xf32>
    %365 = arith.addf %363, %364 : vector<16x64xf32>
    %cst_166 = arith.constant 5.000000e-01 : f32
    %366 = vector.broadcast %cst_166 : f32 to vector<16x64xf32>
    %367 = arith.mulf %366, %365 : vector<16x64xf32>
    %cst_167 = arith.constant 4.471500e-02 : f32
    %368 = vector.broadcast %cst_167 : f32 to vector<16x64xf32>
    %369 = arith.mulf %368, %365 : vector<16x64xf32>
    %370 = arith.mulf %369, %365 : vector<16x64xf32>
    %371 = arith.mulf %370, %365 : vector<16x64xf32>
    %372 = arith.addf %365, %371 : vector<16x64xf32>
    %cst_168 = arith.constant 0.797884583 : f32
    %373 = vector.broadcast %cst_168 : f32 to vector<16x64xf32>
    %374 = arith.mulf %373, %372 : vector<16x64xf32>
    %375 = math.tanh %374 : vector<16x64xf32>
    %cst_169 = arith.constant 1.000000e+00 : f32
    %376 = vector.broadcast %cst_169 : f32 to vector<16x64xf32>
    %377 = arith.addf %376, %375 : vector<16x64xf32>
    %378 = arith.mulf %367, %377 : vector<16x64xf32>
    %c32 = arith.constant 32 : index
    %c0_170 = arith.constant 0 : index
    %379 = vector.load %arg4[%c32, %c0_170] : memref<206x32xf32, #tpu.memory_space<vmem>>, vector<64x32xf32>
    %cst_171 = arith.constant dense<0.000000e+00> : vector<16x32xf32>
    %380 = tpu.matmul %378, %379, %cst_171 {dimension_numbers = #tpu.dot_dimension_numbers<[1], [0], [0], [1], [0, 0, 1, 1], [], []>} : vector<16x64xf32>, vector<64x32xf32>, vector<16x32xf32> -> vector<16x32xf32>
    %c197 = arith.constant 197 : index
    %c0_172 = arith.constant 0 : index
    %381 = vector.load %arg4[%c197, %c0_172] : memref<206x32xf32, #tpu.memory_space<vmem>>, vector<1x32xf32>
    %382 = vector.broadcast %381 : vector<1x32xf32> to vector<16x32xf32>
    %383 = arith.addf %380, %382 : vector<16x32xf32>
    %384 = arith.addf %383, %360 : vector<16x32xf32>
    %c198 = arith.constant 198 : index
    %c0_173 = arith.constant 0 : index
    %385 = vector.load %arg4[%c198, %c0_173] : memref<206x32xf32, #tpu.memory_space<vmem>>, vector<1x32xf32>
    %c199 = arith.constant 199 : index
    %c0_174 = arith.constant 0 : index
    %386 = vector.load %arg4[%c199, %c0_174] : memref<206x32xf32, #tpu.memory_space<vmem>>, vector<1x32xf32>
    %cst_175 = arith.constant dense<0.000000e+00> : vector<16xf32>
    %387 = vector.multi_reduction <add>, %384, %cst_175 [1] : vector<16x32xf32> to vector<16xf32>
    %388 = vector.shape_cast %387 : vector<16xf32> to vector<16x1xf32>
    %cst_176 = arith.constant 3.200000e+01 : f32
    %389 = vector.broadcast %cst_176 : f32 to vector<16x1xf32>
    %390 = arith.divf %388, %389 : vector<16x1xf32>
    %391 = vector.broadcast %390 : vector<16x1xf32> to vector<16x32xf32>
    %392 = arith.subf %384, %391 : vector<16x32xf32>
    %393 = arith.mulf %392, %392 : vector<16x32xf32>
    %cst_177 = arith.constant dense<0.000000e+00> : vector<16xf32>
    %394 = vector.multi_reduction <add>, %393, %cst_177 [1] : vector<16x32xf32> to vector<16xf32>
    %395 = vector.shape_cast %394 : vector<16xf32> to vector<16x1xf32>
    %cst_178 = arith.constant 3.200000e+01 : f32
    %396 = vector.broadcast %cst_178 : f32 to vector<16x1xf32>
    %397 = arith.divf %395, %396 : vector<16x1xf32>
    %cst_179 = arith.constant 9.99999996E-13 : f32
    %398 = vector.broadcast %cst_179 : f32 to vector<16x1xf32>
    %399 = arith.addf %397, %398 : vector<16x1xf32>
    %400 = math.rsqrt %399 : vector<16x1xf32>
    %401 = vector.broadcast %400 : vector<16x1xf32> to vector<16x32xf32>
    %402 = arith.mulf %392, %401 : vector<16x32xf32>
    %403 = vector.broadcast %385 : vector<1x32xf32> to vector<16x32xf32>
    %404 = arith.mulf %402, %403 : vector<16x32xf32>
    %405 = vector.broadcast %386 : vector<1x32xf32> to vector<16x32xf32>
    %406 = arith.addf %404, %405 : vector<16x32xf32>
    %c200 = arith.constant 200 : index
    %c0_180 = arith.constant 0 : index
    %407 = vector.load %arg4[%c200, %c0_180] : memref<206x32xf32, #tpu.memory_space<vmem>>, vector<1x32xf32>
    %408 = vector.extract_strided_slice %406 {offsets = [0, 0], sizes = [8, 32], strides = [1, 1]} : vector<16x32xf32> to vector<8x32xf32>
    %409 = vector.extract_strided_slice %0 {offsets = [0, 0], sizes = [1, 8], strides = [1, 1]} : vector<2x8xf32> to vector<1x8xf32>
    %c12 = arith.constant 12 : index
    %c0_181 = arith.constant 0 : index
    %c0_182 = arith.constant 0 : index
    %410 = vector.load %arg3[%c12, %c0_181, %c0_182] : memref<24x33x8xf32, #tpu.memory_space<vmem>>, vector<1x33x8xf32>
    %411 = vector.shape_cast %410 : vector<1x33x8xf32> to vector<33x8xf32>
    %c16_183 = arith.constant 16 : index
    %c0_184 = arith.constant 0 : index
    %c0_185 = arith.constant 0 : index
    %412 = vector.load %arg3[%c16_183, %c0_184, %c0_185] : memref<24x33x8xf32, #tpu.memory_space<vmem>>, vector<1x33x8xf32>
    %413 = vector.shape_cast %412 : vector<1x33x8xf32> to vector<33x8xf32>
    %c20 = arith.constant 20 : index
    %c0_186 = arith.constant 0 : index
    %c0_187 = arith.constant 0 : index
    %414 = vector.load %arg3[%c20, %c0_186, %c0_187] : memref<24x33x8xf32, #tpu.memory_space<vmem>>, vector<1x33x8xf32>
    %415 = vector.shape_cast %414 : vector<1x33x8xf32> to vector<33x8xf32>
    %416 = vector.extract_strided_slice %411 {offsets = [0, 0], sizes = [32, 8], strides = [1, 1]} : vector<33x8xf32> to vector<32x8xf32>
    %cst_188 = arith.constant dense<0.000000e+00> : vector<8x8xf32>
    %417 = tpu.matmul %408, %416, %cst_188 {dimension_numbers = #tpu.dot_dimension_numbers<[1], [0], [0], [1], [0, 0, 1, 1], [], []>} : vector<8x32xf32>, vector<32x8xf32>, vector<8x8xf32> -> vector<8x8xf32>
    %418 = vector.extract_strided_slice %411 {offsets = [32, 0], sizes = [1, 8], strides = [1, 1]} : vector<33x8xf32> to vector<1x8xf32>
    %419 = vector.broadcast %418 : vector<1x8xf32> to vector<8x8xf32>
    %420 = arith.addf %417, %419 : vector<8x8xf32>
    %421 = vector.extract_strided_slice %413 {offsets = [0, 0], sizes = [32, 8], strides = [1, 1]} : vector<33x8xf32> to vector<32x8xf32>
    %cst_189 = arith.constant dense<0.000000e+00> : vector<8x8xf32>
    %422 = tpu.matmul %408, %421, %cst_189 {dimension_numbers = #tpu.dot_dimension_numbers<[1], [0], [0], [1], [0, 0, 1, 1], [], []>} : vector<8x32xf32>, vector<32x8xf32>, vector<8x8xf32> -> vector<8x8xf32>
    %423 = vector.extract_strided_slice %413 {offsets = [32, 0], sizes = [1, 8], strides = [1, 1]} : vector<33x8xf32> to vector<1x8xf32>
    %424 = vector.broadcast %423 : vector<1x8xf32> to vector<8x8xf32>
    %425 = arith.addf %422, %424 : vector<8x8xf32>
    %426 = vector.extract_strided_slice %415 {offsets = [0, 0], sizes = [32, 8], strides = [1, 1]} : vector<33x8xf32> to vector<32x8xf32>
    %cst_190 = arith.constant dense<0.000000e+00> : vector<8x8xf32>
    %427 = tpu.matmul %408, %426, %cst_190 {dimension_numbers = #tpu.dot_dimension_numbers<[1], [0], [0], [1], [0, 0, 1, 1], [], []>} : vector<8x32xf32>, vector<32x8xf32>, vector<8x8xf32> -> vector<8x8xf32>
    %428 = vector.extract_strided_slice %415 {offsets = [32, 0], sizes = [1, 8], strides = [1, 1]} : vector<33x8xf32> to vector<1x8xf32>
    %429 = vector.broadcast %428 : vector<1x8xf32> to vector<8x8xf32>
    %430 = arith.addf %427, %429 : vector<8x8xf32>
    %cst_191 = arith.constant dense<0.000000e+00> : vector<8x8xf32>
    %431 = tpu.matmul %420, %425, %cst_191 {dimension_numbers = #tpu.dot_dimension_numbers<[1], [1], [0], [0], [0, 0, 1, 0], [], []>} : vector<8x8xf32>, vector<8x8xf32>, vector<8x8xf32> -> vector<8x8xf32>
    %432 = vector.broadcast %409 : vector<1x8xf32> to vector<8x8xf32>
    %433 = arith.addf %431, %432 : vector<8x8xf32>
    %cst_192 = arith.constant dense<0xFF800000> : vector<8xf32>
    %434 = vector.multi_reduction <maximumf>, %433, %cst_192 [1] : vector<8x8xf32> to vector<8xf32>
    %435 = vector.shape_cast %434 : vector<8xf32> to vector<8x1xf32>
    %436 = vector.broadcast %435 : vector<8x1xf32> to vector<8x8xf32>
    %437 = arith.subf %433, %436 : vector<8x8xf32>
    %438 = math.exp %437 : vector<8x8xf32>
    %cst_193 = arith.constant dense<0.000000e+00> : vector<8xf32>
    %439 = vector.multi_reduction <add>, %438, %cst_193 [1] : vector<8x8xf32> to vector<8xf32>
    %440 = vector.shape_cast %439 : vector<8xf32> to vector<8x1xf32>
    %441 = tpu.reciprocal %440 {approx = true} : vector<8x1xf32> -> vector<8x1xf32>
    %442 = vector.broadcast %441 : vector<8x1xf32> to vector<8x8xf32>
    %443 = arith.mulf %438, %442 : vector<8x8xf32>
    %cst_194 = arith.constant dense<0.000000e+00> : vector<8x8xf32>
    %444 = tpu.matmul %443, %430, %cst_194 {dimension_numbers = #tpu.dot_dimension_numbers<[1], [0], [0], [1], [0, 0, 1, 1], [], []>} : vector<8x8xf32>, vector<8x8xf32>, vector<8x8xf32> -> vector<8x8xf32>
    %c96 = arith.constant 96 : index
    %c0_195 = arith.constant 0 : index
    %445 = vector.load %arg4[%c96, %c0_195] : memref<206x32xf32, #tpu.memory_space<vmem>>, vector<8x32xf32>
    %cst_196 = arith.constant dense<0.000000e+00> : vector<8x32xf32>
    %446 = tpu.matmul %444, %445, %cst_196 {dimension_numbers = #tpu.dot_dimension_numbers<[1], [0], [0], [1], [0, 0, 1, 1], [], []>} : vector<8x8xf32>, vector<8x32xf32>, vector<8x32xf32> -> vector<8x32xf32>
    %447 = vector.broadcast %407 : vector<1x32xf32> to vector<8x32xf32>
    %448 = arith.addf %447, %446 : vector<8x32xf32>
    %c13 = arith.constant 13 : index
    %c0_197 = arith.constant 0 : index
    %c0_198 = arith.constant 0 : index
    %449 = vector.load %arg3[%c13, %c0_197, %c0_198] : memref<24x33x8xf32, #tpu.memory_space<vmem>>, vector<1x33x8xf32>
    %450 = vector.shape_cast %449 : vector<1x33x8xf32> to vector<33x8xf32>
    %c17 = arith.constant 17 : index
    %c0_199 = arith.constant 0 : index
    %c0_200 = arith.constant 0 : index
    %451 = vector.load %arg3[%c17, %c0_199, %c0_200] : memref<24x33x8xf32, #tpu.memory_space<vmem>>, vector<1x33x8xf32>
    %452 = vector.shape_cast %451 : vector<1x33x8xf32> to vector<33x8xf32>
    %c21 = arith.constant 21 : index
    %c0_201 = arith.constant 0 : index
    %c0_202 = arith.constant 0 : index
    %453 = vector.load %arg3[%c21, %c0_201, %c0_202] : memref<24x33x8xf32, #tpu.memory_space<vmem>>, vector<1x33x8xf32>
    %454 = vector.shape_cast %453 : vector<1x33x8xf32> to vector<33x8xf32>
    %455 = vector.extract_strided_slice %450 {offsets = [0, 0], sizes = [32, 8], strides = [1, 1]} : vector<33x8xf32> to vector<32x8xf32>
    %cst_203 = arith.constant dense<0.000000e+00> : vector<8x8xf32>
    %456 = tpu.matmul %408, %455, %cst_203 {dimension_numbers = #tpu.dot_dimension_numbers<[1], [0], [0], [1], [0, 0, 1, 1], [], []>} : vector<8x32xf32>, vector<32x8xf32>, vector<8x8xf32> -> vector<8x8xf32>
    %457 = vector.extract_strided_slice %450 {offsets = [32, 0], sizes = [1, 8], strides = [1, 1]} : vector<33x8xf32> to vector<1x8xf32>
    %458 = vector.broadcast %457 : vector<1x8xf32> to vector<8x8xf32>
    %459 = arith.addf %456, %458 : vector<8x8xf32>
    %460 = vector.extract_strided_slice %452 {offsets = [0, 0], sizes = [32, 8], strides = [1, 1]} : vector<33x8xf32> to vector<32x8xf32>
    %cst_204 = arith.constant dense<0.000000e+00> : vector<8x8xf32>
    %461 = tpu.matmul %408, %460, %cst_204 {dimension_numbers = #tpu.dot_dimension_numbers<[1], [0], [0], [1], [0, 0, 1, 1], [], []>} : vector<8x32xf32>, vector<32x8xf32>, vector<8x8xf32> -> vector<8x8xf32>
    %462 = vector.extract_strided_slice %452 {offsets = [32, 0], sizes = [1, 8], strides = [1, 1]} : vector<33x8xf32> to vector<1x8xf32>
    %463 = vector.broadcast %462 : vector<1x8xf32> to vector<8x8xf32>
    %464 = arith.addf %461, %463 : vector<8x8xf32>
    %465 = vector.extract_strided_slice %454 {offsets = [0, 0], sizes = [32, 8], strides = [1, 1]} : vector<33x8xf32> to vector<32x8xf32>
    %cst_205 = arith.constant dense<0.000000e+00> : vector<8x8xf32>
    %466 = tpu.matmul %408, %465, %cst_205 {dimension_numbers = #tpu.dot_dimension_numbers<[1], [0], [0], [1], [0, 0, 1, 1], [], []>} : vector<8x32xf32>, vector<32x8xf32>, vector<8x8xf32> -> vector<8x8xf32>
    %467 = vector.extract_strided_slice %454 {offsets = [32, 0], sizes = [1, 8], strides = [1, 1]} : vector<33x8xf32> to vector<1x8xf32>
    %468 = vector.broadcast %467 : vector<1x8xf32> to vector<8x8xf32>
    %469 = arith.addf %466, %468 : vector<8x8xf32>
    %cst_206 = arith.constant dense<0.000000e+00> : vector<8x8xf32>
    %470 = tpu.matmul %459, %464, %cst_206 {dimension_numbers = #tpu.dot_dimension_numbers<[1], [1], [0], [0], [0, 0, 1, 0], [], []>} : vector<8x8xf32>, vector<8x8xf32>, vector<8x8xf32> -> vector<8x8xf32>
    %471 = vector.broadcast %409 : vector<1x8xf32> to vector<8x8xf32>
    %472 = arith.addf %470, %471 : vector<8x8xf32>
    %cst_207 = arith.constant dense<0xFF800000> : vector<8xf32>
    %473 = vector.multi_reduction <maximumf>, %472, %cst_207 [1] : vector<8x8xf32> to vector<8xf32>
    %474 = vector.shape_cast %473 : vector<8xf32> to vector<8x1xf32>
    %475 = vector.broadcast %474 : vector<8x1xf32> to vector<8x8xf32>
    %476 = arith.subf %472, %475 : vector<8x8xf32>
    %477 = math.exp %476 : vector<8x8xf32>
    %cst_208 = arith.constant dense<0.000000e+00> : vector<8xf32>
    %478 = vector.multi_reduction <add>, %477, %cst_208 [1] : vector<8x8xf32> to vector<8xf32>
    %479 = vector.shape_cast %478 : vector<8xf32> to vector<8x1xf32>
    %480 = tpu.reciprocal %479 {approx = true} : vector<8x1xf32> -> vector<8x1xf32>
    %481 = vector.broadcast %480 : vector<8x1xf32> to vector<8x8xf32>
    %482 = arith.mulf %477, %481 : vector<8x8xf32>
    %cst_209 = arith.constant dense<0.000000e+00> : vector<8x8xf32>
    %483 = tpu.matmul %482, %469, %cst_209 {dimension_numbers = #tpu.dot_dimension_numbers<[1], [0], [0], [1], [0, 0, 1, 1], [], []>} : vector<8x8xf32>, vector<8x8xf32>, vector<8x8xf32> -> vector<8x8xf32>
    %c104 = arith.constant 104 : index
    %c0_210 = arith.constant 0 : index
    %484 = vector.load %arg4[%c104, %c0_210] : memref<206x32xf32, #tpu.memory_space<vmem>>, vector<8x32xf32>
    %cst_211 = arith.constant dense<0.000000e+00> : vector<8x32xf32>
    %485 = tpu.matmul %483, %484, %cst_211 {dimension_numbers = #tpu.dot_dimension_numbers<[1], [0], [0], [1], [0, 0, 1, 1], [], []>} : vector<8x8xf32>, vector<8x32xf32>, vector<8x32xf32> -> vector<8x32xf32>
    %486 = arith.addf %448, %485 : vector<8x32xf32>
    %c14 = arith.constant 14 : index
    %c0_212 = arith.constant 0 : index
    %c0_213 = arith.constant 0 : index
    %487 = vector.load %arg3[%c14, %c0_212, %c0_213] : memref<24x33x8xf32, #tpu.memory_space<vmem>>, vector<1x33x8xf32>
    %488 = vector.shape_cast %487 : vector<1x33x8xf32> to vector<33x8xf32>
    %c18 = arith.constant 18 : index
    %c0_214 = arith.constant 0 : index
    %c0_215 = arith.constant 0 : index
    %489 = vector.load %arg3[%c18, %c0_214, %c0_215] : memref<24x33x8xf32, #tpu.memory_space<vmem>>, vector<1x33x8xf32>
    %490 = vector.shape_cast %489 : vector<1x33x8xf32> to vector<33x8xf32>
    %c22 = arith.constant 22 : index
    %c0_216 = arith.constant 0 : index
    %c0_217 = arith.constant 0 : index
    %491 = vector.load %arg3[%c22, %c0_216, %c0_217] : memref<24x33x8xf32, #tpu.memory_space<vmem>>, vector<1x33x8xf32>
    %492 = vector.shape_cast %491 : vector<1x33x8xf32> to vector<33x8xf32>
    %493 = vector.extract_strided_slice %488 {offsets = [0, 0], sizes = [32, 8], strides = [1, 1]} : vector<33x8xf32> to vector<32x8xf32>
    %cst_218 = arith.constant dense<0.000000e+00> : vector<8x8xf32>
    %494 = tpu.matmul %408, %493, %cst_218 {dimension_numbers = #tpu.dot_dimension_numbers<[1], [0], [0], [1], [0, 0, 1, 1], [], []>} : vector<8x32xf32>, vector<32x8xf32>, vector<8x8xf32> -> vector<8x8xf32>
    %495 = vector.extract_strided_slice %488 {offsets = [32, 0], sizes = [1, 8], strides = [1, 1]} : vector<33x8xf32> to vector<1x8xf32>
    %496 = vector.broadcast %495 : vector<1x8xf32> to vector<8x8xf32>
    %497 = arith.addf %494, %496 : vector<8x8xf32>
    %498 = vector.extract_strided_slice %490 {offsets = [0, 0], sizes = [32, 8], strides = [1, 1]} : vector<33x8xf32> to vector<32x8xf32>
    %cst_219 = arith.constant dense<0.000000e+00> : vector<8x8xf32>
    %499 = tpu.matmul %408, %498, %cst_219 {dimension_numbers = #tpu.dot_dimension_numbers<[1], [0], [0], [1], [0, 0, 1, 1], [], []>} : vector<8x32xf32>, vector<32x8xf32>, vector<8x8xf32> -> vector<8x8xf32>
    %500 = vector.extract_strided_slice %490 {offsets = [32, 0], sizes = [1, 8], strides = [1, 1]} : vector<33x8xf32> to vector<1x8xf32>
    %501 = vector.broadcast %500 : vector<1x8xf32> to vector<8x8xf32>
    %502 = arith.addf %499, %501 : vector<8x8xf32>
    %503 = vector.extract_strided_slice %492 {offsets = [0, 0], sizes = [32, 8], strides = [1, 1]} : vector<33x8xf32> to vector<32x8xf32>
    %cst_220 = arith.constant dense<0.000000e+00> : vector<8x8xf32>
    %504 = tpu.matmul %408, %503, %cst_220 {dimension_numbers = #tpu.dot_dimension_numbers<[1], [0], [0], [1], [0, 0, 1, 1], [], []>} : vector<8x32xf32>, vector<32x8xf32>, vector<8x8xf32> -> vector<8x8xf32>
    %505 = vector.extract_strided_slice %492 {offsets = [32, 0], sizes = [1, 8], strides = [1, 1]} : vector<33x8xf32> to vector<1x8xf32>
    %506 = vector.broadcast %505 : vector<1x8xf32> to vector<8x8xf32>
    %507 = arith.addf %504, %506 : vector<8x8xf32>
    %cst_221 = arith.constant dense<0.000000e+00> : vector<8x8xf32>
    %508 = tpu.matmul %497, %502, %cst_221 {dimension_numbers = #tpu.dot_dimension_numbers<[1], [1], [0], [0], [0, 0, 1, 0], [], []>} : vector<8x8xf32>, vector<8x8xf32>, vector<8x8xf32> -> vector<8x8xf32>
    %509 = vector.broadcast %409 : vector<1x8xf32> to vector<8x8xf32>
    %510 = arith.addf %508, %509 : vector<8x8xf32>
    %cst_222 = arith.constant dense<0xFF800000> : vector<8xf32>
    %511 = vector.multi_reduction <maximumf>, %510, %cst_222 [1] : vector<8x8xf32> to vector<8xf32>
    %512 = vector.shape_cast %511 : vector<8xf32> to vector<8x1xf32>
    %513 = vector.broadcast %512 : vector<8x1xf32> to vector<8x8xf32>
    %514 = arith.subf %510, %513 : vector<8x8xf32>
    %515 = math.exp %514 : vector<8x8xf32>
    %cst_223 = arith.constant dense<0.000000e+00> : vector<8xf32>
    %516 = vector.multi_reduction <add>, %515, %cst_223 [1] : vector<8x8xf32> to vector<8xf32>
    %517 = vector.shape_cast %516 : vector<8xf32> to vector<8x1xf32>
    %518 = tpu.reciprocal %517 {approx = true} : vector<8x1xf32> -> vector<8x1xf32>
    %519 = vector.broadcast %518 : vector<8x1xf32> to vector<8x8xf32>
    %520 = arith.mulf %515, %519 : vector<8x8xf32>
    %cst_224 = arith.constant dense<0.000000e+00> : vector<8x8xf32>
    %521 = tpu.matmul %520, %507, %cst_224 {dimension_numbers = #tpu.dot_dimension_numbers<[1], [0], [0], [1], [0, 0, 1, 1], [], []>} : vector<8x8xf32>, vector<8x8xf32>, vector<8x8xf32> -> vector<8x8xf32>
    %c112 = arith.constant 112 : index
    %c0_225 = arith.constant 0 : index
    %522 = vector.load %arg4[%c112, %c0_225] : memref<206x32xf32, #tpu.memory_space<vmem>>, vector<8x32xf32>
    %cst_226 = arith.constant dense<0.000000e+00> : vector<8x32xf32>
    %523 = tpu.matmul %521, %522, %cst_226 {dimension_numbers = #tpu.dot_dimension_numbers<[1], [0], [0], [1], [0, 0, 1, 1], [], []>} : vector<8x8xf32>, vector<8x32xf32>, vector<8x32xf32> -> vector<8x32xf32>
    %524 = arith.addf %486, %523 : vector<8x32xf32>
    %c15 = arith.constant 15 : index
    %c0_227 = arith.constant 0 : index
    %c0_228 = arith.constant 0 : index
    %525 = vector.load %arg3[%c15, %c0_227, %c0_228] : memref<24x33x8xf32, #tpu.memory_space<vmem>>, vector<1x33x8xf32>
    %526 = vector.shape_cast %525 : vector<1x33x8xf32> to vector<33x8xf32>
    %c19 = arith.constant 19 : index
    %c0_229 = arith.constant 0 : index
    %c0_230 = arith.constant 0 : index
    %527 = vector.load %arg3[%c19, %c0_229, %c0_230] : memref<24x33x8xf32, #tpu.memory_space<vmem>>, vector<1x33x8xf32>
    %528 = vector.shape_cast %527 : vector<1x33x8xf32> to vector<33x8xf32>
    %c23 = arith.constant 23 : index
    %c0_231 = arith.constant 0 : index
    %c0_232 = arith.constant 0 : index
    %529 = vector.load %arg3[%c23, %c0_231, %c0_232] : memref<24x33x8xf32, #tpu.memory_space<vmem>>, vector<1x33x8xf32>
    %530 = vector.shape_cast %529 : vector<1x33x8xf32> to vector<33x8xf32>
    %531 = vector.extract_strided_slice %526 {offsets = [0, 0], sizes = [32, 8], strides = [1, 1]} : vector<33x8xf32> to vector<32x8xf32>
    %cst_233 = arith.constant dense<0.000000e+00> : vector<8x8xf32>
    %532 = tpu.matmul %408, %531, %cst_233 {dimension_numbers = #tpu.dot_dimension_numbers<[1], [0], [0], [1], [0, 0, 1, 1], [], []>} : vector<8x32xf32>, vector<32x8xf32>, vector<8x8xf32> -> vector<8x8xf32>
    %533 = vector.extract_strided_slice %526 {offsets = [32, 0], sizes = [1, 8], strides = [1, 1]} : vector<33x8xf32> to vector<1x8xf32>
    %534 = vector.broadcast %533 : vector<1x8xf32> to vector<8x8xf32>
    %535 = arith.addf %532, %534 : vector<8x8xf32>
    %536 = vector.extract_strided_slice %528 {offsets = [0, 0], sizes = [32, 8], strides = [1, 1]} : vector<33x8xf32> to vector<32x8xf32>
    %cst_234 = arith.constant dense<0.000000e+00> : vector<8x8xf32>
    %537 = tpu.matmul %408, %536, %cst_234 {dimension_numbers = #tpu.dot_dimension_numbers<[1], [0], [0], [1], [0, 0, 1, 1], [], []>} : vector<8x32xf32>, vector<32x8xf32>, vector<8x8xf32> -> vector<8x8xf32>
    %538 = vector.extract_strided_slice %528 {offsets = [32, 0], sizes = [1, 8], strides = [1, 1]} : vector<33x8xf32> to vector<1x8xf32>
    %539 = vector.broadcast %538 : vector<1x8xf32> to vector<8x8xf32>
    %540 = arith.addf %537, %539 : vector<8x8xf32>
    %541 = vector.extract_strided_slice %530 {offsets = [0, 0], sizes = [32, 8], strides = [1, 1]} : vector<33x8xf32> to vector<32x8xf32>
    %cst_235 = arith.constant dense<0.000000e+00> : vector<8x8xf32>
    %542 = tpu.matmul %408, %541, %cst_235 {dimension_numbers = #tpu.dot_dimension_numbers<[1], [0], [0], [1], [0, 0, 1, 1], [], []>} : vector<8x32xf32>, vector<32x8xf32>, vector<8x8xf32> -> vector<8x8xf32>
    %543 = vector.extract_strided_slice %530 {offsets = [32, 0], sizes = [1, 8], strides = [1, 1]} : vector<33x8xf32> to vector<1x8xf32>
    %544 = vector.broadcast %543 : vector<1x8xf32> to vector<8x8xf32>
    %545 = arith.addf %542, %544 : vector<8x8xf32>
    %cst_236 = arith.constant dense<0.000000e+00> : vector<8x8xf32>
    %546 = tpu.matmul %535, %540, %cst_236 {dimension_numbers = #tpu.dot_dimension_numbers<[1], [1], [0], [0], [0, 0, 1, 0], [], []>} : vector<8x8xf32>, vector<8x8xf32>, vector<8x8xf32> -> vector<8x8xf32>
    %547 = vector.broadcast %409 : vector<1x8xf32> to vector<8x8xf32>
    %548 = arith.addf %546, %547 : vector<8x8xf32>
    %cst_237 = arith.constant dense<0xFF800000> : vector<8xf32>
    %549 = vector.multi_reduction <maximumf>, %548, %cst_237 [1] : vector<8x8xf32> to vector<8xf32>
    %550 = vector.shape_cast %549 : vector<8xf32> to vector<8x1xf32>
    %551 = vector.broadcast %550 : vector<8x1xf32> to vector<8x8xf32>
    %552 = arith.subf %548, %551 : vector<8x8xf32>
    %553 = math.exp %552 : vector<8x8xf32>
    %cst_238 = arith.constant dense<0.000000e+00> : vector<8xf32>
    %554 = vector.multi_reduction <add>, %553, %cst_238 [1] : vector<8x8xf32> to vector<8xf32>
    %555 = vector.shape_cast %554 : vector<8xf32> to vector<8x1xf32>
    %556 = tpu.reciprocal %555 {approx = true} : vector<8x1xf32> -> vector<8x1xf32>
    %557 = vector.broadcast %556 : vector<8x1xf32> to vector<8x8xf32>
    %558 = arith.mulf %553, %557 : vector<8x8xf32>
    %cst_239 = arith.constant dense<0.000000e+00> : vector<8x8xf32>
    %559 = tpu.matmul %558, %545, %cst_239 {dimension_numbers = #tpu.dot_dimension_numbers<[1], [0], [0], [1], [0, 0, 1, 1], [], []>} : vector<8x8xf32>, vector<8x8xf32>, vector<8x8xf32> -> vector<8x8xf32>
    %c120 = arith.constant 120 : index
    %c0_240 = arith.constant 0 : index
    %560 = vector.load %arg4[%c120, %c0_240] : memref<206x32xf32, #tpu.memory_space<vmem>>, vector<8x32xf32>
    %cst_241 = arith.constant dense<0.000000e+00> : vector<8x32xf32>
    %561 = tpu.matmul %559, %560, %cst_241 {dimension_numbers = #tpu.dot_dimension_numbers<[1], [0], [0], [1], [0, 0, 1, 1], [], []>} : vector<8x8xf32>, vector<8x32xf32>, vector<8x32xf32> -> vector<8x32xf32>
    %562 = arith.addf %524, %561 : vector<8x32xf32>
    %c0_242 = arith.constant 0 : index
    %c0_243 = arith.constant 0 : index
    %563 = vector.load %arg9[%c0_242, %c0_243] : memref<16x32xf32, #tpu.memory_space<vmem>>, vector<8x32xf32>
    tpu.vector_store %arg9[%c0_242, %c0_243], %562 {strides = array<i32>} : memref<16x32xf32, #tpu.memory_space<vmem>>, vector<8x32xf32>,
    %564 = vector.extract_strided_slice %406 {offsets = [8, 0], sizes = [8, 32], strides = [1, 1]} : vector<16x32xf32> to vector<8x32xf32>
    %565 = vector.extract_strided_slice %0 {offsets = [1, 0], sizes = [1, 8], strides = [1, 1]} : vector<2x8xf32> to vector<1x8xf32>
    %c12_244 = arith.constant 12 : index
    %c0_245 = arith.constant 0 : index
    %c0_246 = arith.constant 0 : index
    %566 = vector.load %arg3[%c12_244, %c0_245, %c0_246] : memref<24x33x8xf32, #tpu.memory_space<vmem>>, vector<1x33x8xf32>
    %567 = vector.shape_cast %566 : vector<1x33x8xf32> to vector<33x8xf32>
    %c16_247 = arith.constant 16 : index
    %c0_248 = arith.constant 0 : index
    %c0_249 = arith.constant 0 : index
    %568 = vector.load %arg3[%c16_247, %c0_248, %c0_249] : memref<24x33x8xf32, #tpu.memory_space<vmem>>, vector<1x33x8xf32>
    %569 = vector.shape_cast %568 : vector<1x33x8xf32> to vector<33x8xf32>
    %c20_250 = arith.constant 20 : index
    %c0_251 = arith.constant 0 : index
    %c0_252 = arith.constant 0 : index
    %570 = vector.load %arg3[%c20_250, %c0_251, %c0_252] : memref<24x33x8xf32, #tpu.memory_space<vmem>>, vector<1x33x8xf32>
    %571 = vector.shape_cast %570 : vector<1x33x8xf32> to vector<33x8xf32>
    %572 = vector.extract_strided_slice %567 {offsets = [0, 0], sizes = [32, 8], strides = [1, 1]} : vector<33x8xf32> to vector<32x8xf32>
    %cst_253 = arith.constant dense<0.000000e+00> : vector<8x8xf32>
    %573 = tpu.matmul %564, %572, %cst_253 {dimension_numbers = #tpu.dot_dimension_numbers<[1], [0], [0], [1], [0, 0, 1, 1], [], []>} : vector<8x32xf32>, vector<32x8xf32>, vector<8x8xf32> -> vector<8x8xf32>
    %574 = vector.extract_strided_slice %567 {offsets = [32, 0], sizes = [1, 8], strides = [1, 1]} : vector<33x8xf32> to vector<1x8xf32>
    %575 = vector.broadcast %574 : vector<1x8xf32> to vector<8x8xf32>
    %576 = arith.addf %573, %575 : vector<8x8xf32>
    %577 = vector.extract_strided_slice %569 {offsets = [0, 0], sizes = [32, 8], strides = [1, 1]} : vector<33x8xf32> to vector<32x8xf32>
    %cst_254 = arith.constant dense<0.000000e+00> : vector<8x8xf32>
    %578 = tpu.matmul %564, %577, %cst_254 {dimension_numbers = #tpu.dot_dimension_numbers<[1], [0], [0], [1], [0, 0, 1, 1], [], []>} : vector<8x32xf32>, vector<32x8xf32>, vector<8x8xf32> -> vector<8x8xf32>
    %579 = vector.extract_strided_slice %569 {offsets = [32, 0], sizes = [1, 8], strides = [1, 1]} : vector<33x8xf32> to vector<1x8xf32>
    %580 = vector.broadcast %579 : vector<1x8xf32> to vector<8x8xf32>
    %581 = arith.addf %578, %580 : vector<8x8xf32>
    %582 = vector.extract_strided_slice %571 {offsets = [0, 0], sizes = [32, 8], strides = [1, 1]} : vector<33x8xf32> to vector<32x8xf32>
    %cst_255 = arith.constant dense<0.000000e+00> : vector<8x8xf32>
    %583 = tpu.matmul %564, %582, %cst_255 {dimension_numbers = #tpu.dot_dimension_numbers<[1], [0], [0], [1], [0, 0, 1, 1], [], []>} : vector<8x32xf32>, vector<32x8xf32>, vector<8x8xf32> -> vector<8x8xf32>
    %584 = vector.extract_strided_slice %571 {offsets = [32, 0], sizes = [1, 8], strides = [1, 1]} : vector<33x8xf32> to vector<1x8xf32>
    %585 = vector.broadcast %584 : vector<1x8xf32> to vector<8x8xf32>
    %586 = arith.addf %583, %585 : vector<8x8xf32>
    %cst_256 = arith.constant dense<0.000000e+00> : vector<8x8xf32>
    %587 = tpu.matmul %576, %581, %cst_256 {dimension_numbers = #tpu.dot_dimension_numbers<[1], [1], [0], [0], [0, 0, 1, 0], [], []>} : vector<8x8xf32>, vector<8x8xf32>, vector<8x8xf32> -> vector<8x8xf32>
    %588 = vector.broadcast %565 : vector<1x8xf32> to vector<8x8xf32>
    %589 = arith.addf %587, %588 : vector<8x8xf32>
    %cst_257 = arith.constant dense<0xFF800000> : vector<8xf32>
    %590 = vector.multi_reduction <maximumf>, %589, %cst_257 [1] : vector<8x8xf32> to vector<8xf32>
    %591 = vector.shape_cast %590 : vector<8xf32> to vector<8x1xf32>
    %592 = vector.broadcast %591 : vector<8x1xf32> to vector<8x8xf32>
    %593 = arith.subf %589, %592 : vector<8x8xf32>
    %594 = math.exp %593 : vector<8x8xf32>
    %cst_258 = arith.constant dense<0.000000e+00> : vector<8xf32>
    %595 = vector.multi_reduction <add>, %594, %cst_258 [1] : vector<8x8xf32> to vector<8xf32>
    %596 = vector.shape_cast %595 : vector<8xf32> to vector<8x1xf32>
    %597 = tpu.reciprocal %596 {approx = true} : vector<8x1xf32> -> vector<8x1xf32>
    %598 = vector.broadcast %597 : vector<8x1xf32> to vector<8x8xf32>
    %599 = arith.mulf %594, %598 : vector<8x8xf32>
    %cst_259 = arith.constant dense<0.000000e+00> : vector<8x8xf32>
    %600 = tpu.matmul %599, %586, %cst_259 {dimension_numbers = #tpu.dot_dimension_numbers<[1], [0], [0], [1], [0, 0, 1, 1], [], []>} : vector<8x8xf32>, vector<8x8xf32>, vector<8x8xf32> -> vector<8x8xf32>
    %c96_260 = arith.constant 96 : index
    %c0_261 = arith.constant 0 : index
    %601 = vector.load %arg4[%c96_260, %c0_261] : memref<206x32xf32, #tpu.memory_space<vmem>>, vector<8x32xf32>
    %cst_262 = arith.constant dense<0.000000e+00> : vector<8x32xf32>
    %602 = tpu.matmul %600, %601, %cst_262 {dimension_numbers = #tpu.dot_dimension_numbers<[1], [0], [0], [1], [0, 0, 1, 1], [], []>} : vector<8x8xf32>, vector<8x32xf32>, vector<8x32xf32> -> vector<8x32xf32>
    %603 = vector.broadcast %407 : vector<1x32xf32> to vector<8x32xf32>
    %604 = arith.addf %603, %602 : vector<8x32xf32>
    %c13_263 = arith.constant 13 : index
    %c0_264 = arith.constant 0 : index
    %c0_265 = arith.constant 0 : index
    %605 = vector.load %arg3[%c13_263, %c0_264, %c0_265] : memref<24x33x8xf32, #tpu.memory_space<vmem>>, vector<1x33x8xf32>
    %606 = vector.shape_cast %605 : vector<1x33x8xf32> to vector<33x8xf32>
    %c17_266 = arith.constant 17 : index
    %c0_267 = arith.constant 0 : index
    %c0_268 = arith.constant 0 : index
    %607 = vector.load %arg3[%c17_266, %c0_267, %c0_268] : memref<24x33x8xf32, #tpu.memory_space<vmem>>, vector<1x33x8xf32>
    %608 = vector.shape_cast %607 : vector<1x33x8xf32> to vector<33x8xf32>
    %c21_269 = arith.constant 21 : index
    %c0_270 = arith.constant 0 : index
    %c0_271 = arith.constant 0 : index
    %609 = vector.load %arg3[%c21_269, %c0_270, %c0_271] : memref<24x33x8xf32, #tpu.memory_space<vmem>>, vector<1x33x8xf32>
    %610 = vector.shape_cast %609 : vector<1x33x8xf32> to vector<33x8xf32>
    %611 = vector.extract_strided_slice %606 {offsets = [0, 0], sizes = [32, 8], strides = [1, 1]} : vector<33x8xf32> to vector<32x8xf32>
    %cst_272 = arith.constant dense<0.000000e+00> : vector<8x8xf32>
    %612 = tpu.matmul %564, %611, %cst_272 {dimension_numbers = #tpu.dot_dimension_numbers<[1], [0], [0], [1], [0, 0, 1, 1], [], []>} : vector<8x32xf32>, vector<32x8xf32>, vector<8x8xf32> -> vector<8x8xf32>
    %613 = vector.extract_strided_slice %606 {offsets = [32, 0], sizes = [1, 8], strides = [1, 1]} : vector<33x8xf32> to vector<1x8xf32>
    %614 = vector.broadcast %613 : vector<1x8xf32> to vector<8x8xf32>
    %615 = arith.addf %612, %614 : vector<8x8xf32>
    %616 = vector.extract_strided_slice %608 {offsets = [0, 0], sizes = [32, 8], strides = [1, 1]} : vector<33x8xf32> to vector<32x8xf32>
    %cst_273 = arith.constant dense<0.000000e+00> : vector<8x8xf32>
    %617 = tpu.matmul %564, %616, %cst_273 {dimension_numbers = #tpu.dot_dimension_numbers<[1], [0], [0], [1], [0, 0, 1, 1], [], []>} : vector<8x32xf32>, vector<32x8xf32>, vector<8x8xf32> -> vector<8x8xf32>
    %618 = vector.extract_strided_slice %608 {offsets = [32, 0], sizes = [1, 8], strides = [1, 1]} : vector<33x8xf32> to vector<1x8xf32>
    %619 = vector.broadcast %618 : vector<1x8xf32> to vector<8x8xf32>
    %620 = arith.addf %617, %619 : vector<8x8xf32>
    %621 = vector.extract_strided_slice %610 {offsets = [0, 0], sizes = [32, 8], strides = [1, 1]} : vector<33x8xf32> to vector<32x8xf32>
    %cst_274 = arith.constant dense<0.000000e+00> : vector<8x8xf32>
    %622 = tpu.matmul %564, %621, %cst_274 {dimension_numbers = #tpu.dot_dimension_numbers<[1], [0], [0], [1], [0, 0, 1, 1], [], []>} : vector<8x32xf32>, vector<32x8xf32>, vector<8x8xf32> -> vector<8x8xf32>
    %623 = vector.extract_strided_slice %610 {offsets = [32, 0], sizes = [1, 8], strides = [1, 1]} : vector<33x8xf32> to vector<1x8xf32>
    %624 = vector.broadcast %623 : vector<1x8xf32> to vector<8x8xf32>
    %625 = arith.addf %622, %624 : vector<8x8xf32>
    %cst_275 = arith.constant dense<0.000000e+00> : vector<8x8xf32>
    %626 = tpu.matmul %615, %620, %cst_275 {dimension_numbers = #tpu.dot_dimension_numbers<[1], [1], [0], [0], [0, 0, 1, 0], [], []>} : vector<8x8xf32>, vector<8x8xf32>, vector<8x8xf32> -> vector<8x8xf32>
    %627 = vector.broadcast %565 : vector<1x8xf32> to vector<8x8xf32>
    %628 = arith.addf %626, %627 : vector<8x8xf32>
    %cst_276 = arith.constant dense<0xFF800000> : vector<8xf32>
    %629 = vector.multi_reduction <maximumf>, %628, %cst_276 [1] : vector<8x8xf32> to vector<8xf32>
    %630 = vector.shape_cast %629 : vector<8xf32> to vector<8x1xf32>
    %631 = vector.broadcast %630 : vector<8x1xf32> to vector<8x8xf32>
    %632 = arith.subf %628, %631 : vector<8x8xf32>
    %633 = math.exp %632 : vector<8x8xf32>
    %cst_277 = arith.constant dense<0.000000e+00> : vector<8xf32>
    %634 = vector.multi_reduction <add>, %633, %cst_277 [1] : vector<8x8xf32> to vector<8xf32>
    %635 = vector.shape_cast %634 : vector<8xf32> to vector<8x1xf32>
    %636 = tpu.reciprocal %635 {approx = true} : vector<8x1xf32> -> vector<8x1xf32>
    %637 = vector.broadcast %636 : vector<8x1xf32> to vector<8x8xf32>
    %638 = arith.mulf %633, %637 : vector<8x8xf32>
    %cst_278 = arith.constant dense<0.000000e+00> : vector<8x8xf32>
    %639 = tpu.matmul %638, %625, %cst_278 {dimension_numbers = #tpu.dot_dimension_numbers<[1], [0], [0], [1], [0, 0, 1, 1], [], []>} : vector<8x8xf32>, vector<8x8xf32>, vector<8x8xf32> -> vector<8x8xf32>
    %c104_279 = arith.constant 104 : index
    %c0_280 = arith.constant 0 : index
    %640 = vector.load %arg4[%c104_279, %c0_280] : memref<206x32xf32, #tpu.memory_space<vmem>>, vector<8x32xf32>
    %cst_281 = arith.constant dense<0.000000e+00> : vector<8x32xf32>
    %641 = tpu.matmul %639, %640, %cst_281 {dimension_numbers = #tpu.dot_dimension_numbers<[1], [0], [0], [1], [0, 0, 1, 1], [], []>} : vector<8x8xf32>, vector<8x32xf32>, vector<8x32xf32> -> vector<8x32xf32>
    %642 = arith.addf %604, %641 : vector<8x32xf32>
    %c14_282 = arith.constant 14 : index
    %c0_283 = arith.constant 0 : index
    %c0_284 = arith.constant 0 : index
    %643 = vector.load %arg3[%c14_282, %c0_283, %c0_284] : memref<24x33x8xf32, #tpu.memory_space<vmem>>, vector<1x33x8xf32>
    %644 = vector.shape_cast %643 : vector<1x33x8xf32> to vector<33x8xf32>
    %c18_285 = arith.constant 18 : index
    %c0_286 = arith.constant 0 : index
    %c0_287 = arith.constant 0 : index
    %645 = vector.load %arg3[%c18_285, %c0_286, %c0_287] : memref<24x33x8xf32, #tpu.memory_space<vmem>>, vector<1x33x8xf32>
    %646 = vector.shape_cast %645 : vector<1x33x8xf32> to vector<33x8xf32>
    %c22_288 = arith.constant 22 : index
    %c0_289 = arith.constant 0 : index
    %c0_290 = arith.constant 0 : index
    %647 = vector.load %arg3[%c22_288, %c0_289, %c0_290] : memref<24x33x8xf32, #tpu.memory_space<vmem>>, vector<1x33x8xf32>
    %648 = vector.shape_cast %647 : vector<1x33x8xf32> to vector<33x8xf32>
    %649 = vector.extract_strided_slice %644 {offsets = [0, 0], sizes = [32, 8], strides = [1, 1]} : vector<33x8xf32> to vector<32x8xf32>
    %cst_291 = arith.constant dense<0.000000e+00> : vector<8x8xf32>
    %650 = tpu.matmul %564, %649, %cst_291 {dimension_numbers = #tpu.dot_dimension_numbers<[1], [0], [0], [1], [0, 0, 1, 1], [], []>} : vector<8x32xf32>, vector<32x8xf32>, vector<8x8xf32> -> vector<8x8xf32>
    %651 = vector.extract_strided_slice %644 {offsets = [32, 0], sizes = [1, 8], strides = [1, 1]} : vector<33x8xf32> to vector<1x8xf32>
    %652 = vector.broadcast %651 : vector<1x8xf32> to vector<8x8xf32>
    %653 = arith.addf %650, %652 : vector<8x8xf32>
    %654 = vector.extract_strided_slice %646 {offsets = [0, 0], sizes = [32, 8], strides = [1, 1]} : vector<33x8xf32> to vector<32x8xf32>
    %cst_292 = arith.constant dense<0.000000e+00> : vector<8x8xf32>
    %655 = tpu.matmul %564, %654, %cst_292 {dimension_numbers = #tpu.dot_dimension_numbers<[1], [0], [0], [1], [0, 0, 1, 1], [], []>} : vector<8x32xf32>, vector<32x8xf32>, vector<8x8xf32> -> vector<8x8xf32>
    %656 = vector.extract_strided_slice %646 {offsets = [32, 0], sizes = [1, 8], strides = [1, 1]} : vector<33x8xf32> to vector<1x8xf32>
    %657 = vector.broadcast %656 : vector<1x8xf32> to vector<8x8xf32>
    %658 = arith.addf %655, %657 : vector<8x8xf32>
    %659 = vector.extract_strided_slice %648 {offsets = [0, 0], sizes = [32, 8], strides = [1, 1]} : vector<33x8xf32> to vector<32x8xf32>
    %cst_293 = arith.constant dense<0.000000e+00> : vector<8x8xf32>
    %660 = tpu.matmul %564, %659, %cst_293 {dimension_numbers = #tpu.dot_dimension_numbers<[1], [0], [0], [1], [0, 0, 1, 1], [], []>} : vector<8x32xf32>, vector<32x8xf32>, vector<8x8xf32> -> vector<8x8xf32>
    %661 = vector.extract_strided_slice %648 {offsets = [32, 0], sizes = [1, 8], strides = [1, 1]} : vector<33x8xf32> to vector<1x8xf32>
    %662 = vector.broadcast %661 : vector<1x8xf32> to vector<8x8xf32>
    %663 = arith.addf %660, %662 : vector<8x8xf32>
    %cst_294 = arith.constant dense<0.000000e+00> : vector<8x8xf32>
    %664 = tpu.matmul %653, %658, %cst_294 {dimension_numbers = #tpu.dot_dimension_numbers<[1], [1], [0], [0], [0, 0, 1, 0], [], []>} : vector<8x8xf32>, vector<8x8xf32>, vector<8x8xf32> -> vector<8x8xf32>
    %665 = vector.broadcast %565 : vector<1x8xf32> to vector<8x8xf32>
    %666 = arith.addf %664, %665 : vector<8x8xf32>
    %cst_295 = arith.constant dense<0xFF800000> : vector<8xf32>
    %667 = vector.multi_reduction <maximumf>, %666, %cst_295 [1] : vector<8x8xf32> to vector<8xf32>
    %668 = vector.shape_cast %667 : vector<8xf32> to vector<8x1xf32>
    %669 = vector.broadcast %668 : vector<8x1xf32> to vector<8x8xf32>
    %670 = arith.subf %666, %669 : vector<8x8xf32>
    %671 = math.exp %670 : vector<8x8xf32>
    %cst_296 = arith.constant dense<0.000000e+00> : vector<8xf32>
    %672 = vector.multi_reduction <add>, %671, %cst_296 [1] : vector<8x8xf32> to vector<8xf32>
    %673 = vector.shape_cast %672 : vector<8xf32> to vector<8x1xf32>
    %674 = tpu.reciprocal %673 {approx = true} : vector<8x1xf32> -> vector<8x1xf32>
    %675 = vector.broadcast %674 : vector<8x1xf32> to vector<8x8xf32>
    %676 = arith.mulf %671, %675 : vector<8x8xf32>
    %cst_297 = arith.constant dense<0.000000e+00> : vector<8x8xf32>
    %677 = tpu.matmul %676, %663, %cst_297 {dimension_numbers = #tpu.dot_dimension_numbers<[1], [0], [0], [1], [0, 0, 1, 1], [], []>} : vector<8x8xf32>, vector<8x8xf32>, vector<8x8xf32> -> vector<8x8xf32>
    %c112_298 = arith.constant 112 : index
    %c0_299 = arith.constant 0 : index
    %678 = vector.load %arg4[%c112_298, %c0_299] : memref<206x32xf32, #tpu.memory_space<vmem>>, vector<8x32xf32>
    %cst_300 = arith.constant dense<0.000000e+00> : vector<8x32xf32>
    %679 = tpu.matmul %677, %678, %cst_300 {dimension_numbers = #tpu.dot_dimension_numbers<[1], [0], [0], [1], [0, 0, 1, 1], [], []>} : vector<8x8xf32>, vector<8x32xf32>, vector<8x32xf32> -> vector<8x32xf32>
    %680 = arith.addf %642, %679 : vector<8x32xf32>
    %c15_301 = arith.constant 15 : index
    %c0_302 = arith.constant 0 : index
    %c0_303 = arith.constant 0 : index
    %681 = vector.load %arg3[%c15_301, %c0_302, %c0_303] : memref<24x33x8xf32, #tpu.memory_space<vmem>>, vector<1x33x8xf32>
    %682 = vector.shape_cast %681 : vector<1x33x8xf32> to vector<33x8xf32>
    %c19_304 = arith.constant 19 : index
    %c0_305 = arith.constant 0 : index
    %c0_306 = arith.constant 0 : index
    %683 = vector.load %arg3[%c19_304, %c0_305, %c0_306] : memref<24x33x8xf32, #tpu.memory_space<vmem>>, vector<1x33x8xf32>
    %684 = vector.shape_cast %683 : vector<1x33x8xf32> to vector<33x8xf32>
    %c23_307 = arith.constant 23 : index
    %c0_308 = arith.constant 0 : index
    %c0_309 = arith.constant 0 : index
    %685 = vector.load %arg3[%c23_307, %c0_308, %c0_309] : memref<24x33x8xf32, #tpu.memory_space<vmem>>, vector<1x33x8xf32>
    %686 = vector.shape_cast %685 : vector<1x33x8xf32> to vector<33x8xf32>
    %687 = vector.extract_strided_slice %682 {offsets = [0, 0], sizes = [32, 8], strides = [1, 1]} : vector<33x8xf32> to vector<32x8xf32>
    %cst_310 = arith.constant dense<0.000000e+00> : vector<8x8xf32>
    %688 = tpu.matmul %564, %687, %cst_310 {dimension_numbers = #tpu.dot_dimension_numbers<[1], [0], [0], [1], [0, 0, 1, 1], [], []>} : vector<8x32xf32>, vector<32x8xf32>, vector<8x8xf32> -> vector<8x8xf32>
    %689 = vector.extract_strided_slice %682 {offsets = [32, 0], sizes = [1, 8], strides = [1, 1]} : vector<33x8xf32> to vector<1x8xf32>
    %690 = vector.broadcast %689 : vector<1x8xf32> to vector<8x8xf32>
    %691 = arith.addf %688, %690 : vector<8x8xf32>
    %692 = vector.extract_strided_slice %684 {offsets = [0, 0], sizes = [32, 8], strides = [1, 1]} : vector<33x8xf32> to vector<32x8xf32>
    %cst_311 = arith.constant dense<0.000000e+00> : vector<8x8xf32>
    %693 = tpu.matmul %564, %692, %cst_311 {dimension_numbers = #tpu.dot_dimension_numbers<[1], [0], [0], [1], [0, 0, 1, 1], [], []>} : vector<8x32xf32>, vector<32x8xf32>, vector<8x8xf32> -> vector<8x8xf32>
    %694 = vector.extract_strided_slice %684 {offsets = [32, 0], sizes = [1, 8], strides = [1, 1]} : vector<33x8xf32> to vector<1x8xf32>
    %695 = vector.broadcast %694 : vector<1x8xf32> to vector<8x8xf32>
    %696 = arith.addf %693, %695 : vector<8x8xf32>
    %697 = vector.extract_strided_slice %686 {offsets = [0, 0], sizes = [32, 8], strides = [1, 1]} : vector<33x8xf32> to vector<32x8xf32>
    %cst_312 = arith.constant dense<0.000000e+00> : vector<8x8xf32>
    %698 = tpu.matmul %564, %697, %cst_312 {dimension_numbers = #tpu.dot_dimension_numbers<[1], [0], [0], [1], [0, 0, 1, 1], [], []>} : vector<8x32xf32>, vector<32x8xf32>, vector<8x8xf32> -> vector<8x8xf32>
    %699 = vector.extract_strided_slice %686 {offsets = [32, 0], sizes = [1, 8], strides = [1, 1]} : vector<33x8xf32> to vector<1x8xf32>
    %700 = vector.broadcast %699 : vector<1x8xf32> to vector<8x8xf32>
    %701 = arith.addf %698, %700 : vector<8x8xf32>
    %cst_313 = arith.constant dense<0.000000e+00> : vector<8x8xf32>
    %702 = tpu.matmul %691, %696, %cst_313 {dimension_numbers = #tpu.dot_dimension_numbers<[1], [1], [0], [0], [0, 0, 1, 0], [], []>} : vector<8x8xf32>, vector<8x8xf32>, vector<8x8xf32> -> vector<8x8xf32>
    %703 = vector.broadcast %565 : vector<1x8xf32> to vector<8x8xf32>
    %704 = arith.addf %702, %703 : vector<8x8xf32>
    %cst_314 = arith.constant dense<0xFF800000> : vector<8xf32>
    %705 = vector.multi_reduction <maximumf>, %704, %cst_314 [1] : vector<8x8xf32> to vector<8xf32>
    %706 = vector.shape_cast %705 : vector<8xf32> to vector<8x1xf32>
    %707 = vector.broadcast %706 : vector<8x1xf32> to vector<8x8xf32>
    %708 = arith.subf %704, %707 : vector<8x8xf32>
    %709 = math.exp %708 : vector<8x8xf32>
    %cst_315 = arith.constant dense<0.000000e+00> : vector<8xf32>
    %710 = vector.multi_reduction <add>, %709, %cst_315 [1] : vector<8x8xf32> to vector<8xf32>
    %711 = vector.shape_cast %710 : vector<8xf32> to vector<8x1xf32>
    %712 = tpu.reciprocal %711 {approx = true} : vector<8x1xf32> -> vector<8x1xf32>
    %713 = vector.broadcast %712 : vector<8x1xf32> to vector<8x8xf32>
    %714 = arith.mulf %709, %713 : vector<8x8xf32>
    %cst_316 = arith.constant dense<0.000000e+00> : vector<8x8xf32>
    %715 = tpu.matmul %714, %701, %cst_316 {dimension_numbers = #tpu.dot_dimension_numbers<[1], [0], [0], [1], [0, 0, 1, 1], [], []>} : vector<8x8xf32>, vector<8x8xf32>, vector<8x8xf32> -> vector<8x8xf32>
    %c120_317 = arith.constant 120 : index
    %c0_318 = arith.constant 0 : index
    %716 = vector.load %arg4[%c120_317, %c0_318] : memref<206x32xf32, #tpu.memory_space<vmem>>, vector<8x32xf32>
    %cst_319 = arith.constant dense<0.000000e+00> : vector<8x32xf32>
    %717 = tpu.matmul %715, %716, %cst_319 {dimension_numbers = #tpu.dot_dimension_numbers<[1], [0], [0], [1], [0, 0, 1, 1], [], []>} : vector<8x8xf32>, vector<8x32xf32>, vector<8x32xf32> -> vector<8x32xf32>
    %718 = arith.addf %680, %717 : vector<8x32xf32>
    %c8_320 = arith.constant 8 : index
    %c0_321 = arith.constant 0 : index
    %719 = vector.load %arg9[%c8_320, %c0_321] : memref<16x32xf32, #tpu.memory_space<vmem>>, vector<8x32xf32>
    tpu.vector_store %arg9[%c8_320, %c0_321], %718 {strides = array<i32>} : memref<16x32xf32, #tpu.memory_space<vmem>>, vector<8x32xf32>,
    %c0_322 = arith.constant 0 : index
    %c0_323 = arith.constant 0 : index
    %720 = vector.load %arg9[%c0_322, %c0_323] : memref<16x32xf32, #tpu.memory_space<vmem>>, vector<16x32xf32>
    %721 = arith.addf %720, %406 : vector<16x32xf32>
    %c201 = arith.constant 201 : index
    %c0_324 = arith.constant 0 : index
    %722 = vector.load %arg4[%c201, %c0_324] : memref<206x32xf32, #tpu.memory_space<vmem>>, vector<1x32xf32>
    %c202 = arith.constant 202 : index
    %c0_325 = arith.constant 0 : index
    %723 = vector.load %arg4[%c202, %c0_325] : memref<206x32xf32, #tpu.memory_space<vmem>>, vector<1x32xf32>
    %cst_326 = arith.constant dense<0.000000e+00> : vector<16xf32>
    %724 = vector.multi_reduction <add>, %721, %cst_326 [1] : vector<16x32xf32> to vector<16xf32>
    %725 = vector.shape_cast %724 : vector<16xf32> to vector<16x1xf32>
    %cst_327 = arith.constant 3.200000e+01 : f32
    %726 = vector.broadcast %cst_327 : f32 to vector<16x1xf32>
    %727 = arith.divf %725, %726 : vector<16x1xf32>
    %728 = vector.broadcast %727 : vector<16x1xf32> to vector<16x32xf32>
    %729 = arith.subf %721, %728 : vector<16x32xf32>
    %730 = arith.mulf %729, %729 : vector<16x32xf32>
    %cst_328 = arith.constant dense<0.000000e+00> : vector<16xf32>
    %731 = vector.multi_reduction <add>, %730, %cst_328 [1] : vector<16x32xf32> to vector<16xf32>
    %732 = vector.shape_cast %731 : vector<16xf32> to vector<16x1xf32>
    %cst_329 = arith.constant 3.200000e+01 : f32
    %733 = vector.broadcast %cst_329 : f32 to vector<16x1xf32>
    %734 = arith.divf %732, %733 : vector<16x1xf32>
    %cst_330 = arith.constant 9.99999996E-13 : f32
    %735 = vector.broadcast %cst_330 : f32 to vector<16x1xf32>
    %736 = arith.addf %734, %735 : vector<16x1xf32>
    %737 = math.rsqrt %736 : vector<16x1xf32>
    %738 = vector.broadcast %737 : vector<16x1xf32> to vector<16x32xf32>
    %739 = arith.mulf %729, %738 : vector<16x32xf32>
    %740 = vector.broadcast %722 : vector<1x32xf32> to vector<16x32xf32>
    %741 = arith.mulf %739, %740 : vector<16x32xf32>
    %742 = vector.broadcast %723 : vector<1x32xf32> to vector<16x32xf32>
    %743 = arith.addf %741, %742 : vector<16x32xf32>
    %c32_331 = arith.constant 32 : index
    %c0_332 = arith.constant 0 : index
    %744 = vector.load %arg5[%c32_331, %c0_332] : memref<66x64xf32, #tpu.memory_space<vmem>>, vector<32x64xf32>
    %c65 = arith.constant 65 : index
    %c0_333 = arith.constant 0 : index
    %745 = vector.load %arg5[%c65, %c0_333] : memref<66x64xf32, #tpu.memory_space<vmem>>, vector<1x64xf32>
    %cst_334 = arith.constant dense<0.000000e+00> : vector<16x64xf32>
    %746 = tpu.matmul %743, %744, %cst_334 {dimension_numbers = #tpu.dot_dimension_numbers<[1], [0], [0], [1], [0, 0, 1, 1], [], []>} : vector<16x32xf32>, vector<32x64xf32>, vector<16x64xf32> -> vector<16x64xf32>
    %747 = vector.broadcast %745 : vector<1x64xf32> to vector<16x64xf32>
    %748 = arith.addf %746, %747 : vector<16x64xf32>
    %cst_335 = arith.constant 5.000000e-01 : f32
    %749 = vector.broadcast %cst_335 : f32 to vector<16x64xf32>
    %750 = arith.mulf %749, %748 : vector<16x64xf32>
    %cst_336 = arith.constant 4.471500e-02 : f32
    %751 = vector.broadcast %cst_336 : f32 to vector<16x64xf32>
    %752 = arith.mulf %751, %748 : vector<16x64xf32>
    %753 = arith.mulf %752, %748 : vector<16x64xf32>
    %754 = arith.mulf %753, %748 : vector<16x64xf32>
    %755 = arith.addf %748, %754 : vector<16x64xf32>
    %cst_337 = arith.constant 0.797884583 : f32
    %756 = vector.broadcast %cst_337 : f32 to vector<16x64xf32>
    %757 = arith.mulf %756, %755 : vector<16x64xf32>
    %758 = math.tanh %757 : vector<16x64xf32>
    %cst_338 = arith.constant 1.000000e+00 : f32
    %759 = vector.broadcast %cst_338 : f32 to vector<16x64xf32>
    %760 = arith.addf %759, %758 : vector<16x64xf32>
    %761 = arith.mulf %750, %760 : vector<16x64xf32>
    %c128 = arith.constant 128 : index
    %c0_339 = arith.constant 0 : index
    %762 = vector.load %arg4[%c128, %c0_339] : memref<206x32xf32, #tpu.memory_space<vmem>>, vector<64x32xf32>
    %cst_340 = arith.constant dense<0.000000e+00> : vector<16x32xf32>
    %763 = tpu.matmul %761, %762, %cst_340 {dimension_numbers = #tpu.dot_dimension_numbers<[1], [0], [0], [1], [0, 0, 1, 1], [], []>} : vector<16x64xf32>, vector<64x32xf32>, vector<16x32xf32> -> vector<16x32xf32>
    %c203 = arith.constant 203 : index
    %c0_341 = arith.constant 0 : index
    %764 = vector.load %arg4[%c203, %c0_341] : memref<206x32xf32, #tpu.memory_space<vmem>>, vector<1x32xf32>
    %765 = vector.broadcast %764 : vector<1x32xf32> to vector<16x32xf32>
    %766 = arith.addf %763, %765 : vector<16x32xf32>
    %767 = arith.addf %766, %743 : vector<16x32xf32>
    %c204 = arith.constant 204 : index
    %c0_342 = arith.constant 0 : index
    %768 = vector.load %arg4[%c204, %c0_342] : memref<206x32xf32, #tpu.memory_space<vmem>>, vector<1x32xf32>
    %c205 = arith.constant 205 : index
    %c0_343 = arith.constant 0 : index
    %769 = vector.load %arg4[%c205, %c0_343] : memref<206x32xf32, #tpu.memory_space<vmem>>, vector<1x32xf32>
    %cst_344 = arith.constant dense<0.000000e+00> : vector<16xf32>
    %770 = vector.multi_reduction <add>, %767, %cst_344 [1] : vector<16x32xf32> to vector<16xf32>
    %771 = vector.shape_cast %770 : vector<16xf32> to vector<16x1xf32>
    %cst_345 = arith.constant 3.200000e+01 : f32
    %772 = vector.broadcast %cst_345 : f32 to vector<16x1xf32>
    %773 = arith.divf %771, %772 : vector<16x1xf32>
    %774 = vector.broadcast %773 : vector<16x1xf32> to vector<16x32xf32>
    %775 = arith.subf %767, %774 : vector<16x32xf32>
    %776 = arith.mulf %775, %775 : vector<16x32xf32>
    %cst_346 = arith.constant dense<0.000000e+00> : vector<16xf32>
    %777 = vector.multi_reduction <add>, %776, %cst_346 [1] : vector<16x32xf32> to vector<16xf32>
    %778 = vector.shape_cast %777 : vector<16xf32> to vector<16x1xf32>
    %cst_347 = arith.constant 3.200000e+01 : f32
    %779 = vector.broadcast %cst_347 : f32 to vector<16x1xf32>
    %780 = arith.divf %778, %779 : vector<16x1xf32>
    %cst_348 = arith.constant 9.99999996E-13 : f32
    %781 = vector.broadcast %cst_348 : f32 to vector<16x1xf32>
    %782 = arith.addf %780, %781 : vector<16x1xf32>
    %783 = math.rsqrt %782 : vector<16x1xf32>
    %784 = vector.broadcast %783 : vector<16x1xf32> to vector<16x32xf32>
    %785 = arith.mulf %775, %784 : vector<16x32xf32>
    %786 = vector.broadcast %768 : vector<1x32xf32> to vector<16x32xf32>
    %787 = arith.mulf %785, %786 : vector<16x32xf32>
    %788 = vector.broadcast %769 : vector<1x32xf32> to vector<16x32xf32>
    %789 = arith.addf %787, %788 : vector<16x32xf32>
    %c0_349 = arith.constant 0 : index
    %c0_350 = arith.constant 0 : index
    %790 = vector.load %arg6[%c0_349, %c0_350] : memref<66x128xf32, #tpu.memory_space<vmem>>, vector<32x128xf32>
    %c64_351 = arith.constant 64 : index
    %c0_352 = arith.constant 0 : index
    %791 = vector.load %arg6[%c64_351, %c0_352] : memref<66x128xf32, #tpu.memory_space<vmem>>, vector<1x128xf32>
    %cst_353 = arith.constant dense<0.000000e+00> : vector<16x128xf32>
    %792 = tpu.matmul %789, %790, %cst_353 {dimension_numbers = #tpu.dot_dimension_numbers<[1], [0], [0], [1], [0, 0, 1, 1], [], []>} : vector<16x32xf32>, vector<32x128xf32>, vector<16x128xf32> -> vector<16x128xf32>
    %793 = vector.broadcast %791 : vector<1x128xf32> to vector<16x128xf32>
    %794 = arith.addf %792, %793 : vector<16x128xf32>
    %c0_354 = arith.constant 0 : index
    %c0_355 = arith.constant 0 : index
    %795 = vector.load %arg7[%c0_354, %c0_355] : memref<16x128xf32, #tpu.memory_space<vmem>>, vector<16x128xf32>
    tpu.vector_store %arg7[%c0_354, %c0_355], %794 {strides = array<i32>} : memref<16x128xf32, #tpu.memory_space<vmem>>, vector<16x128xf32>,
    %796 = tpu.iota {dimensions = array<i32: 0>} : vector<2x16xi32>
    %797 = tpu.iota {dimensions = array<i32: 1>} : vector<2x16xi32>
    %c8_i32 = arith.constant 8 : i32
    %798 = vector.broadcast %c8_i32 : i32 to vector<2x16xi32>
    %799 = arith.muli %796, %798 : vector<2x16xi32>
    %800 = arith.cmpi eq, %797, %799 : vector<2x16xi32>
    %801 = arith.extui %800 : vector<2x16xi1> to vector<2x16xi32>
    %802 = arith.sitofp %801 : vector<2x16xi32> to vector<2x16xf32>
    %cst_356 = arith.constant dense<0.000000e+00> : vector<2x128xf32>
    %803 = tpu.matmul %802, %794, %cst_356 {dimension_numbers = #tpu.dot_dimension_numbers<[1], [0], [0], [1], [0, 0, 1, 1], [], []>} : vector<2x16xf32>, vector<16x128xf32>, vector<2x128xf32> -> vector<2x128xf32>
    %804 = vector.extract_strided_slice %803 {offsets = [0, 0], sizes = [2, 32], strides = [1, 1]} : vector<2x128xf32> to vector<2x32xf32>
    %805 = math.tanh %804 : vector<2x32xf32>
    %c32_357 = arith.constant 32 : index
    %c0_358 = arith.constant 0 : index
    %806 = vector.load %arg6[%c32_357, %c0_358] : memref<66x128xf32, #tpu.memory_space<vmem>>, vector<32x128xf32>
    %c65_359 = arith.constant 65 : index
    %c0_360 = arith.constant 0 : index
    %807 = vector.load %arg6[%c65_359, %c0_360] : memref<66x128xf32, #tpu.memory_space<vmem>>, vector<1x128xf32>
    %cst_361 = arith.constant dense<0.000000e+00> : vector<2x128xf32>
    %808 = tpu.matmul %805, %806, %cst_361 {dimension_numbers = #tpu.dot_dimension_numbers<[1], [0], [0], [1], [0, 0, 1, 1], [], []>} : vector<2x32xf32>, vector<32x128xf32>, vector<2x128xf32> -> vector<2x128xf32>
    %809 = vector.broadcast %807 : vector<1x128xf32> to vector<2x128xf32>
    %810 = arith.addf %808, %809 : vector<2x128xf32>
    %c0_362 = arith.constant 0 : index
    %c0_363 = arith.constant 0 : index
    %811 = vector.load %arg8[%c0_362, %c0_363] : memref<2x128xf32, #tpu.memory_space<vmem>>, vector<2x128xf32>
    tpu.vector_store %arg8[%c0_362, %c0_363], %810 {strides = array<i32>} : memref<2x128xf32, #tpu.memory_space<vmem>>, vector<2x128xf32>,
    return
  }
  func.func @transform_0(%arg0: i32) -> (i32, i32) {
    %c0_i32 = arith.constant 0 : i32
    %c0_i32_0 = arith.constant 0 : i32
    %c0_i32_1 = arith.constant 0 : i32
    return %c0_i32, %c0_i32_0 : i32, i32
  }
  func.func @transform_1(%arg0: i32) -> (i32, i32) {
    %c0_i32 = arith.constant 0 : i32
    %c0_i32_0 = arith.constant 0 : i32
    %c0_i32_1 = arith.constant 0 : i32
    return %c0_i32, %c0_i32_0 : i32, i32
  }
  func.func @transform_2(%arg0: i32) -> (i32, i32, i32) {
    %c0_i32 = arith.constant 0 : i32
    %c0_i32_0 = arith.constant 0 : i32
    %c0_i32_1 = arith.constant 0 : i32
    %c0_i32_2 = arith.constant 0 : i32
    return %c0_i32, %c0_i32_0, %c0_i32_1 : i32, i32, i32
  }
  func.func @transform_3(%arg0: i32) -> (i32, i32) {
    %c0_i32 = arith.constant 0 : i32
    %c0_i32_0 = arith.constant 0 : i32
    %c0_i32_1 = arith.constant 0 : i32
    return %c0_i32, %c0_i32_0 : i32, i32
  }
  func.func @transform_4(%arg0: i32) -> (i32, i32) {
    %c0_i32 = arith.constant 0 : i32
    %c0_i32_0 = arith.constant 0 : i32
    %c0_i32_1 = arith.constant 0 : i32
    return %c0_i32, %c0_i32_0 : i32, i32
  }
  func.func @transform_5(%arg0: i32) -> (i32, i32) {
    %c0_i32 = arith.constant 0 : i32
    %c0_i32_0 = arith.constant 0 : i32
    %c0_i32_1 = arith.constant 0 : i32
    return %c0_i32, %c0_i32_0 : i32, i32
  }
  func.func @transform_6(%arg0: i32) -> (i32, i32) {
    %c0_i32 = arith.constant 0 : i32
    %c0_i32_0 = arith.constant 0 : i32
    %c0_i32_1 = arith.constant 0 : i32
    return %c0_i32, %c0_i32_0 : i32, i32
  }
  func.func @transform_7(%arg0: i32) -> (i32, i32) {
    %c0_i32 = arith.constant 0 : i32
    %c0_i32_0 = arith.constant 0 : i32
    %c0_i32_1 = arith.constant 0 : i32
    return %c0_i32, %c0_i32_0 : i32, i32
  }
}

</mosaic_0001>

<llo_original>
// kernel: hate_speech_detector_forward.1
$region0: #{hate_speech_detector_forward.1}
  #allocation0 [shape = 'u32[]', space=smem, size = 0x4, offset = 0x4, fixed_abs, tag = 'smem constant byte address 0x4 - core index']
  #allocation1 [shape = 'u32[144,128]{1,0:T(1,128)}', space=vmem, size = 0x12000, scoped, tag = 'internal scratch']
  #allocation2 [shape = 'f32[16,32]{1,0:T(8,128)}', space=vmem, size = 0x2000, scoped, tag = 'scratch operand']
  %s0 = inlined_call_operand.vmem [shape: f32[16,32], index: 0, kind: input, shape index: {}]
  %s1 = inlined_call_operand.vmem [shape: f32[2,8], index: 1, kind: input, shape index: {}]
  %s2 = inlined_call_operand.vmem [shape: f32[24,33,8], index: 2, kind: input, shape index: {}]
  %s3 = inlined_call_operand.vmem [shape: f32[206,32], index: 3, kind: input, shape index: {}]
  %s4 = inlined_call_operand.vmem [shape: f32[66,64], index: 4, kind: input, shape index: {}]
  %s5 = inlined_call_operand.vmem [shape: f32[66,128], index: 5, kind: input, shape index: {}]
  %s6 = inlined_call_operand.vmem [shape: f32[16,128], index: 6, kind: output, shape index: {0}]
  %s7 = inlined_call_operand.vmem [shape: f32[2,128], index: 7, kind: output, shape index: {1}]
  %8 = xla_tuple %s6, %s7
  %s9 = sld [smem:[#allocation0]]
  $region42: #{hate_speech_detector_forward.1} parent=0
    _
  %s11 = ssub.s32 1, %s9
  %s12 = scalar_select 0, %s11, %s9
  // Predicated region
  $region2: #{hate_speech_detector_forward.1} parent=0 // pred_check
    _
  $region3: #{hate_speech_detector_forward.1} parent=0 // pred_check_branch
    %14 = sbr.rel (0) target = $region5
  $region4: #{hate_speech_detector_forward.1} parent=0 // pred_region
    _
  $region5: #{hate_speech_detector_forward.1} parent=0 // pred_fallthru
    _
  // Predicated region
  $region6: #{hate_speech_detector_forward.1} parent=0 // pred_check
    _
  $region7: #{hate_speech_detector_forward.1} parent=0 // pred_check_branch
    %16 = sbr.rel (0) target = $region9
  $region8: #{hate_speech_detector_forward.1} parent=0 // pred_region
    _
  $region9: #{hate_speech_detector_forward.1} parent=0 // pred_fallthru
    _
  // Predicated region
  $region10: #{hate_speech_detector_forward.1} parent=0 // pred_check
    _
  $region11: #{hate_speech_detector_forward.1} parent=0 // pred_check_branch
    %18 = sbr.rel (0) target = $region13
  $region12: #{hate_speech_detector_forward.1} parent=0 // pred_region
    _
  $region13: #{hate_speech_detector_forward.1} parent=0 // pred_fallthru
    _
  // Predicated region
  $region14: #{hate_speech_detector_forward.1} parent=0 // pred_check
    _
  $region15: #{hate_speech_detector_forward.1} parent=0 // pred_check_branch
    %20 = sbr.rel (0) target = $region17
  $region16: #{hate_speech_detector_forward.1} parent=0 // pred_region
    _
  $region17: #{hate_speech_detector_forward.1} parent=0 // pred_fallthru
    _
  // Predicated region
  $region18: #{hate_speech_detector_forward.1} parent=0 // pred_check
    _
  $region19: #{hate_speech_detector_forward.1} parent=0 // pred_check_branch
    %22 = sbr.rel (0) target = $region21
  $region20: #{hate_speech_detector_forward.1} parent=0 // pred_region
    _
  $region21: #{hate_speech_detector_forward.1} parent=0 // pred_fallthru
    _
  // Predicated region
  $region22: #{hate_speech_detector_forward.1} parent=0 // pred_check
    _
  $region23: #{hate_speech_detector_forward.1} parent=0 // pred_check_branch
    %24 = sbr.rel (0) target = $region25
  $region24: #{hate_speech_detector_forward.1} parent=0 // pred_region
    _
  $region25: #{hate_speech_detector_forward.1} parent=0 // pred_fallthru
    _
  %v25 = vld [vmem:[%s1] sm:$0x3]
  %v26 = vld [vmem:[%s0] sm:$0xff]
  %v27 = vld [vmem:[%s0 + $0x8] sm:$0xff]
  %v28 = vld [vmem:[%s3 + $0xc0] sm:$0x1]
  %v29 = vld [vmem:[%s3 + $0xc1] sm:$0x1]
  %vm30 = vcmask 261120
  %v31 = vsel %vm30, %v26, 0.0
  %32 = vadd.xlane.f32.xlu0 %v31
  %v33 = vpop.xlane.xlu0 %32
  %v34 = vsel %vm30, %v27, 0.0
  %35 = vadd.xlane.f32.xlu0 %v34
  %v36 = vpop.xlane.xlu0 %35
  %v37 = vrcp.pop 32.0
  %v38 = vmul.f32 %v33, %v37
  %v39 = vmul.f32 %v36, %v37
  %v40 = vsub.f32 %v26, %v38
  %v41 = vsub.f32 %v27, %v39
  %v42 = vmul.f32 %v40, %v40
  %v43 = vmul.f32 %v41, %v41
  %v44 = vsel %vm30, %v42, 0.0
  %45 = vadd.xlane.f32.xlu0 %v44
  %v46 = vpop.xlane.xlu0 %45
  %v47 = vsel %vm30, %v43, 0.0
  %48 = vadd.xlane.f32.xlu0 %v47
  %v49 = vpop.xlane.xlu0 %48
  %v50 = vmul.f32 %v46, %v37
  %v51 = vmul.f32 %v49, %v37
  %v52 = vadd.f32 %v50, 1e-12
  %v53 = vadd.f32 %v51, 1e-12
  %v54 = vrsqrt.pop %v52
  %v55 = vrsqrt.pop %v53
  %v56 = vmul.f32 %v40, %v54
  %v57 = vmul.f32 %v41, %v55
  %v58 = vlaneseq
  %v59 = vshrl.u32 %v58, 7
  %v60 = vsub.s32 0, %v59
  %v61 = vrot.slane %v28, %v60
  %v62 = vmul.f32 %v56, %v61
  %v63 = vmul.f32 %v57, %v61
  %v64 = vlaneseq
  %v65 = vshrl.u32 %v64, 7
  %v66 = vsub.s32 0, %v65
  %v67 = vrot.slane %v29, %v66
  %v68 = vadd.f32 %v62, %v67
  %v69 = vadd.f32 %v63, %v67
  %v70 = vld [vmem:[%s3 + $0xc2] sm:$0x1]
  %v71 = vld [vmem:[%s2] sm:$0xff]
  %v72 = vld [vmem:[%s2 + $0x8] sm:$0xff]
  %v73 = vld [vmem:[%s2 + $0x10] sm:$0xff]
  %v74 = vld [vmem:[%s2 + $0x18] sm:$0xff]
  %v75 = vld [vmem:[%s2 + $0x20] sm:$0x1]
  %s76 = scalar_lea.vmem %s2, 160
  %v77 = vld [vmem:[%s76] sm:$0xff]
  %v78 = vld [vmem:[%s76 + $0x8] sm:$0xff]
  %v79 = vld [vmem:[%s76 + $0x10] sm:$0xff]
  %v80 = vld [vmem:[%s76 + $0x18] sm:$0xff]
  %v81 = vld [vmem:[%s76 + $0x20] sm:$0x1]
  %s82 = scalar_lea.vmem %s2, 320
  %v83 = vld [vmem:[%s82] sm:$0xff]
  %v84 = vld [vmem:[%s82 + $0x8] sm:$0xff]
  %v85 = vld [vmem:[%s82 + $0x10] sm:$0xff]
  %v86 = vld [vmem:[%s82 + $0x18] sm:$0xff]
  %v87 = vld [vmem:[%s82 + $0x20] sm:$0x1]
  %v88 = vlaneseq
  %v89 = vshrl.u32 %v88, 7
  %v90 = vsub.s32 0, %v89
  %v91 = vrot.slane %v75, %v90
  %v93 = vsel %vm30, %v68, 0
  %95 = vmatprep.subr.mxu0 0.0
  %96 = vmatpush1.msra.mxu0 0.0
  %97 = vmatprep.subr.mxu0 0.0
  %98 = vmatpush1.msra.mxu0 0.0
  %99 = vmatprep.subr.mxu0 0.0
  %100 = vmatpush1.msra.mxu0 0.0
  %101 = vmatprep.subr.mxu0 0.0
  %102 = vmatpush1.msra.mxu0 0.0
  %103 = vmatprep.subr.mxu0 0.0
  %104 = vmatpush1.msra.mxu0 0.0
  %105 = vmatprep.subr.mxu0 0.0
  %106 = vmatpush1.msra.mxu0 0.0
  %107 = vmatprep.subr.mxu0 0.0
  %108 = vmatpush1.msra.mxu0 0.0
  %109 = vmatprep.subr.mxu0 0.0
  %110 = vmatpush1.msra.mxu0 0.0
  %111 = vmatprep.subr.mxu0 0.0
  %112 = vmatpush1.msra.mxu0 0.0
  %113 = vmatprep.subr.mxu0 0.0
  %114 = vmatpush1.msra.mxu0 0.0
  %115 = vmatprep.subr.mxu0 0.0
  %116 = vmatpush1.msra.mxu0 0.0
  %117 = vmatprep.subr.mxu0 0.0
  %118 = vmatpush1.msra.mxu0 0.0
  %119 = vmatprep.subr.mxu0 0.0
  %120 = vmatpush1.msra.mxu0 %v74
  %121 = vmatprep.subr.mxu0 0.0
  %122 = vmatpush1.msra.mxu0 %v73
  %123 = vmatprep.subr.mxu0 0.0
  %124 = vmatpush1.msra.mxu0 %v72
  %125 = vmatprep.subr.mxu0 0.0
  %126 = vmatpush1.msra.mxu0 %v71
  %127 = vmatprep.subr.mxu0 0.0
  %128 = vmatpush2.msra.mxu0 0.0
  %129 = vmatprep.subr.mxu0 0.0
  %130 = vmatpush2.msra.mxu0 0.0
  %131 = vmatprep.subr.mxu0 0.0
  %132 = vmatpush2.msra.mxu0 0.0
  %133 = vmatprep.subr.mxu0 0.0
  %134 = vmatpush2.msra.mxu0 0.0
  %135 = vmatprep.subr.mxu0 0.0
  %136 = vmatpush2.msra.mxu0 0.0
  %137 = vmatprep.subr.mxu0 0.0
  %138 = vmatpush2.msra.mxu0 0.0
  %139 = vmatprep.subr.mxu0 0.0
  %140 = vmatpush2.msra.mxu0 0.0
  %141 = vmatprep.subr.mxu0 0.0
  %142 = vmatpush2.msra.mxu0 0.0
  %143 = vmatprep.subr.mxu0 0.0
  %144 = vmatpush2.msra.mxu0 0.0
  %145 = vmatprep.subr.mxu0 0.0
  %146 = vmatpush2.msra.mxu0 0.0
  %147 = vmatprep.subr.mxu0 0.0
  %148 = vmatpush2.msra.mxu0 0.0
  %149 = vmatprep.subr.mxu0 0.0
  %150 = vmatpush2.msra.mxu0 0.0
  %151 = vmatprep.subr.mxu0 0.0
  %152 = vmatpush2.msra.mxu0 0.0
  %153 = vmatprep.subr.mxu0 0.0
  %154 = vmatpush2.msra.mxu0 0.0
  %155 = vmatprep.subr.mxu0 0.0
  %156 = vmatpush2.msra.mxu0 0.0
  %157 = vmatprep.subr.mxu0 0.0
  %158 = vmatpush2.msra.mxu0 0.0
  %159 = vmatprep.mubr.f32.mxu0 0.0
  %160 = vmatmul.mubr.f32.gmra.mxu0 %v93
  %v161 = vpop.f32.mrf.mxu0
  %v162 = vadd.f32 %v91, %v161
  %v163 = vpop.f32.mrf.mxu0
  %164 = vdwg.mxu0
  %v165 = vlaneseq
  %v166 = vshrl.u32 %v165, 7
  %v167 = vsub.s32 0, %v166
  %v168 = vrot.slane %v81, %v167
  %169 = vmatprep.subr.mxu0 0.0
  %170 = vmatpush1.msra.mxu0 0.0
  %171 = vmatprep.subr.mxu0 0.0
  %172 = vmatpush1.msra.mxu0 0.0
  %173 = vmatprep.subr.mxu0 0.0
  %174 = vmatpush1.msra.mxu0 0.0
  %175 = vmatprep.subr.mxu0 0.0
  %176 = vmatpush1.msra.mxu0 0.0
  %177 = vmatprep.subr.mxu0 0.0
  %178 = vmatpush1.msra.mxu0 0.0
  %179 = vmatprep.subr.mxu0 0.0
  %180 = vmatpush1.msra.mxu0 0.0
  %181 = vmatprep.subr.mxu0 0.0
  %182 = vmatpush1.msra.mxu0 0.0
  %183 = vmatprep.subr.mxu0 0.0
  %184 = vmatpush1.msra.mxu0 0.0
  %185 = vmatprep.subr.mxu0 0.0
  %186 = vmatpush1.msra.mxu0 0.0
  %187 = vmatprep.subr.mxu0 0.0
  %188 = vmatpush1.msra.mxu0 0.0
  %189 = vmatprep.subr.mxu0 0.0
  %190 = vmatpush1.msra.mxu0 0.0
  %191 = vmatprep.subr.mxu0 0.0
  %192 = vmatpush1.msra.mxu0 0.0
  %193 = vmatprep.subr.mxu0 0.0
  %194 = vmatpush1.msra.mxu0 %v80
  %195 = vmatprep.subr.mxu0 0.0
  %196 = vmatpush1.msra.mxu0 %v79
  %197 = vmatprep.subr.mxu0 0.0
  %198 = vmatpush1.msra.mxu0 %v78
  %199 = vmatprep.subr.mxu0 0.0
  %200 = vmatpush1.msra.mxu0 %v77
  %201 = vmatprep.subr.mxu0 0.0
  %202 = vmatpush2.msra.mxu0 0.0
  %203 = vmatprep.subr.mxu0 0.0
  %204 = vmatpush2.msra.mxu0 0.0
  %205 = vmatprep.subr.mxu0 0.0
  %206 = vmatpush2.msra.mxu0 0.0
  %207 = vmatprep.subr.mxu0 0.0
  %208 = vmatpush2.msra.mxu0 0.0
  %209 = vmatprep.subr.mxu0 0.0
  %210 = vmatpush2.msra.mxu0 0.0
  %211 = vmatprep.subr.mxu0 0.0
  %212 = vmatpush2.msra.mxu0 0.0
  %213 = vmatprep.subr.mxu0 0.0
  %214 = vmatpush2.msra.mxu0 0.0
  %215 = vmatprep.subr.mxu0 0.0
  %216 = vmatpush2.msra.mxu0 0.0
  %217 = vmatprep.subr.mxu0 0.0
  %218 = vmatpush2.msra.mxu0 0.0
  %219 = vmatprep.subr.mxu0 0.0
  %220 = vmatpush2.msra.mxu0 0.0
  %221 = vmatprep.subr.mxu0 0.0
  %222 = vmatpush2.msra.mxu0 0.0
  %223 = vmatprep.subr.mxu0 0.0
  %224 = vmatpush2.msra.mxu0 0.0
  %225 = vmatprep.subr.mxu0 0.0
  %226 = vmatpush2.msra.mxu0 0.0
  %227 = vmatprep.subr.mxu0 0.0
  %228 = vmatpush2.msra.mxu0 0.0
  %229 = vmatprep.subr.mxu0 0.0
  %230 = vmatpush2.msra.mxu0 0.0
  %231 = vmatprep.subr.mxu0 0.0
  %232 = vmatpush2.msra.mxu0 0.0
  %233 = vmatprep.mubr.f32.mxu0 0.0
  %234 = vmatmul.mubr.f32.gmra.mxu0 %v93
  %v235 = vpop.f32.mrf.mxu0
  %v236 = vadd.f32 %v168, %v235
  %v237 = vpop.f32.mrf.mxu0
  %238 = vdwg.mxu0
  %v239 = vlaneseq
  %v240 = vshrl.u32 %v239, 7
  %v241 = vsub.s32 0, %v240
  %v242 = vrot.slane %v87, %v241
  %243 = vmatprep.subr.mxu0 0.0
  %244 = vmatpush1.msra.mxu0 0.0
  %245 = vmatprep.subr.mxu0 0.0
  %246 = vmatpush1.msra.mxu0 0.0
  %247 = vmatprep.subr.mxu0 0.0
  %248 = vmatpush1.msra.mxu0 0.0
  %249 = vmatprep.subr.mxu0 0.0
  %250 = vmatpush1.msra.mxu0 0.0
  %251 = vmatprep.subr.mxu0 0.0
  %252 = vmatpush1.msra.mxu0 0.0
  %253 = vmatprep.subr.mxu0 0.0
  %254 = vmatpush1.msra.mxu0 0.0
  %255 = vmatprep.subr.mxu0 0.0
  %256 = vmatpush1.msra.mxu0 0.0
  %257 = vmatprep.subr.mxu0 0.0
  %258 = vmatpush1.msra.mxu0 0.0
  %259 = vmatprep.subr.mxu0 0.0
  %260 = vmatpush1.msra.mxu0 0.0
  %261 = vmatprep.subr.mxu0 0.0
  %262 = vmatpush1.msra.mxu0 0.0
  %263 = vmatprep.subr.mxu0 0.0
  %264 = vmatpush1.msra.mxu0 0.0
  %265 = vmatprep.subr.mxu0 0.0
  %266 = vmatpush1.msra.mxu0 0.0
  %267 = vmatprep.subr.mxu0 0.0
  %268 = vmatpush1.msra.mxu0 %v86
  %269 = vmatprep.subr.mxu0 0.0
  %270 = vmatpush1.msra.mxu0 %v85
  %271 = vmatprep.subr.mxu0 0.0
  %272 = vmatpush1.msra.mxu0 %v84
  %273 = vmatprep.subr.mxu0 0.0
  %274 = vmatpush1.msra.mxu0 %v83
  %275 = vmatprep.subr.mxu0 0.0
  %276 = vmatpush2.msra.mxu0 0.0
  %277 = vmatprep.subr.mxu0 0.0
  %278 = vmatpush2.msra.mxu0 0.0
  %279 = vmatprep.subr.mxu0 0.0
  %280 = vmatpush2.msra.mxu0 0.0
  %281 = vmatprep.subr.mxu0 0.0
  %282 = vmatpush2.msra.mxu0 0.0
  %283 = vmatprep.subr.mxu0 0.0
  %284 = vmatpush2.msra.mxu0 0.0
  %285 = vmatprep.subr.mxu0 0.0
  %286 = vmatpush2.msra.mxu0 0.0
  %287 = vmatprep.subr.mxu0 0.0
  %288 = vmatpush2.msra.mxu0 0.0
  %289 = vmatprep.subr.mxu0 0.0
  %290 = vmatpush2.msra.mxu0 0.0
  %291 = vmatprep.subr.mxu0 0.0
  %292 = vmatpush2.msra.mxu0 0.0
  %293 = vmatprep.subr.mxu0 0.0
  %294 = vmatpush2.msra.mxu0 0.0
  %295 = vmatprep.subr.mxu0 0.0
  %296 = vmatpush2.msra.mxu0 0.0
  %297 = vmatprep.subr.mxu0 0.0
  %298 = vmatpush2.msra.mxu0 0.0
  %299 = vmatprep.subr.mxu0 0.0
  %300 = vmatpush2.msra.mxu0 0.0
  %301 = vmatprep.subr.mxu0 0.0
  %302 = vmatpush2.msra.mxu0 0.0
  %303 = vmatprep.subr.mxu0 0.0
  %304 = vmatpush2.msra.mxu0 0.0
  %305 = vmatprep.subr.mxu0 0.0
  %306 = vmatpush2.msra.mxu0 0.0
  %307 = vmatprep.mubr.f32.mxu0 0.0
  %308 = vmatmul.mubr.f32.gmra.mxu0 %v93
  %v309 = vpop.f32.mrf.mxu0
  %v310 = vadd.f32 %v242, %v309
  %v311 = vpop.f32.mrf.mxu0
  %312 = vdwg.mxu0
  %v313 = vlaneseq
  %v314 = vshrl.u32 %v313, 7
  %v315 = vsub.s32 0, %v314
  %v316 = vrot.slane %v25, %v315
  %vm317 = vcmask 64512
  %v319 = vsel %vm317, %v162, 0
  %v322 = vsel %vm317, %v236, 0
  %324 = vmatprep.subr.mxu0 0.0
  %325 = vmatpush1.xpose.msra.mxu0 0.0
  %326 = vmatprep.subr.mxu0 0.0
  %327 = vmatpush1.xpose.msra.mxu0 0.0
  %328 = vmatprep.subr.mxu0 0.0
  %329 = vmatpush1.xpose.msra.mxu0 0.0
  %330 = vmatprep.subr.mxu0 0.0
  %331 = vmatpush1.xpose.msra.mxu0 0.0
  %332 = vmatprep.subr.mxu0 0.0
  %333 = vmatpush1.xpose.msra.mxu0 0.0
  %334 = vmatprep.subr.mxu0 0.0
  %335 = vmatpush1.xpose.msra.mxu0 0.0
  %336 = vmatprep.subr.mxu0 0.0
  %337 = vmatpush1.xpose.msra.mxu0 0.0
  %338 = vmatprep.subr.mxu0 0.0
  %339 = vmatpush1.xpose.msra.mxu0 0.0
  %340 = vmatprep.subr.mxu0 0.0
  %341 = vmatpush1.xpose.msra.mxu0 0.0
  %342 = vmatprep.subr.mxu0 0.0
  %343 = vmatpush1.xpose.msra.mxu0 0.0
  %344 = vmatprep.subr.mxu0 0.0
  %345 = vmatpush1.xpose.msra.mxu0 0.0
  %346 = vmatprep.subr.mxu0 0.0
  %347 = vmatpush1.xpose.msra.mxu0 0.0
  %348 = vmatprep.subr.mxu0 0.0
  %349 = vmatpush1.xpose.msra.mxu0 0.0
  %350 = vmatprep.subr.mxu0 0.0
  %351 = vmatpush1.xpose.msra.mxu0 0.0
  %352 = vmatprep.subr.mxu0 0.0
  %353 = vmatpush1.xpose.msra.mxu0 0.0
  %354 = vmatprep.subr.mxu0 0.0
  %355 = vmatpush1.xpose.msra.mxu0 %v322
  %356 = vmatprep.subr.mxu0 0.0
  %357 = vmatpush2.xpose.msra.mxu0 0.0
  %358 = vmatprep.subr.mxu0 0.0
  %359 = vmatpush2.xpose.msra.mxu0 0.0
  %360 = vmatprep.subr.mxu0 0.0
  %361 = vmatpush2.xpose.msra.mxu0 0.0
  %362 = vmatprep.subr.mxu0 0.0
  %363 = vmatpush2.xpose.msra.mxu0 0.0
  %364 = vmatprep.subr.mxu0 0.0
  %365 = vmatpush2.xpose.msra.mxu0 0.0
  %366 = vmatprep.subr.mxu0 0.0
  %367 = vmatpush2.xpose.msra.mxu0 0.0
  %368 = vmatprep.subr.mxu0 0.0
  %369 = vmatpush2.xpose.msra.mxu0 0.0
  %370 = vmatprep.subr.mxu0 0.0
  %371 = vmatpush2.xpose.msra.mxu0 0.0
  %372 = vmatprep.subr.mxu0 0.0
  %373 = vmatpush2.xpose.msra.mxu0 0.0
  %374 = vmatprep.subr.mxu0 0.0
  %375 = vmatpush2.xpose.msra.mxu0 0.0
  %376 = vmatprep.subr.mxu0 0.0
  %377 = vmatpush2.xpose.msra.mxu0 0.0
  %378 = vmatprep.subr.mxu0 0.0
  %379 = vmatpush2.xpose.msra.mxu0 0.0
  %380 = vmatprep.subr.mxu0 0.0
  %381 = vmatpush2.xpose.msra.mxu0 0.0
  %382 = vmatprep.subr.mxu0 0.0
  %383 = vmatpush2.xpose.msra.mxu0 0.0
  %384 = vmatprep.subr.mxu0 0.0
  %385 = vmatpush2.xpose.msra.mxu0 0.0
  %386 = vmatprep.subr.mxu0 0.0
  %387 = vmatpush2.xpose.msra.mxu0 0.0
  %388 = vmatprep.mubr.f32.mxu0 0.0
  %389 = vmatmul.mubr.f32.gmra.mxu0 %v319
  %v390 = vpop.f32.mrf.mxu0
  %v391 = vadd.f32 %v316, %v390
  %v392 = vpop.f32.mrf.mxu0
  %393 = vdwg.mxu0
  %v394 = vsel %vm317, %v391, -inf
  %395 = vmax.xlane.f32.xlu0 %v394
  %v396 = vpop.xlane.xlu0 %395
  %v397 = vsub.f32 %v391, %v396
  %v398 = vmul.f32 %v397, 1.442695
  %v399 = vpow.pop %v398
  %v400 = vsel %vm317, %v399, 0.0
  %401 = vadd.xlane.f32.xlu0 %v400
  %v402 = vpop.xlane.xlu0 %401
  %v403 = vrcp.pop %v402
  %v404 = vmul.f32 %v399, %v403
  %v406 = vsel %vm317, %v404, 0
  %408 = vmatprep.subr.mxu0 0.0
  %409 = vmatpush1.msra.mxu0 0.0
  %410 = vmatprep.subr.mxu0 0.0
  %411 = vmatpush1.msra.mxu0 0.0
  %412 = vmatprep.subr.mxu0 0.0
  %413 = vmatpush1.msra.mxu0 0.0
  %414 = vmatprep.subr.mxu0 0.0
  %415 = vmatpush1.msra.mxu0 0.0
  %416 = vmatprep.subr.mxu0 0.0
  %417 = vmatpush1.msra.mxu0 0.0
  %418 = vmatprep.subr.mxu0 0.0
  %419 = vmatpush1.msra.mxu0 0.0
  %420 = vmatprep.subr.mxu0 0.0
  %421 = vmatpush1.msra.mxu0 0.0
  %422 = vmatprep.subr.mxu0 0.0
  %423 = vmatpush1.msra.mxu0 0.0
  %424 = vmatprep.subr.mxu0 0.0
  %425 = vmatpush1.msra.mxu0 0.0
  %426 = vmatprep.subr.mxu0 0.0
  %427 = vmatpush1.msra.mxu0 0.0
  %428 = vmatprep.subr.mxu0 0.0
  %429 = vmatpush1.msra.mxu0 0.0
  %430 = vmatprep.subr.mxu0 0.0
  %431 = vmatpush1.msra.mxu0 0.0
  %432 = vmatprep.subr.mxu0 0.0
  %433 = vmatpush1.msra.mxu0 0.0
  %434 = vmatprep.subr.mxu0 0.0
  %435 = vmatpush1.msra.mxu0 0.0
  %436 = vmatprep.subr.mxu0 0.0
  %437 = vmatpush1.msra.mxu0 0.0
  %438 = vmatprep.subr.mxu0 0.0
  %439 = vmatpush1.msra.mxu0 %v310
  %440 = vmatprep.subr.mxu0 0.0
  %441 = vmatpush2.msra.mxu0 0.0
  %442 = vmatprep.subr.mxu0 0.0
  %443 = vmatpush2.msra.mxu0 0.0
  %444 = vmatprep.subr.mxu0 0.0
  %445 = vmatpush2.msra.mxu0 0.0
  %446 = vmatprep.subr.mxu0 0.0
  %447 = vmatpush2.msra.mxu0 0.0
  %448 = vmatprep.subr.mxu0 0.0
  %449 = vmatpush2.msra.mxu0 0.0
  %450 = vmatprep.subr.mxu0 0.0
  %451 = vmatpush2.msra.mxu0 0.0
  %452 = vmatprep.subr.mxu0 0.0
  %453 = vmatpush2.msra.mxu0 0.0
  %454 = vmatprep.subr.mxu0 0.0
  %455 = vmatpush2.msra.mxu0 0.0
  %456 = vmatprep.subr.mxu0 0.0
  %457 = vmatpush2.msra.mxu0 0.0
  %458 = vmatprep.subr.mxu0 0.0
  %459 = vmatpush2.msra.mxu0 0.0
  %460 = vmatprep.subr.mxu0 0.0
  %461 = vmatpush2.msra.mxu0 0.0
  %462 = vmatprep.subr.mxu0 0.0
  %463 = vmatpush2.msra.mxu0 0.0
  %464 = vmatprep.subr.mxu0 0.0
  %465 = vmatpush2.msra.mxu0 0.0
  %466 = vmatprep.subr.mxu0 0.0
  %467 = vmatpush2.msra.mxu0 0.0
  %468 = vmatprep.subr.mxu0 0.0
  %469 = vmatpush2.msra.mxu0 0.0
  %470 = vmatprep.subr.mxu0 0.0
  %471 = vmatpush2.msra.mxu0 0.0
  %472 = vmatprep.mubr.f32.mxu0 0.0
  %473 = vmatmul.mubr.f32.gmra.mxu0 %v406
  %v474 = vpop.f32.mrf.mxu0
  %v475 = vadd.f32 0.0, %v474
  %v476 = vpop.f32.mrf.mxu0
  %477 = vdwg.mxu0
  %v478 = vld [vmem:[%s3] sm:$0xff]
  %v480 = vsel %vm317, %v475, 0
  %482 = vmatprep.subr.mxu0 0.0
  %483 = vmatpush1.msra.mxu0 0.0
  %484 = vmatprep.subr.mxu0 0.0
  %485 = vmatpush1.msra.mxu0 0.0
  %486 = vmatprep.subr.mxu0 0.0
  %487 = vmatpush1.msra.mxu0 0.0
  %488 = vmatprep.subr.mxu0 0.0
  %489 = vmatpush1.msra.mxu0 0.0
  %490 = vmatprep.subr.mxu0 0.0
  %491 = vmatpush1.msra.mxu0 0.0
  %492 = vmatprep.subr.mxu0 0.0
  %493 = vmatpush1.msra.mxu0 0.0
  %494 = vmatprep.subr.mxu0 0.0
  %495 = vmatpush1.msra.mxu0 0.0
  %496 = vmatprep.subr.mxu0 0.0
  %497 = vmatpush1.msra.mxu0 0.0
  %498 = vmatprep.subr.mxu0 0.0
  %499 = vmatpush1.msra.mxu0 0.0
  %500 = vmatprep.subr.mxu0 0.0
  %501 = vmatpush1.msra.mxu0 0.0
  %502 = vmatprep.subr.mxu0 0.0
  %503 = vmatpush1.msra.mxu0 0.0
  %504 = vmatprep.subr.mxu0 0.0
  %505 = vmatpush1.msra.mxu0 0.0
  %506 = vmatprep.subr.mxu0 0.0
  %507 = vmatpush1.msra.mxu0 0.0
  %508 = vmatprep.subr.mxu0 0.0
  %509 = vmatpush1.msra.mxu0 0.0
  %510 = vmatprep.subr.mxu0 0.0
  %511 = vmatpush1.msra.mxu0 0.0
  %512 = vmatprep.subr.mxu0 0.0
  %513 = vmatpush1.msra.mxu0 %v478
  %514 = vmatprep.subr.mxu0 0.0
  %515 = vmatpush2.msra.mxu0 0.0
  %516 = vmatprep.subr.mxu0 0.0
  %517 = vmatpush2.msra.mxu0 0.0
  %518 = vmatprep.subr.mxu0 0.0
  %519 = vmatpush2.msra.mxu0 0.0
  %520 = vmatprep.subr.mxu0 0.0
  %521 = vmatpush2.msra.mxu0 0.0
  %522 = vmatprep.subr.mxu0 0.0
  %523 = vmatpush2.msra.mxu0 0.0
  %524 = vmatprep.subr.mxu0 0.0
  %525 = vmatpush2.msra.mxu0 0.0
  %526 = vmatprep.subr.mxu0 0.0
  %527 = vmatpush2.msra.mxu0 0.0
  %528 = vmatprep.subr.mxu0 0.0
  %529 = vmatpush2.msra.mxu0 0.0
  %530 = vmatprep.subr.mxu0 0.0
  %531 = vmatpush2.msra.mxu0 0.0
  %532 = vmatprep.subr.mxu0 0.0
  %533 = vmatpush2.msra.mxu0 0.0
  %534 = vmatprep.subr.mxu0 0.0
  %535 = vmatpush2.msra.mxu0 0.0
  %536 = vmatprep.subr.mxu0 0.0
  %537 = vmatpush2.msra.mxu0 0.0
  %538 = vmatprep.subr.mxu0 0.0
  %539 = vmatpush2.msra.mxu0 0.0
  %540 = vmatprep.subr.mxu0 0.0
  %541 = vmatpush2.msra.mxu0 0.0
  %542 = vmatprep.subr.mxu0 0.0
  %543 = vmatpush2.msra.mxu0 0.0
  %544 = vmatprep.subr.mxu0 0.0
  %545 = vmatpush2.msra.mxu0 0.0
  %546 = vmatprep.mubr.f32.mxu0 0.0
  %547 = vmatmul.mubr.f32.gmra.mxu0 %v480
  %v548 = vpop.f32.mrf.mxu0
  %v549 = vadd.f32 0.0, %v548
  %v550 = vpop.f32.mrf.mxu0
  %551 = vdwg.mxu0
  %v552 = vlaneseq
  %v553 = vshrl.u32 %v552, 7
  %v554 = vsub.s32 0, %v553
  %v555 = vrot.slane %v70, %v554
  %v556 = vadd.f32 %v555, %v549
  %s557 = scalar_lea.vmem %s2, 40
  %v558 = vld [vmem:[%s557] sm:$0xff]
  %v559 = vld [vmem:[%s557 + $0x8] sm:$0xff]
  %v560 = vld [vmem:[%s557 + $0x10] sm:$0xff]
  %v561 = vld [vmem:[%s557 + $0x18] sm:$0xff]
  %v562 = vld [vmem:[%s557 + $0x20] sm:$0x1]
  %s563 = scalar_lea.vmem %s2, 200
  %v564 = vld [vmem:[%s563] sm:$0xff]
  %v565 = vld [vmem:[%s563 + $0x8] sm:$0xff]
  %v566 = vld [vmem:[%s563 + $0x10] sm:$0xff]
  %v567 = vld [vmem:[%s563 + $0x18] sm:$0xff]
  %v568 = vld [vmem:[%s563 + $0x20] sm:$0x1]
  %s569 = scalar_lea.vmem %s2, 360
  %v570 = vld [vmem:[%s569] sm:$0xff]
  %v571 = vld [vmem:[%s569 + $0x8] sm:$0xff]
  %v572 = vld [vmem:[%s569 + $0x10] sm:$0xff]
  %v573 = vld [vmem:[%s569 + $0x18] sm:$0xff]
  %v574 = vld [vmem:[%s569 + $0x20] sm:$0x1]
  %v575 = vlaneseq
  %v576 = vshrl.u32 %v575, 7
  %v577 = vsub.s32 0, %v576
  %v578 = vrot.slane %v562, %v577
  %579 = vmatprep.subr.mxu0 0.0
  %580 = vmatpush1.msra.mxu0 0.0
  %581 = vmatprep.subr.mxu0 0.0
  %582 = vmatpush1.msra.mxu0 0.0
  %583 = vmatprep.subr.mxu0 0.0
  %584 = vmatpush1.msra.mxu0 0.0
  %585 = vmatprep.subr.mxu0 0.0
  %586 = vmatpush1.msra.mxu0 0.0
  %587 = vmatprep.subr.mxu0 0.0
  %588 = vmatpush1.msra.mxu0 0.0
  %589 = vmatprep.subr.mxu0 0.0
  %590 = vmatpush1.msra.mxu0 0.0
  %591 = vmatprep.subr.mxu0 0.0
  %592 = vmatpush1.msra.mxu0 0.0
  %593 = vmatprep.subr.mxu0 0.0
  %594 = vmatpush1.msra.mxu0 0.0
  %595 = vmatprep.subr.mxu0 0.0
  %596 = vmatpush1.msra.mxu0 0.0
  %597 = vmatprep.subr.mxu0 0.0
  %598 = vmatpush1.msra.mxu0 0.0
  %599 = vmatprep.subr.mxu0 0.0
  %600 = vmatpush1.msra.mxu0 0.0
  %601 = vmatprep.subr.mxu0 0.0
  %602 = vmatpush1.msra.mxu0 0.0
  %603 = vmatprep.subr.mxu0 0.0
  %604 = vmatpush1.msra.mxu0 %v561
  %605 = vmatprep.subr.mxu0 0.0
  %606 = vmatpush1.msra.mxu0 %v560
  %607 = vmatprep.subr.mxu0 0.0
  %608 = vmatpush1.msra.mxu0 %v559
  %609 = vmatprep.subr.mxu0 0.0
  %610 = vmatpush1.msra.mxu0 %v558
  %611 = vmatprep.subr.mxu0 0.0
  %612 = vmatpush2.msra.mxu0 0.0
  %613 = vmatprep.subr.mxu0 0.0
  %614 = vmatpush2.msra.mxu0 0.0
  %615 = vmatprep.subr.mxu0 0.0
  %616 = vmatpush2.msra.mxu0 0.0
  %617 = vmatprep.subr.mxu0 0.0
  %618 = vmatpush2.msra.mxu0 0.0
  %619 = vmatprep.subr.mxu0 0.0
  %620 = vmatpush2.msra.mxu0 0.0
  %621 = vmatprep.subr.mxu0 0.0
  %622 = vmatpush2.msra.mxu0 0.0
  %623 = vmatprep.subr.mxu0 0.0
  %624 = vmatpush2.msra.mxu0 0.0
  %625 = vmatprep.subr.mxu0 0.0
  %626 = vmatpush2.msra.mxu0 0.0
  %627 = vmatprep.subr.mxu0 0.0
  %628 = vmatpush2.msra.mxu0 0.0
  %629 = vmatprep.subr.mxu0 0.0
  %630 = vmatpush2.msra.mxu0 0.0
  %631 = vmatprep.subr.mxu0 0.0
  %632 = vmatpush2.msra.mxu0 0.0
  %633 = vmatprep.subr.mxu0 0.0
  %634 = vmatpush2.msra.mxu0 0.0
  %635 = vmatprep.subr.mxu0 0.0
  %636 = vmatpush2.msra.mxu0 0.0
  %637 = vmatprep.subr.mxu0 0.0
  %638 = vmatpush2.msra.mxu0 0.0
  %639 = vmatprep.subr.mxu0 0.0
  %640 = vmatpush2.msra.mxu0 0.0
  %641 = vmatprep.subr.mxu0 0.0
  %642 = vmatpush2.msra.mxu0 0.0
  %643 = vmatprep.mubr.f32.mxu0 0.0
  %644 = vmatmul.mubr.f32.gmra.mxu0 %v93
  %v645 = vpop.f32.mrf.mxu0
  %v646 = vadd.f32 %v578, %v645
  %v647 = vpop.f32.mrf.mxu0
  %648 = vdwg.mxu0
  %v649 = vlaneseq
  %v650 = vshrl.u32 %v649, 7
  %v651 = vsub.s32 0, %v650
  %v652 = vrot.slane %v568, %v651
  %653 = vmatprep.subr.mxu0 0.0
  %654 = vmatpush1.msra.mxu0 0.0
  %655 = vmatprep.subr.mxu0 0.0
  %656 = vmatpush1.msra.mxu0 0.0
  %657 = vmatprep.subr.mxu0 0.0
  %658 = vmatpush1.msra.mxu0 0.0
  %659 = vmatprep.subr.mxu0 0.0
  %660 = vmatpush1.msra.mxu0 0.0
  %661 = vmatprep.subr.mxu0 0.0
  %662 = vmatpush1.msra.mxu0 0.0
  %663 = vmatprep.subr.mxu0 0.0
  %664 = vmatpush1.msra.mxu0 0.0
  %665 = vmatprep.subr.mxu0 0.0
  %666 = vmatpush1.msra.mxu0 0.0
  %667 = vmatprep.subr.mxu0 0.0
  %668 = vmatpush1.msra.mxu0 0.0
  %669 = vmatprep.subr.mxu0 0.0
  %670 = vmatpush1.msra.mxu0 0.0
  %671 = vmatprep.subr.mxu0 0.0
  %672 = vmatpush1.msra.mxu0 0.0
  %673 = vmatprep.subr.mxu0 0.0
  %674 = vmatpush1.msra.mxu0 0.0
  %675 = vmatprep.subr.mxu0 0.0
  %676 = vmatpush1.msra.mxu0 0.0
  %677 = vmatprep.subr.mxu0 0.0
  %678 = vmatpush1.msra.mxu0 %v567
  %679 = vmatprep.subr.mxu0 0.0
  %680 = vmatpush1.msra.mxu0 %v566
  %681 = vmatprep.subr.mxu0 0.0
  %682 = vmatpush1.msra.mxu0 %v565
  %683 = vmatprep.subr.mxu0 0.0
  %684 = vmatpush1.msra.mxu0 %v564
  %685 = vmatprep.subr.mxu0 0.0
  %686 = vmatpush2.msra.mxu0 0.0
  %687 = vmatprep.subr.mxu0 0.0
  %688 = vmatpush2.msra.mxu0 0.0
  %689 = vmatprep.subr.mxu0 0.0
  %690 = vmatpush2.msra.mxu0 0.0
  %691 = vmatprep.subr.mxu0 0.0
  %692 = vmatpush2.msra.mxu0 0.0
  %693 = vmatprep.subr.mxu0 0.0
  %694 = vmatpush2.msra.mxu0 0.0
  %695 = vmatprep.subr.mxu0 0.0
  %696 = vmatpush2.msra.mxu0 0.0
  %697 = vmatprep.subr.mxu0 0.0
  %698 = vmatpush2.msra.mxu0 0.0
  %699 = vmatprep.subr.mxu0 0.0
  %700 = vmatpush2.msra.mxu0 0.0
  %701 = vmatprep.subr.mxu0 0.0
  %702 = vmatpush2.msra.mxu0 0.0
  %703 = vmatprep.subr.mxu0 0.0
  %704 = vmatpush2.msra.mxu0 0.0
  %705 = vmatprep.subr.mxu0 0.0
  %706 = vmatpush2.msra.mxu0 0.0
  %707 = vmatprep.subr.mxu0 0.0
  %708 = vmatpush2.msra.mxu0 0.0
  %709 = vmatprep.subr.mxu0 0.0
  %710 = vmatpush2.msra.mxu0 0.0
  %711 = vmatprep.subr.mxu0 0.0
  %712 = vmatpush2.msra.mxu0 0.0
  %713 = vmatprep.subr.mxu0 0.0
  %714 = vmatpush2.msra.mxu0 0.0
  %715 = vmatprep.subr.mxu0 0.0
  %716 = vmatpush2.msra.mxu0 0.0
  %717 = vmatprep.mubr.f32.mxu0 0.0
  %718 = vmatmul.mubr.f32.gmra.mxu0 %v93
  %v719 = vpop.f32.mrf.mxu0
  %v720 = vadd.f32 %v652, %v719
  %v721 = vpop.f32.mrf.mxu0
  %722 = vdwg.mxu0
  %v723 = vlaneseq
  %v724 = vshrl.u32 %v723, 7
  %v725 = vsub.s32 0, %v724
  %v726 = vrot.slane %v574, %v725
  %727 = vmatprep.subr.mxu0 0.0
  %728 = vmatpush1.msra.mxu0 0.0
  %729 = vmatprep.subr.mxu0 0.0
  %730 = vmatpush1.msra.mxu0 0.0
  %731 = vmatprep.subr.mxu0 0.0
  %732 = vmatpush1.msra.mxu0 0.0
  %733 = vmatprep.subr.mxu0 0.0
  %734 = vmatpush1.msra.mxu0 0.0
  %735 = vmatprep.subr.mxu0 0.0
  %736 = vmatpush1.msra.mxu0 0.0
  %737 = vmatprep.subr.mxu0 0.0
  %738 = vmatpush1.msra.mxu0 0.0
  %739 = vmatprep.subr.mxu0 0.0
  %740 = vmatpush1.msra.mxu0 0.0
  %741 = vmatprep.subr.mxu0 0.0
  %742 = vmatpush1.msra.mxu0 0.0
  %743 = vmatprep.subr.mxu0 0.0
  %744 = vmatpush1.msra.mxu0 0.0
  %745 = vmatprep.subr.mxu0 0.0
  %746 = vmatpush1.msra.mxu0 0.0
  %747 = vmatprep.subr.mxu0 0.0
  %748 = vmatpush1.msra.mxu0 0.0
  %749 = vmatprep.subr.mxu0 0.0
  %750 = vmatpush1.msra.mxu0 0.0
  %751 = vmatprep.subr.mxu0 0.0
  %752 = vmatpush1.msra.mxu0 %v573
  %753 = vmatprep.subr.mxu0 0.0
  %754 = vmatpush1.msra.mxu0 %v572
  %755 = vmatprep.subr.mxu0 0.0
  %756 = vmatpush1.msra.mxu0 %v571
  %757 = vmatprep.subr.mxu0 0.0
  %758 = vmatpush1.msra.mxu0 %v570
  %759 = vmatprep.subr.mxu0 0.0
  %760 = vmatpush2.msra.mxu0 0.0
  %761 = vmatprep.subr.mxu0 0.0
  %762 = vmatpush2.msra.mxu0 0.0
  %763 = vmatprep.subr.mxu0 0.0
  %764 = vmatpush2.msra.mxu0 0.0
  %765 = vmatprep.subr.mxu0 0.0
  %766 = vmatpush2.msra.mxu0 0.0
  %767 = vmatprep.subr.mxu0 0.0
  %768 = vmatpush2.msra.mxu0 0.0
  %769 = vmatprep.subr.mxu0 0.0
  %770 = vmatpush2.msra.mxu0 0.0
  %771 = vmatprep.subr.mxu0 0.0
  %772 = vmatpush2.msra.mxu0 0.0
  %773 = vmatprep.subr.mxu0 0.0
  %774 = vmatpush2.msra.mxu0 0.0
  %775 = vmatprep.subr.mxu0 0.0
  %776 = vmatpush2.msra.mxu0 0.0
  %777 = vmatprep.subr.mxu0 0.0
  %778 = vmatpush2.msra.mxu0 0.0
  %779 = vmatprep.subr.mxu0 0.0
  %780 = vmatpush2.msra.mxu0 0.0
  %781 = vmatprep.subr.mxu0 0.0
  %782 = vmatpush2.msra.mxu0 0.0
  %783 = vmatprep.subr.mxu0 0.0
  %784 = vmatpush2.msra.mxu0 0.0
  %785 = vmatprep.subr.mxu0 0.0
  %786 = vmatpush2.msra.mxu0 0.0
  %787 = vmatprep.subr.mxu0 0.0
  %788 = vmatpush2.msra.mxu0 0.0
  %789 = vmatprep.subr.mxu0 0.0
  %790 = vmatpush2.msra.mxu0 0.0
  %791 = vmatprep.mubr.f32.mxu0 0.0
  %792 = vmatmul.mubr.f32.gmra.mxu0 %v93
  %v793 = vpop.f32.mrf.mxu0
  %v794 = vadd.f32 %v726, %v793
  %v795 = vpop.f32.mrf.mxu0
  %796 = vdwg.mxu0
  %v798 = vsel %vm317, %v646, 0
  %v801 = vsel %vm317, %v720, 0
  %803 = vmatprep.subr.mxu0 0.0
  %804 = vmatpush1.xpose.msra.mxu0 0.0
  %805 = vmatprep.subr.mxu0 0.0
  %806 = vmatpush1.xpose.msra.mxu0 0.0
  %807 = vmatprep.subr.mxu0 0.0
  %808 = vmatpush1.xpose.msra.mxu0 0.0
  %809 = vmatprep.subr.mxu0 0.0
  %810 = vmatpush1.xpose.msra.mxu0 0.0
  %811 = vmatprep.subr.mxu0 0.0
  %812 = vmatpush1.xpose.msra.mxu0 0.0
  %813 = vmatprep.subr.mxu0 0.0
  %814 = vmatpush1.xpose.msra.mxu0 0.0
  %815 = vmatprep.subr.mxu0 0.0
  %816 = vmatpush1.xpose.msra.mxu0 0.0
  %817 = vmatprep.subr.mxu0 0.0
  %818 = vmatpush1.xpose.msra.mxu0 0.0
  %819 = vmatprep.subr.mxu0 0.0
  %820 = vmatpush1.xpose.msra.mxu0 0.0
  %821 = vmatprep.subr.mxu0 0.0
  %822 = vmatpush1.xpose.msra.mxu0 0.0
  %823 = vmatprep.subr.mxu0 0.0
  %824 = vmatpush1.xpose.msra.mxu0 0.0
  %825 = vmatprep.subr.mxu0 0.0
  %826 = vmatpush1.xpose.msra.mxu0 0.0
  %827 = vmatprep.subr.mxu0 0.0
  %828 = vmatpush1.xpose.msra.mxu0 0.0
  %829 = vmatprep.subr.mxu0 0.0
  %830 = vmatpush1.xpose.msra.mxu0 0.0
  %831 = vmatprep.subr.mxu0 0.0
  %832 = vmatpush1.xpose.msra.mxu0 0.0
  %833 = vmatprep.subr.mxu0 0.0
  %834 = vmatpush1.xpose.msra.mxu0 %v801
  %835 = vmatprep.subr.mxu0 0.0
  %836 = vmatpush2.xpose.msra.mxu0 0.0
  %837 = vmatprep.subr.mxu0 0.0
  %838 = vmatpush2.xpose.msra.mxu0 0.0
  %839 = vmatprep.subr.mxu0 0.0
  %840 = vmatpush2.xpose.msra.mxu0 0.0
  %841 = vmatprep.subr.mxu0 0.0
  %842 = vmatpush2.xpose.msra.mxu0 0.0
  %843 = vmatprep.subr.mxu0 0.0
  %844 = vmatpush2.xpose.msra.mxu0 0.0
  %845 = vmatprep.subr.mxu0 0.0
  %846 = vmatpush2.xpose.msra.mxu0 0.0
  %847 = vmatprep.subr.mxu0 0.0
  %848 = vmatpush2.xpose.msra.mxu0 0.0
  %849 = vmatprep.subr.mxu0 0.0
  %850 = vmatpush2.xpose.msra.mxu0 0.0
  %851 = vmatprep.subr.mxu0 0.0
  %852 = vmatpush2.xpose.msra.mxu0 0.0
  %853 = vmatprep.subr.mxu0 0.0
  %854 = vmatpush2.xpose.msra.mxu0 0.0
  %855 = vmatprep.subr.mxu0 0.0
  %856 = vmatpush2.xpose.msra.mxu0 0.0
  %857 = vmatprep.subr.mxu0 0.0
  %858 = vmatpush2.xpose.msra.mxu0 0.0
  %859 = vmatprep.subr.mxu0 0.0
  %860 = vmatpush2.xpose.msra.mxu0 0.0
  %861 = vmatprep.subr.mxu0 0.0
  %862 = vmatpush2.xpose.msra.mxu0 0.0
  %863 = vmatprep.subr.mxu0 0.0
  %864 = vmatpush2.xpose.msra.mxu0 0.0
  %865 = vmatprep.subr.mxu0 0.0
  %866 = vmatpush2.xpose.msra.mxu0 0.0
  %867 = vmatprep.mubr.f32.mxu0 0.0
  %868 = vmatmul.mubr.f32.gmra.mxu0 %v798
  %v869 = vpop.f32.mrf.mxu0
  %v870 = vadd.f32 %v316, %v869
  %v871 = vpop.f32.mrf.mxu0
  %872 = vdwg.mxu0
  %v873 = vsel %vm317, %v870, -inf
  %874 = vmax.xlane.f32.xlu0 %v873
  %v875 = vpop.xlane.xlu0 %874
  %v876 = vsub.f32 %v870, %v875
  %v877 = vmul.f32 %v876, 1.442695
  %v878 = vpow.pop %v877
  %v879 = vsel %vm317, %v878, 0.0
  %880 = vadd.xlane.f32.xlu0 %v879
  %v881 = vpop.xlane.xlu0 %880
  %v882 = vrcp.pop %v881
  %v883 = vmul.f32 %v878, %v882
  %v885 = vsel %vm317, %v883, 0
  %887 = vmatprep.subr.mxu0 0.0
  %888 = vmatpush1.msra.mxu0 0.0
  %889 = vmatprep.subr.mxu0 0.0
  %890 = vmatpush1.msra.mxu0 0.0
  %891 = vmatprep.subr.mxu0 0.0
  %892 = vmatpush1.msra.mxu0 0.0
  %893 = vmatprep.subr.mxu0 0.0
  %894 = vmatpush1.msra.mxu0 0.0
  %895 = vmatprep.subr.mxu0 0.0
  %896 = vmatpush1.msra.mxu0 0.0
  %897 = vmatprep.subr.mxu0 0.0
  %898 = vmatpush1.msra.mxu0 0.0
  %899 = vmatprep.subr.mxu0 0.0
  %900 = vmatpush1.msra.mxu0 0.0
  %901 = vmatprep.subr.mxu0 0.0
  %902 = vmatpush1.msra.mxu0 0.0
  %903 = vmatprep.subr.mxu0 0.0
  %904 = vmatpush1.msra.mxu0 0.0
  %905 = vmatprep.subr.mxu0 0.0
  %906 = vmatpush1.msra.mxu0 0.0
  %907 = vmatprep.subr.mxu0 0.0
  %908 = vmatpush1.msra.mxu0 0.0
  %909 = vmatprep.subr.mxu0 0.0
  %910 = vmatpush1.msra.mxu0 0.0
  %911 = vmatprep.subr.mxu0 0.0
  %912 = vmatpush1.msra.mxu0 0.0
  %913 = vmatprep.subr.mxu0 0.0
  %914 = vmatpush1.msra.mxu0 0.0
  %915 = vmatprep.subr.mxu0 0.0
  %916 = vmatpush1.msra.mxu0 0.0
  %917 = vmatprep.subr.mxu0 0.0
  %918 = vmatpush1.msra.mxu0 %v794
  %919 = vmatprep.subr.mxu0 0.0
  %920 = vmatpush2.msra.mxu0 0.0
  %921 = vmatprep.subr.mxu0 0.0
  %922 = vmatpush2.msra.mxu0 0.0
  %923 = vmatprep.subr.mxu0 0.0
  %924 = vmatpush2.msra.mxu0 0.0
  %925 = vmatprep.subr.mxu0 0.0
  %926 = vmatpush2.msra.mxu0 0.0
  %927 = vmatprep.subr.mxu0 0.0
  %928 = vmatpush2.msra.mxu0 0.0
  %929 = vmatprep.subr.mxu0 0.0
  %930 = vmatpush2.msra.mxu0 0.0
  %931 = vmatprep.subr.mxu0 0.0
  %932 = vmatpush2.msra.mxu0 0.0
  %933 = vmatprep.subr.mxu0 0.0
  %934 = vmatpush2.msra.mxu0 0.0
  %935 = vmatprep.subr.mxu0 0.0
  %936 = vmatpush2.msra.mxu0 0.0
  %937 = vmatprep.subr.mxu0 0.0
  %938 = vmatpush2.msra.mxu0 0.0
  %939 = vmatprep.subr.mxu0 0.0
  %940 = vmatpush2.msra.mxu0 0.0
  %941 = vmatprep.subr.mxu0 0.0
  %942 = vmatpush2.msra.mxu0 0.0
  %943 = vmatprep.subr.mxu0 0.0
  %944 = vmatpush2.msra.mxu0 0.0
  %945 = vmatprep.subr.mxu0 0.0
  %946 = vmatpush2.msra.mxu0 0.0
  %947 = vmatprep.subr.mxu0 0.0
  %948 = vmatpush2.msra.mxu0 0.0
  %949 = vmatprep.subr.mxu0 0.0
  %950 = vmatpush2.msra.mxu0 0.0
  %951 = vmatprep.mubr.f32.mxu0 0.0
  %952 = vmatmul.mubr.f32.gmra.mxu0 %v885
  %v953 = vpop.f32.mrf.mxu0
  %v954 = vadd.f32 0.0, %v953
  %v955 = vpop.f32.mrf.mxu0
  %956 = vdwg.mxu0
  %v957 = vld [vmem:[%s3 + $0x8] sm:$0xff]
  %v959 = vsel %vm317, %v954, 0
  %961 = vmatprep.subr.mxu0 0.0
  %962 = vmatpush1.msra.mxu0 0.0
  %963 = vmatprep.subr.mxu0 0.0
  %964 = vmatpush1.msra.mxu0 0.0
  %965 = vmatprep.subr.mxu0 0.0
  %966 = vmatpush1.msra.mxu0 0.0
  %967 = vmatprep.subr.mxu0 0.0
  %968 = vmatpush1.msra.mxu0 0.0
  %969 = vmatprep.subr.mxu0 0.0
  %970 = vmatpush1.msra.mxu0 0.0
  %971 = vmatprep.subr.mxu0 0.0
  %972 = vmatpush1.msra.mxu0 0.0
  %973 = vmatprep.subr.mxu0 0.0
  %974 = vmatpush1.msra.mxu0 0.0
  %975 = vmatprep.subr.mxu0 0.0
  %976 = vmatpush1.msra.mxu0 0.0
  %977 = vmatprep.subr.mxu0 0.0
  %978 = vmatpush1.msra.mxu0 0.0
  %979 = vmatprep.subr.mxu0 0.0
  %980 = vmatpush1.msra.mxu0 0.0
  %981 = vmatprep.subr.mxu0 0.0
  %982 = vmatpush1.msra.mxu0 0.0
  %983 = vmatprep.subr.mxu0 0.0
  %984 = vmatpush1.msra.mxu0 0.0
  %985 = vmatprep.subr.mxu0 0.0
  %986 = vmatpush1.msra.mxu0 0.0
  %987 = vmatprep.subr.mxu0 0.0
  %988 = vmatpush1.msra.mxu0 0.0
  %989 = vmatprep.subr.mxu0 0.0
  %990 = vmatpush1.msra.mxu0 0.0
  %991 = vmatprep.subr.mxu0 0.0
  %992 = vmatpush1.msra.mxu0 %v957
  %993 = vmatprep.subr.mxu0 0.0
  %994 = vmatpush2.msra.mxu0 0.0
  %995 = vmatprep.subr.mxu0 0.0
  %996 = vmatpush2.msra.mxu0 0.0
  %997 = vmatprep.subr.mxu0 0.0
  %998 = vmatpush2.msra.mxu0 0.0
  %999 = vmatprep.subr.mxu0 0.0
  %1000 = vmatpush2.msra.mxu0 0.0
  %1001 = vmatprep.subr.mxu0 0.0
  %1002 = vmatpush2.msra.mxu0 0.0
  %1003 = vmatprep.subr.mxu0 0.0
  %1004 = vmatpush2.msra.mxu0 0.0
  %1005 = vmatprep.subr.mxu0 0.0
  %1006 = vmatpush2.msra.mxu0 0.0
  %1007 = vmatprep.subr.mxu0 0.0
  %1008 = vmatpush2.msra.mxu0 0.0
  %1009 = vmatprep.subr.mxu0 0.0
  %1010 = vmatpush2.msra.mxu0 0.0
  %1011 = vmatprep.subr.mxu0 0.0
  %1012 = vmatpush2.msra.mxu0 0.0
  %1013 = vmatprep.subr.mxu0 0.0
  %1014 = vmatpush2.msra.mxu0 0.0
  %1015 = vmatprep.subr.mxu0 0.0
  %1016 = vmatpush2.msra.mxu0 0.0
  %1017 = vmatprep.subr.mxu0 0.0
  %1018 = vmatpush2.msra.mxu0 0.0
  %1019 = vmatprep.subr.mxu0 0.0
  %1020 = vmatpush2.msra.mxu0 0.0
  %1021 = vmatprep.subr.mxu0 0.0
  %1022 = vmatpush2.msra.mxu0 0.0
  %1023 = vmatprep.subr.mxu0 0.0
  %1024 = vmatpush2.msra.mxu0 0.0
  %1025 = vmatprep.mubr.f32.mxu0 0.0
  %1026 = vmatmul.mubr.f32.gmra.mxu0 %v959
  %v1027 = vpop.f32.mrf.mxu0
  %v1028 = vadd.f32 0.0, %v1027
  %v1029 = vpop.f32.mrf.mxu0
  %1030 = vdwg.mxu0
  %v1031 = vadd.f32 %v556, %v1028
  %s1032 = scalar_lea.vmem %s2, 80
  %v1033 = vld [vmem:[%s1032] sm:$0xff]
  %v1034 = vld [vmem:[%s1032 + $0x8] sm:$0xff]
  %v1035 = vld [vmem:[%s1032 + $0x10] sm:$0xff]
  %v1036 = vld [vmem:[%s1032 + $0x18] sm:$0xff]
  %v1037 = vld [vmem:[%s1032 + $0x20] sm:$0x1]
  %s1038 = scalar_lea.vmem %s2, 240
  %v1039 = vld [vmem:[%s1038] sm:$0xff]
  %v1040 = vld [vmem:[%s1038 + $0x8] sm:$0xff]
  %v1041 = vld [vmem:[%s1038 + $0x10] sm:$0xff]
  %v1042 = vld [vmem:[%s1038 + $0x18] sm:$0xff]
  %v1043 = vld [vmem:[%s1038 + $0x20] sm:$0x1]
  %s1044 = scalar_lea.vmem %s2, 400
  %v1045 = vld [vmem:[%s1044] sm:$0xff]
  %v1046 = vld [vmem:[%s1044 + $0x8] sm:$0xff]
  %v1047 = vld [vmem:[%s1044 + $0x10] sm:$0xff]
  %v1048 = vld [vmem:[%s1044 + $0x18] sm:$0xff]
  %v1049 = vld [vmem:[%s1044 + $0x20] sm:$0x1]
  %v1050 = vlaneseq
  %v1051 = vshrl.u32 %v1050, 7
  %v1052 = vsub.s32 0, %v1051
  %v1053 = vrot.slane %v1037, %v1052
  %1054 = vmatprep.subr.mxu0 0.0
  %1055 = vmatpush1.msra.mxu0 0.0
  %1056 = vmatprep.subr.mxu0 0.0
  %1057 = vmatpush1.msra.mxu0 0.0
  %1058 = vmatprep.subr.mxu0 0.0
  %1059 = vmatpush1.msra.mxu0 0.0
  %1060 = vmatprep.subr.mxu0 0.0
  %1061 = vmatpush1.msra.mxu0 0.0
  %1062 = vmatprep.subr.mxu0 0.0
  %1063 = vmatpush1.msra.mxu0 0.0
  %1064 = vmatprep.subr.mxu0 0.0
  %1065 = vmatpush1.msra.mxu0 0.0
  %1066 = vmatprep.subr.mxu0 0.0
  %1067 = vmatpush1.msra.mxu0 0.0
  %1068 = vmatprep.subr.mxu0 0.0
  %1069 = vmatpush1.msra.mxu0 0.0
  %1070 = vmatprep.subr.mxu0 0.0
  %1071 = vmatpush1.msra.mxu0 0.0
  %1072 = vmatprep.subr.mxu0 0.0
  %1073 = vmatpush1.msra.mxu0 0.0
  %1074 = vmatprep.subr.mxu0 0.0
  %1075 = vmatpush1.msra.mxu0 0.0
  %1076 = vmatprep.subr.mxu0 0.0
  %1077 = vmatpush1.msra.mxu0 0.0
  %1078 = vmatprep.subr.mxu0 0.0
  %1079 = vmatpush1.msra.mxu0 %v1036
  %1080 = vmatprep.subr.mxu0 0.0
  %1081 = vmatpush1.msra.mxu0 %v1035
  %1082 = vmatprep.subr.mxu0 0.0
  %1083 = vmatpush1.msra.mxu0 %v1034
  %1084 = vmatprep.subr.mxu0 0.0
  %1085 = vmatpush1.msra.mxu0 %v1033
  %1086 = vmatprep.subr.mxu0 0.0
  %1087 = vmatpush2.msra.mxu0 0.0
  %1088 = vmatprep.subr.mxu0 0.0
  %1089 = vmatpush2.msra.mxu0 0.0
  %1090 = vmatprep.subr.mxu0 0.0
  %1091 = vmatpush2.msra.mxu0 0.0
  %1092 = vmatprep.subr.mxu0 0.0
  %1093 = vmatpush2.msra.mxu0 0.0
  %1094 = vmatprep.subr.mxu0 0.0
  %1095 = vmatpush2.msra.mxu0 0.0
  %1096 = vmatprep.subr.mxu0 0.0
  %1097 = vmatpush2.msra.mxu0 0.0
  %1098 = vmatprep.subr.mxu0 0.0
  %1099 = vmatpush2.msra.mxu0 0.0
  %1100 = vmatprep.subr.mxu0 0.0
  %1101 = vmatpush2.msra.mxu0 0.0
  %1102 = vmatprep.subr.mxu0 0.0
  %1103 = vmatpush2.msra.mxu0 0.0
  %1104 = vmatprep.subr.mxu0 0.0
  %1105 = vmatpush2.msra.mxu0 0.0
  %1106 = vmatprep.subr.mxu0 0.0
  %1107 = vmatpush2.msra.mxu0 0.0
  %1108 = vmatprep.subr.mxu0 0.0
  %1109 = vmatpush2.msra.mxu0 0.0
  %1110 = vmatprep.subr.mxu0 0.0
  %1111 = vmatpush2.msra.mxu0 0.0
  %1112 = vmatprep.subr.mxu0 0.0
  %1113 = vmatpush2.msra.mxu0 0.0
  %1114 = vmatprep.subr.mxu0 0.0
  %1115 = vmatpush2.msra.mxu0 0.0
  %1116 = vmatprep.subr.mxu0 0.0
  %1117 = vmatpush2.msra.mxu0 0.0
  %1118 = vmatprep.mubr.f32.mxu0 0.0
  %1119 = vmatmul.mubr.f32.gmra.mxu0 %v93
  %v1120 = vpop.f32.mrf.mxu0
  %v1121 = vadd.f32 %v1053, %v1120
  %v1122 = vpop.f32.mrf.mxu0
  %1123 = vdwg.mxu0
  %v1124 = vlaneseq
  %v1125 = vshrl.u32 %v1124, 7
  %v1126 = vsub.s32 0, %v1125
  %v1127 = vrot.slane %v1043, %v1126
  %1128 = vmatprep.subr.mxu0 0.0
  %1129 = vmatpush1.msra.mxu0 0.0
  %1130 = vmatprep.subr.mxu0 0.0
  %1131 = vmatpush1.msra.mxu0 0.0
  %1132 = vmatprep.subr.mxu0 0.0
  %1133 = vmatpush1.msra.mxu0 0.0
  %1134 = vmatprep.subr.mxu0 0.0
  %1135 = vmatpush1.msra.mxu0 0.0
  %1136 = vmatprep.subr.mxu0 0.0
  %1137 = vmatpush1.msra.mxu0 0.0
  %1138 = vmatprep.subr.mxu0 0.0
  %1139 = vmatpush1.msra.mxu0 0.0
  %1140 = vmatprep.subr.mxu0 0.0
  %1141 = vmatpush1.msra.mxu0 0.0
  %1142 = vmatprep.subr.mxu0 0.0
  %1143 = vmatpush1.msra.mxu0 0.0
  %1144 = vmatprep.subr.mxu0 0.0
  %1145 = vmatpush1.msra.mxu0 0.0
  %1146 = vmatprep.subr.mxu0 0.0
  %1147 = vmatpush1.msra.mxu0 0.0
  %1148 = vmatprep.subr.mxu0 0.0
  %1149 = vmatpush1.msra.mxu0 0.0
  %1150 = vmatprep.subr.mxu0 0.0
  %1151 = vmatpush1.msra.mxu0 0.0
  %1152 = vmatprep.subr.mxu0 0.0
  %1153 = vmatpush1.msra.mxu0 %v1042
  %1154 = vmatprep.subr.mxu0 0.0
  %1155 = vmatpush1.msra.mxu0 %v1041
  %1156 = vmatprep.subr.mxu0 0.0
  %1157 = vmatpush1.msra.mxu0 %v1040
  %1158 = vmatprep.subr.mxu0 0.0
  %1159 = vmatpush1.msra.mxu0 %v1039
  %1160 = vmatprep.subr.mxu0 0.0
  %1161 = vmatpush2.msra.mxu0 0.0
  %1162 = vmatprep.subr.mxu0 0.0
  %1163 = vmatpush2.msra.mxu0 0.0
  %1164 = vmatprep.subr.mxu0 0.0
  %1165 = vmatpush2.msra.mxu0 0.0
  %1166 = vmatprep.subr.mxu0 0.0
  %1167 = vmatpush2.msra.mxu0 0.0
  %1168 = vmatprep.subr.mxu0 0.0
  %1169 = vmatpush2.msra.mxu0 0.0
  %1170 = vmatprep.subr.mxu0 0.0
  %1171 = vmatpush2.msra.mxu0 0.0
  %1172 = vmatprep.subr.mxu0 0.0
  %1173 = vmatpush2.msra.mxu0 0.0
  %1174 = vmatprep.subr.mxu0 0.0
  %1175 = vmatpush2.msra.mxu0 0.0
  %1176 = vmatprep.subr.mxu0 0.0
  %1177 = vmatpush2.msra.mxu0 0.0
  %1178 = vmatprep.subr.mxu0 0.0
  %1179 = vmatpush2.msra.mxu0 0.0
  %1180 = vmatprep.subr.mxu0 0.0
  %1181 = vmatpush2.msra.mxu0 0.0
  %1182 = vmatprep.subr.mxu0 0.0
  %1183 = vmatpush2.msra.mxu0 0.0
  %1184 = vmatprep.subr.mxu0 0.0
  %1185 = vmatpush2.msra.mxu0 0.0
  %1186 = vmatprep.subr.mxu0 0.0
  %1187 = vmatpush2.msra.mxu0 0.0
  %1188 = vmatprep.subr.mxu0 0.0
  %1189 = vmatpush2.msra.mxu0 0.0
  %1190 = vmatprep.subr.mxu0 0.0
  %1191 = vmatpush2.msra.mxu0 0.0
  %1192 = vmatprep.mubr.f32.mxu0 0.0
  %1193 = vmatmul.mubr.f32.gmra.mxu0 %v93
  %v1194 = vpop.f32.mrf.mxu0
  %v1195 = vadd.f32 %v1127, %v1194
  %v1196 = vpop.f32.mrf.mxu0
  %1197 = vdwg.mxu0
  %v1198 = vlaneseq
  %v1199 = vshrl.u32 %v1198, 7
  %v1200 = vsub.s32 0, %v1199
  %v1201 = vrot.slane %v1049, %v1200
  %1202 = vmatprep.subr.mxu0 0.0
  %1203 = vmatpush1.msra.mxu0 0.0
  %1204 = vmatprep.subr.mxu0 0.0
  %1205 = vmatpush1.msra.mxu0 0.0
  %1206 = vmatprep.subr.mxu0 0.0
  %1207 = vmatpush1.msra.mxu0 0.0
  %1208 = vmatprep.subr.mxu0 0.0
  %1209 = vmatpush1.msra.mxu0 0.0
  %1210 = vmatprep.subr.mxu0 0.0
  %1211 = vmatpush1.msra.mxu0 0.0
  %1212 = vmatprep.subr.mxu0 0.0
  %1213 = vmatpush1.msra.mxu0 0.0
  %1214 = vmatprep.subr.mxu0 0.0
  %1215 = vmatpush1.msra.mxu0 0.0
  %1216 = vmatprep.subr.mxu0 0.0
  %1217 = vmatpush1.msra.mxu0 0.0
  %1218 = vmatprep.subr.mxu0 0.0
  %1219 = vmatpush1.msra.mxu0 0.0
  %1220 = vmatprep.subr.mxu0 0.0
  %1221 = vmatpush1.msra.mxu0 0.0
  %1222 = vmatprep.subr.mxu0 0.0
  %1223 = vmatpush1.msra.mxu0 0.0
  %1224 = vmatprep.subr.mxu0 0.0
  %1225 = vmatpush1.msra.mxu0 0.0
  %1226 = vmatprep.subr.mxu0 0.0
  %1227 = vmatpush1.msra.mxu0 %v1048
  %1228 = vmatprep.subr.mxu0 0.0
  %1229 = vmatpush1.msra.mxu0 %v1047
  %1230 = vmatprep.subr.mxu0 0.0
  %1231 = vmatpush1.msra.mxu0 %v1046
  %1232 = vmatprep.subr.mxu0 0.0
  %1233 = vmatpush1.msra.mxu0 %v1045
  %1234 = vmatprep.subr.mxu0 0.0
  %1235 = vmatpush2.msra.mxu0 0.0
  %1236 = vmatprep.subr.mxu0 0.0
  %1237 = vmatpush2.msra.mxu0 0.0
  %1238 = vmatprep.subr.mxu0 0.0
  %1239 = vmatpush2.msra.mxu0 0.0
  %1240 = vmatprep.subr.mxu0 0.0
  %1241 = vmatpush2.msra.mxu0 0.0
  %1242 = vmatprep.subr.mxu0 0.0
  %1243 = vmatpush2.msra.mxu0 0.0
  %1244 = vmatprep.subr.mxu0 0.0
  %1245 = vmatpush2.msra.mxu0 0.0
  %1246 = vmatprep.subr.mxu0 0.0
  %1247 = vmatpush2.msra.mxu0 0.0
  %1248 = vmatprep.subr.mxu0 0.0
  %1249 = vmatpush2.msra.mxu0 0.0
  %1250 = vmatprep.subr.mxu0 0.0
  %1251 = vmatpush2.msra.mxu0 0.0
  %1252 = vmatprep.subr.mxu0 0.0
  %1253 = vmatpush2.msra.mxu0 0.0
  %1254 = vmatprep.subr.mxu0 0.0
  %1255 = vmatpush2.msra.mxu0 0.0
  %1256 = vmatprep.subr.mxu0 0.0
  %1257 = vmatpush2.msra.mxu0 0.0
  %1258 = vmatprep.subr.mxu0 0.0
  %1259 = vmatpush2.msra.mxu0 0.0
  %1260 = vmatprep.subr.mxu0 0.0
  %1261 = vmatpush2.msra.mxu0 0.0
  %1262 = vmatprep.subr.mxu0 0.0
  %1263 = vmatpush2.msra.mxu0 0.0
  %1264 = vmatprep.subr.mxu0 0.0
  %1265 = vmatpush2.msra.mxu0 0.0
  %1266 = vmatprep.mubr.f32.mxu0 0.0
  %1267 = vmatmul.mubr.f32.gmra.mxu0 %v93
  %v1268 = vpop.f32.mrf.mxu0
  %v1269 = vadd.f32 %v1201, %v1268
  %v1270 = vpop.f32.mrf.mxu0
  %1271 = vdwg.mxu0
  %v1273 = vsel %vm317, %v1121, 0
  %v1276 = vsel %vm317, %v1195, 0
  %1278 = vmatprep.subr.mxu0 0.0
  %1279 = vmatpush1.xpose.msra.mxu0 0.0
  %1280 = vmatprep.subr.mxu0 0.0
  %1281 = vmatpush1.xpose.msra.mxu0 0.0
  %1282 = vmatprep.subr.mxu0 0.0
  %1283 = vmatpush1.xpose.msra.mxu0 0.0
  %1284 = vmatprep.subr.mxu0 0.0
  %1285 = vmatpush1.xpose.msra.mxu0 0.0
  %1286 = vmatprep.subr.mxu0 0.0
  %1287 = vmatpush1.xpose.msra.mxu0 0.0
  %1288 = vmatprep.subr.mxu0 0.0
  %1289 = vmatpush1.xpose.msra.mxu0 0.0
  %1290 = vmatprep.subr.mxu0 0.0
  %1291 = vmatpush1.xpose.msra.mxu0 0.0
  %1292 = vmatprep.subr.mxu0 0.0
  %1293 = vmatpush1.xpose.msra.mxu0 0.0
  %1294 = vmatprep.subr.mxu0 0.0
  %1295 = vmatpush1.xpose.msra.mxu0 0.0
  %1296 = vmatprep.subr.mxu0 0.0
  %1297 = vmatpush1.xpose.msra.mxu0 0.0
  %1298 = vmatprep.subr.mxu0 0.0
  %1299 = vmatpush1.xpose.msra.mxu0 0.0
  %1300 = vmatprep.subr.mxu0 0.0
  %1301 = vmatpush1.xpose.msra.mxu0 0.0
  %1302 = vmatprep.subr.mxu0 0.0
  %1303 = vmatpush1.xpose.msra.mxu0 0.0
  %1304 = vmatprep.subr.mxu0 0.0
  %1305 = vmatpush1.xpose.msra.mxu0 0.0
  %1306 = vmatprep.subr.mxu0 0.0
  %1307 = vmatpush1.xpose.msra.mxu0 0.0
  %1308 = vmatprep.subr.mxu0 0.0
  %1309 = vmatpush1.xpose.msra.mxu0 %v1276
  %1310 = vmatprep.subr.mxu0 0.0
  %1311 = vmatpush2.xpose.msra.mxu0 0.0
  %1312 = vmatprep.subr.mxu0 0.0
  %1313 = vmatpush2.xpose.msra.mxu0 0.0
  %1314 = vmatprep.subr.mxu0 0.0
  %1315 = vmatpush2.xpose.msra.mxu0 0.0
  %1316 = vmatprep.subr.mxu0 0.0
  %1317 = vmatpush2.xpose.msra.mxu0 0.0
  %1318 = vmatprep.subr.mxu0 0.0
  %1319 = vmatpush2.xpose.msra.mxu0 0.0
  %1320 = vmatprep.subr.mxu0 0.0
  %1321 = vmatpush2.xpose.msra.mxu0 0.0
  %1322 = vmatprep.subr.mxu0 0.0
  %1323 = vmatpush2.xpose.msra.mxu0 0.0
  %1324 = vmatprep.subr.mxu0 0.0
  %1325 = vmatpush2.xpose.msra.mxu0 0.0
  %1326 = vmatprep.subr.mxu0 0.0
  %1327 = vmatpush2.xpose.msra.mxu0 0.0
  %1328 = vmatprep.subr.mxu0 0.0
  %1329 = vmatpush2.xpose.msra.mxu0 0.0
  %1330 = vmatprep.subr.mxu0 0.0
  %1331 = vmatpush2.xpose.msra.mxu0 0.0
  %1332 = vmatprep.subr.mxu0 0.0
  %1333 = vmatpush2.xpose.msra.mxu0 0.0
  %1334 = vmatprep.subr.mxu0 0.0
  %1335 = vmatpush2.xpose.msra.mxu0 0.0
  %1336 = vmatprep.subr.mxu0 0.0
  %1337 = vmatpush2.xpose.msra.mxu0 0.0
  %1338 = vmatprep.subr.mxu0 0.0
  %1339 = vmatpush2.xpose.msra.mxu0 0.0
  %1340 = vmatprep.subr.mxu0 0.0
  %1341 = vmatpush2.xpose.msra.mxu0 0.0
  %1342 = vmatprep.mubr.f32.mxu0 0.0
  %1343 = vmatmul.mubr.f32.gmra.mxu0 %v1273
  %v1344 = vpop.f32.mrf.mxu0
  %v1345 = vadd.f32 %v316, %v1344
  %v1346 = vpop.f32.mrf.mxu0
  %1347 = vdwg.mxu0
  %v1348 = vsel %vm317, %v1345, -inf
  %1349 = vmax.xlane.f32.xlu0 %v1348
  %v1350 = vpop.xlane.xlu0 %1349
  %v1351 = vsub.f32 %v1345, %v1350
  %v1352 = vmul.f32 %v1351, 1.442695
  %v1353 = vpow.pop %v1352
  %v1354 = vsel %vm317, %v1353, 0.0
  %1355 = vadd.xlane.f32.xlu0 %v1354
  %v1356 = vpop.xlane.xlu0 %1355
  %v1357 = vrcp.pop %v1356
  %v1358 = vmul.f32 %v1353, %v1357
  %v1360 = vsel %vm317, %v1358, 0
  %1362 = vmatprep.subr.mxu0 0.0
  %1363 = vmatpush1.msra.mxu0 0.0
  %1364 = vmatprep.subr.mxu0 0.0
  %1365 = vmatpush1.msra.mxu0 0.0
  %1366 = vmatprep.subr.mxu0 0.0
  %1367 = vmatpush1.msra.mxu0 0.0
  %1368 = vmatprep.subr.mxu0 0.0
  %1369 = vmatpush1.msra.mxu0 0.0
  %1370 = vmatprep.subr.mxu0 0.0
  %1371 = vmatpush1.msra.mxu0 0.0
  %1372 = vmatprep.subr.mxu0 0.0
  %1373 = vmatpush1.msra.mxu0 0.0
  %1374 = vmatprep.subr.mxu0 0.0
  %1375 = vmatpush1.msra.mxu0 0.0
  %1376 = vmatprep.subr.mxu0 0.0
  %1377 = vmatpush1.msra.mxu0 0.0
  %1378 = vmatprep.subr.mxu0 0.0
  %1379 = vmatpush1.msra.mxu0 0.0
  %1380 = vmatprep.subr.mxu0 0.0
  %1381 = vmatpush1.msra.mxu0 0.0
  %1382 = vmatprep.subr.mxu0 0.0
  %1383 = vmatpush1.msra.mxu0 0.0
  %1384 = vmatprep.subr.mxu0 0.0
  %1385 = vmatpush1.msra.mxu0 0.0
  %1386 = vmatprep.subr.mxu0 0.0
  %1387 = vmatpush1.msra.mxu0 0.0
  %1388 = vmatprep.subr.mxu0 0.0
  %1389 = vmatpush1.msra.mxu0 0.0
  %1390 = vmatprep.subr.mxu0 0.0
  %1391 = vmatpush1.msra.mxu0 0.0
  %1392 = vmatprep.subr.mxu0 0.0
  %1393 = vmatpush1.msra.mxu0 %v1269
  %1394 = vmatprep.subr.mxu0 0.0
  %1395 = vmatpush2.msra.mxu0 0.0
  %1396 = vmatprep.subr.mxu0 0.0
  %1397 = vmatpush2.msra.mxu0 0.0
  %1398 = vmatprep.subr.mxu0 0.0
  %1399 = vmatpush2.msra.mxu0 0.0
  %1400 = vmatprep.subr.mxu0 0.0
  %1401 = vmatpush2.msra.mxu0 0.0
  %1402 = vmatprep.subr.mxu0 0.0
  %1403 = vmatpush2.msra.mxu0 0.0
  %1404 = vmatprep.subr.mxu0 0.0
  %1405 = vmatpush2.msra.mxu0 0.0
  %1406 = vmatprep.subr.mxu0 0.0
  %1407 = vmatpush2.msra.mxu0 0.0
  %1408 = vmatprep.subr.mxu0 0.0
  %1409 = vmatpush2.msra.mxu0 0.0
  %1410 = vmatprep.subr.mxu0 0.0
  %1411 = vmatpush2.msra.mxu0 0.0
  %1412 = vmatprep.subr.mxu0 0.0
  %1413 = vmatpush2.msra.mxu0 0.0
  %1414 = vmatprep.subr.mxu0 0.0
  %1415 = vmatpush2.msra.mxu0 0.0
  %1416 = vmatprep.subr.mxu0 0.0
  %1417 = vmatpush2.msra.mxu0 0.0
  %1418 = vmatprep.subr.mxu0 0.0
  %1419 = vmatpush2.msra.mxu0 0.0
  %1420 = vmatprep.subr.mxu0 0.0
  %1421 = vmatpush2.msra.mxu0 0.0
  %1422 = vmatprep.subr.mxu0 0.0
  %1423 = vmatpush2.msra.mxu0 0.0
  %1424 = vmatprep.subr.mxu0 0.0
  %1425 = vmatpush2.msra.mxu0 0.0
  %1426 = vmatprep.mubr.f32.mxu0 0.0
  %1427 = vmatmul.mubr.f32.gmra.mxu0 %v1360
  %v1428 = vpop.f32.mrf.mxu0
  %v1429 = vadd.f32 0.0, %v1428
  %v1430 = vpop.f32.mrf.mxu0
  %1431 = vdwg.mxu0
  %v1432 = vld [vmem:[%s3 + $0x10] sm:$0xff]
  %v1434 = vsel %vm317, %v1429, 0
  %1436 = vmatprep.subr.mxu0 0.0
  %1437 = vmatpush1.msra.mxu0 0.0
  %1438 = vmatprep.subr.mxu0 0.0
  %1439 = vmatpush1.msra.mxu0 0.0
  %1440 = vmatprep.subr.mxu0 0.0
  %1441 = vmatpush1.msra.mxu0 0.0
  %1442 = vmatprep.subr.mxu0 0.0
  %1443 = vmatpush1.msra.mxu0 0.0
  %1444 = vmatprep.subr.mxu0 0.0
  %1445 = vmatpush1.msra.mxu0 0.0
  %1446 = vmatprep.subr.mxu0 0.0
  %1447 = vmatpush1.msra.mxu0 0.0
  %1448 = vmatprep.subr.mxu0 0.0
  %1449 = vmatpush1.msra.mxu0 0.0
  %1450 = vmatprep.subr.mxu0 0.0
  %1451 = vmatpush1.msra.mxu0 0.0
  %1452 = vmatprep.subr.mxu0 0.0
  %1453 = vmatpush1.msra.mxu0 0.0
  %1454 = vmatprep.subr.mxu0 0.0
  %1455 = vmatpush1.msra.mxu0 0.0
  %1456 = vmatprep.subr.mxu0 0.0
  %1457 = vmatpush1.msra.mxu0 0.0
  %1458 = vmatprep.subr.mxu0 0.0
  %1459 = vmatpush1.msra.mxu0 0.0
  %1460 = vmatprep.subr.mxu0 0.0
  %1461 = vmatpush1.msra.mxu0 0.0
  %1462 = vmatprep.subr.mxu0 0.0
  %1463 = vmatpush1.msra.mxu0 0.0
  %1464 = vmatprep.subr.mxu0 0.0
  %1465 = vmatpush1.msra.mxu0 0.0
  %1466 = vmatprep.subr.mxu0 0.0
  %1467 = vmatpush1.msra.mxu0 %v1432
  %1468 = vmatprep.subr.mxu0 0.0
  %1469 = vmatpush2.msra.mxu0 0.0
  %1470 = vmatprep.subr.mxu0 0.0
  %1471 = vmatpush2.msra.mxu0 0.0
  %1472 = vmatprep.subr.mxu0 0.0
  %1473 = vmatpush2.msra.mxu0 0.0
  %1474 = vmatprep.subr.mxu0 0.0
  %1475 = vmatpush2.msra.mxu0 0.0
  %1476 = vmatprep.subr.mxu0 0.0
  %1477 = vmatpush2.msra.mxu0 0.0
  %1478 = vmatprep.subr.mxu0 0.0
  %1479 = vmatpush2.msra.mxu0 0.0
  %1480 = vmatprep.subr.mxu0 0.0
  %1481 = vmatpush2.msra.mxu0 0.0
  %1482 = vmatprep.subr.mxu0 0.0
  %1483 = vmatpush2.msra.mxu0 0.0
  %1484 = vmatprep.subr.mxu0 0.0
  %1485 = vmatpush2.msra.mxu0 0.0
  %1486 = vmatprep.subr.mxu0 0.0
  %1487 = vmatpush2.msra.mxu0 0.0
  %1488 = vmatprep.subr.mxu0 0.0
  %1489 = vmatpush2.msra.mxu0 0.0
  %1490 = vmatprep.subr.mxu0 0.0
  %1491 = vmatpush2.msra.mxu0 0.0
  %1492 = vmatprep.subr.mxu0 0.0
  %1493 = vmatpush2.msra.mxu0 0.0
  %1494 = vmatprep.subr.mxu0 0.0
  %1495 = vmatpush2.msra.mxu0 0.0
  %1496 = vmatprep.subr.mxu0 0.0
  %1497 = vmatpush2.msra.mxu0 0.0
  %1498 = vmatprep.subr.mxu0 0.0
  %1499 = vmatpush2.msra.mxu0 0.0
  %1500 = vmatprep.mubr.f32.mxu0 0.0
  %1501 = vmatmul.mubr.f32.gmra.mxu0 %v1434
  %v1502 = vpop.f32.mrf.mxu0
  %v1503 = vadd.f32 0.0, %v1502
  %v1504 = vpop.f32.mrf.mxu0
  %1505 = vdwg.mxu0
  %v1506 = vadd.f32 %v1031, %v1503
  %s1507 = scalar_lea.vmem %s2, 120
  %v1508 = vld [vmem:[%s1507] sm:$0xff]
  %v1509 = vld [vmem:[%s1507 + $0x8] sm:$0xff]
  %v1510 = vld [vmem:[%s1507 + $0x10] sm:$0xff]
  %v1511 = vld [vmem:[%s1507 + $0x18] sm:$0xff]
  %v1512 = vld [vmem:[%s1507 + $0x20] sm:$0x1]
  %s1513 = scalar_lea.vmem %s2, 280
  %v1514 = vld [vmem:[%s1513] sm:$0xff]
  %v1515 = vld [vmem:[%s1513 + $0x8] sm:$0xff]
  %v1516 = vld [vmem:[%s1513 + $0x10] sm:$0xff]
  %v1517 = vld [vmem:[%s1513 + $0x18] sm:$0xff]
  %v1518 = vld [vmem:[%s1513 + $0x20] sm:$0x1]
  %s1519 = scalar_lea.vmem %s2, 440
  %v1520 = vld [vmem:[%s1519] sm:$0xff]
  %v1521 = vld [vmem:[%s1519 + $0x8] sm:$0xff]
  %v1522 = vld [vmem:[%s1519 + $0x10] sm:$0xff]
  %v1523 = vld [vmem:[%s1519 + $0x18] sm:$0xff]
  %v1524 = vld [vmem:[%s1519 + $0x20] sm:$0x1]
  %v1525 = vlaneseq
  %v1526 = vshrl.u32 %v1525, 7
  %v1527 = vsub.s32 0, %v1526
  %v1528 = vrot.slane %v1512, %v1527
  %1529 = vmatprep.subr.mxu0 0.0
  %1530 = vmatpush1.msra.mxu0 0.0
  %1531 = vmatprep.subr.mxu0 0.0
  %1532 = vmatpush1.msra.mxu0 0.0
  %1533 = vmatprep.subr.mxu0 0.0
  %1534 = vmatpush1.msra.mxu0 0.0
  %1535 = vmatprep.subr.mxu0 0.0
  %1536 = vmatpush1.msra.mxu0 0.0
  %1537 = vmatprep.subr.mxu0 0.0
  %1538 = vmatpush1.msra.mxu0 0.0
  %1539 = vmatprep.subr.mxu0 0.0
  %1540 = vmatpush1.msra.mxu0 0.0
  %1541 = vmatprep.subr.mxu0 0.0
  %1542 = vmatpush1.msra.mxu0 0.0
  %1543 = vmatprep.subr.mxu0 0.0
  %1544 = vmatpush1.msra.mxu0 0.0
  %1545 = vmatprep.subr.mxu0 0.0
  %1546 = vmatpush1.msra.mxu0 0.0
  %1547 = vmatprep.subr.mxu0 0.0
  %1548 = vmatpush1.msra.mxu0 0.0
  %1549 = vmatprep.subr.mxu0 0.0
  %1550 = vmatpush1.msra.mxu0 0.0
  %1551 = vmatprep.subr.mxu0 0.0
  %1552 = vmatpush1.msra.mxu0 0.0
  %1553 = vmatprep.subr.mxu0 0.0
  %1554 = vmatpush1.msra.mxu0 %v1511
  %1555 = vmatprep.subr.mxu0 0.0
  %1556 = vmatpush1.msra.mxu0 %v1510
  %1557 = vmatprep.subr.mxu0 0.0
  %1558 = vmatpush1.msra.mxu0 %v1509
  %1559 = vmatprep.subr.mxu0 0.0
  %1560 = vmatpush1.msra.mxu0 %v1508
  %1561 = vmatprep.subr.mxu0 0.0
  %1562 = vmatpush2.msra.mxu0 0.0
  %1563 = vmatprep.subr.mxu0 0.0
  %1564 = vmatpush2.msra.mxu0 0.0
  %1565 = vmatprep.subr.mxu0 0.0
  %1566 = vmatpush2.msra.mxu0 0.0
  %1567 = vmatprep.subr.mxu0 0.0
  %1568 = vmatpush2.msra.mxu0 0.0
  %1569 = vmatprep.subr.mxu0 0.0
  %1570 = vmatpush2.msra.mxu0 0.0
  %1571 = vmatprep.subr.mxu0 0.0
  %1572 = vmatpush2.msra.mxu0 0.0
  %1573 = vmatprep.subr.mxu0 0.0
  %1574 = vmatpush2.msra.mxu0 0.0
  %1575 = vmatprep.subr.mxu0 0.0
  %1576 = vmatpush2.msra.mxu0 0.0
  %1577 = vmatprep.subr.mxu0 0.0
  %1578 = vmatpush2.msra.mxu0 0.0
  %1579 = vmatprep.subr.mxu0 0.0
  %1580 = vmatpush2.msra.mxu0 0.0
  %1581 = vmatprep.subr.mxu0 0.0
  %1582 = vmatpush2.msra.mxu0 0.0
  %1583 = vmatprep.subr.mxu0 0.0
  %1584 = vmatpush2.msra.mxu0 0.0
  %1585 = vmatprep.subr.mxu0 0.0
  %1586 = vmatpush2.msra.mxu0 0.0
  %1587 = vmatprep.subr.mxu0 0.0
  %1588 = vmatpush2.msra.mxu0 0.0
  %1589 = vmatprep.subr.mxu0 0.0
  %1590 = vmatpush2.msra.mxu0 0.0
  %1591 = vmatprep.subr.mxu0 0.0
  %1592 = vmatpush2.msra.mxu0 0.0
  %1593 = vmatprep.mubr.f32.mxu0 0.0
  %1594 = vmatmul.mubr.f32.gmra.mxu0 %v93
  %v1595 = vpop.f32.mrf.mxu0
  %v1596 = vadd.f32 %v1528, %v1595
  %v1597 = vpop.f32.mrf.mxu0
  %1598 = vdwg.mxu0
  %v1599 = vlaneseq
  %v1600 = vshrl.u32 %v1599, 7
  %v1601 = vsub.s32 0, %v1600
  %v1602 = vrot.slane %v1518, %v1601
  %1603 = vmatprep.subr.mxu0 0.0
  %1604 = vmatpush1.msra.mxu0 0.0
  %1605 = vmatprep.subr.mxu0 0.0
  %1606 = vmatpush1.msra.mxu0 0.0
  %1607 = vmatprep.subr.mxu0 0.0
  %1608 = vmatpush1.msra.mxu0 0.0
  %1609 = vmatprep.subr.mxu0 0.0
  %1610 = vmatpush1.msra.mxu0 0.0
  %1611 = vmatprep.subr.mxu0 0.0
  %1612 = vmatpush1.msra.mxu0 0.0
  %1613 = vmatprep.subr.mxu0 0.0
  %1614 = vmatpush1.msra.mxu0 0.0
  %1615 = vmatprep.subr.mxu0 0.0
  %1616 = vmatpush1.msra.mxu0 0.0
  %1617 = vmatprep.subr.mxu0 0.0
  %1618 = vmatpush1.msra.mxu0 0.0
  %1619 = vmatprep.subr.mxu0 0.0
  %1620 = vmatpush1.msra.mxu0 0.0
  %1621 = vmatprep.subr.mxu0 0.0
  %1622 = vmatpush1.msra.mxu0 0.0
  %1623 = vmatprep.subr.mxu0 0.0
  %1624 = vmatpush1.msra.mxu0 0.0
  %1625 = vmatprep.subr.mxu0 0.0
  %1626 = vmatpush1.msra.mxu0 0.0
  %1627 = vmatprep.subr.mxu0 0.0
  %1628 = vmatpush1.msra.mxu0 %v1517
  %1629 = vmatprep.subr.mxu0 0.0
  %1630 = vmatpush1.msra.mxu0 %v1516
  %1631 = vmatprep.subr.mxu0 0.0
  %1632 = vmatpush1.msra.mxu0 %v1515
  %1633 = vmatprep.subr.mxu0 0.0
  %1634 = vmatpush1.msra.mxu0 %v1514
  %1635 = vmatprep.subr.mxu0 0.0
  %1636 = vmatpush2.msra.mxu0 0.0
  %1637 = vmatprep.subr.mxu0 0.0
  %1638 = vmatpush2.msra.mxu0 0.0
  %1639 = vmatprep.subr.mxu0 0.0
  %1640 = vmatpush2.msra.mxu0 0.0
  %1641 = vmatprep.subr.mxu0 0.0
  %1642 = vmatpush2.msra.mxu0 0.0
  %1643 = vmatprep.subr.mxu0 0.0
  %1644 = vmatpush2.msra.mxu0 0.0
  %1645 = vmatprep.subr.mxu0 0.0
  %1646 = vmatpush2.msra.mxu0 0.0
  %1647 = vmatprep.subr.mxu0 0.0
  %1648 = vmatpush2.msra.mxu0 0.0
  %1649 = vmatprep.subr.mxu0 0.0
  %1650 = vmatpush2.msra.mxu0 0.0
  %1651 = vmatprep.subr.mxu0 0.0
  %1652 = vmatpush2.msra.mxu0 0.0
  %1653 = vmatprep.subr.mxu0 0.0
  %1654 = vmatpush2.msra.mxu0 0.0
  %1655 = vmatprep.subr.mxu0 0.0
  %1656 = vmatpush2.msra.mxu0 0.0
  %1657 = vmatprep.subr.mxu0 0.0
  %1658 = vmatpush2.msra.mxu0 0.0
  %1659 = vmatprep.subr.mxu0 0.0
  %1660 = vmatpush2.msra.mxu0 0.0
  %1661 = vmatprep.subr.mxu0 0.0
  %1662 = vmatpush2.msra.mxu0 0.0
  %1663 = vmatprep.subr.mxu0 0.0
  %1664 = vmatpush2.msra.mxu0 0.0
  %1665 = vmatprep.subr.mxu0 0.0
  %1666 = vmatpush2.msra.mxu0 0.0
  %1667 = vmatprep.mubr.f32.mxu0 0.0
  %1668 = vmatmul.mubr.f32.gmra.mxu0 %v93
  %v1669 = vpop.f32.mrf.mxu0
  %v1670 = vadd.f32 %v1602, %v1669
  %v1671 = vpop.f32.mrf.mxu0
  %1672 = vdwg.mxu0
  %v1673 = vlaneseq
  %v1674 = vshrl.u32 %v1673, 7
  %v1675 = vsub.s32 0, %v1674
  %v1676 = vrot.slane %v1524, %v1675
  %1677 = vmatprep.subr.mxu0 0.0
  %1678 = vmatpush1.msra.mxu0 0.0
  %1679 = vmatprep.subr.mxu0 0.0
  %1680 = vmatpush1.msra.mxu0 0.0
  %1681 = vmatprep.subr.mxu0 0.0
  %1682 = vmatpush1.msra.mxu0 0.0
  %1683 = vmatprep.subr.mxu0 0.0
  %1684 = vmatpush1.msra.mxu0 0.0
  %1685 = vmatprep.subr.mxu0 0.0
  %1686 = vmatpush1.msra.mxu0 0.0
  %1687 = vmatprep.subr.mxu0 0.0
  %1688 = vmatpush1.msra.mxu0 0.0
  %1689 = vmatprep.subr.mxu0 0.0
  %1690 = vmatpush1.msra.mxu0 0.0
  %1691 = vmatprep.subr.mxu0 0.0
  %1692 = vmatpush1.msra.mxu0 0.0
  %1693 = vmatprep.subr.mxu0 0.0
  %1694 = vmatpush1.msra.mxu0 0.0
  %1695 = vmatprep.subr.mxu0 0.0
  %1696 = vmatpush1.msra.mxu0 0.0
  %1697 = vmatprep.subr.mxu0 0.0
  %1698 = vmatpush1.msra.mxu0 0.0
  %1699 = vmatprep.subr.mxu0 0.0
  %1700 = vmatpush1.msra.mxu0 0.0
  %1701 = vmatprep.subr.mxu0 0.0
  %1702 = vmatpush1.msra.mxu0 %v1523
  %1703 = vmatprep.subr.mxu0 0.0
  %1704 = vmatpush1.msra.mxu0 %v1522
  %1705 = vmatprep.subr.mxu0 0.0
  %1706 = vmatpush1.msra.mxu0 %v1521
  %1707 = vmatprep.subr.mxu0 0.0
  %1708 = vmatpush1.msra.mxu0 %v1520
  %1709 = vmatprep.subr.mxu0 0.0
  %1710 = vmatpush2.msra.mxu0 0.0
  %1711 = vmatprep.subr.mxu0 0.0
  %1712 = vmatpush2.msra.mxu0 0.0
  %1713 = vmatprep.subr.mxu0 0.0
  %1714 = vmatpush2.msra.mxu0 0.0
  %1715 = vmatprep.subr.mxu0 0.0
  %1716 = vmatpush2.msra.mxu0 0.0
  %1717 = vmatprep.subr.mxu0 0.0
  %1718 = vmatpush2.msra.mxu0 0.0
  %1719 = vmatprep.subr.mxu0 0.0
  %1720 = vmatpush2.msra.mxu0 0.0
  %1721 = vmatprep.subr.mxu0 0.0
  %1722 = vmatpush2.msra.mxu0 0.0
  %1723 = vmatprep.subr.mxu0 0.0
  %1724 = vmatpush2.msra.mxu0 0.0
  %1725 = vmatprep.subr.mxu0 0.0
  %1726 = vmatpush2.msra.mxu0 0.0
  %1727 = vmatprep.subr.mxu0 0.0
  %1728 = vmatpush2.msra.mxu0 0.0
  %1729 = vmatprep.subr.mxu0 0.0
  %1730 = vmatpush2.msra.mxu0 0.0
  %1731 = vmatprep.subr.mxu0 0.0
  %1732 = vmatpush2.msra.mxu0 0.0
  %1733 = vmatprep.subr.mxu0 0.0
  %1734 = vmatpush2.msra.mxu0 0.0
  %1735 = vmatprep.subr.mxu0 0.0
  %1736 = vmatpush2.msra.mxu0 0.0
  %1737 = vmatprep.subr.mxu0 0.0
  %1738 = vmatpush2.msra.mxu0 0.0
  %1739 = vmatprep.subr.mxu0 0.0
  %1740 = vmatpush2.msra.mxu0 0.0
  %1741 = vmatprep.mubr.f32.mxu0 0.0
  %1742 = vmatmul.mubr.f32.gmra.mxu0 %v93
  %v1743 = vpop.f32.mrf.mxu0
  %v1744 = vadd.f32 %v1676, %v1743
  %v1745 = vpop.f32.mrf.mxu0
  %1746 = vdwg.mxu0
  %v1748 = vsel %vm317, %v1596, 0
  %v1751 = vsel %vm317, %v1670, 0
  %1753 = vmatprep.subr.mxu0 0.0
  %1754 = vmatpush1.xpose.msra.mxu0 0.0
  %1755 = vmatprep.subr.mxu0 0.0
  %1756 = vmatpush1.xpose.msra.mxu0 0.0
  %1757 = vmatprep.subr.mxu0 0.0
  %1758 = vmatpush1.xpose.msra.mxu0 0.0
  %1759 = vmatprep.subr.mxu0 0.0
  %1760 = vmatpush1.xpose.msra.mxu0 0.0
  %1761 = vmatprep.subr.mxu0 0.0
  %1762 = vmatpush1.xpose.msra.mxu0 0.0
  %1763 = vmatprep.subr.mxu0 0.0
  %1764 = vmatpush1.xpose.msra.mxu0 0.0
  %1765 = vmatprep.subr.mxu0 0.0
  %1766 = vmatpush1.xpose.msra.mxu0 0.0
  %1767 = vmatprep.subr.mxu0 0.0
  %1768 = vmatpush1.xpose.msra.mxu0 0.0
  %1769 = vmatprep.subr.mxu0 0.0
  %1770 = vmatpush1.xpose.msra.mxu0 0.0
  %1771 = vmatprep.subr.mxu0 0.0
  %1772 = vmatpush1.xpose.msra.mxu0 0.0
  %1773 = vmatprep.subr.mxu0 0.0
  %1774 = vmatpush1.xpose.msra.mxu0 0.0
  %1775 = vmatprep.subr.mxu0 0.0
  %1776 = vmatpush1.xpose.msra.mxu0 0.0
  %1777 = vmatprep.subr.mxu0 0.0
  %1778 = vmatpush1.xpose.msra.mxu0 0.0
  %1779 = vmatprep.subr.mxu0 0.0
  %1780 = vmatpush1.xpose.msra.mxu0 0.0
  %1781 = vmatprep.subr.mxu0 0.0
  %1782 = vmatpush1.xpose.msra.mxu0 0.0
  %1783 = vmatprep.subr.mxu0 0.0
  %1784 = vmatpush1.xpose.msra.mxu0 %v1751
  %1785 = vmatprep.subr.mxu0 0.0
  %1786 = vmatpush2.xpose.msra.mxu0 0.0
  %1787 = vmatprep.subr.mxu0 0.0
  %1788 = vmatpush2.xpose.msra.mxu0 0.0
  %1789 = vmatprep.subr.mxu0 0.0
  %1790 = vmatpush2.xpose.msra.mxu0 0.0
  %1791 = vmatprep.subr.mxu0 0.0
  %1792 = vmatpush2.xpose.msra.mxu0 0.0
  %1793 = vmatprep.subr.mxu0 0.0
  %1794 = vmatpush2.xpose.msra.mxu0 0.0
  %1795 = vmatprep.subr.mxu0 0.0
  %1796 = vmatpush2.xpose.msra.mxu0 0.0
  %1797 = vmatprep.subr.mxu0 0.0
  %1798 = vmatpush2.xpose.msra.mxu0 0.0
  %1799 = vmatprep.subr.mxu0 0.0
  %1800 = vmatpush2.xpose.msra.mxu0 0.0
  %1801 = vmatprep.subr.mxu0 0.0
  %1802 = vmatpush2.xpose.msra.mxu0 0.0
  %1803 = vmatprep.subr.mxu0 0.0
  %1804 = vmatpush2.xpose.msra.mxu0 0.0
  %1805 = vmatprep.subr.mxu0 0.0
  %1806 = vmatpush2.xpose.msra.mxu0 0.0
  %1807 = vmatprep.subr.mxu0 0.0
  %1808 = vmatpush2.xpose.msra.mxu0 0.0
  %1809 = vmatprep.subr.mxu0 0.0
  %1810 = vmatpush2.xpose.msra.mxu0 0.0
  %1811 = vmatprep.subr.mxu0 0.0
  %1812 = vmatpush2.xpose.msra.mxu0 0.0
  %1813 = vmatprep.subr.mxu0 0.0
  %1814 = vmatpush2.xpose.msra.mxu0 0.0
  %1815 = vmatprep.subr.mxu0 0.0
  %1816 = vmatpush2.xpose.msra.mxu0 0.0
  %1817 = vmatprep.mubr.f32.mxu0 0.0
  %1818 = vmatmul.mubr.f32.gmra.mxu0 %v1748
  %v1819 = vpop.f32.mrf.mxu0
  %v1820 = vadd.f32 %v316, %v1819
  %v1821 = vpop.f32.mrf.mxu0
  %1822 = vdwg.mxu0
  %v1823 = vsel %vm317, %v1820, -inf
  %1824 = vmax.xlane.f32.xlu0 %v1823
  %v1825 = vpop.xlane.xlu0 %1824
  %v1826 = vsub.f32 %v1820, %v1825
  %v1827 = vmul.f32 %v1826, 1.442695
  %v1828 = vpow.pop %v1827
  %v1829 = vsel %vm317, %v1828, 0.0
  %1830 = vadd.xlane.f32.xlu0 %v1829
  %v1831 = vpop.xlane.xlu0 %1830
  %v1832 = vrcp.pop %v1831
  %v1833 = vmul.f32 %v1828, %v1832
  %v1835 = vsel %vm317, %v1833, 0
  %1837 = vmatprep.subr.mxu0 0.0
  %1838 = vmatpush1.msra.mxu0 0.0
  %1839 = vmatprep.subr.mxu0 0.0
  %1840 = vmatpush1.msra.mxu0 0.0
  %1841 = vmatprep.subr.mxu0 0.0
  %1842 = vmatpush1.msra.mxu0 0.0
  %1843 = vmatprep.subr.mxu0 0.0
  %1844 = vmatpush1.msra.mxu0 0.0
  %1845 = vmatprep.subr.mxu0 0.0
  %1846 = vmatpush1.msra.mxu0 0.0
  %1847 = vmatprep.subr.mxu0 0.0
  %1848 = vmatpush1.msra.mxu0 0.0
  %1849 = vmatprep.subr.mxu0 0.0
  %1850 = vmatpush1.msra.mxu0 0.0
  %1851 = vmatprep.subr.mxu0 0.0
  %1852 = vmatpush1.msra.mxu0 0.0
  %1853 = vmatprep.subr.mxu0 0.0
  %1854 = vmatpush1.msra.mxu0 0.0
  %1855 = vmatprep.subr.mxu0 0.0
  %1856 = vmatpush1.msra.mxu0 0.0
  %1857 = vmatprep.subr.mxu0 0.0
  %1858 = vmatpush1.msra.mxu0 0.0
  %1859 = vmatprep.subr.mxu0 0.0
  %1860 = vmatpush1.msra.mxu0 0.0
  %1861 = vmatprep.subr.mxu0 0.0
  %1862 = vmatpush1.msra.mxu0 0.0
  %1863 = vmatprep.subr.mxu0 0.0
  %1864 = vmatpush1.msra.mxu0 0.0
  %1865 = vmatprep.subr.mxu0 0.0
  %1866 = vmatpush1.msra.mxu0 0.0
  %1867 = vmatprep.subr.mxu0 0.0
  %1868 = vmatpush1.msra.mxu0 %v1744
  %1869 = vmatprep.subr.mxu0 0.0
  %1870 = vmatpush2.msra.mxu0 0.0
  %1871 = vmatprep.subr.mxu0 0.0
  %1872 = vmatpush2.msra.mxu0 0.0
  %1873 = vmatprep.subr.mxu0 0.0
  %1874 = vmatpush2.msra.mxu0 0.0
  %1875 = vmatprep.subr.mxu0 0.0
  %1876 = vmatpush2.msra.mxu0 0.0
  %1877 = vmatprep.subr.mxu0 0.0
  %1878 = vmatpush2.msra.mxu0 0.0
  %1879 = vmatprep.subr.mxu0 0.0
  %1880 = vmatpush2.msra.mxu0 0.0
  %1881 = vmatprep.subr.mxu0 0.0
  %1882 = vmatpush2.msra.mxu0 0.0
  %1883 = vmatprep.subr.mxu0 0.0
  %1884 = vmatpush2.msra.mxu0 0.0
  %1885 = vmatprep.subr.mxu0 0.0
  %1886 = vmatpush2.msra.mxu0 0.0
  %1887 = vmatprep.subr.mxu0 0.0
  %1888 = vmatpush2.msra.mxu0 0.0
  %1889 = vmatprep.subr.mxu0 0.0
  %1890 = vmatpush2.msra.mxu0 0.0
  %1891 = vmatprep.subr.mxu0 0.0
  %1892 = vmatpush2.msra.mxu0 0.0
  %1893 = vmatprep.subr.mxu0 0.0
  %1894 = vmatpush2.msra.mxu0 0.0
  %1895 = vmatprep.subr.mxu0 0.0
  %1896 = vmatpush2.msra.mxu0 0.0
  %1897 = vmatprep.subr.mxu0 0.0
  %1898 = vmatpush2.msra.mxu0 0.0
  %1899 = vmatprep.subr.mxu0 0.0
  %1900 = vmatpush2.msra.mxu0 0.0
  %1901 = vmatprep.mubr.f32.mxu0 0.0
  %1902 = vmatmul.mubr.f32.gmra.mxu0 %v1835
  %v1903 = vpop.f32.mrf.mxu0
  %v1904 = vadd.f32 0.0, %v1903
  %v1905 = vpop.f32.mrf.mxu0
  %1906 = vdwg.mxu0
  %v1907 = vld [vmem:[%s3 + $0x18] sm:$0xff]
  %v1909 = vsel %vm317, %v1904, 0
  %1911 = vmatprep.subr.mxu0 0.0
  %1912 = vmatpush1.msra.mxu0 0.0
  %1913 = vmatprep.subr.mxu0 0.0
  %1914 = vmatpush1.msra.mxu0 0.0
  %1915 = vmatprep.subr.mxu0 0.0
  %1916 = vmatpush1.msra.mxu0 0.0
  %1917 = vmatprep.subr.mxu0 0.0
  %1918 = vmatpush1.msra.mxu0 0.0
  %1919 = vmatprep.subr.mxu0 0.0
  %1920 = vmatpush1.msra.mxu0 0.0
  %1921 = vmatprep.subr.mxu0 0.0
  %1922 = vmatpush1.msra.mxu0 0.0
  %1923 = vmatprep.subr.mxu0 0.0
  %1924 = vmatpush1.msra.mxu0 0.0
  %1925 = vmatprep.subr.mxu0 0.0
  %1926 = vmatpush1.msra.mxu0 0.0
  %1927 = vmatprep.subr.mxu0 0.0
  %1928 = vmatpush1.msra.mxu0 0.0
  %1929 = vmatprep.subr.mxu0 0.0
  %1930 = vmatpush1.msra.mxu0 0.0
  %1931 = vmatprep.subr.mxu0 0.0
  %1932 = vmatpush1.msra.mxu0 0.0
  %1933 = vmatprep.subr.mxu0 0.0
  %1934 = vmatpush1.msra.mxu0 0.0
  %1935 = vmatprep.subr.mxu0 0.0
  %1936 = vmatpush1.msra.mxu0 0.0
  %1937 = vmatprep.subr.mxu0 0.0
  %1938 = vmatpush1.msra.mxu0 0.0
  %1939 = vmatprep.subr.mxu0 0.0
  %1940 = vmatpush1.msra.mxu0 0.0
  %1941 = vmatprep.subr.mxu0 0.0
  %1942 = vmatpush1.msra.mxu0 %v1907
  %1943 = vmatprep.subr.mxu0 0.0
  %1944 = vmatpush2.msra.mxu0 0.0
  %1945 = vmatprep.subr.mxu0 0.0
  %1946 = vmatpush2.msra.mxu0 0.0
  %1947 = vmatprep.subr.mxu0 0.0
  %1948 = vmatpush2.msra.mxu0 0.0
  %1949 = vmatprep.subr.mxu0 0.0
  %1950 = vmatpush2.msra.mxu0 0.0
  %1951 = vmatprep.subr.mxu0 0.0
  %1952 = vmatpush2.msra.mxu0 0.0
  %1953 = vmatprep.subr.mxu0 0.0
  %1954 = vmatpush2.msra.mxu0 0.0
  %1955 = vmatprep.subr.mxu0 0.0
  %1956 = vmatpush2.msra.mxu0 0.0
  %1957 = vmatprep.subr.mxu0 0.0
  %1958 = vmatpush2.msra.mxu0 0.0
  %1959 = vmatprep.subr.mxu0 0.0
  %1960 = vmatpush2.msra.mxu0 0.0
  %1961 = vmatprep.subr.mxu0 0.0
  %1962 = vmatpush2.msra.mxu0 0.0
  %1963 = vmatprep.subr.mxu0 0.0
  %1964 = vmatpush2.msra.mxu0 0.0
  %1965 = vmatprep.subr.mxu0 0.0
  %1966 = vmatpush2.msra.mxu0 0.0
  %1967 = vmatprep.subr.mxu0 0.0
  %1968 = vmatpush2.msra.mxu0 0.0
  %1969 = vmatprep.subr.mxu0 0.0
  %1970 = vmatpush2.msra.mxu0 0.0
  %1971 = vmatprep.subr.mxu0 0.0
  %1972 = vmatpush2.msra.mxu0 0.0
  %1973 = vmatprep.subr.mxu0 0.0
  %1974 = vmatpush2.msra.mxu0 0.0
  %1975 = vmatprep.mubr.f32.mxu0 0.0
  %1976 = vmatmul.mubr.f32.gmra.mxu0 %v1909
  %v1977 = vpop.f32.mrf.mxu0
  %v1978 = vadd.f32 0.0, %v1977
  %v1979 = vpop.f32.mrf.mxu0
  %1980 = vdwg.mxu0
  %v1981 = vadd.f32 %v1506, %v1978
  %1982 = vst.msk [vmem:[#allocation2] sm:$0xff] %vm30, %v1981
  %v1983 = vld [vmem:[%s2] sm:$0xff]
  %v1984 = vld [vmem:[%s2 + $0x8] sm:$0xff]
  %v1985 = vld [vmem:[%s2 + $0x10] sm:$0xff]
  %v1986 = vld [vmem:[%s2 + $0x18] sm:$0xff]
  %v1987 = vld [vmem:[%s2 + $0x20] sm:$0x1]
  %v1988 = vld [vmem:[%s76] sm:$0xff]
  %v1989 = vld [vmem:[%s76 + $0x8] sm:$0xff]
  %v1990 = vld [vmem:[%s76 + $0x10] sm:$0xff]
  %v1991 = vld [vmem:[%s76 + $0x18] sm:$0xff]
  %v1992 = vld [vmem:[%s76 + $0x20] sm:$0x1]
  %v1993 = vld [vmem:[%s82] sm:$0xff]
  %v1994 = vld [vmem:[%s82 + $0x8] sm:$0xff]
  %v1995 = vld [vmem:[%s82 + $0x10] sm:$0xff]
  %v1996 = vld [vmem:[%s82 + $0x18] sm:$0xff]
  %v1997 = vld [vmem:[%s82 + $0x20] sm:$0x1]
  %v1998 = vlaneseq
  %v1999 = vshrl.u32 %v1998, 7
  %v2000 = vsub.s32 0, %v1999
  %v2001 = vrot.slane %v1987, %v2000
  %v2003 = vsel %vm30, %v69, 0
  %2005 = vmatprep.subr.mxu0 0.0
  %2006 = vmatpush1.msra.mxu0 0.0
  %2007 = vmatprep.subr.mxu0 0.0
  %2008 = vmatpush1.msra.mxu0 0.0
  %2009 = vmatprep.subr.mxu0 0.0
  %2010 = vmatpush1.msra.mxu0 0.0
  %2011 = vmatprep.subr.mxu0 0.0
  %2012 = vmatpush1.msra.mxu0 0.0
  %2013 = vmatprep.subr.mxu0 0.0
  %2014 = vmatpush1.msra.mxu0 0.0
  %2015 = vmatprep.subr.mxu0 0.0
  %2016 = vmatpush1.msra.mxu0 0.0
  %2017 = vmatprep.subr.mxu0 0.0
  %2018 = vmatpush1.msra.mxu0 0.0
  %2019 = vmatprep.subr.mxu0 0.0
  %2020 = vmatpush1.msra.mxu0 0.0
  %2021 = vmatprep.subr.mxu0 0.0
  %2022 = vmatpush1.msra.mxu0 0.0
  %2023 = vmatprep.subr.mxu0 0.0
  %2024 = vmatpush1.msra.mxu0 0.0
  %2025 = vmatprep.subr.mxu0 0.0
  %2026 = vmatpush1.msra.mxu0 0.0
  %2027 = vmatprep.subr.mxu0 0.0
  %2028 = vmatpush1.msra.mxu0 0.0
  %2029 = vmatprep.subr.mxu0 0.0
  %2030 = vmatpush1.msra.mxu0 %v1986
  %2031 = vmatprep.subr.mxu0 0.0
  %2032 = vmatpush1.msra.mxu0 %v1985
  %2033 = vmatprep.subr.mxu0 0.0
  %2034 = vmatpush1.msra.mxu0 %v1984
  %2035 = vmatprep.subr.mxu0 0.0
  %2036 = vmatpush1.msra.mxu0 %v1983
  %2037 = vmatprep.subr.mxu0 0.0
  %2038 = vmatpush2.msra.mxu0 0.0
  %2039 = vmatprep.subr.mxu0 0.0
  %2040 = vmatpush2.msra.mxu0 0.0
  %2041 = vmatprep.subr.mxu0 0.0
  %2042 = vmatpush2.msra.mxu0 0.0
  %2043 = vmatprep.subr.mxu0 0.0
  %2044 = vmatpush2.msra.mxu0 0.0
  %2045 = vmatprep.subr.mxu0 0.0
  %2046 = vmatpush2.msra.mxu0 0.0
  %2047 = vmatprep.subr.mxu0 0.0
  %2048 = vmatpush2.msra.mxu0 0.0
  %2049 = vmatprep.subr.mxu0 0.0
  %2050 = vmatpush2.msra.mxu0 0.0
  %2051 = vmatprep.subr.mxu0 0.0
  %2052 = vmatpush2.msra.mxu0 0.0
  %2053 = vmatprep.subr.mxu0 0.0
  %2054 = vmatpush2.msra.mxu0 0.0
  %2055 = vmatprep.subr.mxu0 0.0
  %2056 = vmatpush2.msra.mxu0 0.0
  %2057 = vmatprep.subr.mxu0 0.0
  %2058 = vmatpush2.msra.mxu0 0.0
  %2059 = vmatprep.subr.mxu0 0.0
  %2060 = vmatpush2.msra.mxu0 0.0
  %2061 = vmatprep.subr.mxu0 0.0
  %2062 = vmatpush2.msra.mxu0 0.0
  %2063 = vmatprep.subr.mxu0 0.0
  %2064 = vmatpush2.msra.mxu0 0.0
  %2065 = vmatprep.subr.mxu0 0.0
  %2066 = vmatpush2.msra.mxu0 0.0
  %2067 = vmatprep.subr.mxu0 0.0
  %2068 = vmatpush2.msra.mxu0 0.0
  %2069 = vmatprep.mubr.f32.mxu0 0.0
  %2070 = vmatmul.mubr.f32.gmra.mxu0 %v2003
  %v2071 = vpop.f32.mrf.mxu0
  %v2072 = vadd.f32 %v2001, %v2071
  %v2073 = vpop.f32.mrf.mxu0
  %2074 = vdwg.mxu0
  %v2075 = vlaneseq
  %v2076 = vshrl.u32 %v2075, 7
  %v2077 = vsub.s32 0, %v2076
  %v2078 = vrot.slane %v1992, %v2077
  %2079 = vmatprep.subr.mxu0 0.0
  %2080 = vmatpush1.msra.mxu0 0.0
  %2081 = vmatprep.subr.mxu0 0.0
  %2082 = vmatpush1.msra.mxu0 0.0
  %2083 = vmatprep.subr.mxu0 0.0
  %2084 = vmatpush1.msra.mxu0 0.0
  %2085 = vmatprep.subr.mxu0 0.0
  %2086 = vmatpush1.msra.mxu0 0.0
  %2087 = vmatprep.subr.mxu0 0.0
  %2088 = vmatpush1.msra.mxu0 0.0
  %2089 = vmatprep.subr.mxu0 0.0
  %2090 = vmatpush1.msra.mxu0 0.0
  %2091 = vmatprep.subr.mxu0 0.0
  %2092 = vmatpush1.msra.mxu0 0.0
  %2093 = vmatprep.subr.mxu0 0.0
  %2094 = vmatpush1.msra.mxu0 0.0
  %2095 = vmatprep.subr.mxu0 0.0
  %2096 = vmatpush1.msra.mxu0 0.0
  %2097 = vmatprep.subr.mxu0 0.0
  %2098 = vmatpush1.msra.mxu0 0.0
  %2099 = vmatprep.subr.mxu0 0.0
  %2100 = vmatpush1.msra.mxu0 0.0
  %2101 = vmatprep.subr.mxu0 0.0
  %2102 = vmatpush1.msra.mxu0 0.0
  %2103 = vmatprep.subr.mxu0 0.0
  %2104 = vmatpush1.msra.mxu0 %v1991
  %2105 = vmatprep.subr.mxu0 0.0
  %2106 = vmatpush1.msra.mxu0 %v1990
  %2107 = vmatprep.subr.mxu0 0.0
  %2108 = vmatpush1.msra.mxu0 %v1989
  %2109 = vmatprep.subr.mxu0 0.0
  %2110 = vmatpush1.msra.mxu0 %v1988
  %2111 = vmatprep.subr.mxu0 0.0
  %2112 = vmatpush2.msra.mxu0 0.0
  %2113 = vmatprep.subr.mxu0 0.0
  %2114 = vmatpush2.msra.mxu0 0.0
  %2115 = vmatprep.subr.mxu0 0.0
  %2116 = vmatpush2.msra.mxu0 0.0
  %2117 = vmatprep.subr.mxu0 0.0
  %2118 = vmatpush2.msra.mxu0 0.0
  %2119 = vmatprep.subr.mxu0 0.0
  %2120 = vmatpush2.msra.mxu0 0.0
  %2121 = vmatprep.subr.mxu0 0.0
  %2122 = vmatpush2.msra.mxu0 0.0
  %2123 = vmatprep.subr.mxu0 0.0
  %2124 = vmatpush2.msra.mxu0 0.0
  %2125 = vmatprep.subr.mxu0 0.0
  %2126 = vmatpush2.msra.mxu0 0.0
  %2127 = vmatprep.subr.mxu0 0.0
  %2128 = vmatpush2.msra.mxu0 0.0
  %2129 = vmatprep.subr.mxu0 0.0
  %2130 = vmatpush2.msra.mxu0 0.0
  %2131 = vmatprep.subr.mxu0 0.0
  %2132 = vmatpush2.msra.mxu0 0.0
  %2133 = vmatprep.subr.mxu0 0.0
  %2134 = vmatpush2.msra.mxu0 0.0
  %2135 = vmatprep.subr.mxu0 0.0
  %2136 = vmatpush2.msra.mxu0 0.0
  %2137 = vmatprep.subr.mxu0 0.0
  %2138 = vmatpush2.msra.mxu0 0.0
  %2139 = vmatprep.subr.mxu0 0.0
  %2140 = vmatpush2.msra.mxu0 0.0
  %2141 = vmatprep.subr.mxu0 0.0
  %2142 = vmatpush2.msra.mxu0 0.0
  %2143 = vmatprep.mubr.f32.mxu0 0.0
  %2144 = vmatmul.mubr.f32.gmra.mxu0 %v2003
  %v2145 = vpop.f32.mrf.mxu0
  %v2146 = vadd.f32 %v2078, %v2145
  %v2147 = vpop.f32.mrf.mxu0
  %2148 = vdwg.mxu0
  %v2149 = vlaneseq
  %v2150 = vshrl.u32 %v2149, 7
  %v2151 = vsub.s32 0, %v2150
  %v2152 = vrot.slane %v1997, %v2151
  %2153 = vmatprep.subr.mxu0 0.0
  %2154 = vmatpush1.msra.mxu0 0.0
  %2155 = vmatprep.subr.mxu0 0.0
  %2156 = vmatpush1.msra.mxu0 0.0
  %2157 = vmatprep.subr.mxu0 0.0
  %2158 = vmatpush1.msra.mxu0 0.0
  %2159 = vmatprep.subr.mxu0 0.0
  %2160 = vmatpush1.msra.mxu0 0.0
  %2161 = vmatprep.subr.mxu0 0.0
  %2162 = vmatpush1.msra.mxu0 0.0
  %2163 = vmatprep.subr.mxu0 0.0
  %2164 = vmatpush1.msra.mxu0 0.0
  %2165 = vmatprep.subr.mxu0 0.0
  %2166 = vmatpush1.msra.mxu0 0.0
  %2167 = vmatprep.subr.mxu0 0.0
  %2168 = vmatpush1.msra.mxu0 0.0
  %2169 = vmatprep.subr.mxu0 0.0
  %2170 = vmatpush1.msra.mxu0 0.0
  %2171 = vmatprep.subr.mxu0 0.0
  %2172 = vmatpush1.msra.mxu0 0.0
  %2173 = vmatprep.subr.mxu0 0.0
  %2174 = vmatpush1.msra.mxu0 0.0
  %2175 = vmatprep.subr.mxu0 0.0
  %2176 = vmatpush1.msra.mxu0 0.0
  %2177 = vmatprep.subr.mxu0 0.0
  %2178 = vmatpush1.msra.mxu0 %v1996
  %2179 = vmatprep.subr.mxu0 0.0
  %2180 = vmatpush1.msra.mxu0 %v1995
  %2181 = vmatprep.subr.mxu0 0.0
  %2182 = vmatpush1.msra.mxu0 %v1994
  %2183 = vmatprep.subr.mxu0 0.0
  %2184 = vmatpush1.msra.mxu0 %v1993
  %2185 = vmatprep.subr.mxu0 0.0
  %2186 = vmatpush2.msra.mxu0 0.0
  %2187 = vmatprep.subr.mxu0 0.0
  %2188 = vmatpush2.msra.mxu0 0.0
  %2189 = vmatprep.subr.mxu0 0.0
  %2190 = vmatpush2.msra.mxu0 0.0
  %2191 = vmatprep.subr.mxu0 0.0
  %2192 = vmatpush2.msra.mxu0 0.0
  %2193 = vmatprep.subr.mxu0 0.0
  %2194 = vmatpush2.msra.mxu0 0.0
  %2195 = vmatprep.subr.mxu0 0.0
  %2196 = vmatpush2.msra.mxu0 0.0
  %2197 = vmatprep.subr.mxu0 0.0
  %2198 = vmatpush2.msra.mxu0 0.0
  %2199 = vmatprep.subr.mxu0 0.0
  %2200 = vmatpush2.msra.mxu0 0.0
  %2201 = vmatprep.subr.mxu0 0.0
  %2202 = vmatpush2.msra.mxu0 0.0
  %2203 = vmatprep.subr.mxu0 0.0
  %2204 = vmatpush2.msra.mxu0 0.0
  %2205 = vmatprep.subr.mxu0 0.0
  %2206 = vmatpush2.msra.mxu0 0.0
  %2207 = vmatprep.subr.mxu0 0.0
  %2208 = vmatpush2.msra.mxu0 0.0
  %2209 = vmatprep.subr.mxu0 0.0
  %2210 = vmatpush2.msra.mxu0 0.0
  %2211 = vmatprep.subr.mxu0 0.0
  %2212 = vmatpush2.msra.mxu0 0.0
  %2213 = vmatprep.subr.mxu0 0.0
  %2214 = vmatpush2.msra.mxu0 0.0
  %2215 = vmatprep.subr.mxu0 0.0
  %2216 = vmatpush2.msra.mxu0 0.0
  %2217 = vmatprep.mubr.f32.mxu0 0.0
  %2218 = vmatmul.mubr.f32.gmra.mxu0 %v2003
  %v2219 = vpop.f32.mrf.mxu0
  %v2220 = vadd.f32 %v2152, %v2219
  %v2221 = vpop.f32.mrf.mxu0
  %2222 = vdwg.mxu0
  %v2223 = vlaneseq
  %v2224 = vshrl.u32 %v2223, 7
  %v2225 = vsub.s32 1, %v2224
  %v2226 = vrot.slane %v25, %v2225
  %v2228 = vsel %vm317, %v2072, 0
  %v2231 = vsel %vm317, %v2146, 0
  %2233 = vmatprep.subr.mxu0 0.0
  %2234 = vmatpush1.xpose.msra.mxu0 0.0
  %2235 = vmatprep.subr.mxu0 0.0
  %2236 = vmatpush1.xpose.msra.mxu0 0.0
  %2237 = vmatprep.subr.mxu0 0.0
  %2238 = vmatpush1.xpose.msra.mxu0 0.0
  %2239 = vmatprep.subr.mxu0 0.0
  %2240 = vmatpush1.xpose.msra.mxu0 0.0
  %2241 = vmatprep.subr.mxu0 0.0
  %2242 = vmatpush1.xpose.msra.mxu0 0.0
  %2243 = vmatprep.subr.mxu0 0.0
  %2244 = vmatpush1.xpose.msra.mxu0 0.0
  %2245 = vmatprep.subr.mxu0 0.0
  %2246 = vmatpush1.xpose.msra.mxu0 0.0
  %2247 = vmatprep.subr.mxu0 0.0
  %2248 = vmatpush1.xpose.msra.mxu0 0.0
  %2249 = vmatprep.subr.mxu0 0.0
  %2250 = vmatpush1.xpose.msra.mxu0 0.0
  %2251 = vmatprep.subr.mxu0 0.0
  %2252 = vmatpush1.xpose.msra.mxu0 0.0
  %2253 = vmatprep.subr.mxu0 0.0
  %2254 = vmatpush1.xpose.msra.mxu0 0.0
  %2255 = vmatprep.subr.mxu0 0.0
  %2256 = vmatpush1.xpose.msra.mxu0 0.0
  %2257 = vmatprep.subr.mxu0 0.0
  %2258 = vmatpush1.xpose.msra.mxu0 0.0
  %2259 = vmatprep.subr.mxu0 0.0
  %2260 = vmatpush1.xpose.msra.mxu0 0.0
  %2261 = vmatprep.subr.mxu0 0.0
  %2262 = vmatpush1.xpose.msra.mxu0 0.0
  %2263 = vmatprep.subr.mxu0 0.0
  %2264 = vmatpush1.xpose.msra.mxu0 %v2231
  %2265 = vmatprep.subr.mxu0 0.0
  %2266 = vmatpush2.xpose.msra.mxu0 0.0
  %2267 = vmatprep.subr.mxu0 0.0
  %2268 = vmatpush2.xpose.msra.mxu0 0.0
  %2269 = vmatprep.subr.mxu0 0.0
  %2270 = vmatpush2.xpose.msra.mxu0 0.0
  %2271 = vmatprep.subr.mxu0 0.0
  %2272 = vmatpush2.xpose.msra.mxu0 0.0
  %2273 = vmatprep.subr.mxu0 0.0
  %2274 = vmatpush2.xpose.msra.mxu0 0.0
  %2275 = vmatprep.subr.mxu0 0.0
  %2276 = vmatpush2.xpose.msra.mxu0 0.0
  %2277 = vmatprep.subr.mxu0 0.0
  %2278 = vmatpush2.xpose.msra.mxu0 0.0
  %2279 = vmatprep.subr.mxu0 0.0
  %2280 = vmatpush2.xpose.msra.mxu0 0.0
  %2281 = vmatprep.subr.mxu0 0.0
  %2282 = vmatpush2.xpose.msra.mxu0 0.0
  %2283 = vmatprep.subr.mxu0 0.0
  %2284 = vmatpush2.xpose.msra.mxu0 0.0
  %2285 = vmatprep.subr.mxu0 0.0
  %2286 = vmatpush2.xpose.msra.mxu0 0.0
  %2287 = vmatprep.subr.mxu0 0.0
  %2288 = vmatpush2.xpose.msra.mxu0 0.0
  %2289 = vmatprep.subr.mxu0 0.0
  %2290 = vmatpush2.xpose.msra.mxu0 0.0
  %2291 = vmatprep.subr.mxu0 0.0
  %2292 = vmatpush2.xpose.msra.mxu0 0.0
  %2293 = vmatprep.subr.mxu0 0.0
  %2294 = vmatpush2.xpose.msra.mxu0 0.0
  %2295 = vmatprep.subr.mxu0 0.0
  %2296 = vmatpush2.xpose.msra.mxu0 0.0
  %2297 = vmatprep.mubr.f32.mxu0 0.0
  %2298 = vmatmul.mubr.f32.gmra.mxu0 %v2228
  %v2299 = vpop.f32.mrf.mxu0
  %v2300 = vadd.f32 %v2226, %v2299
  %v2301 = vpop.f32.mrf.mxu0
  %2302 = vdwg.mxu0
  %v2303 = vsel %vm317, %v2300, -inf
  %2304 = vmax.xlane.f32.xlu0 %v2303
  %v2305 = vpop.xlane.xlu0 %2304
  %v2306 = vsub.f32 %v2300, %v2305
  %v2307 = vmul.f32 %v2306, 1.442695
  %v2308 = vpow.pop %v2307
  %v2309 = vsel %vm317, %v2308, 0.0
  %2310 = vadd.xlane.f32.xlu0 %v2309
  %v2311 = vpop.xlane.xlu0 %2310
  %v2312 = vrcp.pop %v2311
  %v2313 = vmul.f32 %v2308, %v2312
  %v2315 = vsel %vm317, %v2313, 0
  %2317 = vmatprep.subr.mxu0 0.0
  %2318 = vmatpush1.msra.mxu0 0.0
  %2319 = vmatprep.subr.mxu0 0.0
  %2320 = vmatpush1.msra.mxu0 0.0
  %2321 = vmatprep.subr.mxu0 0.0
  %2322 = vmatpush1.msra.mxu0 0.0
  %2323 = vmatprep.subr.mxu0 0.0
  %2324 = vmatpush1.msra.mxu0 0.0
  %2325 = vmatprep.subr.mxu0 0.0
  %2326 = vmatpush1.msra.mxu0 0.0
  %2327 = vmatprep.subr.mxu0 0.0
  %2328 = vmatpush1.msra.mxu0 0.0
  %2329 = vmatprep.subr.mxu0 0.0
  %2330 = vmatpush1.msra.mxu0 0.0
  %2331 = vmatprep.subr.mxu0 0.0
  %2332 = vmatpush1.msra.mxu0 0.0
  %2333 = vmatprep.subr.mxu0 0.0
  %2334 = vmatpush1.msra.mxu0 0.0
  %2335 = vmatprep.subr.mxu0 0.0
  %2336 = vmatpush1.msra.mxu0 0.0
  %2337 = vmatprep.subr.mxu0 0.0
  %2338 = vmatpush1.msra.mxu0 0.0
  %2339 = vmatprep.subr.mxu0 0.0
  %2340 = vmatpush1.msra.mxu0 0.0
  %2341 = vmatprep.subr.mxu0 0.0
  %2342 = vmatpush1.msra.mxu0 0.0
  %2343 = vmatprep.subr.mxu0 0.0
  %2344 = vmatpush1.msra.mxu0 0.0
  %2345 = vmatprep.subr.mxu0 0.0
  %2346 = vmatpush1.msra.mxu0 0.0
  %2347 = vmatprep.subr.mxu0 0.0
  %2348 = vmatpush1.msra.mxu0 %v2220
  %2349 = vmatprep.subr.mxu0 0.0
  %2350 = vmatpush2.msra.mxu0 0.0
  %2351 = vmatprep.subr.mxu0 0.0
  %2352 = vmatpush2.msra.mxu0 0.0
  %2353 = vmatprep.subr.mxu0 0.0
  %2354 = vmatpush2.msra.mxu0 0.0
  %2355 = vmatprep.subr.mxu0 0.0
  %2356 = vmatpush2.msra.mxu0 0.0
  %2357 = vmatprep.subr.mxu0 0.0
  %2358 = vmatpush2.msra.mxu0 0.0
  %2359 = vmatprep.subr.mxu0 0.0
  %2360 = vmatpush2.msra.mxu0 0.0
  %2361 = vmatprep.subr.mxu0 0.0
  %2362 = vmatpush2.msra.mxu0 0.0
  %2363 = vmatprep.subr.mxu0 0.0
  %2364 = vmatpush2.msra.mxu0 0.0
  %2365 = vmatprep.subr.mxu0 0.0
  %2366 = vmatpush2.msra.mxu0 0.0
  %2367 = vmatprep.subr.mxu0 0.0
  %2368 = vmatpush2.msra.mxu0 0.0
  %2369 = vmatprep.subr.mxu0 0.0
  %2370 = vmatpush2.msra.mxu0 0.0
  %2371 = vmatprep.subr.mxu0 0.0
  %2372 = vmatpush2.msra.mxu0 0.0
  %2373 = vmatprep.subr.mxu0 0.0
  %2374 = vmatpush2.msra.mxu0 0.0
  %2375 = vmatprep.subr.mxu0 0.0
  %2376 = vmatpush2.msra.mxu0 0.0
  %2377 = vmatprep.subr.mxu0 0.0
  %2378 = vmatpush2.msra.mxu0 0.0
  %2379 = vmatprep.subr.mxu0 0.0
  %2380 = vmatpush2.msra.mxu0 0.0
  %2381 = vmatprep.mubr.f32.mxu0 0.0
  %2382 = vmatmul.mubr.f32.gmra.mxu0 %v2315
  %v2383 = vpop.f32.mrf.mxu0
  %v2384 = vadd.f32 0.0, %v2383
  %v2385 = vpop.f32.mrf.mxu0
  %2386 = vdwg.mxu0
  %v2387 = vld [vmem:[%s3] sm:$0xff]
  %v2389 = vsel %vm317, %v2384, 0
  %2391 = vmatprep.subr.mxu0 0.0
  %2392 = vmatpush1.msra.mxu0 0.0
  %2393 = vmatprep.subr.mxu0 0.0
  %2394 = vmatpush1.msra.mxu0 0.0
  %2395 = vmatprep.subr.mxu0 0.0
  %2396 = vmatpush1.msra.mxu0 0.0
  %2397 = vmatprep.subr.mxu0 0.0
  %2398 = vmatpush1.msra.mxu0 0.0
  %2399 = vmatprep.subr.mxu0 0.0
  %2400 = vmatpush1.msra.mxu0 0.0
  %2401 = vmatprep.subr.mxu0 0.0
  %2402 = vmatpush1.msra.mxu0 0.0
  %2403 = vmatprep.subr.mxu0 0.0
  %2404 = vmatpush1.msra.mxu0 0.0
  %2405 = vmatprep.subr.mxu0 0.0
  %2406 = vmatpush1.msra.mxu0 0.0
  %2407 = vmatprep.subr.mxu0 0.0
  %2408 = vmatpush1.msra.mxu0 0.0
  %2409 = vmatprep.subr.mxu0 0.0
  %2410 = vmatpush1.msra.mxu0 0.0
  %2411 = vmatprep.subr.mxu0 0.0
  %2412 = vmatpush1.msra.mxu0 0.0
  %2413 = vmatprep.subr.mxu0 0.0
  %2414 = vmatpush1.msra.mxu0 0.0
  %2415 = vmatprep.subr.mxu0 0.0
  %2416 = vmatpush1.msra.mxu0 0.0
  %2417 = vmatprep.subr.mxu0 0.0
  %2418 = vmatpush1.msra.mxu0 0.0
  %2419 = vmatprep.subr.mxu0 0.0
  %2420 = vmatpush1.msra.mxu0 0.0
  %2421 = vmatprep.subr.mxu0 0.0
  %2422 = vmatpush1.msra.mxu0 %v2387
  %2423 = vmatprep.subr.mxu0 0.0
  %2424 = vmatpush2.msra.mxu0 0.0
  %2425 = vmatprep.subr.mxu0 0.0
  %2426 = vmatpush2.msra.mxu0 0.0
  %2427 = vmatprep.subr.mxu0 0.0
  %2428 = vmatpush2.msra.mxu0 0.0
  %2429 = vmatprep.subr.mxu0 0.0
  %2430 = vmatpush2.msra.mxu0 0.0
  %2431 = vmatprep.subr.mxu0 0.0
  %2432 = vmatpush2.msra.mxu0 0.0
  %2433 = vmatprep.subr.mxu0 0.0
  %2434 = vmatpush2.msra.mxu0 0.0
  %2435 = vmatprep.subr.mxu0 0.0
  %2436 = vmatpush2.msra.mxu0 0.0
  %2437 = vmatprep.subr.mxu0 0.0
  %2438 = vmatpush2.msra.mxu0 0.0
  %2439 = vmatprep.subr.mxu0 0.0
  %2440 = vmatpush2.msra.mxu0 0.0
  %2441 = vmatprep.subr.mxu0 0.0
  %2442 = vmatpush2.msra.mxu0 0.0
  %2443 = vmatprep.subr.mxu0 0.0
  %2444 = vmatpush2.msra.mxu0 0.0
  %2445 = vmatprep.subr.mxu0 0.0
  %2446 = vmatpush2.msra.mxu0 0.0
  %2447 = vmatprep.subr.mxu0 0.0
  %2448 = vmatpush2.msra.mxu0 0.0
  %2449 = vmatprep.subr.mxu0 0.0
  %2450 = vmatpush2.msra.mxu0 0.0
  %2451 = vmatprep.subr.mxu0 0.0
  %2452 = vmatpush2.msra.mxu0 0.0
  %2453 = vmatprep.subr.mxu0 0.0
  %2454 = vmatpush2.msra.mxu0 0.0
  %2455 = vmatprep.mubr.f32.mxu0 0.0
  %2456 = vmatmul.mubr.f32.gmra.mxu0 %v2389
  %v2457 = vpop.f32.mrf.mxu0
  %v2458 = vadd.f32 0.0, %v2457
  %v2459 = vpop.f32.mrf.mxu0
  %2460 = vdwg.mxu0
  %v2461 = vadd.f32 %v555, %v2458
  %v2462 = vld [vmem:[%s557] sm:$0xff]
  %v2463 = vld [vmem:[%s557 + $0x8] sm:$0xff]
  %v2464 = vld [vmem:[%s557 + $0x10] sm:$0xff]
  %v2465 = vld [vmem:[%s557 + $0x18] sm:$0xff]
  %v2466 = vld [vmem:[%s557 + $0x20] sm:$0x1]
  %v2467 = vld [vmem:[%s563] sm:$0xff]
  %v2468 = vld [vmem:[%s563 + $0x8] sm:$0xff]
  %v2469 = vld [vmem:[%s563 + $0x10] sm:$0xff]
  %v2470 = vld [vmem:[%s563 + $0x18] sm:$0xff]
  %v2471 = vld [vmem:[%s563 + $0x20] sm:$0x1]
  %v2472 = vld [vmem:[%s569] sm:$0xff]
  %v2473 = vld [vmem:[%s569 + $0x8] sm:$0xff]
  %v2474 = vld [vmem:[%s569 + $0x10] sm:$0xff]
  %v2475 = vld [vmem:[%s569 + $0x18] sm:$0xff]
  %v2476 = vld [vmem:[%s569 + $0x20] sm:$0x1]
  %v2477 = vlaneseq
  %v2478 = vshrl.u32 %v2477, 7
  %v2479 = vsub.s32 0, %v2478
  %v2480 = vrot.slane %v2466, %v2479
  %2481 = vmatprep.subr.mxu0 0.0
  %2482 = vmatpush1.msra.mxu0 0.0
  %2483 = vmatprep.subr.mxu0 0.0
  %2484 = vmatpush1.msra.mxu0 0.0
  %2485 = vmatprep.subr.mxu0 0.0
  %2486 = vmatpush1.msra.mxu0 0.0
  %2487 = vmatprep.subr.mxu0 0.0
  %2488 = vmatpush1.msra.mxu0 0.0
  %2489 = vmatprep.subr.mxu0 0.0
  %2490 = vmatpush1.msra.mxu0 0.0
  %2491 = vmatprep.subr.mxu0 0.0
  %2492 = vmatpush1.msra.mxu0 0.0
  %2493 = vmatprep.subr.mxu0 0.0
  %2494 = vmatpush1.msra.mxu0 0.0
  %2495 = vmatprep.subr.mxu0 0.0
  %2496 = vmatpush1.msra.mxu0 0.0
  %2497 = vmatprep.subr.mxu0 0.0
  %2498 = vmatpush1.msra.mxu0 0.0
  %2499 = vmatprep.subr.mxu0 0.0
  %2500 = vmatpush1.msra.mxu0 0.0
  %2501 = vmatprep.subr.mxu0 0.0
  %2502 = vmatpush1.msra.mxu0 0.0
  %2503 = vmatprep.subr.mxu0 0.0
  %2504 = vmatpush1.msra.mxu0 0.0
  %2505 = vmatprep.subr.mxu0 0.0
  %2506 = vmatpush1.msra.mxu0 %v2465
  %2507 = vmatprep.subr.mxu0 0.0
  %2508 = vmatpush1.msra.mxu0 %v2464
  %2509 = vmatprep.subr.mxu0 0.0
  %2510 = vmatpush1.msra.mxu0 %v2463
  %2511 = vmatprep.subr.mxu0 0.0
  %2512 = vmatpush1.msra.mxu0 %v2462
  %2513 = vmatprep.subr.mxu0 0.0
  %2514 = vmatpush2.msra.mxu0 0.0
  %2515 = vmatprep.subr.mxu0 0.0
  %2516 = vmatpush2.msra.mxu0 0.0
  %2517 = vmatprep.subr.mxu0 0.0
  %2518 = vmatpush2.msra.mxu0 0.0
  %2519 = vmatprep.subr.mxu0 0.0
  %2520 = vmatpush2.msra.mxu0 0.0
  %2521 = vmatprep.subr.mxu0 0.0
  %2522 = vmatpush2.msra.mxu0 0.0
  %2523 = vmatprep.subr.mxu0 0.0
  %2524 = vmatpush2.msra.mxu0 0.0
  %2525 = vmatprep.subr.mxu0 0.0
  %2526 = vmatpush2.msra.mxu0 0.0
  %2527 = vmatprep.subr.mxu0 0.0
  %2528 = vmatpush2.msra.mxu0 0.0
  %2529 = vmatprep.subr.mxu0 0.0
  %2530 = vmatpush2.msra.mxu0 0.0
  %2531 = vmatprep.subr.mxu0 0.0
  %2532 = vmatpush2.msra.mxu0 0.0
  %2533 = vmatprep.subr.mxu0 0.0
  %2534 = vmatpush2.msra.mxu0 0.0
  %2535 = vmatprep.subr.mxu0 0.0
  %2536 = vmatpush2.msra.mxu0 0.0
  %2537 = vmatprep.subr.mxu0 0.0
  %2538 = vmatpush2.msra.mxu0 0.0
  %2539 = vmatprep.subr.mxu0 0.0
  %2540 = vmatpush2.msra.mxu0 0.0
  %2541 = vmatprep.subr.mxu0 0.0
  %2542 = vmatpush2.msra.mxu0 0.0
  %2543 = vmatprep.subr.mxu0 0.0
  %2544 = vmatpush2.msra.mxu0 0.0
  %2545 = vmatprep.mubr.f32.mxu0 0.0
  %2546 = vmatmul.mubr.f32.gmra.mxu0 %v2003
  %v2547 = vpop.f32.mrf.mxu0
  %v2548 = vadd.f32 %v2480, %v2547
  %v2549 = vpop.f32.mrf.mxu0
  %2550 = vdwg.mxu0
  %v2551 = vlaneseq
  %v2552 = vshrl.u32 %v2551, 7
  %v2553 = vsub.s32 0, %v2552
  %v2554 = vrot.slane %v2471, %v2553
  %2555 = vmatprep.subr.mxu0 0.0
  %2556 = vmatpush1.msra.mxu0 0.0
  %2557 = vmatprep.subr.mxu0 0.0
  %2558 = vmatpush1.msra.mxu0 0.0
  %2559 = vmatprep.subr.mxu0 0.0
  %2560 = vmatpush1.msra.mxu0 0.0
  %2561 = vmatprep.subr.mxu0 0.0
  %2562 = vmatpush1.msra.mxu0 0.0
  %2563 = vmatprep.subr.mxu0 0.0
  %2564 = vmatpush1.msra.mxu0 0.0
  %2565 = vmatprep.subr.mxu0 0.0
  %2566 = vmatpush1.msra.mxu0 0.0
  %2567 = vmatprep.subr.mxu0 0.0
  %2568 = vmatpush1.msra.mxu0 0.0
  %2569 = vmatprep.subr.mxu0 0.0
  %2570 = vmatpush1.msra.mxu0 0.0
  %2571 = vmatprep.subr.mxu0 0.0
  %2572 = vmatpush1.msra.mxu0 0.0
  %2573 = vmatprep.subr.mxu0 0.0
  %2574 = vmatpush1.msra.mxu0 0.0
  %2575 = vmatprep.subr.mxu0 0.0
  %2576 = vmatpush1.msra.mxu0 0.0
  %2577 = vmatprep.subr.mxu0 0.0
  %2578 = vmatpush1.msra.mxu0 0.0
  %2579 = vmatprep.subr.mxu0 0.0
  %2580 = vmatpush1.msra.mxu0 %v2470
  %2581 = vmatprep.subr.mxu0 0.0
  %2582 = vmatpush1.msra.mxu0 %v2469
  %2583 = vmatprep.subr.mxu0 0.0
  %2584 = vmatpush1.msra.mxu0 %v2468
  %2585 = vmatprep.subr.mxu0 0.0
  %2586 = vmatpush1.msra.mxu0 %v2467
  %2587 = vmatprep.subr.mxu0 0.0
  %2588 = vmatpush2.msra.mxu0 0.0
  %2589 = vmatprep.subr.mxu0 0.0
  %2590 = vmatpush2.msra.mxu0 0.0
  %2591 = vmatprep.subr.mxu0 0.0
  %2592 = vmatpush2.msra.mxu0 0.0
  %2593 = vmatprep.subr.mxu0 0.0
  %2594 = vmatpush2.msra.mxu0 0.0
  %2595 = vmatprep.subr.mxu0 0.0
  %2596 = vmatpush2.msra.mxu0 0.0
  %2597 = vmatprep.subr.mxu0 0.0
  %2598 = vmatpush2.msra.mxu0 0.0
  %2599 = vmatprep.subr.mxu0 0.0
  %2600 = vmatpush2.msra.mxu0 0.0
  %2601 = vmatprep.subr.mxu0 0.0
  %2602 = vmatpush2.msra.mxu0 0.0
  %2603 = vmatprep.subr.mxu0 0.0
  %2604 = vmatpush2.msra.mxu0 0.0
  %2605 = vmatprep.subr.mxu0 0.0
  %2606 = vmatpush2.msra.mxu0 0.0
  %2607 = vmatprep.subr.mxu0 0.0
  %2608 = vmatpush2.msra.mxu0 0.0
  %2609 = vmatprep.subr.mxu0 0.0
  %2610 = vmatpush2.msra.mxu0 0.0
  %2611 = vmatprep.subr.mxu0 0.0
  %2612 = vmatpush2.msra.mxu0 0.0
  %2613 = vmatprep.subr.mxu0 0.0
  %2614 = vmatpush2.msra.mxu0 0.0
  %2615 = vmatprep.subr.mxu0 0.0
  %2616 = vmatpush2.msra.mxu0 0.0
  %2617 = vmatprep.subr.mxu0 0.0
  %2618 = vmatpush2.msra.mxu0 0.0
  %2619 = vmatprep.mubr.f32.mxu0 0.0
  %2620 = vmatmul.mubr.f32.gmra.mxu0 %v2003
  %v2621 = vpop.f32.mrf.mxu0
  %v2622 = vadd.f32 %v2554, %v2621
  %v2623 = vpop.f32.mrf.mxu0
  %2624 = vdwg.mxu0
  %v2625 = vlaneseq
  %v2626 = vshrl.u32 %v2625, 7
  %v2627 = vsub.s32 0, %v2626
  %v2628 = vrot.slane %v2476, %v2627
  %2629 = vmatprep.subr.mxu0 0.0
  %2630 = vmatpush1.msra.mxu0 0.0
  %2631 = vmatprep.subr.mxu0 0.0
  %2632 = vmatpush1.msra.mxu0 0.0
  %2633 = vmatprep.subr.mxu0 0.0
  %2634 = vmatpush1.msra.mxu0 0.0
  %2635 = vmatprep.subr.mxu0 0.0
  %2636 = vmatpush1.msra.mxu0 0.0
  %2637 = vmatprep.subr.mxu0 0.0
  %2638 = vmatpush1.msra.mxu0 0.0
  %2639 = vmatprep.subr.mxu0 0.0
  %2640 = vmatpush1.msra.mxu0 0.0
  %2641 = vmatprep.subr.mxu0 0.0
  %2642 = vmatpush1.msra.mxu0 0.0
  %2643 = vmatprep.subr.mxu0 0.0
  %2644 = vmatpush1.msra.mxu0 0.0
  %2645 = vmatprep.subr.mxu0 0.0
  %2646 = vmatpush1.msra.mxu0 0.0
  %2647 = vmatprep.subr.mxu0 0.0
  %2648 = vmatpush1.msra.mxu0 0.0
  %2649 = vmatprep.subr.mxu0 0.0
  %2650 = vmatpush1.msra.mxu0 0.0
  %2651 = vmatprep.subr.mxu0 0.0
  %2652 = vmatpush1.msra.mxu0 0.0
  %2653 = vmatprep.subr.mxu0 0.0
  %2654 = vmatpush1.msra.mxu0 %v2475
  %2655 = vmatprep.subr.mxu0 0.0
  %2656 = vmatpush1.msra.mxu0 %v2474
  %2657 = vmatprep.subr.mxu0 0.0
  %2658 = vmatpush1.msra.mxu0 %v2473
  %2659 = vmatprep.subr.mxu0 0.0
  %2660 = vmatpush1.msra.mxu0 %v2472
  %2661 = vmatprep.subr.mxu0 0.0
  %2662 = vmatpush2.msra.mxu0 0.0
  %2663 = vmatprep.subr.mxu0 0.0
  %2664 = vmatpush2.msra.mxu0 0.0
  %2665 = vmatprep.subr.mxu0 0.0
  %2666 = vmatpush2.msra.mxu0 0.0
  %2667 = vmatprep.subr.mxu0 0.0
  %2668 = vmatpush2.msra.mxu0 0.0
  %2669 = vmatprep.subr.mxu0 0.0
  %2670 = vmatpush2.msra.mxu0 0.0
  %2671 = vmatprep.subr.mxu0 0.0
  %2672 = vmatpush2.msra.mxu0 0.0
  %2673 = vmatprep.subr.mxu0 0.0
  %2674 = vmatpush2.msra.mxu0 0.0
  %2675 = vmatprep.subr.mxu0 0.0
  %2676 = vmatpush2.msra.mxu0 0.0
  %2677 = vmatprep.subr.mxu0 0.0
  %2678 = vmatpush2.msra.mxu0 0.0
  %2679 = vmatprep.subr.mxu0 0.0
  %2680 = vmatpush2.msra.mxu0 0.0
  %2681 = vmatprep.subr.mxu0 0.0
  %2682 = vmatpush2.msra.mxu0 0.0
  %2683 = vmatprep.subr.mxu0 0.0
  %2684 = vmatpush2.msra.mxu0 0.0
  %2685 = vmatprep.subr.mxu0 0.0
  %2686 = vmatpush2.msra.mxu0 0.0
  %2687 = vmatprep.subr.mxu0 0.0
  %2688 = vmatpush2.msra.mxu0 0.0
  %2689 = vmatprep.subr.mxu0 0.0
  %2690 = vmatpush2.msra.mxu0 0.0
  %2691 = vmatprep.subr.mxu0 0.0
  %2692 = vmatpush2.msra.mxu0 0.0
  %2693 = vmatprep.mubr.f32.mxu0 0.0
  %2694 = vmatmul.mubr.f32.gmra.mxu0 %v2003
  %v2695 = vpop.f32.mrf.mxu0
  %v2696 = vadd.f32 %v2628, %v2695
  %v2697 = vpop.f32.mrf.mxu0
  %2698 = vdwg.mxu0
  %v2700 = vsel %vm317, %v2548, 0
  %v2703 = vsel %vm317, %v2622, 0
  %2705 = vmatprep.subr.mxu0 0.0
  %2706 = vmatpush1.xpose.msra.mxu0 0.0
  %2707 = vmatprep.subr.mxu0 0.0
  %2708 = vmatpush1.xpose.msra.mxu0 0.0
  %2709 = vmatprep.subr.mxu0 0.0
  %2710 = vmatpush1.xpose.msra.mxu0 0.0
  %2711 = vmatprep.subr.mxu0 0.0
  %2712 = vmatpush1.xpose.msra.mxu0 0.0
  %2713 = vmatprep.subr.mxu0 0.0
  %2714 = vmatpush1.xpose.msra.mxu0 0.0
  %2715 = vmatprep.subr.mxu0 0.0
  %2716 = vmatpush1.xpose.msra.mxu0 0.0
  %2717 = vmatprep.subr.mxu0 0.0
  %2718 = vmatpush1.xpose.msra.mxu0 0.0
  %2719 = vmatprep.subr.mxu0 0.0
  %2720 = vmatpush1.xpose.msra.mxu0 0.0
  %2721 = vmatprep.subr.mxu0 0.0
  %2722 = vmatpush1.xpose.msra.mxu0 0.0
  %2723 = vmatprep.subr.mxu0 0.0
  %2724 = vmatpush1.xpose.msra.mxu0 0.0
  %2725 = vmatprep.subr.mxu0 0.0
  %2726 = vmatpush1.xpose.msra.mxu0 0.0
  %2727 = vmatprep.subr.mxu0 0.0
  %2728 = vmatpush1.xpose.msra.mxu0 0.0
  %2729 = vmatprep.subr.mxu0 0.0
  %2730 = vmatpush1.xpose.msra.mxu0 0.0
  %2731 = vmatprep.subr.mxu0 0.0
  %2732 = vmatpush1.xpose.msra.mxu0 0.0
  %2733 = vmatprep.subr.mxu0 0.0
  %2734 = vmatpush1.xpose.msra.mxu0 0.0
  %2735 = vmatprep.subr.mxu0 0.0
  %2736 = vmatpush1.xpose.msra.mxu0 %v2703
  %2737 = vmatprep.subr.mxu0 0.0
  %2738 = vmatpush2.xpose.msra.mxu0 0.0
  %2739 = vmatprep.subr.mxu0 0.0
  %2740 = vmatpush2.xpose.msra.mxu0 0.0
  %2741 = vmatprep.subr.mxu0 0.0
  %2742 = vmatpush2.xpose.msra.mxu0 0.0
  %2743 = vmatprep.subr.mxu0 0.0
  %2744 = vmatpush2.xpose.msra.mxu0 0.0
  %2745 = vmatprep.subr.mxu0 0.0
  %2746 = vmatpush2.xpose.msra.mxu0 0.0
  %2747 = vmatprep.subr.mxu0 0.0
  %2748 = vmatpush2.xpose.msra.mxu0 0.0
  %2749 = vmatprep.subr.mxu0 0.0
  %2750 = vmatpush2.xpose.msra.mxu0 0.0
  %2751 = vmatprep.subr.mxu0 0.0
  %2752 = vmatpush2.xpose.msra.mxu0 0.0
  %2753 = vmatprep.subr.mxu0 0.0
  %2754 = vmatpush2.xpose.msra.mxu0 0.0
  %2755 = vmatprep.subr.mxu0 0.0
  %2756 = vmatpush2.xpose.msra.mxu0 0.0
  %2757 = vmatprep.subr.mxu0 0.0
  %2758 = vmatpush2.xpose.msra.mxu0 0.0
  %2759 = vmatprep.subr.mxu0 0.0
  %2760 = vmatpush2.xpose.msra.mxu0 0.0
  %2761 = vmatprep.subr.mxu0 0.0
  %2762 = vmatpush2.xpose.msra.mxu0 0.0
  %2763 = vmatprep.subr.mxu0 0.0
  %2764 = vmatpush2.xpose.msra.mxu0 0.0
  %2765 = vmatprep.subr.mxu0 0.0
  %2766 = vmatpush2.xpose.msra.mxu0 0.0
  %2767 = vmatprep.subr.mxu0 0.0
  %2768 = vmatpush2.xpose.msra.mxu0 0.0
  %2769 = vmatprep.mubr.f32.mxu0 0.0
  %2770 = vmatmul.mubr.f32.gmra.mxu0 %v2700
  %v2771 = vpop.f32.mrf.mxu0
  %v2772 = vadd.f32 %v2226, %v2771
  %v2773 = vpop.f32.mrf.mxu0
  %2774 = vdwg.mxu0
  %v2775 = vsel %vm317, %v2772, -inf
  %2776 = vmax.xlane.f32.xlu0 %v2775
  %v2777 = vpop.xlane.xlu0 %2776
  %v2778 = vsub.f32 %v2772, %v2777
  %v2779 = vmul.f32 %v2778, 1.442695
  %v2780 = vpow.pop %v2779
  %v2781 = vsel %vm317, %v2780, 0.0
  %2782 = vadd.xlane.f32.xlu0 %v2781
  %v2783 = vpop.xlane.xlu0 %2782
  %v2784 = vrcp.pop %v2783
  %v2785 = vmul.f32 %v2780, %v2784
  %v2787 = vsel %vm317, %v2785, 0
  %2789 = vmatprep.subr.mxu0 0.0
  %2790 = vmatpush1.msra.mxu0 0.0
  %2791 = vmatprep.subr.mxu0 0.0
  %2792 = vmatpush1.msra.mxu0 0.0
  %2793 = vmatprep.subr.mxu0 0.0
  %2794 = vmatpush1.msra.mxu0 0.0
  %2795 = vmatprep.subr.mxu0 0.0
  %2796 = vmatpush1.msra.mxu0 0.0
  %2797 = vmatprep.subr.mxu0 0.0
  %2798 = vmatpush1.msra.mxu0 0.0
  %2799 = vmatprep.subr.mxu0 0.0
  %2800 = vmatpush1.msra.mxu0 0.0
  %2801 = vmatprep.subr.mxu0 0.0
  %2802 = vmatpush1.msra.mxu0 0.0
  %2803 = vmatprep.subr.mxu0 0.0
  %2804 = vmatpush1.msra.mxu0 0.0
  %2805 = vmatprep.subr.mxu0 0.0
  %2806 = vmatpush1.msra.mxu0 0.0
  %2807 = vmatprep.subr.mxu0 0.0
  %2808 = vmatpush1.msra.mxu0 0.0
  %2809 = vmatprep.subr.mxu0 0.0
  %2810 = vmatpush1.msra.mxu0 0.0
  %2811 = vmatprep.subr.mxu0 0.0
  %2812 = vmatpush1.msra.mxu0 0.0
  %2813 = vmatprep.subr.mxu0 0.0
  %2814 = vmatpush1.msra.mxu0 0.0
  %2815 = vmatprep.subr.mxu0 0.0
  %2816 = vmatpush1.msra.mxu0 0.0
  %2817 = vmatprep.subr.mxu0 0.0
  %2818 = vmatpush1.msra.mxu0 0.0
  %2819 = vmatprep.subr.mxu0 0.0
  %2820 = vmatpush1.msra.mxu0 %v2696
  %2821 = vmatprep.subr.mxu0 0.0
  %2822 = vmatpush2.msra.mxu0 0.0
  %2823 = vmatprep.subr.mxu0 0.0
  %2824 = vmatpush2.msra.mxu0 0.0
  %2825 = vmatprep.subr.mxu0 0.0
  %2826 = vmatpush2.msra.mxu0 0.0
  %2827 = vmatprep.subr.mxu0 0.0
  %2828 = vmatpush2.msra.mxu0 0.0
  %2829 = vmatprep.subr.mxu0 0.0
  %2830 = vmatpush2.msra.mxu0 0.0
  %2831 = vmatprep.subr.mxu0 0.0
  %2832 = vmatpush2.msra.mxu0 0.0
  %2833 = vmatprep.subr.mxu0 0.0
  %2834 = vmatpush2.msra.mxu0 0.0
  %2835 = vmatprep.subr.mxu0 0.0
  %2836 = vmatpush2.msra.mxu0 0.0
  %2837 = vmatprep.subr.mxu0 0.0
  %2838 = vmatpush2.msra.mxu0 0.0
  %2839 = vmatprep.subr.mxu0 0.0
  %2840 = vmatpush2.msra.mxu0 0.0
  %2841 = vmatprep.subr.mxu0 0.0
  %2842 = vmatpush2.msra.mxu0 0.0
  %2843 = vmatprep.subr.mxu0 0.0
  %2844 = vmatpush2.msra.mxu0 0.0
  %2845 = vmatprep.subr.mxu0 0.0
  %2846 = vmatpush2.msra.mxu0 0.0
  %2847 = vmatprep.subr.mxu0 0.0
  %2848 = vmatpush2.msra.mxu0 0.0
  %2849 = vmatprep.subr.mxu0 0.0
  %2850 = vmatpush2.msra.mxu0 0.0
  %2851 = vmatprep.subr.mxu0 0.0
  %2852 = vmatpush2.msra.mxu0 0.0
  %2853 = vmatprep.mubr.f32.mxu0 0.0
  %2854 = vmatmul.mubr.f32.gmra.mxu0 %v2787
  %v2855 = vpop.f32.mrf.mxu0
  %v2856 = vadd.f32 0.0, %v2855
  %v2857 = vpop.f32.mrf.mxu0
  %2858 = vdwg.mxu0
  %v2859 = vld [vmem:[%s3 + $0x8] sm:$0xff]
  %v2861 = vsel %vm317, %v2856, 0
  %2863 = vmatprep.subr.mxu0 0.0
  %2864 = vmatpush1.msra.mxu0 0.0
  %2865 = vmatprep.subr.mxu0 0.0
  %2866 = vmatpush1.msra.mxu0 0.0
  %2867 = vmatprep.subr.mxu0 0.0
  %2868 = vmatpush1.msra.mxu0 0.0
  %2869 = vmatprep.subr.mxu0 0.0
  %2870 = vmatpush1.msra.mxu0 0.0
  %2871 = vmatprep.subr.mxu0 0.0
  %2872 = vmatpush1.msra.mxu0 0.0
  %2873 = vmatprep.subr.mxu0 0.0
  %2874 = vmatpush1.msra.mxu0 0.0
  %2875 = vmatprep.subr.mxu0 0.0
  %2876 = vmatpush1.msra.mxu0 0.0
  %2877 = vmatprep.subr.mxu0 0.0
  %2878 = vmatpush1.msra.mxu0 0.0
  %2879 = vmatprep.subr.mxu0 0.0
  %2880 = vmatpush1.msra.mxu0 0.0
  %2881 = vmatprep.subr.mxu0 0.0
  %2882 = vmatpush1.msra.mxu0 0.0
  %2883 = vmatprep.subr.mxu0 0.0
  %2884 = vmatpush1.msra.mxu0 0.0
  %2885 = vmatprep.subr.mxu0 0.0
  %2886 = vmatpush1.msra.mxu0 0.0
  %2887 = vmatprep.subr.mxu0 0.0
  %2888 = vmatpush1.msra.mxu0 0.0
  %2889 = vmatprep.subr.mxu0 0.0
  %2890 = vmatpush1.msra.mxu0 0.0
  %2891 = vmatprep.subr.mxu0 0.0
  %2892 = vmatpush1.msra.mxu0 0.0
  %2893 = vmatprep.subr.mxu0 0.0
  %2894 = vmatpush1.msra.mxu0 %v2859
  %2895 = vmatprep.subr.mxu0 0.0
  %2896 = vmatpush2.msra.mxu0 0.0
  %2897 = vmatprep.subr.mxu0 0.0
  %2898 = vmatpush2.msra.mxu0 0.0
  %2899 = vmatprep.subr.mxu0 0.0
  %2900 = vmatpush2.msra.mxu0 0.0
  %2901 = vmatprep.subr.mxu0 0.0
  %2902 = vmatpush2.msra.mxu0 0.0
  %2903 = vmatprep.subr.mxu0 0.0
  %2904 = vmatpush2.msra.mxu0 0.0
  %2905 = vmatprep.subr.mxu0 0.0
  %2906 = vmatpush2.msra.mxu0 0.0
  %2907 = vmatprep.subr.mxu0 0.0
  %2908 = vmatpush2.msra.mxu0 0.0
  %2909 = vmatprep.subr.mxu0 0.0
  %2910 = vmatpush2.msra.mxu0 0.0
  %2911 = vmatprep.subr.mxu0 0.0
  %2912 = vmatpush2.msra.mxu0 0.0
  %2913 = vmatprep.subr.mxu0 0.0
  %2914 = vmatpush2.msra.mxu0 0.0
  %2915 = vmatprep.subr.mxu0 0.0
  %2916 = vmatpush2.msra.mxu0 0.0
  %2917 = vmatprep.subr.mxu0 0.0
  %2918 = vmatpush2.msra.mxu0 0.0
  %2919 = vmatprep.subr.mxu0 0.0
  %2920 = vmatpush2.msra.mxu0 0.0
  %2921 = vmatprep.subr.mxu0 0.0
  %2922 = vmatpush2.msra.mxu0 0.0
  %2923 = vmatprep.subr.mxu0 0.0
  %2924 = vmatpush2.msra.mxu0 0.0
  %2925 = vmatprep.subr.mxu0 0.0
  %2926 = vmatpush2.msra.mxu0 0.0
  %2927 = vmatprep.mubr.f32.mxu0 0.0
  %2928 = vmatmul.mubr.f32.gmra.mxu0 %v2861
  %v2929 = vpop.f32.mrf.mxu0
  %v2930 = vadd.f32 0.0, %v2929
  %v2931 = vpop.f32.mrf.mxu0
  %2932 = vdwg.mxu0
  %v2933 = vadd.f32 %v2461, %v2930
  %v2934 = vld [vmem:[%s1032] sm:$0xff]
  %v2935 = vld [vmem:[%s1032 + $0x8] sm:$0xff]
  %v2936 = vld [vmem:[%s1032 + $0x10] sm:$0xff]
  %v2937 = vld [vmem:[%s1032 + $0x18] sm:$0xff]
  %v2938 = vld [vmem:[%s1032 + $0x20] sm:$0x1]
  %v2939 = vld [vmem:[%s1038] sm:$0xff]
  %v2940 = vld [vmem:[%s1038 + $0x8] sm:$0xff]
  %v2941 = vld [vmem:[%s1038 + $0x10] sm:$0xff]
  %v2942 = vld [vmem:[%s1038 + $0x18] sm:$0xff]
  %v2943 = vld [vmem:[%s1038 + $0x20] sm:$0x1]
  %v2944 = vld [vmem:[%s1044] sm:$0xff]
  %v2945 = vld [vmem:[%s1044 + $0x8] sm:$0xff]
  %v2946 = vld [vmem:[%s1044 + $0x10] sm:$0xff]
  %v2947 = vld [vmem:[%s1044 + $0x18] sm:$0xff]
  %v2948 = vld [vmem:[%s1044 + $0x20] sm:$0x1]
  %v2949 = vlaneseq
  %v2950 = vshrl.u32 %v2949, 7
  %v2951 = vsub.s32 0, %v2950
  %v2952 = vrot.slane %v2938, %v2951
  %2953 = vmatprep.subr.mxu0 0.0
  %2954 = vmatpush1.msra.mxu0 0.0
  %2955 = vmatprep.subr.mxu0 0.0
  %2956 = vmatpush1.msra.mxu0 0.0
  %2957 = vmatprep.subr.mxu0 0.0
  %2958 = vmatpush1.msra.mxu0 0.0
  %2959 = vmatprep.subr.mxu0 0.0
  %2960 = vmatpush1.msra.mxu0 0.0
  %2961 = vmatprep.subr.mxu0 0.0
  %2962 = vmatpush1.msra.mxu0 0.0
  %2963 = vmatprep.subr.mxu0 0.0
  %2964 = vmatpush1.msra.mxu0 0.0
  %2965 = vmatprep.subr.mxu0 0.0
  %2966 = vmatpush1.msra.mxu0 0.0
  %2967 = vmatprep.subr.mxu0 0.0
  %2968 = vmatpush1.msra.mxu0 0.0
  %2969 = vmatprep.subr.mxu0 0.0
  %2970 = vmatpush1.msra.mxu0 0.0
  %2971 = vmatprep.subr.mxu0 0.0
  %2972 = vmatpush1.msra.mxu0 0.0
  %2973 = vmatprep.subr.mxu0 0.0
  %2974 = vmatpush1.msra.mxu0 0.0
  %2975 = vmatprep.subr.mxu0 0.0
  %2976 = vmatpush1.msra.mxu0 0.0
  %2977 = vmatprep.subr.mxu0 0.0
  %2978 = vmatpush1.msra.mxu0 %v2937
  %2979 = vmatprep.subr.mxu0 0.0
  %2980 = vmatpush1.msra.mxu0 %v2936
  %2981 = vmatprep.subr.mxu0 0.0
  %2982 = vmatpush1.msra.mxu0 %v2935
  %2983 = vmatprep.subr.mxu0 0.0
  %2984 = vmatpush1.msra.mxu0 %v2934
  %2985 = vmatprep.subr.mxu0 0.0
  %2986 = vmatpush2.msra.mxu0 0.0
  %2987 = vmatprep.subr.mxu0 0.0
  %2988 = vmatpush2.msra.mxu0 0.0
  %2989 = vmatprep.subr.mxu0 0.0
  %2990 = vmatpush2.msra.mxu0 0.0
  %2991 = vmatprep.subr.mxu0 0.0
  %2992 = vmatpush2.msra.mxu0 0.0
  %2993 = vmatprep.subr.mxu0 0.0
  %2994 = vmatpush2.msra.mxu0 0.0
  %2995 = vmatprep.subr.mxu0 0.0
  %2996 = vmatpush2.msra.mxu0 0.0
  %2997 = vmatprep.subr.mxu0 0.0
  %2998 = vmatpush2.msra.mxu0 0.0
  %2999 = vmatprep.subr.mxu0 0.0
  %3000 = vmatpush2.msra.mxu0 0.0
  %3001 = vmatprep.subr.mxu0 0.0
  %3002 = vmatpush2.msra.mxu0 0.0
  %3003 = vmatprep.subr.mxu0 0.0
  %3004 = vmatpush2.msra.mxu0 0.0
  %3005 = vmatprep.subr.mxu0 0.0
  %3006 = vmatpush2.msra.mxu0 0.0
  %3007 = vmatprep.subr.mxu0 0.0
  %3008 = vmatpush2.msra.mxu0 0.0
  %3009 = vmatprep.subr.mxu0 0.0
  %3010 = vmatpush2.msra.mxu0 0.0
  %3011 = vmatprep.subr.mxu0 0.0
  %3012 = vmatpush2.msra.mxu0 0.0
  %3013 = vmatprep.subr.mxu0 0.0
  %3014 = vmatpush2.msra.mxu0 0.0
  %3015 = vmatprep.subr.mxu0 0.0
  %3016 = vmatpush2.msra.mxu0 0.0
  %3017 = vmatprep.mubr.f32.mxu0 0.0
  %3018 = vmatmul.mubr.f32.gmra.mxu0 %v2003
  %v3019 = vpop.f32.mrf.mxu0
  %v3020 = vadd.f32 %v2952, %v3019
  %v3021 = vpop.f32.mrf.mxu0
  %3022 = vdwg.mxu0
  %v3023 = vlaneseq
  %v3024 = vshrl.u32 %v3023, 7
  %v3025 = vsub.s32 0, %v3024
  %v3026 = vrot.slane %v2943, %v3025
  %3027 = vmatprep.subr.mxu0 0.0
  %3028 = vmatpush1.msra.mxu0 0.0
  %3029 = vmatprep.subr.mxu0 0.0
  %3030 = vmatpush1.msra.mxu0 0.0
  %3031 = vmatprep.subr.mxu0 0.0
  %3032 = vmatpush1.msra.mxu0 0.0
  %3033 = vmatprep.subr.mxu0 0.0
  %3034 = vmatpush1.msra.mxu0 0.0
  %3035 = vmatprep.subr.mxu0 0.0
  %3036 = vmatpush1.msra.mxu0 0.0
  %3037 = vmatprep.subr.mxu0 0.0
  %3038 = vmatpush1.msra.mxu0 0.0
  %3039 = vmatprep.subr.mxu0 0.0
  %3040 = vmatpush1.msra.mxu0 0.0
  %3041 = vmatprep.subr.mxu0 0.0
  %3042 = vmatpush1.msra.mxu0 0.0
  %3043 = vmatprep.subr.mxu0 0.0
  %3044 = vmatpush1.msra.mxu0 0.0
  %3045 = vmatprep.subr.mxu0 0.0
  %3046 = vmatpush1.msra.mxu0 0.0
  %3047 = vmatprep.subr.mxu0 0.0
  %3048 = vmatpush1.msra.mxu0 0.0
  %3049 = vmatprep.subr.mxu0 0.0
  %3050 = vmatpush1.msra.mxu0 0.0
  %3051 = vmatprep.subr.mxu0 0.0
  %3052 = vmatpush1.msra.mxu0 %v2942
  %3053 = vmatprep.subr.mxu0 0.0
  %3054 = vmatpush1.msra.mxu0 %v2941
  %3055 = vmatprep.subr.mxu0 0.0
  %3056 = vmatpush1.msra.mxu0 %v2940
  %3057 = vmatprep.subr.mxu0 0.0
  %3058 = vmatpush1.msra.mxu0 %v2939
  %3059 = vmatprep.subr.mxu0 0.0
  %3060 = vmatpush2.msra.mxu0 0.0
  %3061 = vmatprep.subr.mxu0 0.0
  %3062 = vmatpush2.msra.mxu0 0.0
  %3063 = vmatprep.subr.mxu0 0.0
  %3064 = vmatpush2.msra.mxu0 0.0
  %3065 = vmatprep.subr.mxu0 0.0
  %3066 = vmatpush2.msra.mxu0 0.0
  %3067 = vmatprep.subr.mxu0 0.0
  %3068 = vmatpush2.msra.mxu0 0.0
  %3069 = vmatprep.subr.mxu0 0.0
  %3070 = vmatpush2.msra.mxu0 0.0
  %3071 = vmatprep.subr.mxu0 0.0
  %3072 = vmatpush2.msra.mxu0 0.0
  %3073 = vmatprep.subr.mxu0 0.0
  %3074 = vmatpush2.msra.mxu0 0.0
  %3075 = vmatprep.subr.mxu0 0.0
  %3076 = vmatpush2.msra.mxu0 0.0
  %3077 = vmatprep.subr.mxu0 0.0
  %3078 = vmatpush2.msra.mxu0 0.0
  %3079 = vmatprep.subr.mxu0 0.0
  %3080 = vmatpush2.msra.mxu0 0.0
  %3081 = vmatprep.subr.mxu0 0.0
  %3082 = vmatpush2.msra.mxu0 0.0
  %3083 = vmatprep.subr.mxu0 0.0
  %3084 = vmatpush2.msra.mxu0 0.0
  %3085 = vmatprep.subr.mxu0 0.0
  %3086 = vmatpush2.msra.mxu0 0.0
  %3087 = vmatprep.subr.mxu0 0.0
  %3088 = vmatpush2.msra.mxu0 0.0
  %3089 = vmatprep.subr.mxu0 0.0
  %3090 = vmatpush2.msra.mxu0 0.0
  %3091 = vmatprep.mubr.f32.mxu0 0.0
  %3092 = vmatmul.mubr.f32.gmra.mxu0 %v2003
  %v3093 = vpop.f32.mrf.mxu0
  %v3094 = vadd.f32 %v3026, %v3093
  %v3095 = vpop.f32.mrf.mxu0
  %3096 = vdwg.mxu0
  %v3097 = vlaneseq
  %v3098 = vshrl.u32 %v3097, 7
  %v3099 = vsub.s32 0, %v3098
  %v3100 = vrot.slane %v2948, %v3099
  %3101 = vmatprep.subr.mxu0 0.0
  %3102 = vmatpush1.msra.mxu0 0.0
  %3103 = vmatprep.subr.mxu0 0.0
  %3104 = vmatpush1.msra.mxu0 0.0
  %3105 = vmatprep.subr.mxu0 0.0
  %3106 = vmatpush1.msra.mxu0 0.0
  %3107 = vmatprep.subr.mxu0 0.0
  %3108 = vmatpush1.msra.mxu0 0.0
  %3109 = vmatprep.subr.mxu0 0.0
  %3110 = vmatpush1.msra.mxu0 0.0
  %3111 = vmatprep.subr.mxu0 0.0
  %3112 = vmatpush1.msra.mxu0 0.0
  %3113 = vmatprep.subr.mxu0 0.0
  %3114 = vmatpush1.msra.mxu0 0.0
  %3115 = vmatprep.subr.mxu0 0.0
  %3116 = vmatpush1.msra.mxu0 0.0
  %3117 = vmatprep.subr.mxu0 0.0
  %3118 = vmatpush1.msra.mxu0 0.0
  %3119 = vmatprep.subr.mxu0 0.0
  %3120 = vmatpush1.msra.mxu0 0.0
  %3121 = vmatprep.subr.mxu0 0.0
  %3122 = vmatpush1.msra.mxu0 0.0
  %3123 = vmatprep.subr.mxu0 0.0
  %3124 = vmatpush1.msra.mxu0 0.0
  %3125 = vmatprep.subr.mxu0 0.0
  %3126 = vmatpush1.msra.mxu0 %v2947
  %3127 = vmatprep.subr.mxu0 0.0
  %3128 = vmatpush1.msra.mxu0 %v2946
  %3129 = vmatprep.subr.mxu0 0.0
  %3130 = vmatpush1.msra.mxu0 %v2945
  %3131 = vmatprep.subr.mxu0 0.0
  %3132 = vmatpush1.msra.mxu0 %v2944
  %3133 = vmatprep.subr.mxu0 0.0
  %3134 = vmatpush2.msra.mxu0 0.0
  %3135 = vmatprep.subr.mxu0 0.0
  %3136 = vmatpush2.msra.mxu0 0.0
  %3137 = vmatprep.subr.mxu0 0.0
  %3138 = vmatpush2.msra.mxu0 0.0
  %3139 = vmatprep.subr.mxu0 0.0
  %3140 = vmatpush2.msra.mxu0 0.0
  %3141 = vmatprep.subr.mxu0 0.0
  %3142 = vmatpush2.msra.mxu0 0.0
  %3143 = vmatprep.subr.mxu0 0.0
  %3144 = vmatpush2.msra.mxu0 0.0
  %3145 = vmatprep.subr.mxu0 0.0
  %3146 = vmatpush2.msra.mxu0 0.0
  %3147 = vmatprep.subr.mxu0 0.0
  %3148 = vmatpush2.msra.mxu0 0.0
  %3149 = vmatprep.subr.mxu0 0.0
  %3150 = vmatpush2.msra.mxu0 0.0
  %3151 = vmatprep.subr.mxu0 0.0
  %3152 = vmatpush2.msra.mxu0 0.0
  %3153 = vmatprep.subr.mxu0 0.0
  %3154 = vmatpush2.msra.mxu0 0.0
  %3155 = vmatprep.subr.mxu0 0.0
  %3156 = vmatpush2.msra.mxu0 0.0
  %3157 = vmatprep.subr.mxu0 0.0
  %3158 = vmatpush2.msra.mxu0 0.0
  %3159 = vmatprep.subr.mxu0 0.0
  %3160 = vmatpush2.msra.mxu0 0.0
  %3161 = vmatprep.subr.mxu0 0.0
  %3162 = vmatpush2.msra.mxu0 0.0
  %3163 = vmatprep.subr.mxu0 0.0
  %3164 = vmatpush2.msra.mxu0 0.0
  %3165 = vmatprep.mubr.f32.mxu0 0.0
  %3166 = vmatmul.mubr.f32.gmra.mxu0 %v2003
  %v3167 = vpop.f32.mrf.mxu0
  %v3168 = vadd.f32 %v3100, %v3167
  %v3169 = vpop.f32.mrf.mxu0
  %3170 = vdwg.mxu0
  %v3172 = vsel %vm317, %v3020, 0
  %v3175 = vsel %vm317, %v3094, 0
  %3177 = vmatprep.subr.mxu0 0.0
  %3178 = vmatpush1.xpose.msra.mxu0 0.0
  %3179 = vmatprep.subr.mxu0 0.0
  %3180 = vmatpush1.xpose.msra.mxu0 0.0
  %3181 = vmatprep.subr.mxu0 0.0
  %3182 = vmatpush1.xpose.msra.mxu0 0.0
  %3183 = vmatprep.subr.mxu0 0.0
  %3184 = vmatpush1.xpose.msra.mxu0 0.0
  %3185 = vmatprep.subr.mxu0 0.0
  %3186 = vmatpush1.xpose.msra.mxu0 0.0
  %3187 = vmatprep.subr.mxu0 0.0
  %3188 = vmatpush1.xpose.msra.mxu0 0.0
  %3189 = vmatprep.subr.mxu0 0.0
  %3190 = vmatpush1.xpose.msra.mxu0 0.0
  %3191 = vmatprep.subr.mxu0 0.0
  %3192 = vmatpush1.xpose.msra.mxu0 0.0
  %3193 = vmatprep.subr.mxu0 0.0
  %3194 = vmatpush1.xpose.msra.mxu0 0.0
  %3195 = vmatprep.subr.mxu0 0.0
  %3196 = vmatpush1.xpose.msra.mxu0 0.0
  %3197 = vmatprep.subr.mxu0 0.0
  %3198 = vmatpush1.xpose.msra.mxu0 0.0
  %3199 = vmatprep.subr.mxu0 0.0
  %3200 = vmatpush1.xpose.msra.mxu0 0.0
  %3201 = vmatprep.subr.mxu0 0.0
  %3202 = vmatpush1.xpose.msra.mxu0 0.0
  %3203 = vmatprep.subr.mxu0 0.0
  %3204 = vmatpush1.xpose.msra.mxu0 0.0
  %3205 = vmatprep.subr.mxu0 0.0
  %3206 = vmatpush1.xpose.msra.mxu0 0.0
  %3207 = vmatprep.subr.mxu0 0.0
  %3208 = vmatpush1.xpose.msra.mxu0 %v3175
  %3209 = vmatprep.subr.mxu0 0.0
  %3210 = vmatpush2.xpose.msra.mxu0 0.0
  %3211 = vmatprep.subr.mxu0 0.0
  %3212 = vmatpush2.xpose.msra.mxu0 0.0
  %3213 = vmatprep.subr.mxu0 0.0
  %3214 = vmatpush2.xpose.msra.mxu0 0.0
  %3215 = vmatprep.subr.mxu0 0.0
  %3216 = vmatpush2.xpose.msra.mxu0 0.0
  %3217 = vmatprep.subr.mxu0 0.0
  %3218 = vmatpush2.xpose.msra.mxu0 0.0
  %3219 = vmatprep.subr.mxu0 0.0
  %3220 = vmatpush2.xpose.msra.mxu0 0.0
  %3221 = vmatprep.subr.mxu0 0.0
  %3222 = vmatpush2.xpose.msra.mxu0 0.0
  %3223 = vmatprep.subr.mxu0 0.0
  %3224 = vmatpush2.xpose.msra.mxu0 0.0
  %3225 = vmatprep.subr.mxu0 0.0
  %3226 = vmatpush2.xpose.msra.mxu0 0.0
  %3227 = vmatprep.subr.mxu0 0.0
  %3228 = vmatpush2.xpose.msra.mxu0 0.0
  %3229 = vmatprep.subr.mxu0 0.0
  %3230 = vmatpush2.xpose.msra.mxu0 0.0
  %3231 = vmatprep.subr.mxu0 0.0
  %3232 = vmatpush2.xpose.msra.mxu0 0.0
  %3233 = vmatprep.subr.mxu0 0.0
  %3234 = vmatpush2.xpose.msra.mxu0 0.0
  %3235 = vmatprep.subr.mxu0 0.0
  %3236 = vmatpush2.xpose.msra.mxu0 0.0
  %3237 = vmatprep.subr.mxu0 0.0
  %3238 = vmatpush2.xpose.msra.mxu0 0.0
  %3239 = vmatprep.subr.mxu0 0.0
  %3240 = vmatpush2.xpose.msra.mxu0 0.0
  %3241 = vmatprep.mubr.f32.mxu0 0.0
  %3242 = vmatmul.mubr.f32.gmra.mxu0 %v3172
  %v3243 = vpop.f32.mrf.mxu0
  %v3244 = vadd.f32 %v2226, %v3243
  %v3245 = vpop.f32.mrf.mxu0
  %3246 = vdwg.mxu0
  %v3247 = vsel %vm317, %v3244, -inf
  %3248 = vmax.xlane.f32.xlu0 %v3247
  %v3249 = vpop.xlane.xlu0 %3248
  %v3250 = vsub.f32 %v3244, %v3249
  %v3251 = vmul.f32 %v3250, 1.442695
  %v3252 = vpow.pop %v3251
  %v3253 = vsel %vm317, %v3252, 0.0
  %3254 = vadd.xlane.f32.xlu0 %v3253
  %v3255 = vpop.xlane.xlu0 %3254
  %v3256 = vrcp.pop %v3255
  %v3257 = vmul.f32 %v3252, %v3256
  %v3259 = vsel %vm317, %v3257, 0
  %3261 = vmatprep.subr.mxu0 0.0
  %3262 = vmatpush1.msra.mxu0 0.0
  %3263 = vmatprep.subr.mxu0 0.0
  %3264 = vmatpush1.msra.mxu0 0.0
  %3265 = vmatprep.subr.mxu0 0.0
  %3266 = vmatpush1.msra.mxu0 0.0
  %3267 = vmatprep.subr.mxu0 0.0
  %3268 = vmatpush1.msra.mxu0 0.0
  %3269 = vmatprep.subr.mxu0 0.0
  %3270 = vmatpush1.msra.mxu0 0.0
  %3271 = vmatprep.subr.mxu0 0.0
  %3272 = vmatpush1.msra.mxu0 0.0
  %3273 = vmatprep.subr.mxu0 0.0
  %3274 = vmatpush1.msra.mxu0 0.0
  %3275 = vmatprep.subr.mxu0 0.0
  %3276 = vmatpush1.msra.mxu0 0.0
  %3277 = vmatprep.subr.mxu0 0.0
  %3278 = vmatpush1.msra.mxu0 0.0
  %3279 = vmatprep.subr.mxu0 0.0
  %3280 = vmatpush1.msra.mxu0 0.0
  %3281 = vmatprep.subr.mxu0 0.0
  %3282 = vmatpush1.msra.mxu0 0.0
  %3283 = vmatprep.subr.mxu0 0.0
  %3284 = vmatpush1.msra.mxu0 0.0
  %3285 = vmatprep.subr.mxu0 0.0
  %3286 = vmatpush1.msra.mxu0 0.0
  %3287 = vmatprep.subr.mxu0 0.0
  %3288 = vmatpush1.msra.mxu0 0.0
  %3289 = vmatprep.subr.mxu0 0.0
  %3290 = vmatpush1.msra.mxu0 0.0
  %3291 = vmatprep.subr.mxu0 0.0
  %3292 = vmatpush1.msra.mxu0 %v3168
  %3293 = vmatprep.subr.mxu0 0.0
  %3294 = vmatpush2.msra.mxu0 0.0
  %3295 = vmatprep.subr.mxu0 0.0
  %3296 = vmatpush2.msra.mxu0 0.0
  %3297 = vmatprep.subr.mxu0 0.0
  %3298 = vmatpush2.msra.mxu0 0.0
  %3299 = vmatprep.subr.mxu0 0.0
  %3300 = vmatpush2.msra.mxu0 0.0
  %3301 = vmatprep.subr.mxu0 0.0
  %3302 = vmatpush2.msra.mxu0 0.0
  %3303 = vmatprep.subr.mxu0 0.0
  %3304 = vmatpush2.msra.mxu0 0.0
  %3305 = vmatprep.subr.mxu0 0.0
  %3306 = vmatpush2.msra.mxu0 0.0
  %3307 = vmatprep.subr.mxu0 0.0
  %3308 = vmatpush2.msra.mxu0 0.0
  %3309 = vmatprep.subr.mxu0 0.0
  %3310 = vmatpush2.msra.mxu0 0.0
  %3311 = vmatprep.subr.mxu0 0.0
  %3312 = vmatpush2.msra.mxu0 0.0
  %3313 = vmatprep.subr.mxu0 0.0
  %3314 = vmatpush2.msra.mxu0 0.0
  %3315 = vmatprep.subr.mxu0 0.0
  %3316 = vmatpush2.msra.mxu0 0.0
  %3317 = vmatprep.subr.mxu0 0.0
  %3318 = vmatpush2.msra.mxu0 0.0
  %3319 = vmatprep.subr.mxu0 0.0
  %3320 = vmatpush2.msra.mxu0 0.0
  %3321 = vmatprep.subr.mxu0 0.0
  %3322 = vmatpush2.msra.mxu0 0.0
  %3323 = vmatprep.subr.mxu0 0.0
  %3324 = vmatpush2.msra.mxu0 0.0
  %3325 = vmatprep.mubr.f32.mxu0 0.0
  %3326 = vmatmul.mubr.f32.gmra.mxu0 %v3259
  %v3327 = vpop.f32.mrf.mxu0
  %v3328 = vadd.f32 0.0, %v3327
  %v3329 = vpop.f32.mrf.mxu0
  %3330 = vdwg.mxu0
  %v3331 = vld [vmem:[%s3 + $0x10] sm:$0xff]
  %v3333 = vsel %vm317, %v3328, 0
  %3335 = vmatprep.subr.mxu0 0.0
  %3336 = vmatpush1.msra.mxu0 0.0
  %3337 = vmatprep.subr.mxu0 0.0
  %3338 = vmatpush1.msra.mxu0 0.0
  %3339 = vmatprep.subr.mxu0 0.0
  %3340 = vmatpush1.msra.mxu0 0.0
  %3341 = vmatprep.subr.mxu0 0.0
  %3342 = vmatpush1.msra.mxu0 0.0
  %3343 = vmatprep.subr.mxu0 0.0
  %3344 = vmatpush1.msra.mxu0 0.0
  %3345 = vmatprep.subr.mxu0 0.0
  %3346 = vmatpush1.msra.mxu0 0.0
  %3347 = vmatprep.subr.mxu0 0.0
  %3348 = vmatpush1.msra.mxu0 0.0
  %3349 = vmatprep.subr.mxu0 0.0
  %3350 = vmatpush1.msra.mxu0 0.0
  %3351 = vmatprep.subr.mxu0 0.0
  %3352 = vmatpush1.msra.mxu0 0.0
  %3353 = vmatprep.subr.mxu0 0.0
  %3354 = vmatpush1.msra.mxu0 0.0
  %3355 = vmatprep.subr.mxu0 0.0
  %3356 = vmatpush1.msra.mxu0 0.0
  %3357 = vmatprep.subr.mxu0 0.0
  %3358 = vmatpush1.msra.mxu0 0.0
  %3359 = vmatprep.subr.mxu0 0.0
  %3360 = vmatpush1.msra.mxu0 0.0
  %3361 = vmatprep.subr.mxu0 0.0
  %3362 = vmatpush1.msra.mxu0 0.0
  %3363 = vmatprep.subr.mxu0 0.0
  %3364 = vmatpush1.msra.mxu0 0.0
  %3365 = vmatprep.subr.mxu0 0.0
  %3366 = vmatpush1.msra.mxu0 %v3331
  %3367 = vmatprep.subr.mxu0 0.0
  %3368 = vmatpush2.msra.mxu0 0.0
  %3369 = vmatprep.subr.mxu0 0.0
  %3370 = vmatpush2.msra.mxu0 0.0
  %3371 = vmatprep.subr.mxu0 0.0
  %3372 = vmatpush2.msra.mxu0 0.0
  %3373 = vmatprep.subr.mxu0 0.0
  %3374 = vmatpush2.msra.mxu0 0.0
  %3375 = vmatprep.subr.mxu0 0.0
  %3376 = vmatpush2.msra.mxu0 0.0
  %3377 = vmatprep.subr.mxu0 0.0
  %3378 = vmatpush2.msra.mxu0 0.0
  %3379 = vmatprep.subr.mxu0 0.0
  %3380 = vmatpush2.msra.mxu0 0.0
  %3381 = vmatprep.subr.mxu0 0.0
  %3382 = vmatpush2.msra.mxu0 0.0
  %3383 = vmatprep.subr.mxu0 0.0
  %3384 = vmatpush2.msra.mxu0 0.0
  %3385 = vmatprep.subr.mxu0 0.0
  %3386 = vmatpush2.msra.mxu0 0.0
  %3387 = vmatprep.subr.mxu0 0.0
  %3388 = vmatpush2.msra.mxu0 0.0
  %3389 = vmatprep.subr.mxu0 0.0
  %3390 = vmatpush2.msra.mxu0 0.0
  %3391 = vmatprep.subr.mxu0 0.0
  %3392 = vmatpush2.msra.mxu0 0.0
  %3393 = vmatprep.subr.mxu0 0.0
  %3394 = vmatpush2.msra.mxu0 0.0
  %3395 = vmatprep.subr.mxu0 0.0
  %3396 = vmatpush2.msra.mxu0 0.0
  %3397 = vmatprep.subr.mxu0 0.0
  %3398 = vmatpush2.msra.mxu0 0.0
  %3399 = vmatprep.mubr.f32.mxu0 0.0
  %3400 = vmatmul.mubr.f32.gmra.mxu0 %v3333
  %v3401 = vpop.f32.mrf.mxu0
  %v3402 = vadd.f32 0.0, %v3401
  %v3403 = vpop.f32.mrf.mxu0
  %3404 = vdwg.mxu0
  %v3405 = vadd.f32 %v2933, %v3402
  %v3406 = vld [vmem:[%s1507] sm:$0xff]
  %v3407 = vld [vmem:[%s1507 + $0x8] sm:$0xff]
  %v3408 = vld [vmem:[%s1507 + $0x10] sm:$0xff]
  %v3409 = vld [vmem:[%s1507 + $0x18] sm:$0xff]
  %v3410 = vld [vmem:[%s1507 + $0x20] sm:$0x1]
  %v3411 = vld [vmem:[%s1513] sm:$0xff]
  %v3412 = vld [vmem:[%s1513 + $0x8] sm:$0xff]
  %v3413 = vld [vmem:[%s1513 + $0x10] sm:$0xff]
  %v3414 = vld [vmem:[%s1513 + $0x18] sm:$0xff]
  %v3415 = vld [vmem:[%s1513 + $0x20] sm:$0x1]
  %v3416 = vld [vmem:[%s1519] sm:$0xff]
  %v3417 = vld [vmem:[%s1519 + $0x8] sm:$0xff]
  %v3418 = vld [vmem:[%s1519 + $0x10] sm:$0xff]
  %v3419 = vld [vmem:[%s1519 + $0x18] sm:$0xff]
  %v3420 = vld [vmem:[%s1519 + $0x20] sm:$0x1]
  %v3421 = vlaneseq
  %v3422 = vshrl.u32 %v3421, 7
  %v3423 = vsub.s32 0, %v3422
  %v3424 = vrot.slane %v3410, %v3423
  %3425 = vmatprep.subr.mxu0 0.0
  %3426 = vmatpush1.msra.mxu0 0.0
  %3427 = vmatprep.subr.mxu0 0.0
  %3428 = vmatpush1.msra.mxu0 0.0
  %3429 = vmatprep.subr.mxu0 0.0
  %3430 = vmatpush1.msra.mxu0 0.0
  %3431 = vmatprep.subr.mxu0 0.0
  %3432 = vmatpush1.msra.mxu0 0.0
  %3433 = vmatprep.subr.mxu0 0.0
  %3434 = vmatpush1.msra.mxu0 0.0
  %3435 = vmatprep.subr.mxu0 0.0
  %3436 = vmatpush1.msra.mxu0 0.0
  %3437 = vmatprep.subr.mxu0 0.0
  %3438 = vmatpush1.msra.mxu0 0.0
  %3439 = vmatprep.subr.mxu0 0.0
  %3440 = vmatpush1.msra.mxu0 0.0
  %3441 = vmatprep.subr.mxu0 0.0
  %3442 = vmatpush1.msra.mxu0 0.0
  %3443 = vmatprep.subr.mxu0 0.0
  %3444 = vmatpush1.msra.mxu0 0.0
  %3445 = vmatprep.subr.mxu0 0.0
  %3446 = vmatpush1.msra.mxu0 0.0
  %3447 = vmatprep.subr.mxu0 0.0
  %3448 = vmatpush1.msra.mxu0 0.0
  %3449 = vmatprep.subr.mxu0 0.0
  %3450 = vmatpush1.msra.mxu0 %v3409
  %3451 = vmatprep.subr.mxu0 0.0
  %3452 = vmatpush1.msra.mxu0 %v3408
  %3453 = vmatprep.subr.mxu0 0.0
  %3454 = vmatpush1.msra.mxu0 %v3407
  %3455 = vmatprep.subr.mxu0 0.0
  %3456 = vmatpush1.msra.mxu0 %v3406
  %3457 = vmatprep.subr.mxu0 0.0
  %3458 = vmatpush2.msra.mxu0 0.0
  %3459 = vmatprep.subr.mxu0 0.0
  %3460 = vmatpush2.msra.mxu0 0.0
  %3461 = vmatprep.subr.mxu0 0.0
  %3462 = vmatpush2.msra.mxu0 0.0
  %3463 = vmatprep.subr.mxu0 0.0
  %3464 = vmatpush2.msra.mxu0 0.0
  %3465 = vmatprep.subr.mxu0 0.0
  %3466 = vmatpush2.msra.mxu0 0.0
  %3467 = vmatprep.subr.mxu0 0.0
  %3468 = vmatpush2.msra.mxu0 0.0
  %3469 = vmatprep.subr.mxu0 0.0
  %3470 = vmatpush2.msra.mxu0 0.0
  %3471 = vmatprep.subr.mxu0 0.0
  %3472 = vmatpush2.msra.mxu0 0.0
  %3473 = vmatprep.subr.mxu0 0.0
  %3474 = vmatpush2.msra.mxu0 0.0
  %3475 = vmatprep.subr.mxu0 0.0
  %3476 = vmatpush2.msra.mxu0 0.0
  %3477 = vmatprep.subr.mxu0 0.0
  %3478 = vmatpush2.msra.mxu0 0.0
  %3479 = vmatprep.subr.mxu0 0.0
  %3480 = vmatpush2.msra.mxu0 0.0
  %3481 = vmatprep.subr.mxu0 0.0
  %3482 = vmatpush2.msra.mxu0 0.0
  %3483 = vmatprep.subr.mxu0 0.0
  %3484 = vmatpush2.msra.mxu0 0.0
  %3485 = vmatprep.subr.mxu0 0.0
  %3486 = vmatpush2.msra.mxu0 0.0
  %3487 = vmatprep.subr.mxu0 0.0
  %3488 = vmatpush2.msra.mxu0 0.0
  %3489 = vmatprep.mubr.f32.mxu0 0.0
  %3490 = vmatmul.mubr.f32.gmra.mxu0 %v2003
  %v3491 = vpop.f32.mrf.mxu0
  %v3492 = vadd.f32 %v3424, %v3491
  %v3493 = vpop.f32.mrf.mxu0
  %3494 = vdwg.mxu0
  %v3495 = vlaneseq
  %v3496 = vshrl.u32 %v3495, 7
  %v3497 = vsub.s32 0, %v3496
  %v3498 = vrot.slane %v3415, %v3497
  %3499 = vmatprep.subr.mxu0 0.0
  %3500 = vmatpush1.msra.mxu0 0.0
  %3501 = vmatprep.subr.mxu0 0.0
  %3502 = vmatpush1.msra.mxu0 0.0
  %3503 = vmatprep.subr.mxu0 0.0
  %3504 = vmatpush1.msra.mxu0 0.0
  %3505 = vmatprep.subr.mxu0 0.0
  %3506 = vmatpush1.msra.mxu0 0.0
  %3507 = vmatprep.subr.mxu0 0.0
  %3508 = vmatpush1.msra.mxu0 0.0
  %3509 = vmatprep.subr.mxu0 0.0
  %3510 = vmatpush1.msra.mxu0 0.0
  %3511 = vmatprep.subr.mxu0 0.0
  %3512 = vmatpush1.msra.mxu0 0.0
  %3513 = vmatprep.subr.mxu0 0.0
  %3514 = vmatpush1.msra.mxu0 0.0
  %3515 = vmatprep.subr.mxu0 0.0
  %3516 = vmatpush1.msra.mxu0 0.0
  %3517 = vmatprep.subr.mxu0 0.0
  %3518 = vmatpush1.msra.mxu0 0.0
  %3519 = vmatprep.subr.mxu0 0.0
  %3520 = vmatpush1.msra.mxu0 0.0
  %3521 = vmatprep.subr.mxu0 0.0
  %3522 = vmatpush1.msra.mxu0 0.0
  %3523 = vmatprep.subr.mxu0 0.0
  %3524 = vmatpush1.msra.mxu0 %v3414
  %3525 = vmatprep.subr.mxu0 0.0
  %3526 = vmatpush1.msra.mxu0 %v3413
  %3527 = vmatprep.subr.mxu0 0.0
  %3528 = vmatpush1.msra.mxu0 %v3412
  %3529 = vmatprep.subr.mxu0 0.0
  %3530 = vmatpush1.msra.mxu0 %v3411
  %3531 = vmatprep.subr.mxu0 0.0
  %3532 = vmatpush2.msra.mxu0 0.0
  %3533 = vmatprep.subr.mxu0 0.0
  %3534 = vmatpush2.msra.mxu0 0.0
  %3535 = vmatprep.subr.mxu0 0.0
  %3536 = vmatpush2.msra.mxu0 0.0
  %3537 = vmatprep.subr.mxu0 0.0
  %3538 = vmatpush2.msra.mxu0 0.0
  %3539 = vmatprep.subr.mxu0 0.0
  %3540 = vmatpush2.msra.mxu0 0.0
  %3541 = vmatprep.subr.mxu0 0.0
  %3542 = vmatpush2.msra.mxu0 0.0
  %3543 = vmatprep.subr.mxu0 0.0
  %3544 = vmatpush2.msra.mxu0 0.0
  %3545 = vmatprep.subr.mxu0 0.0
  %3546 = vmatpush2.msra.mxu0 0.0
  %3547 = vmatprep.subr.mxu0 0.0
  %3548 = vmatpush2.msra.mxu0 0.0
  %3549 = vmatprep.subr.mxu0 0.0
  %3550 = vmatpush2.msra.mxu0 0.0
  %3551 = vmatprep.subr.mxu0 0.0
  %3552 = vmatpush2.msra.mxu0 0.0
  %3553 = vmatprep.subr.mxu0 0.0
  %3554 = vmatpush2.msra.mxu0 0.0
  %3555 = vmatprep.subr.mxu0 0.0
  %3556 = vmatpush2.msra.mxu0 0.0
  %3557 = vmatprep.subr.mxu0 0.0
  %3558 = vmatpush2.msra.mxu0 0.0
  %3559 = vmatprep.subr.mxu0 0.0
  %3560 = vmatpush2.msra.mxu0 0.0
  %3561 = vmatprep.subr.mxu0 0.0
  %3562 = vmatpush2.msra.mxu0 0.0
  %3563 = vmatprep.mubr.f32.mxu0 0.0
  %3564 = vmatmul.mubr.f32.gmra.mxu0 %v2003
  %v3565 = vpop.f32.mrf.mxu0
  %v3566 = vadd.f32 %v3498, %v3565
  %v3567 = vpop.f32.mrf.mxu0
  %3568 = vdwg.mxu0
  %v3569 = vlaneseq
  %v3570 = vshrl.u32 %v3569, 7
  %v3571 = vsub.s32 0, %v3570
  %v3572 = vrot.slane %v3420, %v3571
  %3573 = vmatprep.subr.mxu0 0.0
  %3574 = vmatpush1.msra.mxu0 0.0
  %3575 = vmatprep.subr.mxu0 0.0
  %3576 = vmatpush1.msra.mxu0 0.0
  %3577 = vmatprep.subr.mxu0 0.0
  %3578 = vmatpush1.msra.mxu0 0.0
  %3579 = vmatprep.subr.mxu0 0.0
  %3580 = vmatpush1.msra.mxu0 0.0
  %3581 = vmatprep.subr.mxu0 0.0
  %3582 = vmatpush1.msra.mxu0 0.0
  %3583 = vmatprep.subr.mxu0 0.0
  %3584 = vmatpush1.msra.mxu0 0.0
  %3585 = vmatprep.subr.mxu0 0.0
  %3586 = vmatpush1.msra.mxu0 0.0
  %3587 = vmatprep.subr.mxu0 0.0
  %3588 = vmatpush1.msra.mxu0 0.0
  %3589 = vmatprep.subr.mxu0 0.0
  %3590 = vmatpush1.msra.mxu0 0.0
  %3591 = vmatprep.subr.mxu0 0.0
  %3592 = vmatpush1.msra.mxu0 0.0
  %3593 = vmatprep.subr.mxu0 0.0
  %3594 = vmatpush1.msra.mxu0 0.0
  %3595 = vmatprep.subr.mxu0 0.0
  %3596 = vmatpush1.msra.mxu0 0.0
  %3597 = vmatprep.subr.mxu0 0.0
  %3598 = vmatpush1.msra.mxu0 %v3419
  %3599 = vmatprep.subr.mxu0 0.0
  %3600 = vmatpush1.msra.mxu0 %v3418
  %3601 = vmatprep.subr.mxu0 0.0
  %3602 = vmatpush1.msra.mxu0 %v3417
  %3603 = vmatprep.subr.mxu0 0.0
  %3604 = vmatpush1.msra.mxu0 %v3416
  %3605 = vmatprep.subr.mxu0 0.0
  %3606 = vmatpush2.msra.mxu0 0.0
  %3607 = vmatprep.subr.mxu0 0.0
  %3608 = vmatpush2.msra.mxu0 0.0
  %3609 = vmatprep.subr.mxu0 0.0
  %3610 = vmatpush2.msra.mxu0 0.0
  %3611 = vmatprep.subr.mxu0 0.0
  %3612 = vmatpush2.msra.mxu0 0.0
  %3613 = vmatprep.subr.mxu0 0.0
  %3614 = vmatpush2.msra.mxu0 0.0
  %3615 = vmatprep.subr.mxu0 0.0
  %3616 = vmatpush2.msra.mxu0 0.0
  %3617 = vmatprep.subr.mxu0 0.0
  %3618 = vmatpush2.msra.mxu0 0.0
  %3619 = vmatprep.subr.mxu0 0.0
  %3620 = vmatpush2.msra.mxu0 0.0
  %3621 = vmatprep.subr.mxu0 0.0
  %3622 = vmatpush2.msra.mxu0 0.0
  %3623 = vmatprep.subr.mxu0 0.0
  %3624 = vmatpush2.msra.mxu0 0.0
  %3625 = vmatprep.subr.mxu0 0.0
  %3626 = vmatpush2.msra.mxu0 0.0
  %3627 = vmatprep.subr.mxu0 0.0
  %3628 = vmatpush2.msra.mxu0 0.0
  %3629 = vmatprep.subr.mxu0 0.0
  %3630 = vmatpush2.msra.mxu0 0.0
  %3631 = vmatprep.subr.mxu0 0.0
  %3632 = vmatpush2.msra.mxu0 0.0
  %3633 = vmatprep.subr.mxu0 0.0
  %3634 = vmatpush2.msra.mxu0 0.0
  %3635 = vmatprep.subr.mxu0 0.0
  %3636 = vmatpush2.msra.mxu0 0.0
  %3637 = vmatprep.mubr.f32.mxu0 0.0
  %3638 = vmatmul.mubr.f32.gmra.mxu0 %v2003
  %v3639 = vpop.f32.mrf.mxu0
  %v3640 = vadd.f32 %v3572, %v3639
  %v3641 = vpop.f32.mrf.mxu0
  %3642 = vdwg.mxu0
  %v3644 = vsel %vm317, %v3492, 0
  %v3647 = vsel %vm317, %v3566, 0
  %3649 = vmatprep.subr.mxu0 0.0
  %3650 = vmatpush1.xpose.msra.mxu0 0.0
  %3651 = vmatprep.subr.mxu0 0.0
  %3652 = vmatpush1.xpose.msra.mxu0 0.0
  %3653 = vmatprep.subr.mxu0 0.0
  %3654 = vmatpush1.xpose.msra.mxu0 0.0
  %3655 = vmatprep.subr.mxu0 0.0
  %3656 = vmatpush1.xpose.msra.mxu0 0.0
  %3657 = vmatprep.subr.mxu0 0.0
  %3658 = vmatpush1.xpose.msra.mxu0 0.0
  %3659 = vmatprep.subr.mxu0 0.0
  %3660 = vmatpush1.xpose.msra.mxu0 0.0
  %3661 = vmatprep.subr.mxu0 0.0
  %3662 = vmatpush1.xpose.msra.mxu0 0.0
  %3663 = vmatprep.subr.mxu0 0.0
  %3664 = vmatpush1.xpose.msra.mxu0 0.0
  %3665 = vmatprep.subr.mxu0 0.0
  %3666 = vmatpush1.xpose.msra.mxu0 0.0
  %3667 = vmatprep.subr.mxu0 0.0
  %3668 = vmatpush1.xpose.msra.mxu0 0.0
  %3669 = vmatprep.subr.mxu0 0.0
  %3670 = vmatpush1.xpose.msra.mxu0 0.0
  %3671 = vmatprep.subr.mxu0 0.0
  %3672 = vmatpush1.xpose.msra.mxu0 0.0
  %3673 = vmatprep.subr.mxu0 0.0
  %3674 = vmatpush1.xpose.msra.mxu0 0.0
  %3675 = vmatprep.subr.mxu0 0.0
  %3676 = vmatpush1.xpose.msra.mxu0 0.0
  %3677 = vmatprep.subr.mxu0 0.0
  %3678 = vmatpush1.xpose.msra.mxu0 0.0
  %3679 = vmatprep.subr.mxu0 0.0
  %3680 = vmatpush1.xpose.msra.mxu0 %v3647
  %3681 = vmatprep.subr.mxu0 0.0
  %3682 = vmatpush2.xpose.msra.mxu0 0.0
  %3683 = vmatprep.subr.mxu0 0.0
  %3684 = vmatpush2.xpose.msra.mxu0 0.0
  %3685 = vmatprep.subr.mxu0 0.0
  %3686 = vmatpush2.xpose.msra.mxu0 0.0
  %3687 = vmatprep.subr.mxu0 0.0
  %3688 = vmatpush2.xpose.msra.mxu0 0.0
  %3689 = vmatprep.subr.mxu0 0.0
  %3690 = vmatpush2.xpose.msra.mxu0 0.0
  %3691 = vmatprep.subr.mxu0 0.0
  %3692 = vmatpush2.xpose.msra.mxu0 0.0
  %3693 = vmatprep.subr.mxu0 0.0
  %3694 = vmatpush2.xpose.msra.mxu0 0.0
  %3695 = vmatprep.subr.mxu0 0.0
  %3696 = vmatpush2.xpose.msra.mxu0 0.0
  %3697 = vmatprep.subr.mxu0 0.0
  %3698 = vmatpush2.xpose.msra.mxu0 0.0
  %3699 = vmatprep.subr.mxu0 0.0
  %3700 = vmatpush2.xpose.msra.mxu0 0.0
  %3701 = vmatprep.subr.mxu0 0.0
  %3702 = vmatpush2.xpose.msra.mxu0 0.0
  %3703 = vmatprep.subr.mxu0 0.0
  %3704 = vmatpush2.xpose.msra.mxu0 0.0
  %3705 = vmatprep.subr.mxu0 0.0
  %3706 = vmatpush2.xpose.msra.mxu0 0.0
  %3707 = vmatprep.subr.mxu0 0.0
  %3708 = vmatpush2.xpose.msra.mxu0 0.0
  %3709 = vmatprep.subr.mxu0 0.0
  %3710 = vmatpush2.xpose.msra.mxu0 0.0
  %3711 = vmatprep.subr.mxu0 0.0
  %3712 = vmatpush2.xpose.msra.mxu0 0.0
  %3713 = vmatprep.mubr.f32.mxu0 0.0
  %3714 = vmatmul.mubr.f32.gmra.mxu0 %v3644
  %v3715 = vpop.f32.mrf.mxu0
  %v3716 = vadd.f32 %v2226, %v3715
  %v3717 = vpop.f32.mrf.mxu0
  %3718 = vdwg.mxu0
  %v3719 = vsel %vm317, %v3716, -inf
  %3720 = vmax.xlane.f32.xlu0 %v3719
  %v3721 = vpop.xlane.xlu0 %3720
  %v3722 = vsub.f32 %v3716, %v3721
  %v3723 = vmul.f32 %v3722, 1.442695
  %v3724 = vpow.pop %v3723
  %v3725 = vsel %vm317, %v3724, 0.0
  %3726 = vadd.xlane.f32.xlu0 %v3725
  %v3727 = vpop.xlane.xlu0 %3726
  %v3728 = vrcp.pop %v3727
  %v3729 = vmul.f32 %v3724, %v3728
  %v3731 = vsel %vm317, %v3729, 0
  %3733 = vmatprep.subr.mxu0 0.0
  %3734 = vmatpush1.msra.mxu0 0.0
  %3735 = vmatprep.subr.mxu0 0.0
  %3736 = vmatpush1.msra.mxu0 0.0
  %3737 = vmatprep.subr.mxu0 0.0
  %3738 = vmatpush1.msra.mxu0 0.0
  %3739 = vmatprep.subr.mxu0 0.0
  %3740 = vmatpush1.msra.mxu0 0.0
  %3741 = vmatprep.subr.mxu0 0.0
  %3742 = vmatpush1.msra.mxu0 0.0
  %3743 = vmatprep.subr.mxu0 0.0
  %3744 = vmatpush1.msra.mxu0 0.0
  %3745 = vmatprep.subr.mxu0 0.0
  %3746 = vmatpush1.msra.mxu0 0.0
  %3747 = vmatprep.subr.mxu0 0.0
  %3748 = vmatpush1.msra.mxu0 0.0
  %3749 = vmatprep.subr.mxu0 0.0
  %3750 = vmatpush1.msra.mxu0 0.0
  %3751 = vmatprep.subr.mxu0 0.0
  %3752 = vmatpush1.msra.mxu0 0.0
  %3753 = vmatprep.subr.mxu0 0.0
  %3754 = vmatpush1.msra.mxu0 0.0
  %3755 = vmatprep.subr.mxu0 0.0
  %3756 = vmatpush1.msra.mxu0 0.0
  %3757 = vmatprep.subr.mxu0 0.0
  %3758 = vmatpush1.msra.mxu0 0.0
  %3759 = vmatprep.subr.mxu0 0.0
  %3760 = vmatpush1.msra.mxu0 0.0
  %3761 = vmatprep.subr.mxu0 0.0
  %3762 = vmatpush1.msra.mxu0 0.0
  %3763 = vmatprep.subr.mxu0 0.0
  %3764 = vmatpush1.msra.mxu0 %v3640
  %3765 = vmatprep.subr.mxu0 0.0
  %3766 = vmatpush2.msra.mxu0 0.0
  %3767 = vmatprep.subr.mxu0 0.0
  %3768 = vmatpush2.msra.mxu0 0.0
  %3769 = vmatprep.subr.mxu0 0.0
  %3770 = vmatpush2.msra.mxu0 0.0
  %3771 = vmatprep.subr.mxu0 0.0
  %3772 = vmatpush2.msra.mxu0 0.0
  %3773 = vmatprep.subr.mxu0 0.0
  %3774 = vmatpush2.msra.mxu0 0.0
  %3775 = vmatprep.subr.mxu0 0.0
  %3776 = vmatpush2.msra.mxu0 0.0
  %3777 = vmatprep.subr.mxu0 0.0
  %3778 = vmatpush2.msra.mxu0 0.0
  %3779 = vmatprep.subr.mxu0 0.0
  %3780 = vmatpush2.msra.mxu0 0.0
  %3781 = vmatprep.subr.mxu0 0.0
  %3782 = vmatpush2.msra.mxu0 0.0
  %3783 = vmatprep.subr.mxu0 0.0
  %3784 = vmatpush2.msra.mxu0 0.0
  %3785 = vmatprep.subr.mxu0 0.0
  %3786 = vmatpush2.msra.mxu0 0.0
  %3787 = vmatprep.subr.mxu0 0.0
  %3788 = vmatpush2.msra.mxu0 0.0
  %3789 = vmatprep.subr.mxu0 0.0
  %3790 = vmatpush2.msra.mxu0 0.0
  %3791 = vmatprep.subr.mxu0 0.0
  %3792 = vmatpush2.msra.mxu0 0.0
  %3793 = vmatprep.subr.mxu0 0.0
  %3794 = vmatpush2.msra.mxu0 0.0
  %3795 = vmatprep.subr.mxu0 0.0
  %3796 = vmatpush2.msra.mxu0 0.0
  %3797 = vmatprep.mubr.f32.mxu0 0.0
  %3798 = vmatmul.mubr.f32.gmra.mxu0 %v3731
  %v3799 = vpop.f32.mrf.mxu0
  %v3800 = vadd.f32 0.0, %v3799
  %v3801 = vpop.f32.mrf.mxu0
  %3802 = vdwg.mxu0
  %v3803 = vld [vmem:[%s3 + $0x18] sm:$0xff]
  %v3805 = vsel %vm317, %v3800, 0
  %3807 = vmatprep.subr.mxu0 0.0
  %3808 = vmatpush1.msra.mxu0 0.0
  %3809 = vmatprep.subr.mxu0 0.0
  %3810 = vmatpush1.msra.mxu0 0.0
  %3811 = vmatprep.subr.mxu0 0.0
  %3812 = vmatpush1.msra.mxu0 0.0
  %3813 = vmatprep.subr.mxu0 0.0
  %3814 = vmatpush1.msra.mxu0 0.0
  %3815 = vmatprep.subr.mxu0 0.0
  %3816 = vmatpush1.msra.mxu0 0.0
  %3817 = vmatprep.subr.mxu0 0.0
  %3818 = vmatpush1.msra.mxu0 0.0
  %3819 = vmatprep.subr.mxu0 0.0
  %3820 = vmatpush1.msra.mxu0 0.0
  %3821 = vmatprep.subr.mxu0 0.0
  %3822 = vmatpush1.msra.mxu0 0.0
  %3823 = vmatprep.subr.mxu0 0.0
  %3824 = vmatpush1.msra.mxu0 0.0
  %3825 = vmatprep.subr.mxu0 0.0
  %3826 = vmatpush1.msra.mxu0 0.0
  %3827 = vmatprep.subr.mxu0 0.0
  %3828 = vmatpush1.msra.mxu0 0.0
  %3829 = vmatprep.subr.mxu0 0.0
  %3830 = vmatpush1.msra.mxu0 0.0
  %3831 = vmatprep.subr.mxu0 0.0
  %3832 = vmatpush1.msra.mxu0 0.0
  %3833 = vmatprep.subr.mxu0 0.0
  %3834 = vmatpush1.msra.mxu0 0.0
  %3835 = vmatprep.subr.mxu0 0.0
  %3836 = vmatpush1.msra.mxu0 0.0
  %3837 = vmatprep.subr.mxu0 0.0
  %3838 = vmatpush1.msra.mxu0 %v3803
  %3839 = vmatprep.subr.mxu0 0.0
  %3840 = vmatpush2.msra.mxu0 0.0
  %3841 = vmatprep.subr.mxu0 0.0
  %3842 = vmatpush2.msra.mxu0 0.0
  %3843 = vmatprep.subr.mxu0 0.0
  %3844 = vmatpush2.msra.mxu0 0.0
  %3845 = vmatprep.subr.mxu0 0.0
  %3846 = vmatpush2.msra.mxu0 0.0
  %3847 = vmatprep.subr.mxu0 0.0
  %3848 = vmatpush2.msra.mxu0 0.0
  %3849 = vmatprep.subr.mxu0 0.0
  %3850 = vmatpush2.msra.mxu0 0.0
  %3851 = vmatprep.subr.mxu0 0.0
  %3852 = vmatpush2.msra.mxu0 0.0
  %3853 = vmatprep.subr.mxu0 0.0
  %3854 = vmatpush2.msra.mxu0 0.0
  %3855 = vmatprep.subr.mxu0 0.0
  %3856 = vmatpush2.msra.mxu0 0.0
  %3857 = vmatprep.subr.mxu0 0.0
  %3858 = vmatpush2.msra.mxu0 0.0
  %3859 = vmatprep.subr.mxu0 0.0
  %3860 = vmatpush2.msra.mxu0 0.0
  %3861 = vmatprep.subr.mxu0 0.0
  %3862 = vmatpush2.msra.mxu0 0.0
  %3863 = vmatprep.subr.mxu0 0.0
  %3864 = vmatpush2.msra.mxu0 0.0
  %3865 = vmatprep.subr.mxu0 0.0
  %3866 = vmatpush2.msra.mxu0 0.0
  %3867 = vmatprep.subr.mxu0 0.0
  %3868 = vmatpush2.msra.mxu0 0.0
  %3869 = vmatprep.subr.mxu0 0.0
  %3870 = vmatpush2.msra.mxu0 0.0
  %3871 = vmatprep.mubr.f32.mxu0 0.0
  %3872 = vmatmul.mubr.f32.gmra.mxu0 %v3805
  %v3873 = vpop.f32.mrf.mxu0
  %v3874 = vadd.f32 0.0, %v3873
  %v3875 = vpop.f32.mrf.mxu0
  %3876 = vdwg.mxu0
  %v3877 = vadd.f32 %v3405, %v3874
  %3878 = vst.msk [vmem:[#allocation2 + $0x8] sm:$0xff] %vm30, %v3877
  %v3879 = vld [vmem:[#allocation2] sm:$0xff]
  %v3880 = vld [vmem:[#allocation2 + $0x8] sm:$0xff]
  %v3881 = vadd.f32 %v3879, %v68
  %v3882 = vadd.f32 %v3880, %v69
  %v3883 = vld [vmem:[%s3 + $0xc3] sm:$0x1]
  %v3884 = vld [vmem:[%s3 + $0xc4] sm:$0x1]
  %v3885 = vsel %vm30, %v3881, 0.0
  %3886 = vadd.xlane.f32.xlu0 %v3885
  %v3887 = vpop.xlane.xlu0 %3886
  %v3888 = vsel %vm30, %v3882, 0.0
  %3889 = vadd.xlane.f32.xlu0 %v3888
  %v3890 = vpop.xlane.xlu0 %3889
  %v3891 = vmul.f32 %v3887, %v37
  %v3892 = vmul.f32 %v3890, %v37
  %v3893 = vsub.f32 %v3881, %v3891
  %v3894 = vsub.f32 %v3882, %v3892
  %v3895 = vmul.f32 %v3893, %v3893
  %v3896 = vmul.f32 %v3894, %v3894
  %v3897 = vsel %vm30, %v3895, 0.0
  %3898 = vadd.xlane.f32.xlu0 %v3897
  %v3899 = vpop.xlane.xlu0 %3898
  %v3900 = vsel %vm30, %v3896, 0.0
  %3901 = vadd.xlane.f32.xlu0 %v3900
  %v3902 = vpop.xlane.xlu0 %3901
  %v3903 = vmul.f32 %v3899, %v37
  %v3904 = vmul.f32 %v3902, %v37
  %v3905 = vadd.f32 %v3903, 1e-12
  %v3906 = vadd.f32 %v3904, 1e-12
  %v3907 = vrsqrt.pop %v3905
  %v3908 = vrsqrt.pop %v3906
  %v3909 = vmul.f32 %v3893, %v3907
  %v3910 = vmul.f32 %v3894, %v3908
  %v3911 = vlaneseq
  %v3912 = vshrl.u32 %v3911, 7
  %v3913 = vsub.s32 0, %v3912
  %v3914 = vrot.slane %v3883, %v3913
  %v3915 = vmul.f32 %v3909, %v3914
  %v3916 = vmul.f32 %v3910, %v3914
  %v3917 = vlaneseq
  %v3918 = vshrl.u32 %v3917, 7
  %v3919 = vsub.s32 0, %v3918
  %v3920 = vrot.slane %v3884, %v3919
  %v3921 = vadd.f32 %v3915, %v3920
  %v3922 = vadd.f32 %v3916, %v3920
  %v3923 = vld [vmem:[%s4] sm:$0xff]
  %v3924 = vld [vmem:[%s4 + $0x8] sm:$0xff]
  %v3925 = vld [vmem:[%s4 + $0x10] sm:$0xff]
  %v3926 = vld [vmem:[%s4 + $0x18] sm:$0xff]
  %v3927 = vld [vmem:[%s4 + $0x40] sm:$0x1]
  %v3928 = vlaneseq
  %v3929 = vshrl.u32 %v3928, 7
  %v3930 = vsub.s32 0, %v3929
  %v3931 = vrot.slane %v3927, %v3930
  %v3933 = vsel %vm30, %v3921, 0
  %v3936 = vsel %vm30, %v3922, 0
  %3938 = vmatprep.subr.mxu0 0.0
  %3939 = vmatpush1.msra.mxu0 0.0
  %3940 = vmatprep.subr.mxu0 0.0
  %3941 = vmatpush1.msra.mxu0 0.0
  %3942 = vmatprep.subr.mxu0 0.0
  %3943 = vmatpush1.msra.mxu0 0.0
  %3944 = vmatprep.subr.mxu0 0.0
  %3945 = vmatpush1.msra.mxu0 0.0
  %3946 = vmatprep.subr.mxu0 0.0
  %3947 = vmatpush1.msra.mxu0 0.0
  %3948 = vmatprep.subr.mxu0 0.0
  %3949 = vmatpush1.msra.mxu0 0.0
  %3950 = vmatprep.subr.mxu0 0.0
  %3951 = vmatpush1.msra.mxu0 0.0
  %3952 = vmatprep.subr.mxu0 0.0
  %3953 = vmatpush1.msra.mxu0 0.0
  %3954 = vmatprep.subr.mxu0 0.0
  %3955 = vmatpush1.msra.mxu0 0.0
  %3956 = vmatprep.subr.mxu0 0.0
  %3957 = vmatpush1.msra.mxu0 0.0
  %3958 = vmatprep.subr.mxu0 0.0
  %3959 = vmatpush1.msra.mxu0 0.0
  %3960 = vmatprep.subr.mxu0 0.0
  %3961 = vmatpush1.msra.mxu0 0.0
  %3962 = vmatprep.subr.mxu0 0.0
  %3963 = vmatpush1.msra.mxu0 %v3926
  %3964 = vmatprep.subr.mxu0 0.0
  %3965 = vmatpush1.msra.mxu0 %v3925
  %3966 = vmatprep.subr.mxu0 0.0
  %3967 = vmatpush1.msra.mxu0 %v3924
  %3968 = vmatprep.subr.mxu0 0.0
  %3969 = vmatpush1.msra.mxu0 %v3923
  %3970 = vmatprep.subr.mxu0 0.0
  %3971 = vmatpush2.msra.mxu0 0.0
  %3972 = vmatprep.subr.mxu0 0.0
  %3973 = vmatpush2.msra.mxu0 0.0
  %3974 = vmatprep.subr.mxu0 0.0
  %3975 = vmatpush2.msra.mxu0 0.0
  %3976 = vmatprep.subr.mxu0 0.0
  %3977 = vmatpush2.msra.mxu0 0.0
  %3978 = vmatprep.subr.mxu0 0.0
  %3979 = vmatpush2.msra.mxu0 0.0
  %3980 = vmatprep.subr.mxu0 0.0
  %3981 = vmatpush2.msra.mxu0 0.0
  %3982 = vmatprep.subr.mxu0 0.0
  %3983 = vmatpush2.msra.mxu0 0.0
  %3984 = vmatprep.subr.mxu0 0.0
  %3985 = vmatpush2.msra.mxu0 0.0
  %3986 = vmatprep.subr.mxu0 0.0
  %3987 = vmatpush2.msra.mxu0 0.0
  %3988 = vmatprep.subr.mxu0 0.0
  %3989 = vmatpush2.msra.mxu0 0.0
  %3990 = vmatprep.subr.mxu0 0.0
  %3991 = vmatpush2.msra.mxu0 0.0
  %3992 = vmatprep.subr.mxu0 0.0
  %3993 = vmatpush2.msra.mxu0 0.0
  %3994 = vmatprep.subr.mxu0 0.0
  %3995 = vmatpush2.msra.mxu0 0.0
  %3996 = vmatprep.subr.mxu0 0.0
  %3997 = vmatpush2.msra.mxu0 0.0
  %3998 = vmatprep.subr.mxu0 0.0
  %3999 = vmatpush2.msra.mxu0 0.0
  %4000 = vmatprep.subr.mxu0 0.0
  %4001 = vmatpush2.msra.mxu0 0.0
  %4002 = vmatprep.mubr.f32.mxu0 0.0
  %4003 = vmatmul.mubr.f32.gmra.mxu0 %v3933
  %v4004 = vpop.f32.mrf.mxu0
  %v4005 = vadd.f32 %v3931, %v4004
  %v4006 = vpop.f32.mrf.mxu0
  %4007 = vmatprep.mubr.f32.mxu0 0.0
  %4008 = vmatmul.mubr.f32.gmra.mxu0 %v3936
  %v4009 = vpop.f32.mrf.mxu0
  %v4010 = vadd.f32 %v3931, %v4009
  %v4011 = vpop.f32.mrf.mxu0
  %4012 = vdwg.mxu0
  %v4013 = vmul.f32 %v4005, 0.5
  %v4014 = vmul.f32 %v4010, 0.5
  %v4015 = vmul.f32 %v4005, 0.044715
  %v4016 = vmul.f32 %v4010, 0.044715
  %v4017 = vmul.f32 %v4015, %v4005
  %v4018 = vmul.f32 %v4016, %v4010
  %v4019 = vmul.f32 %v4017, %v4005
  %v4020 = vmul.f32 %v4018, %v4010
  %v4021 = vadd.f32 %v4005, %v4019
  %v4022 = vadd.f32 %v4010, %v4020
  %v4023 = vmul.f32 %v4021, 0.7978846
  %v4024 = vmul.f32 %v4022, 0.7978846
  %v4025 = vtanh.pop %v4023
  %v4026 = vtanh.pop %v4024
  %v4027 = vadd.f32 %v4025, 1.0
  %v4028 = vadd.f32 %v4026, 1.0
  %v4029 = vmul.f32 %v4013, %v4027
  %v4030 = vmul.f32 %v4014, %v4028
  %v4031 = vld [vmem:[%s3 + $0x20] sm:$0xff]
  %v4032 = vld [vmem:[%s3 + $0x28] sm:$0xff]
  %v4033 = vld [vmem:[%s3 + $0x30] sm:$0xff]
  %v4034 = vld [vmem:[%s3 + $0x38] sm:$0xff]
  %v4035 = vld [vmem:[%s3 + $0x40] sm:$0xff]
  %v4036 = vld [vmem:[%s3 + $0x48] sm:$0xff]
  %v4037 = vld [vmem:[%s3 + $0x50] sm:$0xff]
  %v4038 = vld [vmem:[%s3 + $0x58] sm:$0xff]
  %v4039 = vld [vmem:[%s3 + $0xc5] sm:$0x1]
  %v4040 = vlaneseq
  %v4041 = vshrl.u32 %v4040, 7
  %v4042 = vsub.s32 0, %v4041
  %v4043 = vrot.slane %v4039, %v4042
  %vm4044 = vcmask 523264
  %v4046 = vsel %vm4044, %v4029, 0
  %v4049 = vsel %vm4044, %v4030, 0
  %4051 = vmatprep.subr.mxu0 0.0
  %4052 = vmatpush1.msra.mxu0 0.0
  %4053 = vmatprep.subr.mxu0 0.0
  %4054 = vmatpush1.msra.mxu0 0.0
  %4055 = vmatprep.subr.mxu0 0.0
  %4056 = vmatpush1.msra.mxu0 0.0
  %4057 = vmatprep.subr.mxu0 0.0
  %4058 = vmatpush1.msra.mxu0 0.0
  %4059 = vmatprep.subr.mxu0 0.0
  %4060 = vmatpush1.msra.mxu0 0.0
  %4061 = vmatprep.subr.mxu0 0.0
  %4062 = vmatpush1.msra.mxu0 0.0
  %4063 = vmatprep.subr.mxu0 0.0
  %4064 = vmatpush1.msra.mxu0 0.0
  %4065 = vmatprep.subr.mxu0 0.0
  %4066 = vmatpush1.msra.mxu0 0.0
  %4067 = vmatprep.subr.mxu0 0.0
  %4068 = vmatpush1.msra.mxu0 %v4038
  %4069 = vmatprep.subr.mxu0 0.0
  %4070 = vmatpush1.msra.mxu0 %v4037
  %4071 = vmatprep.subr.mxu0 0.0
  %4072 = vmatpush1.msra.mxu0 %v4036
  %4073 = vmatprep.subr.mxu0 0.0
  %4074 = vmatpush1.msra.mxu0 %v4035
  %4075 = vmatprep.subr.mxu0 0.0
  %4076 = vmatpush1.msra.mxu0 %v4034
  %4077 = vmatprep.subr.mxu0 0.0
  %4078 = vmatpush1.msra.mxu0 %v4033
  %4079 = vmatprep.subr.mxu0 0.0
  %4080 = vmatpush1.msra.mxu0 %v4032
  %4081 = vmatprep.subr.mxu0 0.0
  %4082 = vmatpush1.msra.mxu0 %v4031
  %4083 = vmatprep.subr.mxu0 0.0
  %4084 = vmatpush2.msra.mxu0 0.0
  %4085 = vmatprep.subr.mxu0 0.0
  %4086 = vmatpush2.msra.mxu0 0.0
  %4087 = vmatprep.subr.mxu0 0.0
  %4088 = vmatpush2.msra.mxu0 0.0
  %4089 = vmatprep.subr.mxu0 0.0
  %4090 = vmatpush2.msra.mxu0 0.0
  %4091 = vmatprep.subr.mxu0 0.0
  %4092 = vmatpush2.msra.mxu0 0.0
  %4093 = vmatprep.subr.mxu0 0.0
  %4094 = vmatpush2.msra.mxu0 0.0
  %4095 = vmatprep.subr.mxu0 0.0
  %4096 = vmatpush2.msra.mxu0 0.0
  %4097 = vmatprep.subr.mxu0 0.0
  %4098 = vmatpush2.msra.mxu0 0.0
  %4099 = vmatprep.subr.mxu0 0.0
  %4100 = vmatpush2.msra.mxu0 0.0
  %4101 = vmatprep.subr.mxu0 0.0
  %4102 = vmatpush2.msra.mxu0 0.0
  %4103 = vmatprep.subr.mxu0 0.0
  %4104 = vmatpush2.msra.mxu0 0.0
  %4105 = vmatprep.subr.mxu0 0.0
  %4106 = vmatpush2.msra.mxu0 0.0
  %4107 = vmatprep.subr.mxu0 0.0
  %4108 = vmatpush2.msra.mxu0 0.0
  %4109 = vmatprep.subr.mxu0 0.0
  %4110 = vmatpush2.msra.mxu0 0.0
  %4111 = vmatprep.subr.mxu0 0.0
  %4112 = vmatpush2.msra.mxu0 0.0
  %4113 = vmatprep.subr.mxu0 0.0
  %4114 = vmatpush2.msra.mxu0 0.0
  %4115 = vmatprep.mubr.f32.mxu0 0.0
  %4116 = vmatmul.mubr.f32.gmra.mxu0 %v4046
  %v4117 = vpop.f32.mrf.mxu0
  %v4118 = vadd.f32 %v4043, %v4117
  %v4119 = vpop.f32.mrf.mxu0
  %4120 = vmatprep.mubr.f32.mxu0 0.0
  %4121 = vmatmul.mubr.f32.gmra.mxu0 %v4049
  %v4122 = vpop.f32.mrf.mxu0
  %v4123 = vadd.f32 %v4043, %v4122
  %v4124 = vpop.f32.mrf.mxu0
  %4125 = vdwg.mxu0
  %v4126 = vadd.f32 %v4118, %v3921
  %v4127 = vadd.f32 %v4123, %v3922
  %v4128 = vld [vmem:[%s3 + $0xc6] sm:$0x1]
  %v4129 = vld [vmem:[%s3 + $0xc7] sm:$0x1]
  %v4130 = vsel %vm30, %v4126, 0.0
  %4131 = vadd.xlane.f32.xlu0 %v4130
  %v4132 = vpop.xlane.xlu0 %4131
  %v4133 = vsel %vm30, %v4127, 0.0
  %4134 = vadd.xlane.f32.xlu0 %v4133
  %v4135 = vpop.xlane.xlu0 %4134
  %v4136 = vmul.f32 %v4132, %v37
  %v4137 = vmul.f32 %v4135, %v37
  %v4138 = vsub.f32 %v4126, %v4136
  %v4139 = vsub.f32 %v4127, %v4137
  %v4140 = vmul.f32 %v4138, %v4138
  %v4141 = vmul.f32 %v4139, %v4139
  %v4142 = vsel %vm30, %v4140, 0.0
  %4143 = vadd.xlane.f32.xlu0 %v4142
  %v4144 = vpop.xlane.xlu0 %4143
  %v4145 = vsel %vm30, %v4141, 0.0
  %4146 = vadd.xlane.f32.xlu0 %v4145
  %v4147 = vpop.xlane.xlu0 %4146
  %v4148 = vmul.f32 %v4144, %v37
  %v4149 = vmul.f32 %v4147, %v37
  %v4150 = vadd.f32 %v4148, 1e-12
  %v4151 = vadd.f32 %v4149, 1e-12
  %v4152 = vrsqrt.pop %v4150
  %v4153 = vrsqrt.pop %v4151
  %v4154 = vmul.f32 %v4138, %v4152
  %v4155 = vmul.f32 %v4139, %v4153
  %v4156 = vlaneseq
  %v4157 = vshrl.u32 %v4156, 7
  %v4158 = vsub.s32 0, %v4157
  %v4159 = vrot.slane %v4128, %v4158
  %v4160 = vmul.f32 %v4154, %v4159
  %v4161 = vmul.f32 %v4155, %v4159
  %v4162 = vlaneseq
  %v4163 = vshrl.u32 %v4162, 7
  %v4164 = vsub.s32 0, %v4163
  %v4165 = vrot.slane %v4129, %v4164
  %v4166 = vadd.f32 %v4160, %v4165
  %v4167 = vadd.f32 %v4161, %v4165
  %v4168 = vld [vmem:[%s3 + $0xc8] sm:$0x1]
  %s4169 = scalar_lea.vmem %s2, 480
  %v4170 = vld [vmem:[%s4169] sm:$0xff]
  %v4171 = vld [vmem:[%s4169 + $0x8] sm:$0xff]
  %v4172 = vld [vmem:[%s4169 + $0x10] sm:$0xff]
  %v4173 = vld [vmem:[%s4169 + $0x18] sm:$0xff]
  %v4174 = vld [vmem:[%s4169 + $0x20] sm:$0x1]
  %s4175 = scalar_lea.vmem %s2, 640
  %v4176 = vld [vmem:[%s4175] sm:$0xff]
  %v4177 = vld [vmem:[%s4175 + $0x8] sm:$0xff]
  %v4178 = vld [vmem:[%s4175 + $0x10] sm:$0xff]
  %v4179 = vld [vmem:[%s4175 + $0x18] sm:$0xff]
  %v4180 = vld [vmem:[%s4175 + $0x20] sm:$0x1]
  %s4181 = scalar_lea.vmem %s2, 800
  %v4182 = vld [vmem:[%s4181] sm:$0xff]
  %v4183 = vld [vmem:[%s4181 + $0x8] sm:$0xff]
  %v4184 = vld [vmem:[%s4181 + $0x10] sm:$0xff]
  %v4185 = vld [vmem:[%s4181 + $0x18] sm:$0xff]
  %v4186 = vld [vmem:[%s4181 + $0x20] sm:$0x1]
  %v4187 = vlaneseq
  %v4188 = vshrl.u32 %v4187, 7
  %v4189 = vsub.s32 0, %v4188
  %v4190 = vrot.slane %v4174, %v4189
  %v4192 = vsel %vm30, %v4166, 0
  %4194 = vmatprep.subr.mxu0 0.0
  %4195 = vmatpush1.msra.mxu0 0.0
  %4196 = vmatprep.subr.mxu0 0.0
  %4197 = vmatpush1.msra.mxu0 0.0
  %4198 = vmatprep.subr.mxu0 0.0
  %4199 = vmatpush1.msra.mxu0 0.0
  %4200 = vmatprep.subr.mxu0 0.0
  %4201 = vmatpush1.msra.mxu0 0.0
  %4202 = vmatprep.subr.mxu0 0.0
  %4203 = vmatpush1.msra.mxu0 0.0
  %4204 = vmatprep.subr.mxu0 0.0
  %4205 = vmatpush1.msra.mxu0 0.0
  %4206 = vmatprep.subr.mxu0 0.0
  %4207 = vmatpush1.msra.mxu0 0.0
  %4208 = vmatprep.subr.mxu0 0.0
  %4209 = vmatpush1.msra.mxu0 0.0
  %4210 = vmatprep.subr.mxu0 0.0
  %4211 = vmatpush1.msra.mxu0 0.0
  %4212 = vmatprep.subr.mxu0 0.0
  %4213 = vmatpush1.msra.mxu0 0.0
  %4214 = vmatprep.subr.mxu0 0.0
  %4215 = vmatpush1.msra.mxu0 0.0
  %4216 = vmatprep.subr.mxu0 0.0
  %4217 = vmatpush1.msra.mxu0 0.0
  %4218 = vmatprep.subr.mxu0 0.0
  %4219 = vmatpush1.msra.mxu0 %v4173
  %4220 = vmatprep.subr.mxu0 0.0
  %4221 = vmatpush1.msra.mxu0 %v4172
  %4222 = vmatprep.subr.mxu0 0.0
  %4223 = vmatpush1.msra.mxu0 %v4171
  %4224 = vmatprep.subr.mxu0 0.0
  %4225 = vmatpush1.msra.mxu0 %v4170
  %4226 = vmatprep.subr.mxu0 0.0
  %4227 = vmatpush2.msra.mxu0 0.0
  %4228 = vmatprep.subr.mxu0 0.0
  %4229 = vmatpush2.msra.mxu0 0.0
  %4230 = vmatprep.subr.mxu0 0.0
  %4231 = vmatpush2.msra.mxu0 0.0
  %4232 = vmatprep.subr.mxu0 0.0
  %4233 = vmatpush2.msra.mxu0 0.0
  %4234 = vmatprep.subr.mxu0 0.0
  %4235 = vmatpush2.msra.mxu0 0.0
  %4236 = vmatprep.subr.mxu0 0.0
  %4237 = vmatpush2.msra.mxu0 0.0
  %4238 = vmatprep.subr.mxu0 0.0
  %4239 = vmatpush2.msra.mxu0 0.0
  %4240 = vmatprep.subr.mxu0 0.0
  %4241 = vmatpush2.msra.mxu0 0.0
  %4242 = vmatprep.subr.mxu0 0.0
  %4243 = vmatpush2.msra.mxu0 0.0
  %4244 = vmatprep.subr.mxu0 0.0
  %4245 = vmatpush2.msra.mxu0 0.0
  %4246 = vmatprep.subr.mxu0 0.0
  %4247 = vmatpush2.msra.mxu0 0.0
  %4248 = vmatprep.subr.mxu0 0.0
  %4249 = vmatpush2.msra.mxu0 0.0
  %4250 = vmatprep.subr.mxu0 0.0
  %4251 = vmatpush2.msra.mxu0 0.0
  %4252 = vmatprep.subr.mxu0 0.0
  %4253 = vmatpush2.msra.mxu0 0.0
  %4254 = vmatprep.subr.mxu0 0.0
  %4255 = vmatpush2.msra.mxu0 0.0
  %4256 = vmatprep.subr.mxu0 0.0
  %4257 = vmatpush2.msra.mxu0 0.0
  %4258 = vmatprep.mubr.f32.mxu0 0.0
  %4259 = vmatmul.mubr.f32.gmra.mxu0 %v4192
  %v4260 = vpop.f32.mrf.mxu0
  %v4261 = vadd.f32 %v4190, %v4260
  %v4262 = vpop.f32.mrf.mxu0
  %4263 = vdwg.mxu0
  %v4264 = vlaneseq
  %v4265 = vshrl.u32 %v4264, 7
  %v4266 = vsub.s32 0, %v4265
  %v4267 = vrot.slane %v4180, %v4266
  %4268 = vmatprep.subr.mxu0 0.0
  %4269 = vmatpush1.msra.mxu0 0.0
  %4270 = vmatprep.subr.mxu0 0.0
  %4271 = vmatpush1.msra.mxu0 0.0
  %4272 = vmatprep.subr.mxu0 0.0
  %4273 = vmatpush1.msra.mxu0 0.0
  %4274 = vmatprep.subr.mxu0 0.0
  %4275 = vmatpush1.msra.mxu0 0.0
  %4276 = vmatprep.subr.mxu0 0.0
  %4277 = vmatpush1.msra.mxu0 0.0
  %4278 = vmatprep.subr.mxu0 0.0
  %4279 = vmatpush1.msra.mxu0 0.0
  %4280 = vmatprep.subr.mxu0 0.0
  %4281 = vmatpush1.msra.mxu0 0.0
  %4282 = vmatprep.subr.mxu0 0.0
  %4283 = vmatpush1.msra.mxu0 0.0
  %4284 = vmatprep.subr.mxu0 0.0
  %4285 = vmatpush1.msra.mxu0 0.0
  %4286 = vmatprep.subr.mxu0 0.0
  %4287 = vmatpush1.msra.mxu0 0.0
  %4288 = vmatprep.subr.mxu0 0.0
  %4289 = vmatpush1.msra.mxu0 0.0
  %4290 = vmatprep.subr.mxu0 0.0
  %4291 = vmatpush1.msra.mxu0 0.0
  %4292 = vmatprep.subr.mxu0 0.0
  %4293 = vmatpush1.msra.mxu0 %v4179
  %4294 = vmatprep.subr.mxu0 0.0
  %4295 = vmatpush1.msra.mxu0 %v4178
  %4296 = vmatprep.subr.mxu0 0.0
  %4297 = vmatpush1.msra.mxu0 %v4177
  %4298 = vmatprep.subr.mxu0 0.0
  %4299 = vmatpush1.msra.mxu0 %v4176
  %4300 = vmatprep.subr.mxu0 0.0
  %4301 = vmatpush2.msra.mxu0 0.0
  %4302 = vmatprep.subr.mxu0 0.0
  %4303 = vmatpush2.msra.mxu0 0.0
  %4304 = vmatprep.subr.mxu0 0.0
  %4305 = vmatpush2.msra.mxu0 0.0
  %4306 = vmatprep.subr.mxu0 0.0
  %4307 = vmatpush2.msra.mxu0 0.0
  %4308 = vmatprep.subr.mxu0 0.0
  %4309 = vmatpush2.msra.mxu0 0.0
  %4310 = vmatprep.subr.mxu0 0.0
  %4311 = vmatpush2.msra.mxu0 0.0
  %4312 = vmatprep.subr.mxu0 0.0
  %4313 = vmatpush2.msra.mxu0 0.0
  %4314 = vmatprep.subr.mxu0 0.0
  %4315 = vmatpush2.msra.mxu0 0.0
  %4316 = vmatprep.subr.mxu0 0.0
  %4317 = vmatpush2.msra.mxu0 0.0
  %4318 = vmatprep.subr.mxu0 0.0
  %4319 = vmatpush2.msra.mxu0 0.0
  %4320 = vmatprep.subr.mxu0 0.0
  %4321 = vmatpush2.msra.mxu0 0.0
  %4322 = vmatprep.subr.mxu0 0.0
  %4323 = vmatpush2.msra.mxu0 0.0
  %4324 = vmatprep.subr.mxu0 0.0
  %4325 = vmatpush2.msra.mxu0 0.0
  %4326 = vmatprep.subr.mxu0 0.0
  %4327 = vmatpush2.msra.mxu0 0.0
  %4328 = vmatprep.subr.mxu0 0.0
  %4329 = vmatpush2.msra.mxu0 0.0
  %4330 = vmatprep.subr.mxu0 0.0
  %4331 = vmatpush2.msra.mxu0 0.0
  %4332 = vmatprep.mubr.f32.mxu0 0.0
  %4333 = vmatmul.mubr.f32.gmra.mxu0 %v4192
  %v4334 = vpop.f32.mrf.mxu0
  %v4335 = vadd.f32 %v4267, %v4334
  %v4336 = vpop.f32.mrf.mxu0
  %4337 = vdwg.mxu0
  %v4338 = vlaneseq
  %v4339 = vshrl.u32 %v4338, 7
  %v4340 = vsub.s32 0, %v4339
  %v4341 = vrot.slane %v4186, %v4340
  %4342 = vmatprep.subr.mxu0 0.0
  %4343 = vmatpush1.msra.mxu0 0.0
  %4344 = vmatprep.subr.mxu0 0.0
  %4345 = vmatpush1.msra.mxu0 0.0
  %4346 = vmatprep.subr.mxu0 0.0
  %4347 = vmatpush1.msra.mxu0 0.0
  %4348 = vmatprep.subr.mxu0 0.0
  %4349 = vmatpush1.msra.mxu0 0.0
  %4350 = vmatprep.subr.mxu0 0.0
  %4351 = vmatpush1.msra.mxu0 0.0
  %4352 = vmatprep.subr.mxu0 0.0
  %4353 = vmatpush1.msra.mxu0 0.0
  %4354 = vmatprep.subr.mxu0 0.0
  %4355 = vmatpush1.msra.mxu0 0.0
  %4356 = vmatprep.subr.mxu0 0.0
  %4357 = vmatpush1.msra.mxu0 0.0
  %4358 = vmatprep.subr.mxu0 0.0
  %4359 = vmatpush1.msra.mxu0 0.0
  %4360 = vmatprep.subr.mxu0 0.0
  %4361 = vmatpush1.msra.mxu0 0.0
  %4362 = vmatprep.subr.mxu0 0.0
  %4363 = vmatpush1.msra.mxu0 0.0
  %4364 = vmatprep.subr.mxu0 0.0
  %4365 = vmatpush1.msra.mxu0 0.0
  %4366 = vmatprep.subr.mxu0 0.0
  %4367 = vmatpush1.msra.mxu0 %v4185
  %4368 = vmatprep.subr.mxu0 0.0
  %4369 = vmatpush1.msra.mxu0 %v4184
  %4370 = vmatprep.subr.mxu0 0.0
  %4371 = vmatpush1.msra.mxu0 %v4183
  %4372 = vmatprep.subr.mxu0 0.0
  %4373 = vmatpush1.msra.mxu0 %v4182
  %4374 = vmatprep.subr.mxu0 0.0
  %4375 = vmatpush2.msra.mxu0 0.0
  %4376 = vmatprep.subr.mxu0 0.0
  %4377 = vmatpush2.msra.mxu0 0.0
  %4378 = vmatprep.subr.mxu0 0.0
  %4379 = vmatpush2.msra.mxu0 0.0
  %4380 = vmatprep.subr.mxu0 0.0
  %4381 = vmatpush2.msra.mxu0 0.0
  %4382 = vmatprep.subr.mxu0 0.0
  %4383 = vmatpush2.msra.mxu0 0.0
  %4384 = vmatprep.subr.mxu0 0.0
  %4385 = vmatpush2.msra.mxu0 0.0
  %4386 = vmatprep.subr.mxu0 0.0
  %4387 = vmatpush2.msra.mxu0 0.0
  %4388 = vmatprep.subr.mxu0 0.0
  %4389 = vmatpush2.msra.mxu0 0.0
  %4390 = vmatprep.subr.mxu0 0.0
  %4391 = vmatpush2.msra.mxu0 0.0
  %4392 = vmatprep.subr.mxu0 0.0
  %4393 = vmatpush2.msra.mxu0 0.0
  %4394 = vmatprep.subr.mxu0 0.0
  %4395 = vmatpush2.msra.mxu0 0.0
  %4396 = vmatprep.subr.mxu0 0.0
  %4397 = vmatpush2.msra.mxu0 0.0
  %4398 = vmatprep.subr.mxu0 0.0
  %4399 = vmatpush2.msra.mxu0 0.0
  %4400 = vmatprep.subr.mxu0 0.0
  %4401 = vmatpush2.msra.mxu0 0.0
  %4402 = vmatprep.subr.mxu0 0.0
  %4403 = vmatpush2.msra.mxu0 0.0
  %4404 = vmatprep.subr.mxu0 0.0
  %4405 = vmatpush2.msra.mxu0 0.0
  %4406 = vmatprep.mubr.f32.mxu0 0.0
  %4407 = vmatmul.mubr.f32.gmra.mxu0 %v4192
  %v4408 = vpop.f32.mrf.mxu0
  %v4409 = vadd.f32 %v4341, %v4408
  %v4410 = vpop.f32.mrf.mxu0
  %4411 = vdwg.mxu0
  %v4413 = vsel %vm317, %v4261, 0
  %v4416 = vsel %vm317, %v4335, 0
  %4418 = vmatprep.subr.mxu0 0.0
  %4419 = vmatpush1.xpose.msra.mxu0 0.0
  %4420 = vmatprep.subr.mxu0 0.0
  %4421 = vmatpush1.xpose.msra.mxu0 0.0
  %4422 = vmatprep.subr.mxu0 0.0
  %4423 = vmatpush1.xpose.msra.mxu0 0.0
  %4424 = vmatprep.subr.mxu0 0.0
  %4425 = vmatpush1.xpose.msra.mxu0 0.0
  %4426 = vmatprep.subr.mxu0 0.0
  %4427 = vmatpush1.xpose.msra.mxu0 0.0
  %4428 = vmatprep.subr.mxu0 0.0
  %4429 = vmatpush1.xpose.msra.mxu0 0.0
  %4430 = vmatprep.subr.mxu0 0.0
  %4431 = vmatpush1.xpose.msra.mxu0 0.0
  %4432 = vmatprep.subr.mxu0 0.0
  %4433 = vmatpush1.xpose.msra.mxu0 0.0
  %4434 = vmatprep.subr.mxu0 0.0
  %4435 = vmatpush1.xpose.msra.mxu0 0.0
  %4436 = vmatprep.subr.mxu0 0.0
  %4437 = vmatpush1.xpose.msra.mxu0 0.0
  %4438 = vmatprep.subr.mxu0 0.0
  %4439 = vmatpush1.xpose.msra.mxu0 0.0
  %4440 = vmatprep.subr.mxu0 0.0
  %4441 = vmatpush1.xpose.msra.mxu0 0.0
  %4442 = vmatprep.subr.mxu0 0.0
  %4443 = vmatpush1.xpose.msra.mxu0 0.0
  %4444 = vmatprep.subr.mxu0 0.0
  %4445 = vmatpush1.xpose.msra.mxu0 0.0
  %4446 = vmatprep.subr.mxu0 0.0
  %4447 = vmatpush1.xpose.msra.mxu0 0.0
  %4448 = vmatprep.subr.mxu0 0.0
  %4449 = vmatpush1.xpose.msra.mxu0 %v4416
  %4450 = vmatprep.subr.mxu0 0.0
  %4451 = vmatpush2.xpose.msra.mxu0 0.0
  %4452 = vmatprep.subr.mxu0 0.0
  %4453 = vmatpush2.xpose.msra.mxu0 0.0
  %4454 = vmatprep.subr.mxu0 0.0
  %4455 = vmatpush2.xpose.msra.mxu0 0.0
  %4456 = vmatprep.subr.mxu0 0.0
  %4457 = vmatpush2.xpose.msra.mxu0 0.0
  %4458 = vmatprep.subr.mxu0 0.0
  %4459 = vmatpush2.xpose.msra.mxu0 0.0
  %4460 = vmatprep.subr.mxu0 0.0
  %4461 = vmatpush2.xpose.msra.mxu0 0.0
  %4462 = vmatprep.subr.mxu0 0.0
  %4463 = vmatpush2.xpose.msra.mxu0 0.0
  %4464 = vmatprep.subr.mxu0 0.0
  %4465 = vmatpush2.xpose.msra.mxu0 0.0
  %4466 = vmatprep.subr.mxu0 0.0
  %4467 = vmatpush2.xpose.msra.mxu0 0.0
  %4468 = vmatprep.subr.mxu0 0.0
  %4469 = vmatpush2.xpose.msra.mxu0 0.0
  %4470 = vmatprep.subr.mxu0 0.0
  %4471 = vmatpush2.xpose.msra.mxu0 0.0
  %4472 = vmatprep.subr.mxu0 0.0
  %4473 = vmatpush2.xpose.msra.mxu0 0.0
  %4474 = vmatprep.subr.mxu0 0.0
  %4475 = vmatpush2.xpose.msra.mxu0 0.0
  %4476 = vmatprep.subr.mxu0 0.0
  %4477 = vmatpush2.xpose.msra.mxu0 0.0
  %4478 = vmatprep.subr.mxu0 0.0
  %4479 = vmatpush2.xpose.msra.mxu0 0.0
  %4480 = vmatprep.subr.mxu0 0.0
  %4481 = vmatpush2.xpose.msra.mxu0 0.0
  %4482 = vmatprep.mubr.f32.mxu0 0.0
  %4483 = vmatmul.mubr.f32.gmra.mxu0 %v4413
  %v4484 = vpop.f32.mrf.mxu0
  %v4485 = vadd.f32 %v316, %v4484
  %v4486 = vpop.f32.mrf.mxu0
  %4487 = vdwg.mxu0
  %v4488 = vsel %vm317, %v4485, -inf
  %4489 = vmax.xlane.f32.xlu0 %v4488
  %v4490 = vpop.xlane.xlu0 %4489
  %v4491 = vsub.f32 %v4485, %v4490
  %v4492 = vmul.f32 %v4491, 1.442695
  %v4493 = vpow.pop %v4492
  %v4494 = vsel %vm317, %v4493, 0.0
  %4495 = vadd.xlane.f32.xlu0 %v4494
  %v4496 = vpop.xlane.xlu0 %4495
  %v4497 = vrcp.pop %v4496
  %v4498 = vmul.f32 %v4493, %v4497
  %v4500 = vsel %vm317, %v4498, 0
  %4502 = vmatprep.subr.mxu0 0.0
  %4503 = vmatpush1.msra.mxu0 0.0
  %4504 = vmatprep.subr.mxu0 0.0
  %4505 = vmatpush1.msra.mxu0 0.0
  %4506 = vmatprep.subr.mxu0 0.0
  %4507 = vmatpush1.msra.mxu0 0.0
  %4508 = vmatprep.subr.mxu0 0.0
  %4509 = vmatpush1.msra.mxu0 0.0
  %4510 = vmatprep.subr.mxu0 0.0
  %4511 = vmatpush1.msra.mxu0 0.0
  %4512 = vmatprep.subr.mxu0 0.0
  %4513 = vmatpush1.msra.mxu0 0.0
  %4514 = vmatprep.subr.mxu0 0.0
  %4515 = vmatpush1.msra.mxu0 0.0
  %4516 = vmatprep.subr.mxu0 0.0
  %4517 = vmatpush1.msra.mxu0 0.0
  %4518 = vmatprep.subr.mxu0 0.0
  %4519 = vmatpush1.msra.mxu0 0.0
  %4520 = vmatprep.subr.mxu0 0.0
  %4521 = vmatpush1.msra.mxu0 0.0
  %4522 = vmatprep.subr.mxu0 0.0
  %4523 = vmatpush1.msra.mxu0 0.0
  %4524 = vmatprep.subr.mxu0 0.0
  %4525 = vmatpush1.msra.mxu0 0.0
  %4526 = vmatprep.subr.mxu0 0.0
  %4527 = vmatpush1.msra.mxu0 0.0
  %4528 = vmatprep.subr.mxu0 0.0
  %4529 = vmatpush1.msra.mxu0 0.0
  %4530 = vmatprep.subr.mxu0 0.0
  %4531 = vmatpush1.msra.mxu0 0.0
  %4532 = vmatprep.subr.mxu0 0.0
  %4533 = vmatpush1.msra.mxu0 %v4409
  %4534 = vmatprep.subr.mxu0 0.0
  %4535 = vmatpush2.msra.mxu0 0.0
  %4536 = vmatprep.subr.mxu0 0.0
  %4537 = vmatpush2.msra.mxu0 0.0
  %4538 = vmatprep.subr.mxu0 0.0
  %4539 = vmatpush2.msra.mxu0 0.0
  %4540 = vmatprep.subr.mxu0 0.0
  %4541 = vmatpush2.msra.mxu0 0.0
  %4542 = vmatprep.subr.mxu0 0.0
  %4543 = vmatpush2.msra.mxu0 0.0
  %4544 = vmatprep.subr.mxu0 0.0
  %4545 = vmatpush2.msra.mxu0 0.0
  %4546 = vmatprep.subr.mxu0 0.0
  %4547 = vmatpush2.msra.mxu0 0.0
  %4548 = vmatprep.subr.mxu0 0.0
  %4549 = vmatpush2.msra.mxu0 0.0
  %4550 = vmatprep.subr.mxu0 0.0
  %4551 = vmatpush2.msra.mxu0 0.0
  %4552 = vmatprep.subr.mxu0 0.0
  %4553 = vmatpush2.msra.mxu0 0.0
  %4554 = vmatprep.subr.mxu0 0.0
  %4555 = vmatpush2.msra.mxu0 0.0
  %4556 = vmatprep.subr.mxu0 0.0
  %4557 = vmatpush2.msra.mxu0 0.0
  %4558 = vmatprep.subr.mxu0 0.0
  %4559 = vmatpush2.msra.mxu0 0.0
  %4560 = vmatprep.subr.mxu0 0.0
  %4561 = vmatpush2.msra.mxu0 0.0
  %4562 = vmatprep.subr.mxu0 0.0
  %4563 = vmatpush2.msra.mxu0 0.0
  %4564 = vmatprep.subr.mxu0 0.0
  %4565 = vmatpush2.msra.mxu0 0.0
  %4566 = vmatprep.mubr.f32.mxu0 0.0
  %4567 = vmatmul.mubr.f32.gmra.mxu0 %v4500
  %v4568 = vpop.f32.mrf.mxu0
  %v4569 = vadd.f32 0.0, %v4568
  %v4570 = vpop.f32.mrf.mxu0
  %4571 = vdwg.mxu0
  %v4572 = vld [vmem:[%s3 + $0x60] sm:$0xff]
  %v4574 = vsel %vm317, %v4569, 0
  %4576 = vmatprep.subr.mxu0 0.0
  %4577 = vmatpush1.msra.mxu0 0.0
  %4578 = vmatprep.subr.mxu0 0.0
  %4579 = vmatpush1.msra.mxu0 0.0
  %4580 = vmatprep.subr.mxu0 0.0
  %4581 = vmatpush1.msra.mxu0 0.0
  %4582 = vmatprep.subr.mxu0 0.0
  %4583 = vmatpush1.msra.mxu0 0.0
  %4584 = vmatprep.subr.mxu0 0.0
  %4585 = vmatpush1.msra.mxu0 0.0
  %4586 = vmatprep.subr.mxu0 0.0
  %4587 = vmatpush1.msra.mxu0 0.0
  %4588 = vmatprep.subr.mxu0 0.0
  %4589 = vmatpush1.msra.mxu0 0.0
  %4590 = vmatprep.subr.mxu0 0.0
  %4591 = vmatpush1.msra.mxu0 0.0
  %4592 = vmatprep.subr.mxu0 0.0
  %4593 = vmatpush1.msra.mxu0 0.0
  %4594 = vmatprep.subr.mxu0 0.0
  %4595 = vmatpush1.msra.mxu0 0.0
  %4596 = vmatprep.subr.mxu0 0.0
  %4597 = vmatpush1.msra.mxu0 0.0
  %4598 = vmatprep.subr.mxu0 0.0
  %4599 = vmatpush1.msra.mxu0 0.0
  %4600 = vmatprep.subr.mxu0 0.0
  %4601 = vmatpush1.msra.mxu0 0.0
  %4602 = vmatprep.subr.mxu0 0.0
  %4603 = vmatpush1.msra.mxu0 0.0
  %4604 = vmatprep.subr.mxu0 0.0
  %4605 = vmatpush1.msra.mxu0 0.0
  %4606 = vmatprep.subr.mxu0 0.0
  %4607 = vmatpush1.msra.mxu0 %v4572
  %4608 = vmatprep.subr.mxu0 0.0
  %4609 = vmatpush2.msra.mxu0 0.0
  %4610 = vmatprep.subr.mxu0 0.0
  %4611 = vmatpush2.msra.mxu0 0.0
  %4612 = vmatprep.subr.mxu0 0.0
  %4613 = vmatpush2.msra.mxu0 0.0
  %4614 = vmatprep.subr.mxu0 0.0
  %4615 = vmatpush2.msra.mxu0 0.0
  %4616 = vmatprep.subr.mxu0 0.0
  %4617 = vmatpush2.msra.mxu0 0.0
  %4618 = vmatprep.subr.mxu0 0.0
  %4619 = vmatpush2.msra.mxu0 0.0
  %4620 = vmatprep.subr.mxu0 0.0
  %4621 = vmatpush2.msra.mxu0 0.0
  %4622 = vmatprep.subr.mxu0 0.0
  %4623 = vmatpush2.msra.mxu0 0.0
  %4624 = vmatprep.subr.mxu0 0.0
  %4625 = vmatpush2.msra.mxu0 0.0
  %4626 = vmatprep.subr.mxu0 0.0
  %4627 = vmatpush2.msra.mxu0 0.0
  %4628 = vmatprep.subr.mxu0 0.0
  %4629 = vmatpush2.msra.mxu0 0.0
  %4630 = vmatprep.subr.mxu0 0.0
  %4631 = vmatpush2.msra.mxu0 0.0
  %4632 = vmatprep.subr.mxu0 0.0
  %4633 = vmatpush2.msra.mxu0 0.0
  %4634 = vmatprep.subr.mxu0 0.0
  %4635 = vmatpush2.msra.mxu0 0.0
  %4636 = vmatprep.subr.mxu0 0.0
  %4637 = vmatpush2.msra.mxu0 0.0
  %4638 = vmatprep.subr.mxu0 0.0
  %4639 = vmatpush2.msra.mxu0 0.0
  %4640 = vmatprep.mubr.f32.mxu0 0.0
  %4641 = vmatmul.mubr.f32.gmra.mxu0 %v4574
  %v4642 = vpop.f32.mrf.mxu0
  %v4643 = vadd.f32 0.0, %v4642
  %v4644 = vpop.f32.mrf.mxu0
  %4645 = vdwg.mxu0
  %v4646 = vlaneseq
  %v4647 = vshrl.u32 %v4646, 7
  %v4648 = vsub.s32 0, %v4647
  %v4649 = vrot.slane %v4168, %v4648
  %v4650 = vadd.f32 %v4649, %v4643
  %s4651 = scalar_lea.vmem %s2, 520
  %v4652 = vld [vmem:[%s4651] sm:$0xff]
  %v4653 = vld [vmem:[%s4651 + $0x8] sm:$0xff]
  %v4654 = vld [vmem:[%s4651 + $0x10] sm:$0xff]
  %v4655 = vld [vmem:[%s4651 + $0x18] sm:$0xff]
  %v4656 = vld [vmem:[%s4651 + $0x20] sm:$0x1]
  %s4657 = scalar_lea.vmem %s2, 680
  %v4658 = vld [vmem:[%s4657] sm:$0xff]
  %v4659 = vld [vmem:[%s4657 + $0x8] sm:$0xff]
  %v4660 = vld [vmem:[%s4657 + $0x10] sm:$0xff]
  %v4661 = vld [vmem:[%s4657 + $0x18] sm:$0xff]
  %v4662 = vld [vmem:[%s4657 + $0x20] sm:$0x1]
  %s4663 = scalar_lea.vmem %s2, 840
  %v4664 = vld [vmem:[%s4663] sm:$0xff]
  %v4665 = vld [vmem:[%s4663 + $0x8] sm:$0xff]
  %v4666 = vld [vmem:[%s4663 + $0x10] sm:$0xff]
  %v4667 = vld [vmem:[%s4663 + $0x18] sm:$0xff]
  %v4668 = vld [vmem:[%s4663 + $0x20] sm:$0x1]
  %v4669 = vlaneseq
  %v4670 = vshrl.u32 %v4669, 7
  %v4671 = vsub.s32 0, %v4670
  %v4672 = vrot.slane %v4656, %v4671
  %4673 = vmatprep.subr.mxu0 0.0
  %4674 = vmatpush1.msra.mxu0 0.0
  %4675 = vmatprep.subr.mxu0 0.0
  %4676 = vmatpush1.msra.mxu0 0.0
  %4677 = vmatprep.subr.mxu0 0.0
  %4678 = vmatpush1.msra.mxu0 0.0
  %4679 = vmatprep.subr.mxu0 0.0
  %4680 = vmatpush1.msra.mxu0 0.0
  %4681 = vmatprep.subr.mxu0 0.0
  %4682 = vmatpush1.msra.mxu0 0.0
  %4683 = vmatprep.subr.mxu0 0.0
  %4684 = vmatpush1.msra.mxu0 0.0
  %4685 = vmatprep.subr.mxu0 0.0
  %4686 = vmatpush1.msra.mxu0 0.0
  %4687 = vmatprep.subr.mxu0 0.0
  %4688 = vmatpush1.msra.mxu0 0.0
  %4689 = vmatprep.subr.mxu0 0.0
  %4690 = vmatpush1.msra.mxu0 0.0
  %4691 = vmatprep.subr.mxu0 0.0
  %4692 = vmatpush1.msra.mxu0 0.0
  %4693 = vmatprep.subr.mxu0 0.0
  %4694 = vmatpush1.msra.mxu0 0.0
  %4695 = vmatprep.subr.mxu0 0.0
  %4696 = vmatpush1.msra.mxu0 0.0
  %4697 = vmatprep.subr.mxu0 0.0
  %4698 = vmatpush1.msra.mxu0 %v4655
  %4699 = vmatprep.subr.mxu0 0.0
  %4700 = vmatpush1.msra.mxu0 %v4654
  %4701 = vmatprep.subr.mxu0 0.0
  %4702 = vmatpush1.msra.mxu0 %v4653
  %4703 = vmatprep.subr.mxu0 0.0
  %4704 = vmatpush1.msra.mxu0 %v4652
  %4705 = vmatprep.subr.mxu0 0.0
  %4706 = vmatpush2.msra.mxu0 0.0
  %4707 = vmatprep.subr.mxu0 0.0
  %4708 = vmatpush2.msra.mxu0 0.0
  %4709 = vmatprep.subr.mxu0 0.0
  %4710 = vmatpush2.msra.mxu0 0.0
  %4711 = vmatprep.subr.mxu0 0.0
  %4712 = vmatpush2.msra.mxu0 0.0
  %4713 = vmatprep.subr.mxu0 0.0
  %4714 = vmatpush2.msra.mxu0 0.0
  %4715 = vmatprep.subr.mxu0 0.0
  %4716 = vmatpush2.msra.mxu0 0.0
  %4717 = vmatprep.subr.mxu0 0.0
  %4718 = vmatpush2.msra.mxu0 0.0
  %4719 = vmatprep.subr.mxu0 0.0
  %4720 = vmatpush2.msra.mxu0 0.0
  %4721 = vmatprep.subr.mxu0 0.0
  %4722 = vmatpush2.msra.mxu0 0.0
  %4723 = vmatprep.subr.mxu0 0.0
  %4724 = vmatpush2.msra.mxu0 0.0
  %4725 = vmatprep.subr.mxu0 0.0
  %4726 = vmatpush2.msra.mxu0 0.0
  %4727 = vmatprep.subr.mxu0 0.0
  %4728 = vmatpush2.msra.mxu0 0.0
  %4729 = vmatprep.subr.mxu0 0.0
  %4730 = vmatpush2.msra.mxu0 0.0
  %4731 = vmatprep.subr.mxu0 0.0
  %4732 = vmatpush2.msra.mxu0 0.0
  %4733 = vmatprep.subr.mxu0 0.0
  %4734 = vmatpush2.msra.mxu0 0.0
  %4735 = vmatprep.subr.mxu0 0.0
  %4736 = vmatpush2.msra.mxu0 0.0
  %4737 = vmatprep.mubr.f32.mxu0 0.0
  %4738 = vmatmul.mubr.f32.gmra.mxu0 %v4192
  %v4739 = vpop.f32.mrf.mxu0
  %v4740 = vadd.f32 %v4672, %v4739
  %v4741 = vpop.f32.mrf.mxu0
  %4742 = vdwg.mxu0
  %v4743 = vlaneseq
  %v4744 = vshrl.u32 %v4743, 7
  %v4745 = vsub.s32 0, %v4744
  %v4746 = vrot.slane %v4662, %v4745
  %4747 = vmatprep.subr.mxu0 0.0
  %4748 = vmatpush1.msra.mxu0 0.0
  %4749 = vmatprep.subr.mxu0 0.0
  %4750 = vmatpush1.msra.mxu0 0.0
  %4751 = vmatprep.subr.mxu0 0.0
  %4752 = vmatpush1.msra.mxu0 0.0
  %4753 = vmatprep.subr.mxu0 0.0
  %4754 = vmatpush1.msra.mxu0 0.0
  %4755 = vmatprep.subr.mxu0 0.0
  %4756 = vmatpush1.msra.mxu0 0.0
  %4757 = vmatprep.subr.mxu0 0.0
  %4758 = vmatpush1.msra.mxu0 0.0
  %4759 = vmatprep.subr.mxu0 0.0
  %4760 = vmatpush1.msra.mxu0 0.0
  %4761 = vmatprep.subr.mxu0 0.0
  %4762 = vmatpush1.msra.mxu0 0.0
  %4763 = vmatprep.subr.mxu0 0.0
  %4764 = vmatpush1.msra.mxu0 0.0
  %4765 = vmatprep.subr.mxu0 0.0
  %4766 = vmatpush1.msra.mxu0 0.0
  %4767 = vmatprep.subr.mxu0 0.0
  %4768 = vmatpush1.msra.mxu0 0.0
  %4769 = vmatprep.subr.mxu0 0.0
  %4770 = vmatpush1.msra.mxu0 0.0
  %4771 = vmatprep.subr.mxu0 0.0
  %4772 = vmatpush1.msra.mxu0 %v4661
  %4773 = vmatprep.subr.mxu0 0.0
  %4774 = vmatpush1.msra.mxu0 %v4660
  %4775 = vmatprep.subr.mxu0 0.0
  %4776 = vmatpush1.msra.mxu0 %v4659
  %4777 = vmatprep.subr.mxu0 0.0
  %4778 = vmatpush1.msra.mxu0 %v4658
  %4779 = vmatprep.subr.mxu0 0.0
  %4780 = vmatpush2.msra.mxu0 0.0
  %4781 = vmatprep.subr.mxu0 0.0
  %4782 = vmatpush2.msra.mxu0 0.0
  %4783 = vmatprep.subr.mxu0 0.0
  %4784 = vmatpush2.msra.mxu0 0.0
  %4785 = vmatprep.subr.mxu0 0.0
  %4786 = vmatpush2.msra.mxu0 0.0
  %4787 = vmatprep.subr.mxu0 0.0
  %4788 = vmatpush2.msra.mxu0 0.0
  %4789 = vmatprep.subr.mxu0 0.0
  %4790 = vmatpush2.msra.mxu0 0.0
  %4791 = vmatprep.subr.mxu0 0.0
  %4792 = vmatpush2.msra.mxu0 0.0
  %4793 = vmatprep.subr.mxu0 0.0
  %4794 = vmatpush2.msra.mxu0 0.0
  %4795 = vmatprep.subr.mxu0 0.0
  %4796 = vmatpush2.msra.mxu0 0.0
  %4797 = vmatprep.subr.mxu0 0.0
  %4798 = vmatpush2.msra.mxu0 0.0
  %4799 = vmatprep.subr.mxu0 0.0
  %4800 = vmatpush2.msra.mxu0 0.0
  %4801 = vmatprep.subr.mxu0 0.0
  %4802 = vmatpush2.msra.mxu0 0.0
  %4803 = vmatprep.subr.mxu0 0.0
  %4804 = vmatpush2.msra.mxu0 0.0
  %4805 = vmatprep.subr.mxu0 0.0
  %4806 = vmatpush2.msra.mxu0 0.0
  %4807 = vmatprep.subr.mxu0 0.0
  %4808 = vmatpush2.msra.mxu0 0.0
  %4809 = vmatprep.subr.mxu0 0.0
  %4810 = vmatpush2.msra.mxu0 0.0
  %4811 = vmatprep.mubr.f32.mxu0 0.0
  %4812 = vmatmul.mubr.f32.gmra.mxu0 %v4192
  %v4813 = vpop.f32.mrf.mxu0
  %v4814 = vadd.f32 %v4746, %v4813
  %v4815 = vpop.f32.mrf.mxu0
  %4816 = vdwg.mxu0
  %v4817 = vlaneseq
  %v4818 = vshrl.u32 %v4817, 7
  %v4819 = vsub.s32 0, %v4818
  %v4820 = vrot.slane %v4668, %v4819
  %4821 = vmatprep.subr.mxu0 0.0
  %4822 = vmatpush1.msra.mxu0 0.0
  %4823 = vmatprep.subr.mxu0 0.0
  %4824 = vmatpush1.msra.mxu0 0.0
  %4825 = vmatprep.subr.mxu0 0.0
  %4826 = vmatpush1.msra.mxu0 0.0
  %4827 = vmatprep.subr.mxu0 0.0
  %4828 = vmatpush1.msra.mxu0 0.0
  %4829 = vmatprep.subr.mxu0 0.0
  %4830 = vmatpush1.msra.mxu0 0.0
  %4831 = vmatprep.subr.mxu0 0.0
  %4832 = vmatpush1.msra.mxu0 0.0
  %4833 = vmatprep.subr.mxu0 0.0
  %4834 = vmatpush1.msra.mxu0 0.0
  %4835 = vmatprep.subr.mxu0 0.0
  %4836 = vmatpush1.msra.mxu0 0.0
  %4837 = vmatprep.subr.mxu0 0.0
  %4838 = vmatpush1.msra.mxu0 0.0
  %4839 = vmatprep.subr.mxu0 0.0
  %4840 = vmatpush1.msra.mxu0 0.0
  %4841 = vmatprep.subr.mxu0 0.0
  %4842 = vmatpush1.msra.mxu0 0.0
  %4843 = vmatprep.subr.mxu0 0.0
  %4844 = vmatpush1.msra.mxu0 0.0
  %4845 = vmatprep.subr.mxu0 0.0
  %4846 = vmatpush1.msra.mxu0 %v4667
  %4847 = vmatprep.subr.mxu0 0.0
  %4848 = vmatpush1.msra.mxu0 %v4666
  %4849 = vmatprep.subr.mxu0 0.0
  %4850 = vmatpush1.msra.mxu0 %v4665
  %4851 = vmatprep.subr.mxu0 0.0
  %4852 = vmatpush1.msra.mxu0 %v4664
  %4853 = vmatprep.subr.mxu0 0.0
  %4854 = vmatpush2.msra.mxu0 0.0
  %4855 = vmatprep.subr.mxu0 0.0
  %4856 = vmatpush2.msra.mxu0 0.0
  %4857 = vmatprep.subr.mxu0 0.0
  %4858 = vmatpush2.msra.mxu0 0.0
  %4859 = vmatprep.subr.mxu0 0.0
  %4860 = vmatpush2.msra.mxu0 0.0
  %4861 = vmatprep.subr.mxu0 0.0
  %4862 = vmatpush2.msra.mxu0 0.0
  %4863 = vmatprep.subr.mxu0 0.0
  %4864 = vmatpush2.msra.mxu0 0.0
  %4865 = vmatprep.subr.mxu0 0.0
  %4866 = vmatpush2.msra.mxu0 0.0
  %4867 = vmatprep.subr.mxu0 0.0
  %4868 = vmatpush2.msra.mxu0 0.0
  %4869 = vmatprep.subr.mxu0 0.0
  %4870 = vmatpush2.msra.mxu0 0.0
  %4871 = vmatprep.subr.mxu0 0.0
  %4872 = vmatpush2.msra.mxu0 0.0
  %4873 = vmatprep.subr.mxu0 0.0
  %4874 = vmatpush2.msra.mxu0 0.0
  %4875 = vmatprep.subr.mxu0 0.0
  %4876 = vmatpush2.msra.mxu0 0.0
  %4877 = vmatprep.subr.mxu0 0.0
  %4878 = vmatpush2.msra.mxu0 0.0
  %4879 = vmatprep.subr.mxu0 0.0
  %4880 = vmatpush2.msra.mxu0 0.0
  %4881 = vmatprep.subr.mxu0 0.0
  %4882 = vmatpush2.msra.mxu0 0.0
  %4883 = vmatprep.subr.mxu0 0.0
  %4884 = vmatpush2.msra.mxu0 0.0
  %4885 = vmatprep.mubr.f32.mxu0 0.0
  %4886 = vmatmul.mubr.f32.gmra.mxu0 %v4192
  %v4887 = vpop.f32.mrf.mxu0
  %v4888 = vadd.f32 %v4820, %v4887
  %v4889 = vpop.f32.mrf.mxu0
  %4890 = vdwg.mxu0
  %v4892 = vsel %vm317, %v4740, 0
  %v4895 = vsel %vm317, %v4814, 0
  %4897 = vmatprep.subr.mxu0 0.0
  %4898 = vmatpush1.xpose.msra.mxu0 0.0
  %4899 = vmatprep.subr.mxu0 0.0
  %4900 = vmatpush1.xpose.msra.mxu0 0.0
  %4901 = vmatprep.subr.mxu0 0.0
  %4902 = vmatpush1.xpose.msra.mxu0 0.0
  %4903 = vmatprep.subr.mxu0 0.0
  %4904 = vmatpush1.xpose.msra.mxu0 0.0
  %4905 = vmatprep.subr.mxu0 0.0
  %4906 = vmatpush1.xpose.msra.mxu0 0.0
  %4907 = vmatprep.subr.mxu0 0.0
  %4908 = vmatpush1.xpose.msra.mxu0 0.0
  %4909 = vmatprep.subr.mxu0 0.0
  %4910 = vmatpush1.xpose.msra.mxu0 0.0
  %4911 = vmatprep.subr.mxu0 0.0
  %4912 = vmatpush1.xpose.msra.mxu0 0.0
  %4913 = vmatprep.subr.mxu0 0.0
  %4914 = vmatpush1.xpose.msra.mxu0 0.0
  %4915 = vmatprep.subr.mxu0 0.0
  %4916 = vmatpush1.xpose.msra.mxu0 0.0
  %4917 = vmatprep.subr.mxu0 0.0
  %4918 = vmatpush1.xpose.msra.mxu0 0.0
  %4919 = vmatprep.subr.mxu0 0.0
  %4920 = vmatpush1.xpose.msra.mxu0 0.0
  %4921 = vmatprep.subr.mxu0 0.0
  %4922 = vmatpush1.xpose.msra.mxu0 0.0
  %4923 = vmatprep.subr.mxu0 0.0
  %4924 = vmatpush1.xpose.msra.mxu0 0.0
  %4925 = vmatprep.subr.mxu0 0.0
  %4926 = vmatpush1.xpose.msra.mxu0 0.0
  %4927 = vmatprep.subr.mxu0 0.0
  %4928 = vmatpush1.xpose.msra.mxu0 %v4895
  %4929 = vmatprep.subr.mxu0 0.0
  %4930 = vmatpush2.xpose.msra.mxu0 0.0
  %4931 = vmatprep.subr.mxu0 0.0
  %4932 = vmatpush2.xpose.msra.mxu0 0.0
  %4933 = vmatprep.subr.mxu0 0.0
  %4934 = vmatpush2.xpose.msra.mxu0 0.0
  %4935 = vmatprep.subr.mxu0 0.0
  %4936 = vmatpush2.xpose.msra.mxu0 0.0
  %4937 = vmatprep.subr.mxu0 0.0
  %4938 = vmatpush2.xpose.msra.mxu0 0.0
  %4939 = vmatprep.subr.mxu0 0.0
  %4940 = vmatpush2.xpose.msra.mxu0 0.0
  %4941 = vmatprep.subr.mxu0 0.0
  %4942 = vmatpush2.xpose.msra.mxu0 0.0
  %4943 = vmatprep.subr.mxu0 0.0
  %4944 = vmatpush2.xpose.msra.mxu0 0.0
  %4945 = vmatprep.subr.mxu0 0.0
  %4946 = vmatpush2.xpose.msra.mxu0 0.0
  %4947 = vmatprep.subr.mxu0 0.0
  %4948 = vmatpush2.xpose.msra.mxu0 0.0
  %4949 = vmatprep.subr.mxu0 0.0
  %4950 = vmatpush2.xpose.msra.mxu0 0.0
  %4951 = vmatprep.subr.mxu0 0.0
  %4952 = vmatpush2.xpose.msra.mxu0 0.0
  %4953 = vmatprep.subr.mxu0 0.0
  %4954 = vmatpush2.xpose.msra.mxu0 0.0
  %4955 = vmatprep.subr.mxu0 0.0
  %4956 = vmatpush2.xpose.msra.mxu0 0.0
  %4957 = vmatprep.subr.mxu0 0.0
  %4958 = vmatpush2.xpose.msra.mxu0 0.0
  %4959 = vmatprep.subr.mxu0 0.0
  %4960 = vmatpush2.xpose.msra.mxu0 0.0
  %4961 = vmatprep.mubr.f32.mxu0 0.0
  %4962 = vmatmul.mubr.f32.gmra.mxu0 %v4892
  %v4963 = vpop.f32.mrf.mxu0
  %v4964 = vadd.f32 %v316, %v4963
  %v4965 = vpop.f32.mrf.mxu0
  %4966 = vdwg.mxu0
  %v4967 = vsel %vm317, %v4964, -inf
  %4968 = vmax.xlane.f32.xlu0 %v4967
  %v4969 = vpop.xlane.xlu0 %4968
  %v4970 = vsub.f32 %v4964, %v4969
  %v4971 = vmul.f32 %v4970, 1.442695
  %v4972 = vpow.pop %v4971
  %v4973 = vsel %vm317, %v4972, 0.0
  %4974 = vadd.xlane.f32.xlu0 %v4973
  %v4975 = vpop.xlane.xlu0 %4974
  %v4976 = vrcp.pop %v4975
  %v4977 = vmul.f32 %v4972, %v4976
  %v4979 = vsel %vm317, %v4977, 0
  %4981 = vmatprep.subr.mxu0 0.0
  %4982 = vmatpush1.msra.mxu0 0.0
  %4983 = vmatprep.subr.mxu0 0.0
  %4984 = vmatpush1.msra.mxu0 0.0
  %4985 = vmatprep.subr.mxu0 0.0
  %4986 = vmatpush1.msra.mxu0 0.0
  %4987 = vmatprep.subr.mxu0 0.0
  %4988 = vmatpush1.msra.mxu0 0.0
  %4989 = vmatprep.subr.mxu0 0.0
  %4990 = vmatpush1.msra.mxu0 0.0
  %4991 = vmatprep.subr.mxu0 0.0
  %4992 = vmatpush1.msra.mxu0 0.0
  %4993 = vmatprep.subr.mxu0 0.0
  %4994 = vmatpush1.msra.mxu0 0.0
  %4995 = vmatprep.subr.mxu0 0.0
  %4996 = vmatpush1.msra.mxu0 0.0
  %4997 = vmatprep.subr.mxu0 0.0
  %4998 = vmatpush1.msra.mxu0 0.0
  %4999 = vmatprep.subr.mxu0 0.0
  %5000 = vmatpush1.msra.mxu0 0.0
  %5001 = vmatprep.subr.mxu0 0.0
  %5002 = vmatpush1.msra.mxu0 0.0
  %5003 = vmatprep.subr.mxu0 0.0
  %5004 = vmatpush1.msra.mxu0 0.0
  %5005 = vmatprep.subr.mxu0 0.0
  %5006 = vmatpush1.msra.mxu0 0.0
  %5007 = vmatprep.subr.mxu0 0.0
  %5008 = vmatpush1.msra.mxu0 0.0
  %5009 = vmatprep.subr.mxu0 0.0
  %5010 = vmatpush1.msra.mxu0 0.0
  %5011 = vmatprep.subr.mxu0 0.0
  %5012 = vmatpush1.msra.mxu0 %v4888
  %5013 = vmatprep.subr.mxu0 0.0
  %5014 = vmatpush2.msra.mxu0 0.0
  %5015 = vmatprep.subr.mxu0 0.0
  %5016 = vmatpush2.msra.mxu0 0.0
  %5017 = vmatprep.subr.mxu0 0.0
  %5018 = vmatpush2.msra.mxu0 0.0
  %5019 = vmatprep.subr.mxu0 0.0
  %5020 = vmatpush2.msra.mxu0 0.0
  %5021 = vmatprep.subr.mxu0 0.0
  %5022 = vmatpush2.msra.mxu0 0.0
  %5023 = vmatprep.subr.mxu0 0.0
  %5024 = vmatpush2.msra.mxu0 0.0
  %5025 = vmatprep.subr.mxu0 0.0
  %5026 = vmatpush2.msra.mxu0 0.0
  %5027 = vmatprep.subr.mxu0 0.0
  %5028 = vmatpush2.msra.mxu0 0.0
  %5029 = vmatprep.subr.mxu0 0.0
  %5030 = vmatpush2.msra.mxu0 0.0
  %5031 = vmatprep.subr.mxu0 0.0
  %5032 = vmatpush2.msra.mxu0 0.0
  %5033 = vmatprep.subr.mxu0 0.0
  %5034 = vmatpush2.msra.mxu0 0.0
  %5035 = vmatprep.subr.mxu0 0.0
  %5036 = vmatpush2.msra.mxu0 0.0
  %5037 = vmatprep.subr.mxu0 0.0
  %5038 = vmatpush2.msra.mxu0 0.0
  %5039 = vmatprep.subr.mxu0 0.0
  %5040 = vmatpush2.msra.mxu0 0.0
  %5041 = vmatprep.subr.mxu0 0.0
  %5042 = vmatpush2.msra.mxu0 0.0
  %5043 = vmatprep.subr.mxu0 0.0
  %5044 = vmatpush2.msra.mxu0 0.0
  %5045 = vmatprep.mubr.f32.mxu0 0.0
  %5046 = vmatmul.mubr.f32.gmra.mxu0 %v4979
  %v5047 = vpop.f32.mrf.mxu0
  %v5048 = vadd.f32 0.0, %v5047
  %v5049 = vpop.f32.mrf.mxu0
  %5050 = vdwg.mxu0
  %v5051 = vld [vmem:[%s3 + $0x68] sm:$0xff]
  %v5053 = vsel %vm317, %v5048, 0
  %5055 = vmatprep.subr.mxu0 0.0
  %5056 = vmatpush1.msra.mxu0 0.0
  %5057 = vmatprep.subr.mxu0 0.0
  %5058 = vmatpush1.msra.mxu0 0.0
  %5059 = vmatprep.subr.mxu0 0.0
  %5060 = vmatpush1.msra.mxu0 0.0
  %5061 = vmatprep.subr.mxu0 0.0
  %5062 = vmatpush1.msra.mxu0 0.0
  %5063 = vmatprep.subr.mxu0 0.0
  %5064 = vmatpush1.msra.mxu0 0.0
  %5065 = vmatprep.subr.mxu0 0.0
  %5066 = vmatpush1.msra.mxu0 0.0
  %5067 = vmatprep.subr.mxu0 0.0
  %5068 = vmatpush1.msra.mxu0 0.0
  %5069 = vmatprep.subr.mxu0 0.0
  %5070 = vmatpush1.msra.mxu0 0.0
  %5071 = vmatprep.subr.mxu0 0.0
  %5072 = vmatpush1.msra.mxu0 0.0
  %5073 = vmatprep.subr.mxu0 0.0
  %5074 = vmatpush1.msra.mxu0 0.0
  %5075 = vmatprep.subr.mxu0 0.0
  %5076 = vmatpush1.msra.mxu0 0.0
  %5077 = vmatprep.subr.mxu0 0.0
  %5078 = vmatpush1.msra.mxu0 0.0
  %5079 = vmatprep.subr.mxu0 0.0
  %5080 = vmatpush1.msra.mxu0 0.0
  %5081 = vmatprep.subr.mxu0 0.0
  %5082 = vmatpush1.msra.mxu0 0.0
  %5083 = vmatprep.subr.mxu0 0.0
  %5084 = vmatpush1.msra.mxu0 0.0
  %5085 = vmatprep.subr.mxu0 0.0
  %5086 = vmatpush1.msra.mxu0 %v5051
  %5087 = vmatprep.subr.mxu0 0.0
  %5088 = vmatpush2.msra.mxu0 0.0
  %5089 = vmatprep.subr.mxu0 0.0
  %5090 = vmatpush2.msra.mxu0 0.0
  %5091 = vmatprep.subr.mxu0 0.0
  %5092 = vmatpush2.msra.mxu0 0.0
  %5093 = vmatprep.subr.mxu0 0.0
  %5094 = vmatpush2.msra.mxu0 0.0
  %5095 = vmatprep.subr.mxu0 0.0
  %5096 = vmatpush2.msra.mxu0 0.0
  %5097 = vmatprep.subr.mxu0 0.0
  %5098 = vmatpush2.msra.mxu0 0.0
  %5099 = vmatprep.subr.mxu0 0.0
  %5100 = vmatpush2.msra.mxu0 0.0
  %5101 = vmatprep.subr.mxu0 0.0
  %5102 = vmatpush2.msra.mxu0 0.0
  %5103 = vmatprep.subr.mxu0 0.0
  %5104 = vmatpush2.msra.mxu0 0.0
  %5105 = vmatprep.subr.mxu0 0.0
  %5106 = vmatpush2.msra.mxu0 0.0
  %5107 = vmatprep.subr.mxu0 0.0
  %5108 = vmatpush2.msra.mxu0 0.0
  %5109 = vmatprep.subr.mxu0 0.0
  %5110 = vmatpush2.msra.mxu0 0.0
  %5111 = vmatprep.subr.mxu0 0.0
  %5112 = vmatpush2.msra.mxu0 0.0
  %5113 = vmatprep.subr.mxu0 0.0
  %5114 = vmatpush2.msra.mxu0 0.0
  %5115 = vmatprep.subr.mxu0 0.0
  %5116 = vmatpush2.msra.mxu0 0.0
  %5117 = vmatprep.subr.mxu0 0.0
  %5118 = vmatpush2.msra.mxu0 0.0
  %5119 = vmatprep.mubr.f32.mxu0 0.0
  %5120 = vmatmul.mubr.f32.gmra.mxu0 %v5053
  %v5121 = vpop.f32.mrf.mxu0
  %v5122 = vadd.f32 0.0, %v5121
  %v5123 = vpop.f32.mrf.mxu0
  %5124 = vdwg.mxu0
  %v5125 = vadd.f32 %v4650, %v5122
  %s5126 = scalar_lea.vmem %s2, 560
  %v5127 = vld [vmem:[%s5126] sm:$0xff]
  %v5128 = vld [vmem:[%s5126 + $0x8] sm:$0xff]
  %v5129 = vld [vmem:[%s5126 + $0x10] sm:$0xff]
  %v5130 = vld [vmem:[%s5126 + $0x18] sm:$0xff]
  %v5131 = vld [vmem:[%s5126 + $0x20] sm:$0x1]
  %s5132 = scalar_lea.vmem %s2, 720
  %v5133 = vld [vmem:[%s5132] sm:$0xff]
  %v5134 = vld [vmem:[%s5132 + $0x8] sm:$0xff]
  %v5135 = vld [vmem:[%s5132 + $0x10] sm:$0xff]
  %v5136 = vld [vmem:[%s5132 + $0x18] sm:$0xff]
  %v5137 = vld [vmem:[%s5132 + $0x20] sm:$0x1]
  %s5138 = scalar_lea.vmem %s2, 880
  %v5139 = vld [vmem:[%s5138] sm:$0xff]
  %v5140 = vld [vmem:[%s5138 + $0x8] sm:$0xff]
  %v5141 = vld [vmem:[%s5138 + $0x10] sm:$0xff]
  %v5142 = vld [vmem:[%s5138 + $0x18] sm:$0xff]
  %v5143 = vld [vmem:[%s5138 + $0x20] sm:$0x1]
  %v5144 = vlaneseq
  %v5145 = vshrl.u32 %v5144, 7
  %v5146 = vsub.s32 0, %v5145
  %v5147 = vrot.slane %v5131, %v5146
  %5148 = vmatprep.subr.mxu0 0.0
  %5149 = vmatpush1.msra.mxu0 0.0
  %5150 = vmatprep.subr.mxu0 0.0
  %5151 = vmatpush1.msra.mxu0 0.0
  %5152 = vmatprep.subr.mxu0 0.0
  %5153 = vmatpush1.msra.mxu0 0.0
  %5154 = vmatprep.subr.mxu0 0.0
  %5155 = vmatpush1.msra.mxu0 0.0
  %5156 = vmatprep.subr.mxu0 0.0
  %5157 = vmatpush1.msra.mxu0 0.0
  %5158 = vmatprep.subr.mxu0 0.0
  %5159 = vmatpush1.msra.mxu0 0.0
  %5160 = vmatprep.subr.mxu0 0.0
  %5161 = vmatpush1.msra.mxu0 0.0
  %5162 = vmatprep.subr.mxu0 0.0
  %5163 = vmatpush1.msra.mxu0 0.0
  %5164 = vmatprep.subr.mxu0 0.0
  %5165 = vmatpush1.msra.mxu0 0.0
  %5166 = vmatprep.subr.mxu0 0.0
  %5167 = vmatpush1.msra.mxu0 0.0
  %5168 = vmatprep.subr.mxu0 0.0
  %5169 = vmatpush1.msra.mxu0 0.0
  %5170 = vmatprep.subr.mxu0 0.0
  %5171 = vmatpush1.msra.mxu0 0.0
  %5172 = vmatprep.subr.mxu0 0.0
  %5173 = vmatpush1.msra.mxu0 %v5130
  %5174 = vmatprep.subr.mxu0 0.0
  %5175 = vmatpush1.msra.mxu0 %v5129
  %5176 = vmatprep.subr.mxu0 0.0
  %5177 = vmatpush1.msra.mxu0 %v5128
  %5178 = vmatprep.subr.mxu0 0.0
  %5179 = vmatpush1.msra.mxu0 %v5127
  %5180 = vmatprep.subr.mxu0 0.0
  %5181 = vmatpush2.msra.mxu0 0.0
  %5182 = vmatprep.subr.mxu0 0.0
  %5183 = vmatpush2.msra.mxu0 0.0
  %5184 = vmatprep.subr.mxu0 0.0
  %5185 = vmatpush2.msra.mxu0 0.0
  %5186 = vmatprep.subr.mxu0 0.0
  %5187 = vmatpush2.msra.mxu0 0.0
  %5188 = vmatprep.subr.mxu0 0.0
  %5189 = vmatpush2.msra.mxu0 0.0
  %5190 = vmatprep.subr.mxu0 0.0
  %5191 = vmatpush2.msra.mxu0 0.0
  %5192 = vmatprep.subr.mxu0 0.0
  %5193 = vmatpush2.msra.mxu0 0.0
  %5194 = vmatprep.subr.mxu0 0.0
  %5195 = vmatpush2.msra.mxu0 0.0
  %5196 = vmatprep.subr.mxu0 0.0
  %5197 = vmatpush2.msra.mxu0 0.0
  %5198 = vmatprep.subr.mxu0 0.0
  %5199 = vmatpush2.msra.mxu0 0.0
  %5200 = vmatprep.subr.mxu0 0.0
  %5201 = vmatpush2.msra.mxu0 0.0
  %5202 = vmatprep.subr.mxu0 0.0
  %5203 = vmatpush2.msra.mxu0 0.0
  %5204 = vmatprep.subr.mxu0 0.0
  %5205 = vmatpush2.msra.mxu0 0.0
  %5206 = vmatprep.subr.mxu0 0.0
  %5207 = vmatpush2.msra.mxu0 0.0
  %5208 = vmatprep.subr.mxu0 0.0
  %5209 = vmatpush2.msra.mxu0 0.0
  %5210 = vmatprep.subr.mxu0 0.0
  %5211 = vmatpush2.msra.mxu0 0.0
  %5212 = vmatprep.mubr.f32.mxu0 0.0
  %5213 = vmatmul.mubr.f32.gmra.mxu0 %v4192
  %v5214 = vpop.f32.mrf.mxu0
  %v5215 = vadd.f32 %v5147, %v5214
  %v5216 = vpop.f32.mrf.mxu0
  %5217 = vdwg.mxu0
  %v5218 = vlaneseq
  %v5219 = vshrl.u32 %v5218, 7
  %v5220 = vsub.s32 0, %v5219
  %v5221 = vrot.slane %v5137, %v5220
  %5222 = vmatprep.subr.mxu0 0.0
  %5223 = vmatpush1.msra.mxu0 0.0
  %5224 = vmatprep.subr.mxu0 0.0
  %5225 = vmatpush1.msra.mxu0 0.0
  %5226 = vmatprep.subr.mxu0 0.0
  %5227 = vmatpush1.msra.mxu0 0.0
  %5228 = vmatprep.subr.mxu0 0.0
  %5229 = vmatpush1.msra.mxu0 0.0
  %5230 = vmatprep.subr.mxu0 0.0
  %5231 = vmatpush1.msra.mxu0 0.0
  %5232 = vmatprep.subr.mxu0 0.0
  %5233 = vmatpush1.msra.mxu0 0.0
  %5234 = vmatprep.subr.mxu0 0.0
  %5235 = vmatpush1.msra.mxu0 0.0
  %5236 = vmatprep.subr.mxu0 0.0
  %5237 = vmatpush1.msra.mxu0 0.0
  %5238 = vmatprep.subr.mxu0 0.0
  %5239 = vmatpush1.msra.mxu0 0.0
  %5240 = vmatprep.subr.mxu0 0.0
  %5241 = vmatpush1.msra.mxu0 0.0
  %5242 = vmatprep.subr.mxu0 0.0
  %5243 = vmatpush1.msra.mxu0 0.0
  %5244 = vmatprep.subr.mxu0 0.0
  %5245 = vmatpush1.msra.mxu0 0.0
  %5246 = vmatprep.subr.mxu0 0.0
  %5247 = vmatpush1.msra.mxu0 %v5136
  %5248 = vmatprep.subr.mxu0 0.0
  %5249 = vmatpush1.msra.mxu0 %v5135
  %5250 = vmatprep.subr.mxu0 0.0
  %5251 = vmatpush1.msra.mxu0 %v5134
  %5252 = vmatprep.subr.mxu0 0.0
  %5253 = vmatpush1.msra.mxu0 %v5133
  %5254 = vmatprep.subr.mxu0 0.0
  %5255 = vmatpush2.msra.mxu0 0.0
  %5256 = vmatprep.subr.mxu0 0.0
  %5257 = vmatpush2.msra.mxu0 0.0
  %5258 = vmatprep.subr.mxu0 0.0
  %5259 = vmatpush2.msra.mxu0 0.0
  %5260 = vmatprep.subr.mxu0 0.0
  %5261 = vmatpush2.msra.mxu0 0.0
  %5262 = vmatprep.subr.mxu0 0.0
  %5263 = vmatpush2.msra.mxu0 0.0
  %5264 = vmatprep.subr.mxu0 0.0
  %5265 = vmatpush2.msra.mxu0 0.0
  %5266 = vmatprep.subr.mxu0 0.0
  %5267 = vmatpush2.msra.mxu0 0.0
  %5268 = vmatprep.subr.mxu0 0.0
  %5269 = vmatpush2.msra.mxu0 0.0
  %5270 = vmatprep.subr.mxu0 0.0
  %5271 = vmatpush2.msra.mxu0 0.0
  %5272 = vmatprep.subr.mxu0 0.0
  %5273 = vmatpush2.msra.mxu0 0.0
  %5274 = vmatprep.subr.mxu0 0.0
  %5275 = vmatpush2.msra.mxu0 0.0
  %5276 = vmatprep.subr.mxu0 0.0
  %5277 = vmatpush2.msra.mxu0 0.0
  %5278 = vmatprep.subr.mxu0 0.0
  %5279 = vmatpush2.msra.mxu0 0.0
  %5280 = vmatprep.subr.mxu0 0.0
  %5281 = vmatpush2.msra.mxu0 0.0
  %5282 = vmatprep.subr.mxu0 0.0
  %5283 = vmatpush2.msra.mxu0 0.0
  %5284 = vmatprep.subr.mxu0 0.0
  %5285 = vmatpush2.msra.mxu0 0.0
  %5286 = vmatprep.mubr.f32.mxu0 0.0
  %5287 = vmatmul.mubr.f32.gmra.mxu0 %v4192
  %v5288 = vpop.f32.mrf.mxu0
  %v5289 = vadd.f32 %v5221, %v5288
  %v5290 = vpop.f32.mrf.mxu0
  %5291 = vdwg.mxu0
  %v5292 = vlaneseq
  %v5293 = vshrl.u32 %v5292, 7
  %v5294 = vsub.s32 0, %v5293
  %v5295 = vrot.slane %v5143, %v5294
  %5296 = vmatprep.subr.mxu0 0.0
  %5297 = vmatpush1.msra.mxu0 0.0
  %5298 = vmatprep.subr.mxu0 0.0
  %5299 = vmatpush1.msra.mxu0 0.0
  %5300 = vmatprep.subr.mxu0 0.0
  %5301 = vmatpush1.msra.mxu0 0.0
  %5302 = vmatprep.subr.mxu0 0.0
  %5303 = vmatpush1.msra.mxu0 0.0
  %5304 = vmatprep.subr.mxu0 0.0
  %5305 = vmatpush1.msra.mxu0 0.0
  %5306 = vmatprep.subr.mxu0 0.0
  %5307 = vmatpush1.msra.mxu0 0.0
  %5308 = vmatprep.subr.mxu0 0.0
  %5309 = vmatpush1.msra.mxu0 0.0
  %5310 = vmatprep.subr.mxu0 0.0
  %5311 = vmatpush1.msra.mxu0 0.0
  %5312 = vmatprep.subr.mxu0 0.0
  %5313 = vmatpush1.msra.mxu0 0.0
  %5314 = vmatprep.subr.mxu0 0.0
  %5315 = vmatpush1.msra.mxu0 0.0
  %5316 = vmatprep.subr.mxu0 0.0
  %5317 = vmatpush1.msra.mxu0 0.0
  %5318 = vmatprep.subr.mxu0 0.0
  %5319 = vmatpush1.msra.mxu0 0.0
  %5320 = vmatprep.subr.mxu0 0.0
  %5321 = vmatpush1.msra.mxu0 %v5142
  %5322 = vmatprep.subr.mxu0 0.0
  %5323 = vmatpush1.msra.mxu0 %v5141
  %5324 = vmatprep.subr.mxu0 0.0
  %5325 = vmatpush1.msra.mxu0 %v5140
  %5326 = vmatprep.subr.mxu0 0.0
  %5327 = vmatpush1.msra.mxu0 %v5139
  %5328 = vmatprep.subr.mxu0 0.0
  %5329 = vmatpush2.msra.mxu0 0.0
  %5330 = vmatprep.subr.mxu0 0.0
  %5331 = vmatpush2.msra.mxu0 0.0
  %5332 = vmatprep.subr.mxu0 0.0
  %5333 = vmatpush2.msra.mxu0 0.0
  %5334 = vmatprep.subr.mxu0 0.0
  %5335 = vmatpush2.msra.mxu0 0.0
  %5336 = vmatprep.subr.mxu0 0.0
  %5337 = vmatpush2.msra.mxu0 0.0
  %5338 = vmatprep.subr.mxu0 0.0
  %5339 = vmatpush2.msra.mxu0 0.0
  %5340 = vmatprep.subr.mxu0 0.0
  %5341 = vmatpush2.msra.mxu0 0.0
  %5342 = vmatprep.subr.mxu0 0.0
  %5343 = vmatpush2.msra.mxu0 0.0
  %5344 = vmatprep.subr.mxu0 0.0
  %5345 = vmatpush2.msra.mxu0 0.0
  %5346 = vmatprep.subr.mxu0 0.0
  %5347 = vmatpush2.msra.mxu0 0.0
  %5348 = vmatprep.subr.mxu0 0.0
  %5349 = vmatpush2.msra.mxu0 0.0
  %5350 = vmatprep.subr.mxu0 0.0
  %5351 = vmatpush2.msra.mxu0 0.0
  %5352 = vmatprep.subr.mxu0 0.0
  %5353 = vmatpush2.msra.mxu0 0.0
  %5354 = vmatprep.subr.mxu0 0.0
  %5355 = vmatpush2.msra.mxu0 0.0
  %5356 = vmatprep.subr.mxu0 0.0
  %5357 = vmatpush2.msra.mxu0 0.0
  %5358 = vmatprep.subr.mxu0 0.0
  %5359 = vmatpush2.msra.mxu0 0.0
  %5360 = vmatprep.mubr.f32.mxu0 0.0
  %5361 = vmatmul.mubr.f32.gmra.mxu0 %v4192
  %v5362 = vpop.f32.mrf.mxu0
  %v5363 = vadd.f32 %v5295, %v5362
  %v5364 = vpop.f32.mrf.mxu0
  %5365 = vdwg.mxu0
  %v5367 = vsel %vm317, %v5215, 0
  %v5370 = vsel %vm317, %v5289, 0
  %5372 = vmatprep.subr.mxu0 0.0
  %5373 = vmatpush1.xpose.msra.mxu0 0.0
  %5374 = vmatprep.subr.mxu0 0.0
  %5375 = vmatpush1.xpose.msra.mxu0 0.0
  %5376 = vmatprep.subr.mxu0 0.0
  %5377 = vmatpush1.xpose.msra.mxu0 0.0
  %5378 = vmatprep.subr.mxu0 0.0
  %5379 = vmatpush1.xpose.msra.mxu0 0.0
  %5380 = vmatprep.subr.mxu0 0.0
  %5381 = vmatpush1.xpose.msra.mxu0 0.0
  %5382 = vmatprep.subr.mxu0 0.0
  %5383 = vmatpush1.xpose.msra.mxu0 0.0
  %5384 = vmatprep.subr.mxu0 0.0
  %5385 = vmatpush1.xpose.msra.mxu0 0.0
  %5386 = vmatprep.subr.mxu0 0.0
  %5387 = vmatpush1.xpose.msra.mxu0 0.0
  %5388 = vmatprep.subr.mxu0 0.0
  %5389 = vmatpush1.xpose.msra.mxu0 0.0
  %5390 = vmatprep.subr.mxu0 0.0
  %5391 = vmatpush1.xpose.msra.mxu0 0.0
  %5392 = vmatprep.subr.mxu0 0.0
  %5393 = vmatpush1.xpose.msra.mxu0 0.0
  %5394 = vmatprep.subr.mxu0 0.0
  %5395 = vmatpush1.xpose.msra.mxu0 0.0
  %5396 = vmatprep.subr.mxu0 0.0
  %5397 = vmatpush1.xpose.msra.mxu0 0.0
  %5398 = vmatprep.subr.mxu0 0.0
  %5399 = vmatpush1.xpose.msra.mxu0 0.0
  %5400 = vmatprep.subr.mxu0 0.0
  %5401 = vmatpush1.xpose.msra.mxu0 0.0
  %5402 = vmatprep.subr.mxu0 0.0
  %5403 = vmatpush1.xpose.msra.mxu0 %v5370
  %5404 = vmatprep.subr.mxu0 0.0
  %5405 = vmatpush2.xpose.msra.mxu0 0.0
  %5406 = vmatprep.subr.mxu0 0.0
  %5407 = vmatpush2.xpose.msra.mxu0 0.0
  %5408 = vmatprep.subr.mxu0 0.0
  %5409 = vmatpush2.xpose.msra.mxu0 0.0
  %5410 = vmatprep.subr.mxu0 0.0
  %5411 = vmatpush2.xpose.msra.mxu0 0.0
  %5412 = vmatprep.subr.mxu0 0.0
  %5413 = vmatpush2.xpose.msra.mxu0 0.0
  %5414 = vmatprep.subr.mxu0 0.0
  %5415 = vmatpush2.xpose.msra.mxu0 0.0
  %5416 = vmatprep.subr.mxu0 0.0
  %5417 = vmatpush2.xpose.msra.mxu0 0.0
  %5418 = vmatprep.subr.mxu0 0.0
  %5419 = vmatpush2.xpose.msra.mxu0 0.0
  %5420 = vmatprep.subr.mxu0 0.0
  %5421 = vmatpush2.xpose.msra.mxu0 0.0
  %5422 = vmatprep.subr.mxu0 0.0
  %5423 = vmatpush2.xpose.msra.mxu0 0.0
  %5424 = vmatprep.subr.mxu0 0.0
  %5425 = vmatpush2.xpose.msra.mxu0 0.0
  %5426 = vmatprep.subr.mxu0 0.0
  %5427 = vmatpush2.xpose.msra.mxu0 0.0
  %5428 = vmatprep.subr.mxu0 0.0
  %5429 = vmatpush2.xpose.msra.mxu0 0.0
  %5430 = vmatprep.subr.mxu0 0.0
  %5431 = vmatpush2.xpose.msra.mxu0 0.0
  %5432 = vmatprep.subr.mxu0 0.0
  %5433 = vmatpush2.xpose.msra.mxu0 0.0
  %5434 = vmatprep.subr.mxu0 0.0
  %5435 = vmatpush2.xpose.msra.mxu0 0.0
  %5436 = vmatprep.mubr.f32.mxu0 0.0
  %5437 = vmatmul.mubr.f32.gmra.mxu0 %v5367
  %v5438 = vpop.f32.mrf.mxu0
  %v5439 = vadd.f32 %v316, %v5438
  %v5440 = vpop.f32.mrf.mxu0
  %5441 = vdwg.mxu0
  %v5442 = vsel %vm317, %v5439, -inf
  %5443 = vmax.xlane.f32.xlu0 %v5442
  %v5444 = vpop.xlane.xlu0 %5443
  %v5445 = vsub.f32 %v5439, %v5444
  %v5446 = vmul.f32 %v5445, 1.442695
  %v5447 = vpow.pop %v5446
  %v5448 = vsel %vm317, %v5447, 0.0
  %5449 = vadd.xlane.f32.xlu0 %v5448
  %v5450 = vpop.xlane.xlu0 %5449
  %v5451 = vrcp.pop %v5450
  %v5452 = vmul.f32 %v5447, %v5451
  %v5454 = vsel %vm317, %v5452, 0
  %5456 = vmatprep.subr.mxu0 0.0
  %5457 = vmatpush1.msra.mxu0 0.0
  %5458 = vmatprep.subr.mxu0 0.0
  %5459 = vmatpush1.msra.mxu0 0.0
  %5460 = vmatprep.subr.mxu0 0.0
  %5461 = vmatpush1.msra.mxu0 0.0
  %5462 = vmatprep.subr.mxu0 0.0
  %5463 = vmatpush1.msra.mxu0 0.0
  %5464 = vmatprep.subr.mxu0 0.0
  %5465 = vmatpush1.msra.mxu0 0.0
  %5466 = vmatprep.subr.mxu0 0.0
  %5467 = vmatpush1.msra.mxu0 0.0
  %5468 = vmatprep.subr.mxu0 0.0
  %5469 = vmatpush1.msra.mxu0 0.0
  %5470 = vmatprep.subr.mxu0 0.0
  %5471 = vmatpush1.msra.mxu0 0.0
  %5472 = vmatprep.subr.mxu0 0.0
  %5473 = vmatpush1.msra.mxu0 0.0
  %5474 = vmatprep.subr.mxu0 0.0
  %5475 = vmatpush1.msra.mxu0 0.0
  %5476 = vmatprep.subr.mxu0 0.0
  %5477 = vmatpush1.msra.mxu0 0.0
  %5478 = vmatprep.subr.mxu0 0.0
  %5479 = vmatpush1.msra.mxu0 0.0
  %5480 = vmatprep.subr.mxu0 0.0
  %5481 = vmatpush1.msra.mxu0 0.0
  %5482 = vmatprep.subr.mxu0 0.0
  %5483 = vmatpush1.msra.mxu0 0.0
  %5484 = vmatprep.subr.mxu0 0.0
  %5485 = vmatpush1.msra.mxu0 0.0
  %5486 = vmatprep.subr.mxu0 0.0
  %5487 = vmatpush1.msra.mxu0 %v5363
  %5488 = vmatprep.subr.mxu0 0.0
  %5489 = vmatpush2.msra.mxu0 0.0
  %5490 = vmatprep.subr.mxu0 0.0
  %5491 = vmatpush2.msra.mxu0 0.0
  %5492 = vmatprep.subr.mxu0 0.0
  %5493 = vmatpush2.msra.mxu0 0.0
  %5494 = vmatprep.subr.mxu0 0.0
  %5495 = vmatpush2.msra.mxu0 0.0
  %5496 = vmatprep.subr.mxu0 0.0
  %5497 = vmatpush2.msra.mxu0 0.0
  %5498 = vmatprep.subr.mxu0 0.0
  %5499 = vmatpush2.msra.mxu0 0.0
  %5500 = vmatprep.subr.mxu0 0.0
  %5501 = vmatpush2.msra.mxu0 0.0
  %5502 = vmatprep.subr.mxu0 0.0
  %5503 = vmatpush2.msra.mxu0 0.0
  %5504 = vmatprep.subr.mxu0 0.0
  %5505 = vmatpush2.msra.mxu0 0.0
  %5506 = vmatprep.subr.mxu0 0.0
  %5507 = vmatpush2.msra.mxu0 0.0
  %5508 = vmatprep.subr.mxu0 0.0
  %5509 = vmatpush2.msra.mxu0 0.0
  %5510 = vmatprep.subr.mxu0 0.0
  %5511 = vmatpush2.msra.mxu0 0.0
  %5512 = vmatprep.subr.mxu0 0.0
  %5513 = vmatpush2.msra.mxu0 0.0
  %5514 = vmatprep.subr.mxu0 0.0
  %5515 = vmatpush2.msra.mxu0 0.0
  %5516 = vmatprep.subr.mxu0 0.0
  %5517 = vmatpush2.msra.mxu0 0.0
  %5518 = vmatprep.subr.mxu0 0.0
  %5519 = vmatpush2.msra.mxu0 0.0
  %5520 = vmatprep.mubr.f32.mxu0 0.0
  %5521 = vmatmul.mubr.f32.gmra.mxu0 %v5454
  %v5522 = vpop.f32.mrf.mxu0
  %v5523 = vadd.f32 0.0, %v5522
  %v5524 = vpop.f32.mrf.mxu0
  %5525 = vdwg.mxu0
  %v5526 = vld [vmem:[%s3 + $0x70] sm:$0xff]
  %v5528 = vsel %vm317, %v5523, 0
  %5530 = vmatprep.subr.mxu0 0.0
  %5531 = vmatpush1.msra.mxu0 0.0
  %5532 = vmatprep.subr.mxu0 0.0
  %5533 = vmatpush1.msra.mxu0 0.0
  %5534 = vmatprep.subr.mxu0 0.0
  %5535 = vmatpush1.msra.mxu0 0.0
  %5536 = vmatprep.subr.mxu0 0.0
  %5537 = vmatpush1.msra.mxu0 0.0
  %5538 = vmatprep.subr.mxu0 0.0
  %5539 = vmatpush1.msra.mxu0 0.0
  %5540 = vmatprep.subr.mxu0 0.0
  %5541 = vmatpush1.msra.mxu0 0.0
  %5542 = vmatprep.subr.mxu0 0.0
  %5543 = vmatpush1.msra.mxu0 0.0
  %5544 = vmatprep.subr.mxu0 0.0
  %5545 = vmatpush1.msra.mxu0 0.0
  %5546 = vmatprep.subr.mxu0 0.0
  %5547 = vmatpush1.msra.mxu0 0.0
  %5548 = vmatprep.subr.mxu0 0.0
  %5549 = vmatpush1.msra.mxu0 0.0
  %5550 = vmatprep.subr.mxu0 0.0
  %5551 = vmatpush1.msra.mxu0 0.0
  %5552 = vmatprep.subr.mxu0 0.0
  %5553 = vmatpush1.msra.mxu0 0.0
  %5554 = vmatprep.subr.mxu0 0.0
  %5555 = vmatpush1.msra.mxu0 0.0
  %5556 = vmatprep.subr.mxu0 0.0
  %5557 = vmatpush1.msra.mxu0 0.0
  %5558 = vmatprep.subr.mxu0 0.0
  %5559 = vmatpush1.msra.mxu0 0.0
  %5560 = vmatprep.subr.mxu0 0.0
  %5561 = vmatpush1.msra.mxu0 %v5526
  %5562 = vmatprep.subr.mxu0 0.0
  %5563 = vmatpush2.msra.mxu0 0.0
  %5564 = vmatprep.subr.mxu0 0.0
  %5565 = vmatpush2.msra.mxu0 0.0
  %5566 = vmatprep.subr.mxu0 0.0
  %5567 = vmatpush2.msra.mxu0 0.0
  %5568 = vmatprep.subr.mxu0 0.0
  %5569 = vmatpush2.msra.mxu0 0.0
  %5570 = vmatprep.subr.mxu0 0.0
  %5571 = vmatpush2.msra.mxu0 0.0
  %5572 = vmatprep.subr.mxu0 0.0
  %5573 = vmatpush2.msra.mxu0 0.0
  %5574 = vmatprep.subr.mxu0 0.0
  %5575 = vmatpush2.msra.mxu0 0.0
  %5576 = vmatprep.subr.mxu0 0.0
  %5577 = vmatpush2.msra.mxu0 0.0
  %5578 = vmatprep.subr.mxu0 0.0
  %5579 = vmatpush2.msra.mxu0 0.0
  %5580 = vmatprep.subr.mxu0 0.0
  %5581 = vmatpush2.msra.mxu0 0.0
  %5582 = vmatprep.subr.mxu0 0.0
  %5583 = vmatpush2.msra.mxu0 0.0
  %5584 = vmatprep.subr.mxu0 0.0
  %5585 = vmatpush2.msra.mxu0 0.0
  %5586 = vmatprep.subr.mxu0 0.0
  %5587 = vmatpush2.msra.mxu0 0.0
  %5588 = vmatprep.subr.mxu0 0.0
  %5589 = vmatpush2.msra.mxu0 0.0
  %5590 = vmatprep.subr.mxu0 0.0
  %5591 = vmatpush2.msra.mxu0 0.0
  %5592 = vmatprep.subr.mxu0 0.0
  %5593 = vmatpush2.msra.mxu0 0.0
  %5594 = vmatprep.mubr.f32.mxu0 0.0
  %5595 = vmatmul.mubr.f32.gmra.mxu0 %v5528
  %v5596 = vpop.f32.mrf.mxu0
  %v5597 = vadd.f32 0.0, %v5596
  %v5598 = vpop.f32.mrf.mxu0
  %5599 = vdwg.mxu0
  %v5600 = vadd.f32 %v5125, %v5597
  %s5601 = scalar_lea.vmem %s2, 600
  %v5602 = vld [vmem:[%s5601] sm:$0xff]
  %v5603 = vld [vmem:[%s5601 + $0x8] sm:$0xff]
  %v5604 = vld [vmem:[%s5601 + $0x10] sm:$0xff]
  %v5605 = vld [vmem:[%s5601 + $0x18] sm:$0xff]
  %v5606 = vld [vmem:[%s5601 + $0x20] sm:$0x1]
  %s5607 = scalar_lea.vmem %s2, 760
  %v5608 = vld [vmem:[%s5607] sm:$0xff]
  %v5609 = vld [vmem:[%s5607 + $0x8] sm:$0xff]
  %v5610 = vld [vmem:[%s5607 + $0x10] sm:$0xff]
  %v5611 = vld [vmem:[%s5607 + $0x18] sm:$0xff]
  %v5612 = vld [vmem:[%s5607 + $0x20] sm:$0x1]
  %s5613 = scalar_lea.vmem %s2, 920
  %v5614 = vld [vmem:[%s5613] sm:$0xff]
  %v5615 = vld [vmem:[%s5613 + $0x8] sm:$0xff]
  %v5616 = vld [vmem:[%s5613 + $0x10] sm:$0xff]
  %v5617 = vld [vmem:[%s5613 + $0x18] sm:$0xff]
  %v5618 = vld [vmem:[%s5613 + $0x20] sm:$0x1]
  %v5619 = vlaneseq
  %v5620 = vshrl.u32 %v5619, 7
  %v5621 = vsub.s32 0, %v5620
  %v5622 = vrot.slane %v5606, %v5621
  %5623 = vmatprep.subr.mxu0 0.0
  %5624 = vmatpush1.msra.mxu0 0.0
  %5625 = vmatprep.subr.mxu0 0.0
  %5626 = vmatpush1.msra.mxu0 0.0
  %5627 = vmatprep.subr.mxu0 0.0
  %5628 = vmatpush1.msra.mxu0 0.0
  %5629 = vmatprep.subr.mxu0 0.0
  %5630 = vmatpush1.msra.mxu0 0.0
  %5631 = vmatprep.subr.mxu0 0.0
  %5632 = vmatpush1.msra.mxu0 0.0
  %5633 = vmatprep.subr.mxu0 0.0
  %5634 = vmatpush1.msra.mxu0 0.0
  %5635 = vmatprep.subr.mxu0 0.0
  %5636 = vmatpush1.msra.mxu0 0.0
  %5637 = vmatprep.subr.mxu0 0.0
  %5638 = vmatpush1.msra.mxu0 0.0
  %5639 = vmatprep.subr.mxu0 0.0
  %5640 = vmatpush1.msra.mxu0 0.0
  %5641 = vmatprep.subr.mxu0 0.0
  %5642 = vmatpush1.msra.mxu0 0.0
  %5643 = vmatprep.subr.mxu0 0.0
  %5644 = vmatpush1.msra.mxu0 0.0
  %5645 = vmatprep.subr.mxu0 0.0
  %5646 = vmatpush1.msra.mxu0 0.0
  %5647 = vmatprep.subr.mxu0 0.0
  %5648 = vmatpush1.msra.mxu0 %v5605
  %5649 = vmatprep.subr.mxu0 0.0
  %5650 = vmatpush1.msra.mxu0 %v5604
  %5651 = vmatprep.subr.mxu0 0.0
  %5652 = vmatpush1.msra.mxu0 %v5603
  %5653 = vmatprep.subr.mxu0 0.0
  %5654 = vmatpush1.msra.mxu0 %v5602
  %5655 = vmatprep.subr.mxu0 0.0
  %5656 = vmatpush2.msra.mxu0 0.0
  %5657 = vmatprep.subr.mxu0 0.0
  %5658 = vmatpush2.msra.mxu0 0.0
  %5659 = vmatprep.subr.mxu0 0.0
  %5660 = vmatpush2.msra.mxu0 0.0
  %5661 = vmatprep.subr.mxu0 0.0
  %5662 = vmatpush2.msra.mxu0 0.0
  %5663 = vmatprep.subr.mxu0 0.0
  %5664 = vmatpush2.msra.mxu0 0.0
  %5665 = vmatprep.subr.mxu0 0.0
  %5666 = vmatpush2.msra.mxu0 0.0
  %5667 = vmatprep.subr.mxu0 0.0
  %5668 = vmatpush2.msra.mxu0 0.0
  %5669 = vmatprep.subr.mxu0 0.0
  %5670 = vmatpush2.msra.mxu0 0.0
  %5671 = vmatprep.subr.mxu0 0.0
  %5672 = vmatpush2.msra.mxu0 0.0
  %5673 = vmatprep.subr.mxu0 0.0
  %5674 = vmatpush2.msra.mxu0 0.0
  %5675 = vmatprep.subr.mxu0 0.0
  %5676 = vmatpush2.msra.mxu0 0.0
  %5677 = vmatprep.subr.mxu0 0.0
  %5678 = vmatpush2.msra.mxu0 0.0
  %5679 = vmatprep.subr.mxu0 0.0
  %5680 = vmatpush2.msra.mxu0 0.0
  %5681 = vmatprep.subr.mxu0 0.0
  %5682 = vmatpush2.msra.mxu0 0.0
  %5683 = vmatprep.subr.mxu0 0.0
  %5684 = vmatpush2.msra.mxu0 0.0
  %5685 = vmatprep.subr.mxu0 0.0
  %5686 = vmatpush2.msra.mxu0 0.0
  %5687 = vmatprep.mubr.f32.mxu0 0.0
  %5688 = vmatmul.mubr.f32.gmra.mxu0 %v4192
  %v5689 = vpop.f32.mrf.mxu0
  %v5690 = vadd.f32 %v5622, %v5689
  %v5691 = vpop.f32.mrf.mxu0
  %5692 = vdwg.mxu0
  %v5693 = vlaneseq
  %v5694 = vshrl.u32 %v5693, 7
  %v5695 = vsub.s32 0, %v5694
  %v5696 = vrot.slane %v5612, %v5695
  %5697 = vmatprep.subr.mxu0 0.0
  %5698 = vmatpush1.msra.mxu0 0.0
  %5699 = vmatprep.subr.mxu0 0.0
  %5700 = vmatpush1.msra.mxu0 0.0
  %5701 = vmatprep.subr.mxu0 0.0
  %5702 = vmatpush1.msra.mxu0 0.0
  %5703 = vmatprep.subr.mxu0 0.0
  %5704 = vmatpush1.msra.mxu0 0.0
  %5705 = vmatprep.subr.mxu0 0.0
  %5706 = vmatpush1.msra.mxu0 0.0
  %5707 = vmatprep.subr.mxu0 0.0
  %5708 = vmatpush1.msra.mxu0 0.0
  %5709 = vmatprep.subr.mxu0 0.0
  %5710 = vmatpush1.msra.mxu0 0.0
  %5711 = vmatprep.subr.mxu0 0.0
  %5712 = vmatpush1.msra.mxu0 0.0
  %5713 = vmatprep.subr.mxu0 0.0
  %5714 = vmatpush1.msra.mxu0 0.0
  %5715 = vmatprep.subr.mxu0 0.0
  %5716 = vmatpush1.msra.mxu0 0.0
  %5717 = vmatprep.subr.mxu0 0.0
  %5718 = vmatpush1.msra.mxu0 0.0
  %5719 = vmatprep.subr.mxu0 0.0
  %5720 = vmatpush1.msra.mxu0 0.0
  %5721 = vmatprep.subr.mxu0 0.0
  %5722 = vmatpush1.msra.mxu0 %v5611
  %5723 = vmatprep.subr.mxu0 0.0
  %5724 = vmatpush1.msra.mxu0 %v5610
  %5725 = vmatprep.subr.mxu0 0.0
  %5726 = vmatpush1.msra.mxu0 %v5609
  %5727 = vmatprep.subr.mxu0 0.0
  %5728 = vmatpush1.msra.mxu0 %v5608
  %5729 = vmatprep.subr.mxu0 0.0
  %5730 = vmatpush2.msra.mxu0 0.0
  %5731 = vmatprep.subr.mxu0 0.0
  %5732 = vmatpush2.msra.mxu0 0.0
  %5733 = vmatprep.subr.mxu0 0.0
  %5734 = vmatpush2.msra.mxu0 0.0
  %5735 = vmatprep.subr.mxu0 0.0
  %5736 = vmatpush2.msra.mxu0 0.0
  %5737 = vmatprep.subr.mxu0 0.0
  %5738 = vmatpush2.msra.mxu0 0.0
  %5739 = vmatprep.subr.mxu0 0.0
  %5740 = vmatpush2.msra.mxu0 0.0
  %5741 = vmatprep.subr.mxu0 0.0
  %5742 = vmatpush2.msra.mxu0 0.0
  %5743 = vmatprep.subr.mxu0 0.0
  %5744 = vmatpush2.msra.mxu0 0.0
  %5745 = vmatprep.subr.mxu0 0.0
  %5746 = vmatpush2.msra.mxu0 0.0
  %5747 = vmatprep.subr.mxu0 0.0
  %5748 = vmatpush2.msra.mxu0 0.0
  %5749 = vmatprep.subr.mxu0 0.0
  %5750 = vmatpush2.msra.mxu0 0.0
  %5751 = vmatprep.subr.mxu0 0.0
  %5752 = vmatpush2.msra.mxu0 0.0
  %5753 = vmatprep.subr.mxu0 0.0
  %5754 = vmatpush2.msra.mxu0 0.0
  %5755 = vmatprep.subr.mxu0 0.0
  %5756 = vmatpush2.msra.mxu0 0.0
  %5757 = vmatprep.subr.mxu0 0.0
  %5758 = vmatpush2.msra.mxu0 0.0
  %5759 = vmatprep.subr.mxu0 0.0
  %5760 = vmatpush2.msra.mxu0 0.0
  %5761 = vmatprep.mubr.f32.mxu0 0.0
  %5762 = vmatmul.mubr.f32.gmra.mxu0 %v4192
  %v5763 = vpop.f32.mrf.mxu0
  %v5764 = vadd.f32 %v5696, %v5763
  %v5765 = vpop.f32.mrf.mxu0
  %5766 = vdwg.mxu0
  %v5767 = vlaneseq
  %v5768 = vshrl.u32 %v5767, 7
  %v5769 = vsub.s32 0, %v5768
  %v5770 = vrot.slane %v5618, %v5769
  %5771 = vmatprep.subr.mxu0 0.0
  %5772 = vmatpush1.msra.mxu0 0.0
  %5773 = vmatprep.subr.mxu0 0.0
  %5774 = vmatpush1.msra.mxu0 0.0
  %5775 = vmatprep.subr.mxu0 0.0
  %5776 = vmatpush1.msra.mxu0 0.0
  %5777 = vmatprep.subr.mxu0 0.0
  %5778 = vmatpush1.msra.mxu0 0.0
  %5779 = vmatprep.subr.mxu0 0.0
  %5780 = vmatpush1.msra.mxu0 0.0
  %5781 = vmatprep.subr.mxu0 0.0
  %5782 = vmatpush1.msra.mxu0 0.0
  %5783 = vmatprep.subr.mxu0 0.0
  %5784 = vmatpush1.msra.mxu0 0.0
  %5785 = vmatprep.subr.mxu0 0.0
  %5786 = vmatpush1.msra.mxu0 0.0
  %5787 = vmatprep.subr.mxu0 0.0
  %5788 = vmatpush1.msra.mxu0 0.0
  %5789 = vmatprep.subr.mxu0 0.0
  %5790 = vmatpush1.msra.mxu0 0.0
  %5791 = vmatprep.subr.mxu0 0.0
  %5792 = vmatpush1.msra.mxu0 0.0
  %5793 = vmatprep.subr.mxu0 0.0
  %5794 = vmatpush1.msra.mxu0 0.0
  %5795 = vmatprep.subr.mxu0 0.0
  %5796 = vmatpush1.msra.mxu0 %v5617
  %5797 = vmatprep.subr.mxu0 0.0
  %5798 = vmatpush1.msra.mxu0 %v5616
  %5799 = vmatprep.subr.mxu0 0.0
  %5800 = vmatpush1.msra.mxu0 %v5615
  %5801 = vmatprep.subr.mxu0 0.0
  %5802 = vmatpush1.msra.mxu0 %v5614
  %5803 = vmatprep.subr.mxu0 0.0
  %5804 = vmatpush2.msra.mxu0 0.0
  %5805 = vmatprep.subr.mxu0 0.0
  %5806 = vmatpush2.msra.mxu0 0.0
  %5807 = vmatprep.subr.mxu0 0.0
  %5808 = vmatpush2.msra.mxu0 0.0
  %5809 = vmatprep.subr.mxu0 0.0
  %5810 = vmatpush2.msra.mxu0 0.0
  %5811 = vmatprep.subr.mxu0 0.0
  %5812 = vmatpush2.msra.mxu0 0.0
  %5813 = vmatprep.subr.mxu0 0.0
  %5814 = vmatpush2.msra.mxu0 0.0
  %5815 = vmatprep.subr.mxu0 0.0
  %5816 = vmatpush2.msra.mxu0 0.0
  %5817 = vmatprep.subr.mxu0 0.0
  %5818 = vmatpush2.msra.mxu0 0.0
  %5819 = vmatprep.subr.mxu0 0.0
  %5820 = vmatpush2.msra.mxu0 0.0
  %5821 = vmatprep.subr.mxu0 0.0
  %5822 = vmatpush2.msra.mxu0 0.0
  %5823 = vmatprep.subr.mxu0 0.0
  %5824 = vmatpush2.msra.mxu0 0.0
  %5825 = vmatprep.subr.mxu0 0.0
  %5826 = vmatpush2.msra.mxu0 0.0
  %5827 = vmatprep.subr.mxu0 0.0
  %5828 = vmatpush2.msra.mxu0 0.0
  %5829 = vmatprep.subr.mxu0 0.0
  %5830 = vmatpush2.msra.mxu0 0.0
  %5831 = vmatprep.subr.mxu0 0.0
  %5832 = vmatpush2.msra.mxu0 0.0
  %5833 = vmatprep.subr.mxu0 0.0
  %5834 = vmatpush2.msra.mxu0 0.0
  %5835 = vmatprep.mubr.f32.mxu0 0.0
  %5836 = vmatmul.mubr.f32.gmra.mxu0 %v4192
  %v5837 = vpop.f32.mrf.mxu0
  %v5838 = vadd.f32 %v5770, %v5837
  %v5839 = vpop.f32.mrf.mxu0
  %5840 = vdwg.mxu0
  %v5842 = vsel %vm317, %v5690, 0
  %v5845 = vsel %vm317, %v5764, 0
  %5847 = vmatprep.subr.mxu0 0.0
  %5848 = vmatpush1.xpose.msra.mxu0 0.0
  %5849 = vmatprep.subr.mxu0 0.0
  %5850 = vmatpush1.xpose.msra.mxu0 0.0
  %5851 = vmatprep.subr.mxu0 0.0
  %5852 = vmatpush1.xpose.msra.mxu0 0.0
  %5853 = vmatprep.subr.mxu0 0.0
  %5854 = vmatpush1.xpose.msra.mxu0 0.0
  %5855 = vmatprep.subr.mxu0 0.0
  %5856 = vmatpush1.xpose.msra.mxu0 0.0
  %5857 = vmatprep.subr.mxu0 0.0
  %5858 = vmatpush1.xpose.msra.mxu0 0.0
  %5859 = vmatprep.subr.mxu0 0.0
  %5860 = vmatpush1.xpose.msra.mxu0 0.0
  %5861 = vmatprep.subr.mxu0 0.0
  %5862 = vmatpush1.xpose.msra.mxu0 0.0
  %5863 = vmatprep.subr.mxu0 0.0
  %5864 = vmatpush1.xpose.msra.mxu0 0.0
  %5865 = vmatprep.subr.mxu0 0.0
  %5866 = vmatpush1.xpose.msra.mxu0 0.0
  %5867 = vmatprep.subr.mxu0 0.0
  %5868 = vmatpush1.xpose.msra.mxu0 0.0
  %5869 = vmatprep.subr.mxu0 0.0
  %5870 = vmatpush1.xpose.msra.mxu0 0.0
  %5871 = vmatprep.subr.mxu0 0.0
  %5872 = vmatpush1.xpose.msra.mxu0 0.0
  %5873 = vmatprep.subr.mxu0 0.0
  %5874 = vmatpush1.xpose.msra.mxu0 0.0
  %5875 = vmatprep.subr.mxu0 0.0
  %5876 = vmatpush1.xpose.msra.mxu0 0.0
  %5877 = vmatprep.subr.mxu0 0.0
  %5878 = vmatpush1.xpose.msra.mxu0 %v5845
  %5879 = vmatprep.subr.mxu0 0.0
  %5880 = vmatpush2.xpose.msra.mxu0 0.0
  %5881 = vmatprep.subr.mxu0 0.0
  %5882 = vmatpush2.xpose.msra.mxu0 0.0
  %5883 = vmatprep.subr.mxu0 0.0
  %5884 = vmatpush2.xpose.msra.mxu0 0.0
  %5885 = vmatprep.subr.mxu0 0.0
  %5886 = vmatpush2.xpose.msra.mxu0 0.0
  %5887 = vmatprep.subr.mxu0 0.0
  %5888 = vmatpush2.xpose.msra.mxu0 0.0
  %5889 = vmatprep.subr.mxu0 0.0
  %5890 = vmatpush2.xpose.msra.mxu0 0.0
  %5891 = vmatprep.subr.mxu0 0.0
  %5892 = vmatpush2.xpose.msra.mxu0 0.0
  %5893 = vmatprep.subr.mxu0 0.0
  %5894 = vmatpush2.xpose.msra.mxu0 0.0
  %5895 = vmatprep.subr.mxu0 0.0
  %5896 = vmatpush2.xpose.msra.mxu0 0.0
  %5897 = vmatprep.subr.mxu0 0.0
  %5898 = vmatpush2.xpose.msra.mxu0 0.0
  %5899 = vmatprep.subr.mxu0 0.0
  %5900 = vmatpush2.xpose.msra.mxu0 0.0
  %5901 = vmatprep.subr.mxu0 0.0
  %5902 = vmatpush2.xpose.msra.mxu0 0.0
  %5903 = vmatprep.subr.mxu0 0.0
  %5904 = vmatpush2.xpose.msra.mxu0 0.0
  %5905 = vmatprep.subr.mxu0 0.0
  %5906 = vmatpush2.xpose.msra.mxu0 0.0
  %5907 = vmatprep.subr.mxu0 0.0
  %5908 = vmatpush2.xpose.msra.mxu0 0.0
  %5909 = vmatprep.subr.mxu0 0.0
  %5910 = vmatpush2.xpose.msra.mxu0 0.0
  %5911 = vmatprep.mubr.f32.mxu0 0.0
  %5912 = vmatmul.mubr.f32.gmra.mxu0 %v5842
  %v5913 = vpop.f32.mrf.mxu0
  %v5914 = vadd.f32 %v316, %v5913
  %v5915 = vpop.f32.mrf.mxu0
  %5916 = vdwg.mxu0
  %v5917 = vsel %vm317, %v5914, -inf
  %5918 = vmax.xlane.f32.xlu0 %v5917
  %v5919 = vpop.xlane.xlu0 %5918
  %v5920 = vsub.f32 %v5914, %v5919
  %v5921 = vmul.f32 %v5920, 1.442695
  %v5922 = vpow.pop %v5921
  %v5923 = vsel %vm317, %v5922, 0.0
  %5924 = vadd.xlane.f32.xlu0 %v5923
  %v5925 = vpop.xlane.xlu0 %5924
  %v5926 = vrcp.pop %v5925
  %v5927 = vmul.f32 %v5922, %v5926
  %v5929 = vsel %vm317, %v5927, 0
  %5931 = vmatprep.subr.mxu0 0.0
  %5932 = vmatpush1.msra.mxu0 0.0
  %5933 = vmatprep.subr.mxu0 0.0
  %5934 = vmatpush1.msra.mxu0 0.0
  %5935 = vmatprep.subr.mxu0 0.0
  %5936 = vmatpush1.msra.mxu0 0.0
  %5937 = vmatprep.subr.mxu0 0.0
  %5938 = vmatpush1.msra.mxu0 0.0
  %5939 = vmatprep.subr.mxu0 0.0
  %5940 = vmatpush1.msra.mxu0 0.0
  %5941 = vmatprep.subr.mxu0 0.0
  %5942 = vmatpush1.msra.mxu0 0.0
  %5943 = vmatprep.subr.mxu0 0.0
  %5944 = vmatpush1.msra.mxu0 0.0
  %5945 = vmatprep.subr.mxu0 0.0
  %5946 = vmatpush1.msra.mxu0 0.0
  %5947 = vmatprep.subr.mxu0 0.0
  %5948 = vmatpush1.msra.mxu0 0.0
  %5949 = vmatprep.subr.mxu0 0.0
  %5950 = vmatpush1.msra.mxu0 0.0
  %5951 = vmatprep.subr.mxu0 0.0
  %5952 = vmatpush1.msra.mxu0 0.0
  %5953 = vmatprep.subr.mxu0 0.0
  %5954 = vmatpush1.msra.mxu0 0.0
  %5955 = vmatprep.subr.mxu0 0.0
  %5956 = vmatpush1.msra.mxu0 0.0
  %5957 = vmatprep.subr.mxu0 0.0
  %5958 = vmatpush1.msra.mxu0 0.0
  %5959 = vmatprep.subr.mxu0 0.0
  %5960 = vmatpush1.msra.mxu0 0.0
  %5961 = vmatprep.subr.mxu0 0.0
  %5962 = vmatpush1.msra.mxu0 %v5838
  %5963 = vmatprep.subr.mxu0 0.0
  %5964 = vmatpush2.msra.mxu0 0.0
  %5965 = vmatprep.subr.mxu0 0.0
  %5966 = vmatpush2.msra.mxu0 0.0
  %5967 = vmatprep.subr.mxu0 0.0
  %5968 = vmatpush2.msra.mxu0 0.0
  %5969 = vmatprep.subr.mxu0 0.0
  %5970 = vmatpush2.msra.mxu0 0.0
  %5971 = vmatprep.subr.mxu0 0.0
  %5972 = vmatpush2.msra.mxu0 0.0
  %5973 = vmatprep.subr.mxu0 0.0
  %5974 = vmatpush2.msra.mxu0 0.0
  %5975 = vmatprep.subr.mxu0 0.0
  %5976 = vmatpush2.msra.mxu0 0.0
  %5977 = vmatprep.subr.mxu0 0.0
  %5978 = vmatpush2.msra.mxu0 0.0
  %5979 = vmatprep.subr.mxu0 0.0
  %5980 = vmatpush2.msra.mxu0 0.0
  %5981 = vmatprep.subr.mxu0 0.0
  %5982 = vmatpush2.msra.mxu0 0.0
  %5983 = vmatprep.subr.mxu0 0.0
  %5984 = vmatpush2.msra.mxu0 0.0
  %5985 = vmatprep.subr.mxu0 0.0
  %5986 = vmatpush2.msra.mxu0 0.0
  %5987 = vmatprep.subr.mxu0 0.0
  %5988 = vmatpush2.msra.mxu0 0.0
  %5989 = vmatprep.subr.mxu0 0.0
  %5990 = vmatpush2.msra.mxu0 0.0
  %5991 = vmatprep.subr.mxu0 0.0
  %5992 = vmatpush2.msra.mxu0 0.0
  %5993 = vmatprep.subr.mxu0 0.0
  %5994 = vmatpush2.msra.mxu0 0.0
  %5995 = vmatprep.mubr.f32.mxu0 0.0
  %5996 = vmatmul.mubr.f32.gmra.mxu0 %v5929
  %v5997 = vpop.f32.mrf.mxu0
  %v5998 = vadd.f32 0.0, %v5997
  %v5999 = vpop.f32.mrf.mxu0
  %6000 = vdwg.mxu0
  %v6001 = vld [vmem:[%s3 + $0x78] sm:$0xff]
  %v6003 = vsel %vm317, %v5998, 0
  %6005 = vmatprep.subr.mxu0 0.0
  %6006 = vmatpush1.msra.mxu0 0.0
  %6007 = vmatprep.subr.mxu0 0.0
  %6008 = vmatpush1.msra.mxu0 0.0
  %6009 = vmatprep.subr.mxu0 0.0
  %6010 = vmatpush1.msra.mxu0 0.0
  %6011 = vmatprep.subr.mxu0 0.0
  %6012 = vmatpush1.msra.mxu0 0.0
  %6013 = vmatprep.subr.mxu0 0.0
  %6014 = vmatpush1.msra.mxu0 0.0
  %6015 = vmatprep.subr.mxu0 0.0
  %6016 = vmatpush1.msra.mxu0 0.0
  %6017 = vmatprep.subr.mxu0 0.0
  %6018 = vmatpush1.msra.mxu0 0.0
  %6019 = vmatprep.subr.mxu0 0.0
  %6020 = vmatpush1.msra.mxu0 0.0
  %6021 = vmatprep.subr.mxu0 0.0
  %6022 = vmatpush1.msra.mxu0 0.0
  %6023 = vmatprep.subr.mxu0 0.0
  %6024 = vmatpush1.msra.mxu0 0.0
  %6025 = vmatprep.subr.mxu0 0.0
  %6026 = vmatpush1.msra.mxu0 0.0
  %6027 = vmatprep.subr.mxu0 0.0
  %6028 = vmatpush1.msra.mxu0 0.0
  %6029 = vmatprep.subr.mxu0 0.0
  %6030 = vmatpush1.msra.mxu0 0.0
  %6031 = vmatprep.subr.mxu0 0.0
  %6032 = vmatpush1.msra.mxu0 0.0
  %6033 = vmatprep.subr.mxu0 0.0
  %6034 = vmatpush1.msra.mxu0 0.0
  %6035 = vmatprep.subr.mxu0 0.0
  %6036 = vmatpush1.msra.mxu0 %v6001
  %6037 = vmatprep.subr.mxu0 0.0
  %6038 = vmatpush2.msra.mxu0 0.0
  %6039 = vmatprep.subr.mxu0 0.0
  %6040 = vmatpush2.msra.mxu0 0.0
  %6041 = vmatprep.subr.mxu0 0.0
  %6042 = vmatpush2.msra.mxu0 0.0
  %6043 = vmatprep.subr.mxu0 0.0
  %6044 = vmatpush2.msra.mxu0 0.0
  %6045 = vmatprep.subr.mxu0 0.0
  %6046 = vmatpush2.msra.mxu0 0.0
  %6047 = vmatprep.subr.mxu0 0.0
  %6048 = vmatpush2.msra.mxu0 0.0
  %6049 = vmatprep.subr.mxu0 0.0
  %6050 = vmatpush2.msra.mxu0 0.0
  %6051 = vmatprep.subr.mxu0 0.0
  %6052 = vmatpush2.msra.mxu0 0.0
  %6053 = vmatprep.subr.mxu0 0.0
  %6054 = vmatpush2.msra.mxu0 0.0
  %6055 = vmatprep.subr.mxu0 0.0
  %6056 = vmatpush2.msra.mxu0 0.0
  %6057 = vmatprep.subr.mxu0 0.0
  %6058 = vmatpush2.msra.mxu0 0.0
  %6059 = vmatprep.subr.mxu0 0.0
  %6060 = vmatpush2.msra.mxu0 0.0
  %6061 = vmatprep.subr.mxu0 0.0
  %6062 = vmatpush2.msra.mxu0 0.0
  %6063 = vmatprep.subr.mxu0 0.0
  %6064 = vmatpush2.msra.mxu0 0.0
  %6065 = vmatprep.subr.mxu0 0.0
  %6066 = vmatpush2.msra.mxu0 0.0
  %6067 = vmatprep.subr.mxu0 0.0
  %6068 = vmatpush2.msra.mxu0 0.0
  %6069 = vmatprep.mubr.f32.mxu0 0.0
  %6070 = vmatmul.mubr.f32.gmra.mxu0 %v6003
  %v6071 = vpop.f32.mrf.mxu0
  %v6072 = vadd.f32 0.0, %v6071
  %v6073 = vpop.f32.mrf.mxu0
  %6074 = vdwg.mxu0
  %v6075 = vadd.f32 %v5600, %v6072
  %6076 = vst.msk [vmem:[#allocation2] sm:$0xff] %vm30, %v6075
  %v6077 = vld [vmem:[%s4169] sm:$0xff]
  %v6078 = vld [vmem:[%s4169 + $0x8] sm:$0xff]
  %v6079 = vld [vmem:[%s4169 + $0x10] sm:$0xff]
  %v6080 = vld [vmem:[%s4169 + $0x18] sm:$0xff]
  %v6081 = vld [vmem:[%s4169 + $0x20] sm:$0x1]
  %v6082 = vld [vmem:[%s4175] sm:$0xff]
  %v6083 = vld [vmem:[%s4175 + $0x8] sm:$0xff]
  %v6084 = vld [vmem:[%s4175 + $0x10] sm:$0xff]
  %v6085 = vld [vmem:[%s4175 + $0x18] sm:$0xff]
  %v6086 = vld [vmem:[%s4175 + $0x20] sm:$0x1]
  %v6087 = vld [vmem:[%s4181] sm:$0xff]
  %v6088 = vld [vmem:[%s4181 + $0x8] sm:$0xff]
  %v6089 = vld [vmem:[%s4181 + $0x10] sm:$0xff]
  %v6090 = vld [vmem:[%s4181 + $0x18] sm:$0xff]
  %v6091 = vld [vmem:[%s4181 + $0x20] sm:$0x1]
  %v6092 = vlaneseq
  %v6093 = vshrl.u32 %v6092, 7
  %v6094 = vsub.s32 0, %v6093
  %v6095 = vrot.slane %v6081, %v6094
  %v6097 = vsel %vm30, %v4167, 0
  %6099 = vmatprep.subr.mxu0 0.0
  %6100 = vmatpush1.msra.mxu0 0.0
  %6101 = vmatprep.subr.mxu0 0.0
  %6102 = vmatpush1.msra.mxu0 0.0
  %6103 = vmatprep.subr.mxu0 0.0
  %6104 = vmatpush1.msra.mxu0 0.0
  %6105 = vmatprep.subr.mxu0 0.0
  %6106 = vmatpush1.msra.mxu0 0.0
  %6107 = vmatprep.subr.mxu0 0.0
  %6108 = vmatpush1.msra.mxu0 0.0
  %6109 = vmatprep.subr.mxu0 0.0
  %6110 = vmatpush1.msra.mxu0 0.0
  %6111 = vmatprep.subr.mxu0 0.0
  %6112 = vmatpush1.msra.mxu0 0.0
  %6113 = vmatprep.subr.mxu0 0.0
  %6114 = vmatpush1.msra.mxu0 0.0
  %6115 = vmatprep.subr.mxu0 0.0
  %6116 = vmatpush1.msra.mxu0 0.0
  %6117 = vmatprep.subr.mxu0 0.0
  %6118 = vmatpush1.msra.mxu0 0.0
  %6119 = vmatprep.subr.mxu0 0.0
  %6120 = vmatpush1.msra.mxu0 0.0
  %6121 = vmatprep.subr.mxu0 0.0
  %6122 = vmatpush1.msra.mxu0 0.0
  %6123 = vmatprep.subr.mxu0 0.0
  %6124 = vmatpush1.msra.mxu0 %v6080
  %6125 = vmatprep.subr.mxu0 0.0
  %6126 = vmatpush1.msra.mxu0 %v6079
  %6127 = vmatprep.subr.mxu0 0.0
  %6128 = vmatpush1.msra.mxu0 %v6078
  %6129 = vmatprep.subr.mxu0 0.0
  %6130 = vmatpush1.msra.mxu0 %v6077
  %6131 = vmatprep.subr.mxu0 0.0
  %6132 = vmatpush2.msra.mxu0 0.0
  %6133 = vmatprep.subr.mxu0 0.0
  %6134 = vmatpush2.msra.mxu0 0.0
  %6135 = vmatprep.subr.mxu0 0.0
  %6136 = vmatpush2.msra.mxu0 0.0
  %6137 = vmatprep.subr.mxu0 0.0
  %6138 = vmatpush2.msra.mxu0 0.0
  %6139 = vmatprep.subr.mxu0 0.0
  %6140 = vmatpush2.msra.mxu0 0.0
  %6141 = vmatprep.subr.mxu0 0.0
  %6142 = vmatpush2.msra.mxu0 0.0
  %6143 = vmatprep.subr.mxu0 0.0
  %6144 = vmatpush2.msra.mxu0 0.0
  %6145 = vmatprep.subr.mxu0 0.0
  %6146 = vmatpush2.msra.mxu0 0.0
  %6147 = vmatprep.subr.mxu0 0.0
  %6148 = vmatpush2.msra.mxu0 0.0
  %6149 = vmatprep.subr.mxu0 0.0
  %6150 = vmatpush2.msra.mxu0 0.0
  %6151 = vmatprep.subr.mxu0 0.0
  %6152 = vmatpush2.msra.mxu0 0.0
  %6153 = vmatprep.subr.mxu0 0.0
  %6154 = vmatpush2.msra.mxu0 0.0
  %6155 = vmatprep.subr.mxu0 0.0
  %6156 = vmatpush2.msra.mxu0 0.0
  %6157 = vmatprep.subr.mxu0 0.0
  %6158 = vmatpush2.msra.mxu0 0.0
  %6159 = vmatprep.subr.mxu0 0.0
  %6160 = vmatpush2.msra.mxu0 0.0
  %6161 = vmatprep.subr.mxu0 0.0
  %6162 = vmatpush2.msra.mxu0 0.0
  %6163 = vmatprep.mubr.f32.mxu0 0.0
  %6164 = vmatmul.mubr.f32.gmra.mxu0 %v6097
  %v6165 = vpop.f32.mrf.mxu0
  %v6166 = vadd.f32 %v6095, %v6165
  %v6167 = vpop.f32.mrf.mxu0
  %6168 = vdwg.mxu0
  %v6169 = vlaneseq
  %v6170 = vshrl.u32 %v6169, 7
  %v6171 = vsub.s32 0, %v6170
  %v6172 = vrot.slane %v6086, %v6171
  %6173 = vmatprep.subr.mxu0 0.0
  %6174 = vmatpush1.msra.mxu0 0.0
  %6175 = vmatprep.subr.mxu0 0.0
  %6176 = vmatpush1.msra.mxu0 0.0
  %6177 = vmatprep.subr.mxu0 0.0
  %6178 = vmatpush1.msra.mxu0 0.0
  %6179 = vmatprep.subr.mxu0 0.0
  %6180 = vmatpush1.msra.mxu0 0.0
  %6181 = vmatprep.subr.mxu0 0.0
  %6182 = vmatpush1.msra.mxu0 0.0
  %6183 = vmatprep.subr.mxu0 0.0
  %6184 = vmatpush1.msra.mxu0 0.0
  %6185 = vmatprep.subr.mxu0 0.0
  %6186 = vmatpush1.msra.mxu0 0.0
  %6187 = vmatprep.subr.mxu0 0.0
  %6188 = vmatpush1.msra.mxu0 0.0
  %6189 = vmatprep.subr.mxu0 0.0
  %6190 = vmatpush1.msra.mxu0 0.0
  %6191 = vmatprep.subr.mxu0 0.0
  %6192 = vmatpush1.msra.mxu0 0.0
  %6193 = vmatprep.subr.mxu0 0.0
  %6194 = vmatpush1.msra.mxu0 0.0
  %6195 = vmatprep.subr.mxu0 0.0
  %6196 = vmatpush1.msra.mxu0 0.0
  %6197 = vmatprep.subr.mxu0 0.0
  %6198 = vmatpush1.msra.mxu0 %v6085
  %6199 = vmatprep.subr.mxu0 0.0
  %6200 = vmatpush1.msra.mxu0 %v6084
  %6201 = vmatprep.subr.mxu0 0.0
  %6202 = vmatpush1.msra.mxu0 %v6083
  %6203 = vmatprep.subr.mxu0 0.0
  %6204 = vmatpush1.msra.mxu0 %v6082
  %6205 = vmatprep.subr.mxu0 0.0
  %6206 = vmatpush2.msra.mxu0 0.0
  %6207 = vmatprep.subr.mxu0 0.0
  %6208 = vmatpush2.msra.mxu0 0.0
  %6209 = vmatprep.subr.mxu0 0.0
  %6210 = vmatpush2.msra.mxu0 0.0
  %6211 = vmatprep.subr.mxu0 0.0
  %6212 = vmatpush2.msra.mxu0 0.0
  %6213 = vmatprep.subr.mxu0 0.0
  %6214 = vmatpush2.msra.mxu0 0.0
  %6215 = vmatprep.subr.mxu0 0.0
  %6216 = vmatpush2.msra.mxu0 0.0
  %6217 = vmatprep.subr.mxu0 0.0
  %6218 = vmatpush2.msra.mxu0 0.0
  %6219 = vmatprep.subr.mxu0 0.0
  %6220 = vmatpush2.msra.mxu0 0.0
  %6221 = vmatprep.subr.mxu0 0.0
  %6222 = vmatpush2.msra.mxu0 0.0
  %6223 = vmatprep.subr.mxu0 0.0
  %6224 = vmatpush2.msra.mxu0 0.0
  %6225 = vmatprep.subr.mxu0 0.0
  %6226 = vmatpush2.msra.mxu0 0.0
  %6227 = vmatprep.subr.mxu0 0.0
  %6228 = vmatpush2.msra.mxu0 0.0
  %6229 = vmatprep.subr.mxu0 0.0
  %6230 = vmatpush2.msra.mxu0 0.0
  %6231 = vmatprep.subr.mxu0 0.0
  %6232 = vmatpush2.msra.mxu0 0.0
  %6233 = vmatprep.subr.mxu0 0.0
  %6234 = vmatpush2.msra.mxu0 0.0
  %6235 = vmatprep.subr.mxu0 0.0
  %6236 = vmatpush2.msra.mxu0 0.0
  %6237 = vmatprep.mubr.f32.mxu0 0.0
  %6238 = vmatmul.mubr.f32.gmra.mxu0 %v6097
  %v6239 = vpop.f32.mrf.mxu0
  %v6240 = vadd.f32 %v6172, %v6239
  %v6241 = vpop.f32.mrf.mxu0
  %6242 = vdwg.mxu0
  %v6243 = vlaneseq
  %v6244 = vshrl.u32 %v6243, 7
  %v6245 = vsub.s32 0, %v6244
  %v6246 = vrot.slane %v6091, %v6245
  %6247 = vmatprep.subr.mxu0 0.0
  %6248 = vmatpush1.msra.mxu0 0.0
  %6249 = vmatprep.subr.mxu0 0.0
  %6250 = vmatpush1.msra.mxu0 0.0
  %6251 = vmatprep.subr.mxu0 0.0
  %6252 = vmatpush1.msra.mxu0 0.0
  %6253 = vmatprep.subr.mxu0 0.0
  %6254 = vmatpush1.msra.mxu0 0.0
  %6255 = vmatprep.subr.mxu0 0.0
  %6256 = vmatpush1.msra.mxu0 0.0
  %6257 = vmatprep.subr.mxu0 0.0
  %6258 = vmatpush1.msra.mxu0 0.0
  %6259 = vmatprep.subr.mxu0 0.0
  %6260 = vmatpush1.msra.mxu0 0.0
  %6261 = vmatprep.subr.mxu0 0.0
  %6262 = vmatpush1.msra.mxu0 0.0
  %6263 = vmatprep.subr.mxu0 0.0
  %6264 = vmatpush1.msra.mxu0 0.0
  %6265 = vmatprep.subr.mxu0 0.0
  %6266 = vmatpush1.msra.mxu0 0.0
  %6267 = vmatprep.subr.mxu0 0.0
  %6268 = vmatpush1.msra.mxu0 0.0
  %6269 = vmatprep.subr.mxu0 0.0
  %6270 = vmatpush1.msra.mxu0 0.0
  %6271 = vmatprep.subr.mxu0 0.0
  %6272 = vmatpush1.msra.mxu0 %v6090
  %6273 = vmatprep.subr.mxu0 0.0
  %6274 = vmatpush1.msra.mxu0 %v6089
  %6275 = vmatprep.subr.mxu0 0.0
  %6276 = vmatpush1.msra.mxu0 %v6088
  %6277 = vmatprep.subr.mxu0 0.0
  %6278 = vmatpush1.msra.mxu0 %v6087
  %6279 = vmatprep.subr.mxu0 0.0
  %6280 = vmatpush2.msra.mxu0 0.0
  %6281 = vmatprep.subr.mxu0 0.0
  %6282 = vmatpush2.msra.mxu0 0.0
  %6283 = vmatprep.subr.mxu0 0.0
  %6284 = vmatpush2.msra.mxu0 0.0
  %6285 = vmatprep.subr.mxu0 0.0
  %6286 = vmatpush2.msra.mxu0 0.0
  %6287 = vmatprep.subr.mxu0 0.0
  %6288 = vmatpush2.msra.mxu0 0.0
  %6289 = vmatprep.subr.mxu0 0.0
  %6290 = vmatpush2.msra.mxu0 0.0
  %6291 = vmatprep.subr.mxu0 0.0
  %6292 = vmatpush2.msra.mxu0 0.0
  %6293 = vmatprep.subr.mxu0 0.0
  %6294 = vmatpush2.msra.mxu0 0.0
  %6295 = vmatprep.subr.mxu0 0.0
  %6296 = vmatpush2.msra.mxu0 0.0
  %6297 = vmatprep.subr.mxu0 0.0
  %6298 = vmatpush2.msra.mxu0 0.0
  %6299 = vmatprep.subr.mxu0 0.0
  %6300 = vmatpush2.msra.mxu0 0.0
  %6301 = vmatprep.subr.mxu0 0.0
  %6302 = vmatpush2.msra.mxu0 0.0
  %6303 = vmatprep.subr.mxu0 0.0
  %6304 = vmatpush2.msra.mxu0 0.0
  %6305 = vmatprep.subr.mxu0 0.0
  %6306 = vmatpush2.msra.mxu0 0.0
  %6307 = vmatprep.subr.mxu0 0.0
  %6308 = vmatpush2.msra.mxu0 0.0
  %6309 = vmatprep.subr.mxu0 0.0
  %6310 = vmatpush2.msra.mxu0 0.0
  %6311 = vmatprep.mubr.f32.mxu0 0.0
  %6312 = vmatmul.mubr.f32.gmra.mxu0 %v6097
  %v6313 = vpop.f32.mrf.mxu0
  %v6314 = vadd.f32 %v6246, %v6313
  %v6315 = vpop.f32.mrf.mxu0
  %6316 = vdwg.mxu0
  %v6318 = vsel %vm317, %v6166, 0
  %v6321 = vsel %vm317, %v6240, 0
  %6323 = vmatprep.subr.mxu0 0.0
  %6324 = vmatpush1.xpose.msra.mxu0 0.0
  %6325 = vmatprep.subr.mxu0 0.0
  %6326 = vmatpush1.xpose.msra.mxu0 0.0
  %6327 = vmatprep.subr.mxu0 0.0
  %6328 = vmatpush1.xpose.msra.mxu0 0.0
  %6329 = vmatprep.subr.mxu0 0.0
  %6330 = vmatpush1.xpose.msra.mxu0 0.0
  %6331 = vmatprep.subr.mxu0 0.0
  %6332 = vmatpush1.xpose.msra.mxu0 0.0
  %6333 = vmatprep.subr.mxu0 0.0
  %6334 = vmatpush1.xpose.msra.mxu0 0.0
  %6335 = vmatprep.subr.mxu0 0.0
  %6336 = vmatpush1.xpose.msra.mxu0 0.0
  %6337 = vmatprep.subr.mxu0 0.0
  %6338 = vmatpush1.xpose.msra.mxu0 0.0
  %6339 = vmatprep.subr.mxu0 0.0
  %6340 = vmatpush1.xpose.msra.mxu0 0.0
  %6341 = vmatprep.subr.mxu0 0.0
  %6342 = vmatpush1.xpose.msra.mxu0 0.0
  %6343 = vmatprep.subr.mxu0 0.0
  %6344 = vmatpush1.xpose.msra.mxu0 0.0
  %6345 = vmatprep.subr.mxu0 0.0
  %6346 = vmatpush1.xpose.msra.mxu0 0.0
  %6347 = vmatprep.subr.mxu0 0.0
  %6348 = vmatpush1.xpose.msra.mxu0 0.0
  %6349 = vmatprep.subr.mxu0 0.0
  %6350 = vmatpush1.xpose.msra.mxu0 0.0
  %6351 = vmatprep.subr.mxu0 0.0
  %6352 = vmatpush1.xpose.msra.mxu0 0.0
  %6353 = vmatprep.subr.mxu0 0.0
  %6354 = vmatpush1.xpose.msra.mxu0 %v6321
  %6355 = vmatprep.subr.mxu0 0.0
  %6356 = vmatpush2.xpose.msra.mxu0 0.0
  %6357 = vmatprep.subr.mxu0 0.0
  %6358 = vmatpush2.xpose.msra.mxu0 0.0
  %6359 = vmatprep.subr.mxu0 0.0
  %6360 = vmatpush2.xpose.msra.mxu0 0.0
  %6361 = vmatprep.subr.mxu0 0.0
  %6362 = vmatpush2.xpose.msra.mxu0 0.0
  %6363 = vmatprep.subr.mxu0 0.0
  %6364 = vmatpush2.xpose.msra.mxu0 0.0
  %6365 = vmatprep.subr.mxu0 0.0
  %6366 = vmatpush2.xpose.msra.mxu0 0.0
  %6367 = vmatprep.subr.mxu0 0.0
  %6368 = vmatpush2.xpose.msra.mxu0 0.0
  %6369 = vmatprep.subr.mxu0 0.0
  %6370 = vmatpush2.xpose.msra.mxu0 0.0
  %6371 = vmatprep.subr.mxu0 0.0
  %6372 = vmatpush2.xpose.msra.mxu0 0.0
  %6373 = vmatprep.subr.mxu0 0.0
  %6374 = vmatpush2.xpose.msra.mxu0 0.0
  %6375 = vmatprep.subr.mxu0 0.0
  %6376 = vmatpush2.xpose.msra.mxu0 0.0
  %6377 = vmatprep.subr.mxu0 0.0
  %6378 = vmatpush2.xpose.msra.mxu0 0.0
  %6379 = vmatprep.subr.mxu0 0.0
  %6380 = vmatpush2.xpose.msra.mxu0 0.0
  %6381 = vmatprep.subr.mxu0 0.0
  %6382 = vmatpush2.xpose.msra.mxu0 0.0
  %6383 = vmatprep.subr.mxu0 0.0
  %6384 = vmatpush2.xpose.msra.mxu0 0.0
  %6385 = vmatprep.subr.mxu0 0.0
  %6386 = vmatpush2.xpose.msra.mxu0 0.0
  %6387 = vmatprep.mubr.f32.mxu0 0.0
  %6388 = vmatmul.mubr.f32.gmra.mxu0 %v6318
  %v6389 = vpop.f32.mrf.mxu0
  %v6390 = vadd.f32 %v2226, %v6389
  %v6391 = vpop.f32.mrf.mxu0
  %6392 = vdwg.mxu0
  %v6393 = vsel %vm317, %v6390, -inf
  %6394 = vmax.xlane.f32.xlu0 %v6393
  %v6395 = vpop.xlane.xlu0 %6394
  %v6396 = vsub.f32 %v6390, %v6395
  %v6397 = vmul.f32 %v6396, 1.442695
  %v6398 = vpow.pop %v6397
  %v6399 = vsel %vm317, %v6398, 0.0
  %6400 = vadd.xlane.f32.xlu0 %v6399
  %v6401 = vpop.xlane.xlu0 %6400
  %v6402 = vrcp.pop %v6401
  %v6403 = vmul.f32 %v6398, %v6402
  %v6405 = vsel %vm317, %v6403, 0
  %6407 = vmatprep.subr.mxu0 0.0
  %6408 = vmatpush1.msra.mxu0 0.0
  %6409 = vmatprep.subr.mxu0 0.0
  %6410 = vmatpush1.msra.mxu0 0.0
  %6411 = vmatprep.subr.mxu0 0.0
  %6412 = vmatpush1.msra.mxu0 0.0
  %6413 = vmatprep.subr.mxu0 0.0
  %6414 = vmatpush1.msra.mxu0 0.0
  %6415 = vmatprep.subr.mxu0 0.0
  %6416 = vmatpush1.msra.mxu0 0.0
  %6417 = vmatprep.subr.mxu0 0.0
  %6418 = vmatpush1.msra.mxu0 0.0
  %6419 = vmatprep.subr.mxu0 0.0
  %6420 = vmatpush1.msra.mxu0 0.0
  %6421 = vmatprep.subr.mxu0 0.0
  %6422 = vmatpush1.msra.mxu0 0.0
  %6423 = vmatprep.subr.mxu0 0.0
  %6424 = vmatpush1.msra.mxu0 0.0
  %6425 = vmatprep.subr.mxu0 0.0
  %6426 = vmatpush1.msra.mxu0 0.0
  %6427 = vmatprep.subr.mxu0 0.0
  %6428 = vmatpush1.msra.mxu0 0.0
  %6429 = vmatprep.subr.mxu0 0.0
  %6430 = vmatpush1.msra.mxu0 0.0
  %6431 = vmatprep.subr.mxu0 0.0
  %6432 = vmatpush1.msra.mxu0 0.0
  %6433 = vmatprep.subr.mxu0 0.0
  %6434 = vmatpush1.msra.mxu0 0.0
  %6435 = vmatprep.subr.mxu0 0.0
  %6436 = vmatpush1.msra.mxu0 0.0
  %6437 = vmatprep.subr.mxu0 0.0
  %6438 = vmatpush1.msra.mxu0 %v6314
  %6439 = vmatprep.subr.mxu0 0.0
  %6440 = vmatpush2.msra.mxu0 0.0
  %6441 = vmatprep.subr.mxu0 0.0
  %6442 = vmatpush2.msra.mxu0 0.0
  %6443 = vmatprep.subr.mxu0 0.0
  %6444 = vmatpush2.msra.mxu0 0.0
  %6445 = vmatprep.subr.mxu0 0.0
  %6446 = vmatpush2.msra.mxu0 0.0
  %6447 = vmatprep.subr.mxu0 0.0
  %6448 = vmatpush2.msra.mxu0 0.0
  %6449 = vmatprep.subr.mxu0 0.0
  %6450 = vmatpush2.msra.mxu0 0.0
  %6451 = vmatprep.subr.mxu0 0.0
  %6452 = vmatpush2.msra.mxu0 0.0
  %6453 = vmatprep.subr.mxu0 0.0
  %6454 = vmatpush2.msra.mxu0 0.0
  %6455 = vmatprep.subr.mxu0 0.0
  %6456 = vmatpush2.msra.mxu0 0.0
  %6457 = vmatprep.subr.mxu0 0.0
  %6458 = vmatpush2.msra.mxu0 0.0
  %6459 = vmatprep.subr.mxu0 0.0
  %6460 = vmatpush2.msra.mxu0 0.0
  %6461 = vmatprep.subr.mxu0 0.0
  %6462 = vmatpush2.msra.mxu0 0.0
  %6463 = vmatprep.subr.mxu0 0.0
  %6464 = vmatpush2.msra.mxu0 0.0
  %6465 = vmatprep.subr.mxu0 0.0
  %6466 = vmatpush2.msra.mxu0 0.0
  %6467 = vmatprep.subr.mxu0 0.0
  %6468 = vmatpush2.msra.mxu0 0.0
  %6469 = vmatprep.subr.mxu0 0.0
  %6470 = vmatpush2.msra.mxu0 0.0
  %6471 = vmatprep.mubr.f32.mxu0 0.0
  %6472 = vmatmul.mubr.f32.gmra.mxu0 %v6405
  %v6473 = vpop.f32.mrf.mxu0
  %v6474 = vadd.f32 0.0, %v6473
  %v6475 = vpop.f32.mrf.mxu0
  %6476 = vdwg.mxu0
  %v6477 = vld [vmem:[%s3 + $0x60] sm:$0xff]
  %v6479 = vsel %vm317, %v6474, 0
  %6481 = vmatprep.subr.mxu0 0.0
  %6482 = vmatpush1.msra.mxu0 0.0
  %6483 = vmatprep.subr.mxu0 0.0
  %6484 = vmatpush1.msra.mxu0 0.0
  %6485 = vmatprep.subr.mxu0 0.0
  %6486 = vmatpush1.msra.mxu0 0.0
  %6487 = vmatprep.subr.mxu0 0.0
  %6488 = vmatpush1.msra.mxu0 0.0
  %6489 = vmatprep.subr.mxu0 0.0
  %6490 = vmatpush1.msra.mxu0 0.0
  %6491 = vmatprep.subr.mxu0 0.0
  %6492 = vmatpush1.msra.mxu0 0.0
  %6493 = vmatprep.subr.mxu0 0.0
  %6494 = vmatpush1.msra.mxu0 0.0
  %6495 = vmatprep.subr.mxu0 0.0
  %6496 = vmatpush1.msra.mxu0 0.0
  %6497 = vmatprep.subr.mxu0 0.0
  %6498 = vmatpush1.msra.mxu0 0.0
  %6499 = vmatprep.subr.mxu0 0.0
  %6500 = vmatpush1.msra.mxu0 0.0
  %6501 = vmatprep.subr.mxu0 0.0
  %6502 = vmatpush1.msra.mxu0 0.0
  %6503 = vmatprep.subr.mxu0 0.0
  %6504 = vmatpush1.msra.mxu0 0.0
  %6505 = vmatprep.subr.mxu0 0.0
  %6506 = vmatpush1.msra.mxu0 0.0
  %6507 = vmatprep.subr.mxu0 0.0
  %6508 = vmatpush1.msra.mxu0 0.0
  %6509 = vmatprep.subr.mxu0 0.0
  %6510 = vmatpush1.msra.mxu0 0.0
  %6511 = vmatprep.subr.mxu0 0.0
  %6512 = vmatpush1.msra.mxu0 %v6477
  %6513 = vmatprep.subr.mxu0 0.0
  %6514 = vmatpush2.msra.mxu0 0.0
  %6515 = vmatprep.subr.mxu0 0.0
  %6516 = vmatpush2.msra.mxu0 0.0
  %6517 = vmatprep.subr.mxu0 0.0
  %6518 = vmatpush2.msra.mxu0 0.0
  %6519 = vmatprep.subr.mxu0 0.0
  %6520 = vmatpush2.msra.mxu0 0.0
  %6521 = vmatprep.subr.mxu0 0.0
  %6522 = vmatpush2.msra.mxu0 0.0
  %6523 = vmatprep.subr.mxu0 0.0
  %6524 = vmatpush2.msra.mxu0 0.0
  %6525 = vmatprep.subr.mxu0 0.0
  %6526 = vmatpush2.msra.mxu0 0.0
  %6527 = vmatprep.subr.mxu0 0.0
  %6528 = vmatpush2.msra.mxu0 0.0
  %6529 = vmatprep.subr.mxu0 0.0
  %6530 = vmatpush2.msra.mxu0 0.0
  %6531 = vmatprep.subr.mxu0 0.0
  %6532 = vmatpush2.msra.mxu0 0.0
  %6533 = vmatprep.subr.mxu0 0.0
  %6534 = vmatpush2.msra.mxu0 0.0
  %6535 = vmatprep.subr.mxu0 0.0
  %6536 = vmatpush2.msra.mxu0 0.0
  %6537 = vmatprep.subr.mxu0 0.0
  %6538 = vmatpush2.msra.mxu0 0.0
  %6539 = vmatprep.subr.mxu0 0.0
  %6540 = vmatpush2.msra.mxu0 0.0
  %6541 = vmatprep.subr.mxu0 0.0
  %6542 = vmatpush2.msra.mxu0 0.0
  %6543 = vmatprep.subr.mxu0 0.0
  %6544 = vmatpush2.msra.mxu0 0.0
  %6545 = vmatprep.mubr.f32.mxu0 0.0
  %6546 = vmatmul.mubr.f32.gmra.mxu0 %v6479
  %v6547 = vpop.f32.mrf.mxu0
  %v6548 = vadd.f32 0.0, %v6547
  %v6549 = vpop.f32.mrf.mxu0
  %6550 = vdwg.mxu0
  %v6551 = vadd.f32 %v4649, %v6548
  %v6552 = vld [vmem:[%s4651] sm:$0xff]
  %v6553 = vld [vmem:[%s4651 + $0x8] sm:$0xff]
  %v6554 = vld [vmem:[%s4651 + $0x10] sm:$0xff]
  %v6555 = vld [vmem:[%s4651 + $0x18] sm:$0xff]
  %v6556 = vld [vmem:[%s4651 + $0x20] sm:$0x1]
  %v6557 = vld [vmem:[%s4657] sm:$0xff]
  %v6558 = vld [vmem:[%s4657 + $0x8] sm:$0xff]
  %v6559 = vld [vmem:[%s4657 + $0x10] sm:$0xff]
  %v6560 = vld [vmem:[%s4657 + $0x18] sm:$0xff]
  %v6561 = vld [vmem:[%s4657 + $0x20] sm:$0x1]
  %v6562 = vld [vmem:[%s4663] sm:$0xff]
  %v6563 = vld [vmem:[%s4663 + $0x8] sm:$0xff]
  %v6564 = vld [vmem:[%s4663 + $0x10] sm:$0xff]
  %v6565 = vld [vmem:[%s4663 + $0x18] sm:$0xff]
  %v6566 = vld [vmem:[%s4663 + $0x20] sm:$0x1]
  %v6567 = vlaneseq
  %v6568 = vshrl.u32 %v6567, 7
  %v6569 = vsub.s32 0, %v6568
  %v6570 = vrot.slane %v6556, %v6569
  %6571 = vmatprep.subr.mxu0 0.0
  %6572 = vmatpush1.msra.mxu0 0.0
  %6573 = vmatprep.subr.mxu0 0.0
  %6574 = vmatpush1.msra.mxu0 0.0
  %6575 = vmatprep.subr.mxu0 0.0
  %6576 = vmatpush1.msra.mxu0 0.0
  %6577 = vmatprep.subr.mxu0 0.0
  %6578 = vmatpush1.msra.mxu0 0.0
  %6579 = vmatprep.subr.mxu0 0.0
  %6580 = vmatpush1.msra.mxu0 0.0
  %6581 = vmatprep.subr.mxu0 0.0
  %6582 = vmatpush1.msra.mxu0 0.0
  %6583 = vmatprep.subr.mxu0 0.0
  %6584 = vmatpush1.msra.mxu0 0.0
  %6585 = vmatprep.subr.mxu0 0.0
  %6586 = vmatpush1.msra.mxu0 0.0
  %6587 = vmatprep.subr.mxu0 0.0
  %6588 = vmatpush1.msra.mxu0 0.0
  %6589 = vmatprep.subr.mxu0 0.0
  %6590 = vmatpush1.msra.mxu0 0.0
  %6591 = vmatprep.subr.mxu0 0.0
  %6592 = vmatpush1.msra.mxu0 0.0
  %6593 = vmatprep.subr.mxu0 0.0
  %6594 = vmatpush1.msra.mxu0 0.0
  %6595 = vmatprep.subr.mxu0 0.0
  %6596 = vmatpush1.msra.mxu0 %v6555
  %6597 = vmatprep.subr.mxu0 0.0
  %6598 = vmatpush1.msra.mxu0 %v6554
  %6599 = vmatprep.subr.mxu0 0.0
  %6600 = vmatpush1.msra.mxu0 %v6553
  %6601 = vmatprep.subr.mxu0 0.0
  %6602 = vmatpush1.msra.mxu0 %v6552
  %6603 = vmatprep.subr.mxu0 0.0
  %6604 = vmatpush2.msra.mxu0 0.0
  %6605 = vmatprep.subr.mxu0 0.0
  %6606 = vmatpush2.msra.mxu0 0.0
  %6607 = vmatprep.subr.mxu0 0.0
  %6608 = vmatpush2.msra.mxu0 0.0
  %6609 = vmatprep.subr.mxu0 0.0
  %6610 = vmatpush2.msra.mxu0 0.0
  %6611 = vmatprep.subr.mxu0 0.0
  %6612 = vmatpush2.msra.mxu0 0.0
  %6613 = vmatprep.subr.mxu0 0.0
  %6614 = vmatpush2.msra.mxu0 0.0
  %6615 = vmatprep.subr.mxu0 0.0
  %6616 = vmatpush2.msra.mxu0 0.0
  %6617 = vmatprep.subr.mxu0 0.0
  %6618 = vmatpush2.msra.mxu0 0.0
  %6619 = vmatprep.subr.mxu0 0.0
  %6620 = vmatpush2.msra.mxu0 0.0
  %6621 = vmatprep.subr.mxu0 0.0
  %6622 = vmatpush2.msra.mxu0 0.0
  %6623 = vmatprep.subr.mxu0 0.0
  %6624 = vmatpush2.msra.mxu0 0.0
  %6625 = vmatprep.subr.mxu0 0.0
  %6626 = vmatpush2.msra.mxu0 0.0
  %6627 = vmatprep.subr.mxu0 0.0
  %6628 = vmatpush2.msra.mxu0 0.0
  %6629 = vmatprep.subr.mxu0 0.0
  %6630 = vmatpush2.msra.mxu0 0.0
  %6631 = vmatprep.subr.mxu0 0.0
  %6632 = vmatpush2.msra.mxu0 0.0
  %6633 = vmatprep.subr.mxu0 0.0
  %6634 = vmatpush2.msra.mxu0 0.0
  %6635 = vmatprep.mubr.f32.mxu0 0.0
  %6636 = vmatmul.mubr.f32.gmra.mxu0 %v6097
  %v6637 = vpop.f32.mrf.mxu0
  %v6638 = vadd.f32 %v6570, %v6637
  %v6639 = vpop.f32.mrf.mxu0
  %6640 = vdwg.mxu0
  %v6641 = vlaneseq
  %v6642 = vshrl.u32 %v6641, 7
  %v6643 = vsub.s32 0, %v6642
  %v6644 = vrot.slane %v6561, %v6643
  %6645 = vmatprep.subr.mxu0 0.0
  %6646 = vmatpush1.msra.mxu0 0.0
  %6647 = vmatprep.subr.mxu0 0.0
  %6648 = vmatpush1.msra.mxu0 0.0
  %6649 = vmatprep.subr.mxu0 0.0
  %6650 = vmatpush1.msra.mxu0 0.0
  %6651 = vmatprep.subr.mxu0 0.0
  %6652 = vmatpush1.msra.mxu0 0.0
  %6653 = vmatprep.subr.mxu0 0.0
  %6654 = vmatpush1.msra.mxu0 0.0
  %6655 = vmatprep.subr.mxu0 0.0
  %6656 = vmatpush1.msra.mxu0 0.0
  %6657 = vmatprep.subr.mxu0 0.0
  %6658 = vmatpush1.msra.mxu0 0.0
  %6659 = vmatprep.subr.mxu0 0.0
  %6660 = vmatpush1.msra.mxu0 0.0
  %6661 = vmatprep.subr.mxu0 0.0
  %6662 = vmatpush1.msra.mxu0 0.0
  %6663 = vmatprep.subr.mxu0 0.0
  %6664 = vmatpush1.msra.mxu0 0.0
  %6665 = vmatprep.subr.mxu0 0.0
  %6666 = vmatpush1.msra.mxu0 0.0
  %6667 = vmatprep.subr.mxu0 0.0
  %6668 = vmatpush1.msra.mxu0 0.0
  %6669 = vmatprep.subr.mxu0 0.0
  %6670 = vmatpush1.msra.mxu0 %v6560
  %6671 = vmatprep.subr.mxu0 0.0
  %6672 = vmatpush1.msra.mxu0 %v6559
  %6673 = vmatprep.subr.mxu0 0.0
  %6674 = vmatpush1.msra.mxu0 %v6558
  %6675 = vmatprep.subr.mxu0 0.0
  %6676 = vmatpush1.msra.mxu0 %v6557
  %6677 = vmatprep.subr.mxu0 0.0
  %6678 = vmatpush2.msra.mxu0 0.0
  %6679 = vmatprep.subr.mxu0 0.0
  %6680 = vmatpush2.msra.mxu0 0.0
  %6681 = vmatprep.subr.mxu0 0.0
  %6682 = vmatpush2.msra.mxu0 0.0
  %6683 = vmatprep.subr.mxu0 0.0
  %6684 = vmatpush2.msra.mxu0 0.0
  %6685 = vmatprep.subr.mxu0 0.0
  %6686 = vmatpush2.msra.mxu0 0.0
  %6687 = vmatprep.subr.mxu0 0.0
  %6688 = vmatpush2.msra.mxu0 0.0
  %6689 = vmatprep.subr.mxu0 0.0
  %6690 = vmatpush2.msra.mxu0 0.0
  %6691 = vmatprep.subr.mxu0 0.0
  %6692 = vmatpush2.msra.mxu0 0.0
  %6693 = vmatprep.subr.mxu0 0.0
  %6694 = vmatpush2.msra.mxu0 0.0
  %6695 = vmatprep.subr.mxu0 0.0
  %6696 = vmatpush2.msra.mxu0 0.0
  %6697 = vmatprep.subr.mxu0 0.0
  %6698 = vmatpush2.msra.mxu0 0.0
  %6699 = vmatprep.subr.mxu0 0.0
  %6700 = vmatpush2.msra.mxu0 0.0
  %6701 = vmatprep.subr.mxu0 0.0
  %6702 = vmatpush2.msra.mxu0 0.0
  %6703 = vmatprep.subr.mxu0 0.0
  %6704 = vmatpush2.msra.mxu0 0.0
  %6705 = vmatprep.subr.mxu0 0.0
  %6706 = vmatpush2.msra.mxu0 0.0
  %6707 = vmatprep.subr.mxu0 0.0
  %6708 = vmatpush2.msra.mxu0 0.0
  %6709 = vmatprep.mubr.f32.mxu0 0.0
  %6710 = vmatmul.mubr.f32.gmra.mxu0 %v6097
  %v6711 = vpop.f32.mrf.mxu0
  %v6712 = vadd.f32 %v6644, %v6711
  %v6713 = vpop.f32.mrf.mxu0
  %6714 = vdwg.mxu0
  %v6715 = vlaneseq
  %v6716 = vshrl.u32 %v6715, 7
  %v6717 = vsub.s32 0, %v6716
  %v6718 = vrot.slane %v6566, %v6717
  %6719 = vmatprep.subr.mxu0 0.0
  %6720 = vmatpush1.msra.mxu0 0.0
  %6721 = vmatprep.subr.mxu0 0.0
  %6722 = vmatpush1.msra.mxu0 0.0
  %6723 = vmatprep.subr.mxu0 0.0
  %6724 = vmatpush1.msra.mxu0 0.0
  %6725 = vmatprep.subr.mxu0 0.0
  %6726 = vmatpush1.msra.mxu0 0.0
  %6727 = vmatprep.subr.mxu0 0.0
  %6728 = vmatpush1.msra.mxu0 0.0
  %6729 = vmatprep.subr.mxu0 0.0
  %6730 = vmatpush1.msra.mxu0 0.0
  %6731 = vmatprep.subr.mxu0 0.0
  %6732 = vmatpush1.msra.mxu0 0.0
  %6733 = vmatprep.subr.mxu0 0.0
  %6734 = vmatpush1.msra.mxu0 0.0
  %6735 = vmatprep.subr.mxu0 0.0
  %6736 = vmatpush1.msra.mxu0 0.0
  %6737 = vmatprep.subr.mxu0 0.0
  %6738 = vmatpush1.msra.mxu0 0.0
  %6739 = vmatprep.subr.mxu0 0.0
  %6740 = vmatpush1.msra.mxu0 0.0
  %6741 = vmatprep.subr.mxu0 0.0
  %6742 = vmatpush1.msra.mxu0 0.0
  %6743 = vmatprep.subr.mxu0 0.0
  %6744 = vmatpush1.msra.mxu0 %v6565
  %6745 = vmatprep.subr.mxu0 0.0
  %6746 = vmatpush1.msra.mxu0 %v6564
  %6747 = vmatprep.subr.mxu0 0.0
  %6748 = vmatpush1.msra.mxu0 %v6563
  %6749 = vmatprep.subr.mxu0 0.0
  %6750 = vmatpush1.msra.mxu0 %v6562
  %6751 = vmatprep.subr.mxu0 0.0
  %6752 = vmatpush2.msra.mxu0 0.0
  %6753 = vmatprep.subr.mxu0 0.0
  %6754 = vmatpush2.msra.mxu0 0.0
  %6755 = vmatprep.subr.mxu0 0.0
  %6756 = vmatpush2.msra.mxu0 0.0
  %6757 = vmatprep.subr.mxu0 0.0
  %6758 = vmatpush2.msra.mxu0 0.0
  %6759 = vmatprep.subr.mxu0 0.0
  %6760 = vmatpush2.msra.mxu0 0.0
  %6761 = vmatprep.subr.mxu0 0.0
  %6762 = vmatpush2.msra.mxu0 0.0
  %6763 = vmatprep.subr.mxu0 0.0
  %6764 = vmatpush2.msra.mxu0 0.0
  %6765 = vmatprep.subr.mxu0 0.0
  %6766 = vmatpush2.msra.mxu0 0.0
  %6767 = vmatprep.subr.mxu0 0.0
  %6768 = vmatpush2.msra.mxu0 0.0
  %6769 = vmatprep.subr.mxu0 0.0
  %6770 = vmatpush2.msra.mxu0 0.0
  %6771 = vmatprep.subr.mxu0 0.0
  %6772 = vmatpush2.msra.mxu0 0.0
  %6773 = vmatprep.subr.mxu0 0.0
  %6774 = vmatpush2.msra.mxu0 0.0
  %6775 = vmatprep.subr.mxu0 0.0
  %6776 = vmatpush2.msra.mxu0 0.0
  %6777 = vmatprep.subr.mxu0 0.0
  %6778 = vmatpush2.msra.mxu0 0.0
  %6779 = vmatprep.subr.mxu0 0.0
  %6780 = vmatpush2.msra.mxu0 0.0
  %6781 = vmatprep.subr.mxu0 0.0
  %6782 = vmatpush2.msra.mxu0 0.0
  %6783 = vmatprep.mubr.f32.mxu0 0.0
  %6784 = vmatmul.mubr.f32.gmra.mxu0 %v6097
  %v6785 = vpop.f32.mrf.mxu0
  %v6786 = vadd.f32 %v6718, %v6785
  %v6787 = vpop.f32.mrf.mxu0
  %6788 = vdwg.mxu0
  %v6790 = vsel %vm317, %v6638, 0
  %v6793 = vsel %vm317, %v6712, 0
  %6795 = vmatprep.subr.mxu0 0.0
  %6796 = vmatpush1.xpose.msra.mxu0 0.0
  %6797 = vmatprep.subr.mxu0 0.0
  %6798 = vmatpush1.xpose.msra.mxu0 0.0
  %6799 = vmatprep.subr.mxu0 0.0
  %6800 = vmatpush1.xpose.msra.mxu0 0.0
  %6801 = vmatprep.subr.mxu0 0.0
  %6802 = vmatpush1.xpose.msra.mxu0 0.0
  %6803 = vmatprep.subr.mxu0 0.0
  %6804 = vmatpush1.xpose.msra.mxu0 0.0
  %6805 = vmatprep.subr.mxu0 0.0
  %6806 = vmatpush1.xpose.msra.mxu0 0.0
  %6807 = vmatprep.subr.mxu0 0.0
  %6808 = vmatpush1.xpose.msra.mxu0 0.0
  %6809 = vmatprep.subr.mxu0 0.0
  %6810 = vmatpush1.xpose.msra.mxu0 0.0
  %6811 = vmatprep.subr.mxu0 0.0
  %6812 = vmatpush1.xpose.msra.mxu0 0.0
  %6813 = vmatprep.subr.mxu0 0.0
  %6814 = vmatpush1.xpose.msra.mxu0 0.0
  %6815 = vmatprep.subr.mxu0 0.0
  %6816 = vmatpush1.xpose.msra.mxu0 0.0
  %6817 = vmatprep.subr.mxu0 0.0
  %6818 = vmatpush1.xpose.msra.mxu0 0.0
  %6819 = vmatprep.subr.mxu0 0.0
  %6820 = vmatpush1.xpose.msra.mxu0 0.0
  %6821 = vmatprep.subr.mxu0 0.0
  %6822 = vmatpush1.xpose.msra.mxu0 0.0
  %6823 = vmatprep.subr.mxu0 0.0
  %6824 = vmatpush1.xpose.msra.mxu0 0.0
  %6825 = vmatprep.subr.mxu0 0.0
  %6826 = vmatpush1.xpose.msra.mxu0 %v6793
  %6827 = vmatprep.subr.mxu0 0.0
  %6828 = vmatpush2.xpose.msra.mxu0 0.0
  %6829 = vmatprep.subr.mxu0 0.0
  %6830 = vmatpush2.xpose.msra.mxu0 0.0
  %6831 = vmatprep.subr.mxu0 0.0
  %6832 = vmatpush2.xpose.msra.mxu0 0.0
  %6833 = vmatprep.subr.mxu0 0.0
  %6834 = vmatpush2.xpose.msra.mxu0 0.0
  %6835 = vmatprep.subr.mxu0 0.0
  %6836 = vmatpush2.xpose.msra.mxu0 0.0
  %6837 = vmatprep.subr.mxu0 0.0
  %6838 = vmatpush2.xpose.msra.mxu0 0.0
  %6839 = vmatprep.subr.mxu0 0.0
  %6840 = vmatpush2.xpose.msra.mxu0 0.0
  %6841 = vmatprep.subr.mxu0 0.0
  %6842 = vmatpush2.xpose.msra.mxu0 0.0
  %6843 = vmatprep.subr.mxu0 0.0
  %6844 = vmatpush2.xpose.msra.mxu0 0.0
  %6845 = vmatprep.subr.mxu0 0.0
  %6846 = vmatpush2.xpose.msra.mxu0 0.0
  %6847 = vmatprep.subr.mxu0 0.0
  %6848 = vmatpush2.xpose.msra.mxu0 0.0
  %6849 = vmatprep.subr.mxu0 0.0
  %6850 = vmatpush2.xpose.msra.mxu0 0.0
  %6851 = vmatprep.subr.mxu0 0.0
  %6852 = vmatpush2.xpose.msra.mxu0 0.0
  %6853 = vmatprep.subr.mxu0 0.0
  %6854 = vmatpush2.xpose.msra.mxu0 0.0
  %6855 = vmatprep.subr.mxu0 0.0
  %6856 = vmatpush2.xpose.msra.mxu0 0.0
  %6857 = vmatprep.subr.mxu0 0.0
  %6858 = vmatpush2.xpose.msra.mxu0 0.0
  %6859 = vmatprep.mubr.f32.mxu0 0.0
  %6860 = vmatmul.mubr.f32.gmra.mxu0 %v6790
  %v6861 = vpop.f32.mrf.mxu0
  %v6862 = vadd.f32 %v2226, %v6861
  %v6863 = vpop.f32.mrf.mxu0
  %6864 = vdwg.mxu0
  %v6865 = vsel %vm317, %v6862, -inf
  %6866 = vmax.xlane.f32.xlu0 %v6865
  %v6867 = vpop.xlane.xlu0 %6866
  %v6868 = vsub.f32 %v6862, %v6867
  %v6869 = vmul.f32 %v6868, 1.442695
  %v6870 = vpow.pop %v6869
  %v6871 = vsel %vm317, %v6870, 0.0
  %6872 = vadd.xlane.f32.xlu0 %v6871
  %v6873 = vpop.xlane.xlu0 %6872
  %v6874 = vrcp.pop %v6873
  %v6875 = vmul.f32 %v6870, %v6874
  %v6877 = vsel %vm317, %v6875, 0
  %6879 = vmatprep.subr.mxu0 0.0
  %6880 = vmatpush1.msra.mxu0 0.0
  %6881 = vmatprep.subr.mxu0 0.0
  %6882 = vmatpush1.msra.mxu0 0.0
  %6883 = vmatprep.subr.mxu0 0.0
  %6884 = vmatpush1.msra.mxu0 0.0
  %6885 = vmatprep.subr.mxu0 0.0
  %6886 = vmatpush1.msra.mxu0 0.0
  %6887 = vmatprep.subr.mxu0 0.0
  %6888 = vmatpush1.msra.mxu0 0.0
  %6889 = vmatprep.subr.mxu0 0.0
  %6890 = vmatpush1.msra.mxu0 0.0
  %6891 = vmatprep.subr.mxu0 0.0
  %6892 = vmatpush1.msra.mxu0 0.0
  %6893 = vmatprep.subr.mxu0 0.0
  %6894 = vmatpush1.msra.mxu0 0.0
  %6895 = vmatprep.subr.mxu0 0.0
  %6896 = vmatpush1.msra.mxu0 0.0
  %6897 = vmatprep.subr.mxu0 0.0
  %6898 = vmatpush1.msra.mxu0 0.0
  %6899 = vmatprep.subr.mxu0 0.0
  %6900 = vmatpush1.msra.mxu0 0.0
  %6901 = vmatprep.subr.mxu0 0.0
  %6902 = vmatpush1.msra.mxu0 0.0
  %6903 = vmatprep.subr.mxu0 0.0
  %6904 = vmatpush1.msra.mxu0 0.0
  %6905 = vmatprep.subr.mxu0 0.0
  %6906 = vmatpush1.msra.mxu0 0.0
  %6907 = vmatprep.subr.mxu0 0.0
  %6908 = vmatpush1.msra.mxu0 0.0
  %6909 = vmatprep.subr.mxu0 0.0
  %6910 = vmatpush1.msra.mxu0 %v6786
  %6911 = vmatprep.subr.mxu0 0.0
  %6912 = vmatpush2.msra.mxu0 0.0
  %6913 = vmatprep.subr.mxu0 0.0
  %6914 = vmatpush2.msra.mxu0 0.0
  %6915 = vmatprep.subr.mxu0 0.0
  %6916 = vmatpush2.msra.mxu0 0.0
  %6917 = vmatprep.subr.mxu0 0.0
  %6918 = vmatpush2.msra.mxu0 0.0
  %6919 = vmatprep.subr.mxu0 0.0
  %6920 = vmatpush2.msra.mxu0 0.0
  %6921 = vmatprep.subr.mxu0 0.0
  %6922 = vmatpush2.msra.mxu0 0.0
  %6923 = vmatprep.subr.mxu0 0.0
  %6924 = vmatpush2.msra.mxu0 0.0
  %6925 = vmatprep.subr.mxu0 0.0
  %6926 = vmatpush2.msra.mxu0 0.0
  %6927 = vmatprep.subr.mxu0 0.0
  %6928 = vmatpush2.msra.mxu0 0.0
  %6929 = vmatprep.subr.mxu0 0.0
  %6930 = vmatpush2.msra.mxu0 0.0
  %6931 = vmatprep.subr.mxu0 0.0
  %6932 = vmatpush2.msra.mxu0 0.0
  %6933 = vmatprep.subr.mxu0 0.0
  %6934 = vmatpush2.msra.mxu0 0.0
  %6935 = vmatprep.subr.mxu0 0.0
  %6936 = vmatpush2.msra.mxu0 0.0
  %6937 = vmatprep.subr.mxu0 0.0
  %6938 = vmatpush2.msra.mxu0 0.0
  %6939 = vmatprep.subr.mxu0 0.0
  %6940 = vmatpush2.msra.mxu0 0.0
  %6941 = vmatprep.subr.mxu0 0.0
  %6942 = vmatpush2.msra.mxu0 0.0
  %6943 = vmatprep.mubr.f32.mxu0 0.0
  %6944 = vmatmul.mubr.f32.gmra.mxu0 %v6877
  %v6945 = vpop.f32.mrf.mxu0
  %v6946 = vadd.f32 0.0, %v6945
  %v6947 = vpop.f32.mrf.mxu0
  %6948 = vdwg.mxu0
  %v6949 = vld [vmem:[%s3 + $0x68] sm:$0xff]
  %v6951 = vsel %vm317, %v6946, 0
  %6953 = vmatprep.subr.mxu0 0.0
  %6954 = vmatpush1.msra.mxu0 0.0
  %6955 = vmatprep.subr.mxu0 0.0
  %6956 = vmatpush1.msra.mxu0 0.0
  %6957 = vmatprep.subr.mxu0 0.0
  %6958 = vmatpush1.msra.mxu0 0.0
  %6959 = vmatprep.subr.mxu0 0.0
  %6960 = vmatpush1.msra.mxu0 0.0
  %6961 = vmatprep.subr.mxu0 0.0
  %6962 = vmatpush1.msra.mxu0 0.0
  %6963 = vmatprep.subr.mxu0 0.0
  %6964 = vmatpush1.msra.mxu0 0.0
  %6965 = vmatprep.subr.mxu0 0.0
  %6966 = vmatpush1.msra.mxu0 0.0
  %6967 = vmatprep.subr.mxu0 0.0
  %6968 = vmatpush1.msra.mxu0 0.0
  %6969 = vmatprep.subr.mxu0 0.0
  %6970 = vmatpush1.msra.mxu0 0.0
  %6971 = vmatprep.subr.mxu0 0.0
  %6972 = vmatpush1.msra.mxu0 0.0
  %6973 = vmatprep.subr.mxu0 0.0
  %6974 = vmatpush1.msra.mxu0 0.0
  %6975 = vmatprep.subr.mxu0 0.0
  %6976 = vmatpush1.msra.mxu0 0.0
  %6977 = vmatprep.subr.mxu0 0.0
  %6978 = vmatpush1.msra.mxu0 0.0
  %6979 = vmatprep.subr.mxu0 0.0
  %6980 = vmatpush1.msra.mxu0 0.0
  %6981 = vmatprep.subr.mxu0 0.0
  %6982 = vmatpush1.msra.mxu0 0.0
  %6983 = vmatprep.subr.mxu0 0.0
  %6984 = vmatpush1.msra.mxu0 %v6949
  %6985 = vmatprep.subr.mxu0 0.0
  %6986 = vmatpush2.msra.mxu0 0.0
  %6987 = vmatprep.subr.mxu0 0.0
  %6988 = vmatpush2.msra.mxu0 0.0
  %6989 = vmatprep.subr.mxu0 0.0
  %6990 = vmatpush2.msra.mxu0 0.0
  %6991 = vmatprep.subr.mxu0 0.0
  %6992 = vmatpush2.msra.mxu0 0.0
  %6993 = vmatprep.subr.mxu0 0.0
  %6994 = vmatpush2.msra.mxu0 0.0
  %6995 = vmatprep.subr.mxu0 0.0
  %6996 = vmatpush2.msra.mxu0 0.0
  %6997 = vmatprep.subr.mxu0 0.0
  %6998 = vmatpush2.msra.mxu0 0.0
  %6999 = vmatprep.subr.mxu0 0.0
  %7000 = vmatpush2.msra.mxu0 0.0
  %7001 = vmatprep.subr.mxu0 0.0
  %7002 = vmatpush2.msra.mxu0 0.0
  %7003 = vmatprep.subr.mxu0 0.0
  %7004 = vmatpush2.msra.mxu0 0.0
  %7005 = vmatprep.subr.mxu0 0.0
  %7006 = vmatpush2.msra.mxu0 0.0
  %7007 = vmatprep.subr.mxu0 0.0
  %7008 = vmatpush2.msra.mxu0 0.0
  %7009 = vmatprep.subr.mxu0 0.0
  %7010 = vmatpush2.msra.mxu0 0.0
  %7011 = vmatprep.subr.mxu0 0.0
  %7012 = vmatpush2.msra.mxu0 0.0
  %7013 = vmatprep.subr.mxu0 0.0
  %7014 = vmatpush2.msra.mxu0 0.0
  %7015 = vmatprep.subr.mxu0 0.0
  %7016 = vmatpush2.msra.mxu0 0.0
  %7017 = vmatprep.mubr.f32.mxu0 0.0
  %7018 = vmatmul.mubr.f32.gmra.mxu0 %v6951
  %v7019 = vpop.f32.mrf.mxu0
  %v7020 = vadd.f32 0.0, %v7019
  %v7021 = vpop.f32.mrf.mxu0
  %7022 = vdwg.mxu0
  %v7023 = vadd.f32 %v6551, %v7020
  %v7024 = vld [vmem:[%s5126] sm:$0xff]
  %v7025 = vld [vmem:[%s5126 + $0x8] sm:$0xff]
  %v7026 = vld [vmem:[%s5126 + $0x10] sm:$0xff]
  %v7027 = vld [vmem:[%s5126 + $0x18] sm:$0xff]
  %v7028 = vld [vmem:[%s5126 + $0x20] sm:$0x1]
  %v7029 = vld [vmem:[%s5132] sm:$0xff]
  %v7030 = vld [vmem:[%s5132 + $0x8] sm:$0xff]
  %v7031 = vld [vmem:[%s5132 + $0x10] sm:$0xff]
  %v7032 = vld [vmem:[%s5132 + $0x18] sm:$0xff]
  %v7033 = vld [vmem:[%s5132 + $0x20] sm:$0x1]
  %v7034 = vld [vmem:[%s5138] sm:$0xff]
  %v7035 = vld [vmem:[%s5138 + $0x8] sm:$0xff]
  %v7036 = vld [vmem:[%s5138 + $0x10] sm:$0xff]
  %v7037 = vld [vmem:[%s5138 + $0x18] sm:$0xff]
  %v7038 = vld [vmem:[%s5138 + $0x20] sm:$0x1]
  %v7039 = vlaneseq
  %v7040 = vshrl.u32 %v7039, 7
  %v7041 = vsub.s32 0, %v7040
  %v7042 = vrot.slane %v7028, %v7041
  %7043 = vmatprep.subr.mxu0 0.0
  %7044 = vmatpush1.msra.mxu0 0.0
  %7045 = vmatprep.subr.mxu0 0.0
  %7046 = vmatpush1.msra.mxu0 0.0
  %7047 = vmatprep.subr.mxu0 0.0
  %7048 = vmatpush1.msra.mxu0 0.0
  %7049 = vmatprep.subr.mxu0 0.0
  %7050 = vmatpush1.msra.mxu0 0.0
  %7051 = vmatprep.subr.mxu0 0.0
  %7052 = vmatpush1.msra.mxu0 0.0
  %7053 = vmatprep.subr.mxu0 0.0
  %7054 = vmatpush1.msra.mxu0 0.0
  %7055 = vmatprep.subr.mxu0 0.0
  %7056 = vmatpush1.msra.mxu0 0.0
  %7057 = vmatprep.subr.mxu0 0.0
  %7058 = vmatpush1.msra.mxu0 0.0
  %7059 = vmatprep.subr.mxu0 0.0
  %7060 = vmatpush1.msra.mxu0 0.0
  %7061 = vmatprep.subr.mxu0 0.0
  %7062 = vmatpush1.msra.mxu0 0.0
  %7063 = vmatprep.subr.mxu0 0.0
  %7064 = vmatpush1.msra.mxu0 0.0
  %7065 = vmatprep.subr.mxu0 0.0
  %7066 = vmatpush1.msra.mxu0 0.0
  %7067 = vmatprep.subr.mxu0 0.0
  %7068 = vmatpush1.msra.mxu0 %v7027
  %7069 = vmatprep.subr.mxu0 0.0
  %7070 = vmatpush1.msra.mxu0 %v7026
  %7071 = vmatprep.subr.mxu0 0.0
  %7072 = vmatpush1.msra.mxu0 %v7025
  %7073 = vmatprep.subr.mxu0 0.0
  %7074 = vmatpush1.msra.mxu0 %v7024
  %7075 = vmatprep.subr.mxu0 0.0
  %7076 = vmatpush2.msra.mxu0 0.0
  %7077 = vmatprep.subr.mxu0 0.0
  %7078 = vmatpush2.msra.mxu0 0.0
  %7079 = vmatprep.subr.mxu0 0.0
  %7080 = vmatpush2.msra.mxu0 0.0
  %7081 = vmatprep.subr.mxu0 0.0
  %7082 = vmatpush2.msra.mxu0 0.0
  %7083 = vmatprep.subr.mxu0 0.0
  %7084 = vmatpush2.msra.mxu0 0.0
  %7085 = vmatprep.subr.mxu0 0.0
  %7086 = vmatpush2.msra.mxu0 0.0
  %7087 = vmatprep.subr.mxu0 0.0
  %7088 = vmatpush2.msra.mxu0 0.0
  %7089 = vmatprep.subr.mxu0 0.0
  %7090 = vmatpush2.msra.mxu0 0.0
  %7091 = vmatprep.subr.mxu0 0.0
  %7092 = vmatpush2.msra.mxu0 0.0
  %7093 = vmatprep.subr.mxu0 0.0
  %7094 = vmatpush2.msra.mxu0 0.0
  %7095 = vmatprep.subr.mxu0 0.0
  %7096 = vmatpush2.msra.mxu0 0.0
  %7097 = vmatprep.subr.mxu0 0.0
  %7098 = vmatpush2.msra.mxu0 0.0
  %7099 = vmatprep.subr.mxu0 0.0
  %7100 = vmatpush2.msra.mxu0 0.0
  %7101 = vmatprep.subr.mxu0 0.0
  %7102 = vmatpush2.msra.mxu0 0.0
  %7103 = vmatprep.subr.mxu0 0.0
  %7104 = vmatpush2.msra.mxu0 0.0
  %7105 = vmatprep.subr.mxu0 0.0
  %7106 = vmatpush2.msra.mxu0 0.0
  %7107 = vmatprep.mubr.f32.mxu0 0.0
  %7108 = vmatmul.mubr.f32.gmra.mxu0 %v6097
  %v7109 = vpop.f32.mrf.mxu0
  %v7110 = vadd.f32 %v7042, %v7109
  %v7111 = vpop.f32.mrf.mxu0
  %7112 = vdwg.mxu0
  %v7113 = vlaneseq
  %v7114 = vshrl.u32 %v7113, 7
  %v7115 = vsub.s32 0, %v7114
  %v7116 = vrot.slane %v7033, %v7115
  %7117 = vmatprep.subr.mxu0 0.0
  %7118 = vmatpush1.msra.mxu0 0.0
  %7119 = vmatprep.subr.mxu0 0.0
  %7120 = vmatpush1.msra.mxu0 0.0
  %7121 = vmatprep.subr.mxu0 0.0
  %7122 = vmatpush1.msra.mxu0 0.0
  %7123 = vmatprep.subr.mxu0 0.0
  %7124 = vmatpush1.msra.mxu0 0.0
  %7125 = vmatprep.subr.mxu0 0.0
  %7126 = vmatpush1.msra.mxu0 0.0
  %7127 = vmatprep.subr.mxu0 0.0
  %7128 = vmatpush1.msra.mxu0 0.0
  %7129 = vmatprep.subr.mxu0 0.0
  %7130 = vmatpush1.msra.mxu0 0.0
  %7131 = vmatprep.subr.mxu0 0.0
  %7132 = vmatpush1.msra.mxu0 0.0
  %7133 = vmatprep.subr.mxu0 0.0
  %7134 = vmatpush1.msra.mxu0 0.0
  %7135 = vmatprep.subr.mxu0 0.0
  %7136 = vmatpush1.msra.mxu0 0.0
  %7137 = vmatprep.subr.mxu0 0.0
  %7138 = vmatpush1.msra.mxu0 0.0
  %7139 = vmatprep.subr.mxu0 0.0
  %7140 = vmatpush1.msra.mxu0 0.0
  %7141 = vmatprep.subr.mxu0 0.0
  %7142 = vmatpush1.msra.mxu0 %v7032
  %7143 = vmatprep.subr.mxu0 0.0
  %7144 = vmatpush1.msra.mxu0 %v7031
  %7145 = vmatprep.subr.mxu0 0.0
  %7146 = vmatpush1.msra.mxu0 %v7030
  %7147 = vmatprep.subr.mxu0 0.0
  %7148 = vmatpush1.msra.mxu0 %v7029
  %7149 = vmatprep.subr.mxu0 0.0
  %7150 = vmatpush2.msra.mxu0 0.0
  %7151 = vmatprep.subr.mxu0 0.0
  %7152 = vmatpush2.msra.mxu0 0.0
  %7153 = vmatprep.subr.mxu0 0.0
  %7154 = vmatpush2.msra.mxu0 0.0
  %7155 = vmatprep.subr.mxu0 0.0
  %7156 = vmatpush2.msra.mxu0 0.0
  %7157 = vmatprep.subr.mxu0 0.0
  %7158 = vmatpush2.msra.mxu0 0.0
  %7159 = vmatprep.subr.mxu0 0.0
  %7160 = vmatpush2.msra.mxu0 0.0
  %7161 = vmatprep.subr.mxu0 0.0
  %7162 = vmatpush2.msra.mxu0 0.0
  %7163 = vmatprep.subr.mxu0 0.0
  %7164 = vmatpush2.msra.mxu0 0.0
  %7165 = vmatprep.subr.mxu0 0.0
  %7166 = vmatpush2.msra.mxu0 0.0
  %7167 = vmatprep.subr.mxu0 0.0
  %7168 = vmatpush2.msra.mxu0 0.0
  %7169 = vmatprep.subr.mxu0 0.0
  %7170 = vmatpush2.msra.mxu0 0.0
  %7171 = vmatprep.subr.mxu0 0.0
  %7172 = vmatpush2.msra.mxu0 0.0
  %7173 = vmatprep.subr.mxu0 0.0
  %7174 = vmatpush2.msra.mxu0 0.0
  %7175 = vmatprep.subr.mxu0 0.0
  %7176 = vmatpush2.msra.mxu0 0.0
  %7177 = vmatprep.subr.mxu0 0.0
  %7178 = vmatpush2.msra.mxu0 0.0
  %7179 = vmatprep.subr.mxu0 0.0
  %7180 = vmatpush2.msra.mxu0 0.0
  %7181 = vmatprep.mubr.f32.mxu0 0.0
  %7182 = vmatmul.mubr.f32.gmra.mxu0 %v6097
  %v7183 = vpop.f32.mrf.mxu0
  %v7184 = vadd.f32 %v7116, %v7183
  %v7185 = vpop.f32.mrf.mxu0
  %7186 = vdwg.mxu0
  %v7187 = vlaneseq
  %v7188 = vshrl.u32 %v7187, 7
  %v7189 = vsub.s32 0, %v7188
  %v7190 = vrot.slane %v7038, %v7189
  %7191 = vmatprep.subr.mxu0 0.0
  %7192 = vmatpush1.msra.mxu0 0.0
  %7193 = vmatprep.subr.mxu0 0.0
  %7194 = vmatpush1.msra.mxu0 0.0
  %7195 = vmatprep.subr.mxu0 0.0
  %7196 = vmatpush1.msra.mxu0 0.0
  %7197 = vmatprep.subr.mxu0 0.0
  %7198 = vmatpush1.msra.mxu0 0.0
  %7199 = vmatprep.subr.mxu0 0.0
  %7200 = vmatpush1.msra.mxu0 0.0
  %7201 = vmatprep.subr.mxu0 0.0
  %7202 = vmatpush1.msra.mxu0 0.0
  %7203 = vmatprep.subr.mxu0 0.0
  %7204 = vmatpush1.msra.mxu0 0.0
  %7205 = vmatprep.subr.mxu0 0.0
  %7206 = vmatpush1.msra.mxu0 0.0
  %7207 = vmatprep.subr.mxu0 0.0
  %7208 = vmatpush1.msra.mxu0 0.0
  %7209 = vmatprep.subr.mxu0 0.0
  %7210 = vmatpush1.msra.mxu0 0.0
  %7211 = vmatprep.subr.mxu0 0.0
  %7212 = vmatpush1.msra.mxu0 0.0
  %7213 = vmatprep.subr.mxu0 0.0
  %7214 = vmatpush1.msra.mxu0 0.0
  %7215 = vmatprep.subr.mxu0 0.0
  %7216 = vmatpush1.msra.mxu0 %v7037
  %7217 = vmatprep.subr.mxu0 0.0
  %7218 = vmatpush1.msra.mxu0 %v7036
  %7219 = vmatprep.subr.mxu0 0.0
  %7220 = vmatpush1.msra.mxu0 %v7035
  %7221 = vmatprep.subr.mxu0 0.0
  %7222 = vmatpush1.msra.mxu0 %v7034
  %7223 = vmatprep.subr.mxu0 0.0
  %7224 = vmatpush2.msra.mxu0 0.0
  %7225 = vmatprep.subr.mxu0 0.0
  %7226 = vmatpush2.msra.mxu0 0.0
  %7227 = vmatprep.subr.mxu0 0.0
  %7228 = vmatpush2.msra.mxu0 0.0
  %7229 = vmatprep.subr.mxu0 0.0
  %7230 = vmatpush2.msra.mxu0 0.0
  %7231 = vmatprep.subr.mxu0 0.0
  %7232 = vmatpush2.msra.mxu0 0.0
  %7233 = vmatprep.subr.mxu0 0.0
  %7234 = vmatpush2.msra.mxu0 0.0
  %7235 = vmatprep.subr.mxu0 0.0
  %7236 = vmatpush2.msra.mxu0 0.0
  %7237 = vmatprep.subr.mxu0 0.0
  %7238 = vmatpush2.msra.mxu0 0.0
  %7239 = vmatprep.subr.mxu0 0.0
  %7240 = vmatpush2.msra.mxu0 0.0
  %7241 = vmatprep.subr.mxu0 0.0
  %7242 = vmatpush2.msra.mxu0 0.0
  %7243 = vmatprep.subr.mxu0 0.0
  %7244 = vmatpush2.msra.mxu0 0.0
  %7245 = vmatprep.subr.mxu0 0.0
  %7246 = vmatpush2.msra.mxu0 0.0
  %7247 = vmatprep.subr.mxu0 0.0
  %7248 = vmatpush2.msra.mxu0 0.0
  %7249 = vmatprep.subr.mxu0 0.0
  %7250 = vmatpush2.msra.mxu0 0.0
  %7251 = vmatprep.subr.mxu0 0.0
  %7252 = vmatpush2.msra.mxu0 0.0
  %7253 = vmatprep.subr.mxu0 0.0
  %7254 = vmatpush2.msra.mxu0 0.0
  %7255 = vmatprep.mubr.f32.mxu0 0.0
  %7256 = vmatmul.mubr.f32.gmra.mxu0 %v6097
  %v7257 = vpop.f32.mrf.mxu0
  %v7258 = vadd.f32 %v7190, %v7257
  %v7259 = vpop.f32.mrf.mxu0
  %7260 = vdwg.mxu0
  %v7262 = vsel %vm317, %v7110, 0
  %v7265 = vsel %vm317, %v7184, 0
  %7267 = vmatprep.subr.mxu0 0.0
  %7268 = vmatpush1.xpose.msra.mxu0 0.0
  %7269 = vmatprep.subr.mxu0 0.0
  %7270 = vmatpush1.xpose.msra.mxu0 0.0
  %7271 = vmatprep.subr.mxu0 0.0
  %7272 = vmatpush1.xpose.msra.mxu0 0.0
  %7273 = vmatprep.subr.mxu0 0.0
  %7274 = vmatpush1.xpose.msra.mxu0 0.0
  %7275 = vmatprep.subr.mxu0 0.0
  %7276 = vmatpush1.xpose.msra.mxu0 0.0
  %7277 = vmatprep.subr.mxu0 0.0
  %7278 = vmatpush1.xpose.msra.mxu0 0.0
  %7279 = vmatprep.subr.mxu0 0.0
  %7280 = vmatpush1.xpose.msra.mxu0 0.0
  %7281 = vmatprep.subr.mxu0 0.0
  %7282 = vmatpush1.xpose.msra.mxu0 0.0
  %7283 = vmatprep.subr.mxu0 0.0
  %7284 = vmatpush1.xpose.msra.mxu0 0.0
  %7285 = vmatprep.subr.mxu0 0.0
  %7286 = vmatpush1.xpose.msra.mxu0 0.0
  %7287 = vmatprep.subr.mxu0 0.0
  %7288 = vmatpush1.xpose.msra.mxu0 0.0
  %7289 = vmatprep.subr.mxu0 0.0
  %7290 = vmatpush1.xpose.msra.mxu0 0.0
  %7291 = vmatprep.subr.mxu0 0.0
  %7292 = vmatpush1.xpose.msra.mxu0 0.0
  %7293 = vmatprep.subr.mxu0 0.0
  %7294 = vmatpush1.xpose.msra.mxu0 0.0
  %7295 = vmatprep.subr.mxu0 0.0
  %7296 = vmatpush1.xpose.msra.mxu0 0.0
  %7297 = vmatprep.subr.mxu0 0.0
  %7298 = vmatpush1.xpose.msra.mxu0 %v7265
  %7299 = vmatprep.subr.mxu0 0.0
  %7300 = vmatpush2.xpose.msra.mxu0 0.0
  %7301 = vmatprep.subr.mxu0 0.0
  %7302 = vmatpush2.xpose.msra.mxu0 0.0
  %7303 = vmatprep.subr.mxu0 0.0
  %7304 = vmatpush2.xpose.msra.mxu0 0.0
  %7305 = vmatprep.subr.mxu0 0.0
  %7306 = vmatpush2.xpose.msra.mxu0 0.0
  %7307 = vmatprep.subr.mxu0 0.0
  %7308 = vmatpush2.xpose.msra.mxu0 0.0
  %7309 = vmatprep.subr.mxu0 0.0
  %7310 = vmatpush2.xpose.msra.mxu0 0.0
  %7311 = vmatprep.subr.mxu0 0.0
  %7312 = vmatpush2.xpose.msra.mxu0 0.0
  %7313 = vmatprep.subr.mxu0 0.0
  %7314 = vmatpush2.xpose.msra.mxu0 0.0
  %7315 = vmatprep.subr.mxu0 0.0
  %7316 = vmatpush2.xpose.msra.mxu0 0.0
  %7317 = vmatprep.subr.mxu0 0.0
  %7318 = vmatpush2.xpose.msra.mxu0 0.0
  %7319 = vmatprep.subr.mxu0 0.0
  %7320 = vmatpush2.xpose.msra.mxu0 0.0
  %7321 = vmatprep.subr.mxu0 0.0
  %7322 = vmatpush2.xpose.msra.mxu0 0.0
  %7323 = vmatprep.subr.mxu0 0.0
  %7324 = vmatpush2.xpose.msra.mxu0 0.0
  %7325 = vmatprep.subr.mxu0 0.0
  %7326 = vmatpush2.xpose.msra.mxu0 0.0
  %7327 = vmatprep.subr.mxu0 0.0
  %7328 = vmatpush2.xpose.msra.mxu0 0.0
  %7329 = vmatprep.subr.mxu0 0.0
  %7330 = vmatpush2.xpose.msra.mxu0 0.0
  %7331 = vmatprep.mubr.f32.mxu0 0.0
  %7332 = vmatmul.mubr.f32.gmra.mxu0 %v7262
  %v7333 = vpop.f32.mrf.mxu0
  %v7334 = vadd.f32 %v2226, %v7333
  %v7335 = vpop.f32.mrf.mxu0
  %7336 = vdwg.mxu0
  %v7337 = vsel %vm317, %v7334, -inf
  %7338 = vmax.xlane.f32.xlu0 %v7337
  %v7339 = vpop.xlane.xlu0 %7338
  %v7340 = vsub.f32 %v7334, %v7339
  %v7341 = vmul.f32 %v7340, 1.442695
  %v7342 = vpow.pop %v7341
  %v7343 = vsel %vm317, %v7342, 0.0
  %7344 = vadd.xlane.f32.xlu0 %v7343
  %v7345 = vpop.xlane.xlu0 %7344
  %v7346 = vrcp.pop %v7345
  %v7347 = vmul.f32 %v7342, %v7346
  %v7349 = vsel %vm317, %v7347, 0
  %7351 = vmatprep.subr.mxu0 0.0
  %7352 = vmatpush1.msra.mxu0 0.0
  %7353 = vmatprep.subr.mxu0 0.0
  %7354 = vmatpush1.msra.mxu0 0.0
  %7355 = vmatprep.subr.mxu0 0.0
  %7356 = vmatpush1.msra.mxu0 0.0
  %7357 = vmatprep.subr.mxu0 0.0
  %7358 = vmatpush1.msra.mxu0 0.0
  %7359 = vmatprep.subr.mxu0 0.0
  %7360 = vmatpush1.msra.mxu0 0.0
  %7361 = vmatprep.subr.mxu0 0.0
  %7362 = vmatpush1.msra.mxu0 0.0
  %7363 = vmatprep.subr.mxu0 0.0
  %7364 = vmatpush1.msra.mxu0 0.0
  %7365 = vmatprep.subr.mxu0 0.0
  %7366 = vmatpush1.msra.mxu0 0.0
  %7367 = vmatprep.subr.mxu0 0.0
  %7368 = vmatpush1.msra.mxu0 0.0
  %7369 = vmatprep.subr.mxu0 0.0
  %7370 = vmatpush1.msra.mxu0 0.0
  %7371 = vmatprep.subr.mxu0 0.0
  %7372 = vmatpush1.msra.mxu0 0.0
  %7373 = vmatprep.subr.mxu0 0.0
  %7374 = vmatpush1.msra.mxu0 0.0
  %7375 = vmatprep.subr.mxu0 0.0
  %7376 = vmatpush1.msra.mxu0 0.0
  %7377 = vmatprep.subr.mxu0 0.0
  %7378 = vmatpush1.msra.mxu0 0.0
  %7379 = vmatprep.subr.mxu0 0.0
  %7380 = vmatpush1.msra.mxu0 0.0
  %7381 = vmatprep.subr.mxu0 0.0
  %7382 = vmatpush1.msra.mxu0 %v7258
  %7383 = vmatprep.subr.mxu0 0.0
  %7384 = vmatpush2.msra.mxu0 0.0
  %7385 = vmatprep.subr.mxu0 0.0
  %7386 = vmatpush2.msra.mxu0 0.0
  %7387 = vmatprep.subr.mxu0 0.0
  %7388 = vmatpush2.msra.mxu0 0.0
  %7389 = vmatprep.subr.mxu0 0.0
  %7390 = vmatpush2.msra.mxu0 0.0
  %7391 = vmatprep.subr.mxu0 0.0
  %7392 = vmatpush2.msra.mxu0 0.0
  %7393 = vmatprep.subr.mxu0 0.0
  %7394 = vmatpush2.msra.mxu0 0.0
  %7395 = vmatprep.subr.mxu0 0.0
  %7396 = vmatpush2.msra.mxu0 0.0
  %7397 = vmatprep.subr.mxu0 0.0
  %7398 = vmatpush2.msra.mxu0 0.0
  %7399 = vmatprep.subr.mxu0 0.0
  %7400 = vmatpush2.msra.mxu0 0.0
  %7401 = vmatprep.subr.mxu0 0.0
  %7402 = vmatpush2.msra.mxu0 0.0
  %7403 = vmatprep.subr.mxu0 0.0
  %7404 = vmatpush2.msra.mxu0 0.0
  %7405 = vmatprep.subr.mxu0 0.0
  %7406 = vmatpush2.msra.mxu0 0.0
  %7407 = vmatprep.subr.mxu0 0.0
  %7408 = vmatpush2.msra.mxu0 0.0
  %7409 = vmatprep.subr.mxu0 0.0
  %7410 = vmatpush2.msra.mxu0 0.0
  %7411 = vmatprep.subr.mxu0 0.0
  %7412 = vmatpush2.msra.mxu0 0.0
  %7413 = vmatprep.subr.mxu0 0.0
  %7414 = vmatpush2.msra.mxu0 0.0
  %7415 = vmatprep.mubr.f32.mxu0 0.0
  %7416 = vmatmul.mubr.f32.gmra.mxu0 %v7349
  %v7417 = vpop.f32.mrf.mxu0
  %v7418 = vadd.f32 0.0, %v7417
  %v7419 = vpop.f32.mrf.mxu0
  %7420 = vdwg.mxu0
  %v7421 = vld [vmem:[%s3 + $0x70] sm:$0xff]
  %v7423 = vsel %vm317, %v7418, 0
  %7425 = vmatprep.subr.mxu0 0.0
  %7426 = vmatpush1.msra.mxu0 0.0
  %7427 = vmatprep.subr.mxu0 0.0
  %7428 = vmatpush1.msra.mxu0 0.0
  %7429 = vmatprep.subr.mxu0 0.0
  %7430 = vmatpush1.msra.mxu0 0.0
  %7431 = vmatprep.subr.mxu0 0.0
  %7432 = vmatpush1.msra.mxu0 0.0
  %7433 = vmatprep.subr.mxu0 0.0
  %7434 = vmatpush1.msra.mxu0 0.0
  %7435 = vmatprep.subr.mxu0 0.0
  %7436 = vmatpush1.msra.mxu0 0.0
  %7437 = vmatprep.subr.mxu0 0.0
  %7438 = vmatpush1.msra.mxu0 0.0
  %7439 = vmatprep.subr.mxu0 0.0
  %7440 = vmatpush1.msra.mxu0 0.0
  %7441 = vmatprep.subr.mxu0 0.0
  %7442 = vmatpush1.msra.mxu0 0.0
  %7443 = vmatprep.subr.mxu0 0.0
  %7444 = vmatpush1.msra.mxu0 0.0
  %7445 = vmatprep.subr.mxu0 0.0
  %7446 = vmatpush1.msra.mxu0 0.0
  %7447 = vmatprep.subr.mxu0 0.0
  %7448 = vmatpush1.msra.mxu0 0.0
  %7449 = vmatprep.subr.mxu0 0.0
  %7450 = vmatpush1.msra.mxu0 0.0
  %7451 = vmatprep.subr.mxu0 0.0
  %7452 = vmatpush1.msra.mxu0 0.0
  %7453 = vmatprep.subr.mxu0 0.0
  %7454 = vmatpush1.msra.mxu0 0.0
  %7455 = vmatprep.subr.mxu0 0.0
  %7456 = vmatpush1.msra.mxu0 %v7421
  %7457 = vmatprep.subr.mxu0 0.0
  %7458 = vmatpush2.msra.mxu0 0.0
  %7459 = vmatprep.subr.mxu0 0.0
  %7460 = vmatpush2.msra.mxu0 0.0
  %7461 = vmatprep.subr.mxu0 0.0
  %7462 = vmatpush2.msra.mxu0 0.0
  %7463 = vmatprep.subr.mxu0 0.0
  %7464 = vmatpush2.msra.mxu0 0.0
  %7465 = vmatprep.subr.mxu0 0.0
  %7466 = vmatpush2.msra.mxu0 0.0
  %7467 = vmatprep.subr.mxu0 0.0
  %7468 = vmatpush2.msra.mxu0 0.0
  %7469 = vmatprep.subr.mxu0 0.0
  %7470 = vmatpush2.msra.mxu0 0.0
  %7471 = vmatprep.subr.mxu0 0.0
  %7472 = vmatpush2.msra.mxu0 0.0
  %7473 = vmatprep.subr.mxu0 0.0
  %7474 = vmatpush2.msra.mxu0 0.0
  %7475 = vmatprep.subr.mxu0 0.0
  %7476 = vmatpush2.msra.mxu0 0.0
  %7477 = vmatprep.subr.mxu0 0.0
  %7478 = vmatpush2.msra.mxu0 0.0
  %7479 = vmatprep.subr.mxu0 0.0
  %7480 = vmatpush2.msra.mxu0 0.0
  %7481 = vmatprep.subr.mxu0 0.0
  %7482 = vmatpush2.msra.mxu0 0.0
  %7483 = vmatprep.subr.mxu0 0.0
  %7484 = vmatpush2.msra.mxu0 0.0
  %7485 = vmatprep.subr.mxu0 0.0
  %7486 = vmatpush2.msra.mxu0 0.0
  %7487 = vmatprep.subr.mxu0 0.0
  %7488 = vmatpush2.msra.mxu0 0.0
  %7489 = vmatprep.mubr.f32.mxu0 0.0
  %7490 = vmatmul.mubr.f32.gmra.mxu0 %v7423
  %v7491 = vpop.f32.mrf.mxu0
  %v7492 = vadd.f32 0.0, %v7491
  %v7493 = vpop.f32.mrf.mxu0
  %7494 = vdwg.mxu0
  %v7495 = vadd.f32 %v7023, %v7492
  %v7496 = vld [vmem:[%s5601] sm:$0xff]
  %v7497 = vld [vmem:[%s5601 + $0x8] sm:$0xff]
  %v7498 = vld [vmem:[%s5601 + $0x10] sm:$0xff]
  %v7499 = vld [vmem:[%s5601 + $0x18] sm:$0xff]
  %v7500 = vld [vmem:[%s5601 + $0x20] sm:$0x1]
  %v7501 = vld [vmem:[%s5607] sm:$0xff]
  %v7502 = vld [vmem:[%s5607 + $0x8] sm:$0xff]
  %v7503 = vld [vmem:[%s5607 + $0x10] sm:$0xff]
  %v7504 = vld [vmem:[%s5607 + $0x18] sm:$0xff]
  %v7505 = vld [vmem:[%s5607 + $0x20] sm:$0x1]
  %v7506 = vld [vmem:[%s5613] sm:$0xff]
  %v7507 = vld [vmem:[%s5613 + $0x8] sm:$0xff]
  %v7508 = vld [vmem:[%s5613 + $0x10] sm:$0xff]
  %v7509 = vld [vmem:[%s5613 + $0x18] sm:$0xff]
  %v7510 = vld [vmem:[%s5613 + $0x20] sm:$0x1]
  %v7511 = vlaneseq
  %v7512 = vshrl.u32 %v7511, 7
  %v7513 = vsub.s32 0, %v7512
  %v7514 = vrot.slane %v7500, %v7513
  %7515 = vmatprep.subr.mxu0 0.0
  %7516 = vmatpush1.msra.mxu0 0.0
  %7517 = vmatprep.subr.mxu0 0.0
  %7518 = vmatpush1.msra.mxu0 0.0
  %7519 = vmatprep.subr.mxu0 0.0
  %7520 = vmatpush1.msra.mxu0 0.0
  %7521 = vmatprep.subr.mxu0 0.0
  %7522 = vmatpush1.msra.mxu0 0.0
  %7523 = vmatprep.subr.mxu0 0.0
  %7524 = vmatpush1.msra.mxu0 0.0
  %7525 = vmatprep.subr.mxu0 0.0
  %7526 = vmatpush1.msra.mxu0 0.0
  %7527 = vmatprep.subr.mxu0 0.0
  %7528 = vmatpush1.msra.mxu0 0.0
  %7529 = vmatprep.subr.mxu0 0.0
  %7530 = vmatpush1.msra.mxu0 0.0
  %7531 = vmatprep.subr.mxu0 0.0
  %7532 = vmatpush1.msra.mxu0 0.0
  %7533 = vmatprep.subr.mxu0 0.0
  %7534 = vmatpush1.msra.mxu0 0.0
  %7535 = vmatprep.subr.mxu0 0.0
  %7536 = vmatpush1.msra.mxu0 0.0
  %7537 = vmatprep.subr.mxu0 0.0
  %7538 = vmatpush1.msra.mxu0 0.0
  %7539 = vmatprep.subr.mxu0 0.0
  %7540 = vmatpush1.msra.mxu0 %v7499
  %7541 = vmatprep.subr.mxu0 0.0
  %7542 = vmatpush1.msra.mxu0 %v7498
  %7543 = vmatprep.subr.mxu0 0.0
  %7544 = vmatpush1.msra.mxu0 %v7497
  %7545 = vmatprep.subr.mxu0 0.0
  %7546 = vmatpush1.msra.mxu0 %v7496
  %7547 = vmatprep.subr.mxu0 0.0
  %7548 = vmatpush2.msra.mxu0 0.0
  %7549 = vmatprep.subr.mxu0 0.0
  %7550 = vmatpush2.msra.mxu0 0.0
  %7551 = vmatprep.subr.mxu0 0.0
  %7552 = vmatpush2.msra.mxu0 0.0
  %7553 = vmatprep.subr.mxu0 0.0
  %7554 = vmatpush2.msra.mxu0 0.0
  %7555 = vmatprep.subr.mxu0 0.0
  %7556 = vmatpush2.msra.mxu0 0.0
  %7557 = vmatprep.subr.mxu0 0.0
  %7558 = vmatpush2.msra.mxu0 0.0
  %7559 = vmatprep.subr.mxu0 0.0
  %7560 = vmatpush2.msra.mxu0 0.0
  %7561 = vmatprep.subr.mxu0 0.0
  %7562 = vmatpush2.msra.mxu0 0.0
  %7563 = vmatprep.subr.mxu0 0.0
  %7564 = vmatpush2.msra.mxu0 0.0
  %7565 = vmatprep.subr.mxu0 0.0
  %7566 = vmatpush2.msra.mxu0 0.0
  %7567 = vmatprep.subr.mxu0 0.0
  %7568 = vmatpush2.msra.mxu0 0.0
  %7569 = vmatprep.subr.mxu0 0.0
  %7570 = vmatpush2.msra.mxu0 0.0
  %7571 = vmatprep.subr.mxu0 0.0
  %7572 = vmatpush2.msra.mxu0 0.0
  %7573 = vmatprep.subr.mxu0 0.0
  %7574 = vmatpush2.msra.mxu0 0.0
  %7575 = vmatprep.subr.mxu0 0.0
  %7576 = vmatpush2.msra.mxu0 0.0
  %7577 = vmatprep.subr.mxu0 0.0
  %7578 = vmatpush2.msra.mxu0 0.0
  %7579 = vmatprep.mubr.f32.mxu0 0.0
  %7580 = vmatmul.mubr.f32.gmra.mxu0 %v6097
  %v7581 = vpop.f32.mrf.mxu0
  %v7582 = vadd.f32 %v7514, %v7581
  %v7583 = vpop.f32.mrf.mxu0
  %7584 = vdwg.mxu0
  %v7585 = vlaneseq
  %v7586 = vshrl.u32 %v7585, 7
  %v7587 = vsub.s32 0, %v7586
  %v7588 = vrot.slane %v7505, %v7587
  %7589 = vmatprep.subr.mxu0 0.0
  %7590 = vmatpush1.msra.mxu0 0.0
  %7591 = vmatprep.subr.mxu0 0.0
  %7592 = vmatpush1.msra.mxu0 0.0
  %7593 = vmatprep.subr.mxu0 0.0
  %7594 = vmatpush1.msra.mxu0 0.0
  %7595 = vmatprep.subr.mxu0 0.0
  %7596 = vmatpush1.msra.mxu0 0.0
  %7597 = vmatprep.subr.mxu0 0.0
  %7598 = vmatpush1.msra.mxu0 0.0
  %7599 = vmatprep.subr.mxu0 0.0
  %7600 = vmatpush1.msra.mxu0 0.0
  %7601 = vmatprep.subr.mxu0 0.0
  %7602 = vmatpush1.msra.mxu0 0.0
  %7603 = vmatprep.subr.mxu0 0.0
  %7604 = vmatpush1.msra.mxu0 0.0
  %7605 = vmatprep.subr.mxu0 0.0
  %7606 = vmatpush1.msra.mxu0 0.0
  %7607 = vmatprep.subr.mxu0 0.0
  %7608 = vmatpush1.msra.mxu0 0.0
  %7609 = vmatprep.subr.mxu0 0.0
  %7610 = vmatpush1.msra.mxu0 0.0
  %7611 = vmatprep.subr.mxu0 0.0
  %7612 = vmatpush1.msra.mxu0 0.0
  %7613 = vmatprep.subr.mxu0 0.0
  %7614 = vmatpush1.msra.mxu0 %v7504
  %7615 = vmatprep.subr.mxu0 0.0
  %7616 = vmatpush1.msra.mxu0 %v7503
  %7617 = vmatprep.subr.mxu0 0.0
  %7618 = vmatpush1.msra.mxu0 %v7502
  %7619 = vmatprep.subr.mxu0 0.0
  %7620 = vmatpush1.msra.mxu0 %v7501
  %7621 = vmatprep.subr.mxu0 0.0
  %7622 = vmatpush2.msra.mxu0 0.0
  %7623 = vmatprep.subr.mxu0 0.0
  %7624 = vmatpush2.msra.mxu0 0.0
  %7625 = vmatprep.subr.mxu0 0.0
  %7626 = vmatpush2.msra.mxu0 0.0
  %7627 = vmatprep.subr.mxu0 0.0
  %7628 = vmatpush2.msra.mxu0 0.0
  %7629 = vmatprep.subr.mxu0 0.0
  %7630 = vmatpush2.msra.mxu0 0.0
  %7631 = vmatprep.subr.mxu0 0.0
  %7632 = vmatpush2.msra.mxu0 0.0
  %7633 = vmatprep.subr.mxu0 0.0
  %7634 = vmatpush2.msra.mxu0 0.0
  %7635 = vmatprep.subr.mxu0 0.0
  %7636 = vmatpush2.msra.mxu0 0.0
  %7637 = vmatprep.subr.mxu0 0.0
  %7638 = vmatpush2.msra.mxu0 0.0
  %7639 = vmatprep.subr.mxu0 0.0
  %7640 = vmatpush2.msra.mxu0 0.0
  %7641 = vmatprep.subr.mxu0 0.0
  %7642 = vmatpush2.msra.mxu0 0.0
  %7643 = vmatprep.subr.mxu0 0.0
  %7644 = vmatpush2.msra.mxu0 0.0
  %7645 = vmatprep.subr.mxu0 0.0
  %7646 = vmatpush2.msra.mxu0 0.0
  %7647 = vmatprep.subr.mxu0 0.0
  %7648 = vmatpush2.msra.mxu0 0.0
  %7649 = vmatprep.subr.mxu0 0.0
  %7650 = vmatpush2.msra.mxu0 0.0
  %7651 = vmatprep.subr.mxu0 0.0
  %7652 = vmatpush2.msra.mxu0 0.0
  %7653 = vmatprep.mubr.f32.mxu0 0.0
  %7654 = vmatmul.mubr.f32.gmra.mxu0 %v6097
  %v7655 = vpop.f32.mrf.mxu0
  %v7656 = vadd.f32 %v7588, %v7655
  %v7657 = vpop.f32.mrf.mxu0
  %7658 = vdwg.mxu0
  %v7659 = vlaneseq
  %v7660 = vshrl.u32 %v7659, 7
  %v7661 = vsub.s32 0, %v7660
  %v7662 = vrot.slane %v7510, %v7661
  %7663 = vmatprep.subr.mxu0 0.0
  %7664 = vmatpush1.msra.mxu0 0.0
  %7665 = vmatprep.subr.mxu0 0.0
  %7666 = vmatpush1.msra.mxu0 0.0
  %7667 = vmatprep.subr.mxu0 0.0
  %7668 = vmatpush1.msra.mxu0 0.0
  %7669 = vmatprep.subr.mxu0 0.0
  %7670 = vmatpush1.msra.mxu0 0.0
  %7671 = vmatprep.subr.mxu0 0.0
  %7672 = vmatpush1.msra.mxu0 0.0
  %7673 = vmatprep.subr.mxu0 0.0
  %7674 = vmatpush1.msra.mxu0 0.0
  %7675 = vmatprep.subr.mxu0 0.0
  %7676 = vmatpush1.msra.mxu0 0.0
  %7677 = vmatprep.subr.mxu0 0.0
  %7678 = vmatpush1.msra.mxu0 0.0
  %7679 = vmatprep.subr.mxu0 0.0
  %7680 = vmatpush1.msra.mxu0 0.0
  %7681 = vmatprep.subr.mxu0 0.0
  %7682 = vmatpush1.msra.mxu0 0.0
  %7683 = vmatprep.subr.mxu0 0.0
  %7684 = vmatpush1.msra.mxu0 0.0
  %7685 = vmatprep.subr.mxu0 0.0
  %7686 = vmatpush1.msra.mxu0 0.0
  %7687 = vmatprep.subr.mxu0 0.0
  %7688 = vmatpush1.msra.mxu0 %v7509
  %7689 = vmatprep.subr.mxu0 0.0
  %7690 = vmatpush1.msra.mxu0 %v7508
  %7691 = vmatprep.subr.mxu0 0.0
  %7692 = vmatpush1.msra.mxu0 %v7507
  %7693 = vmatprep.subr.mxu0 0.0
  %7694 = vmatpush1.msra.mxu0 %v7506
  %7695 = vmatprep.subr.mxu0 0.0
  %7696 = vmatpush2.msra.mxu0 0.0
  %7697 = vmatprep.subr.mxu0 0.0
  %7698 = vmatpush2.msra.mxu0 0.0
  %7699 = vmatprep.subr.mxu0 0.0
  %7700 = vmatpush2.msra.mxu0 0.0
  %7701 = vmatprep.subr.mxu0 0.0
  %7702 = vmatpush2.msra.mxu0 0.0
  %7703 = vmatprep.subr.mxu0 0.0
  %7704 = vmatpush2.msra.mxu0 0.0
  %7705 = vmatprep.subr.mxu0 0.0
  %7706 = vmatpush2.msra.mxu0 0.0
  %7707 = vmatprep.subr.mxu0 0.0
  %7708 = vmatpush2.msra.mxu0 0.0
  %7709 = vmatprep.subr.mxu0 0.0
  %7710 = vmatpush2.msra.mxu0 0.0
  %7711 = vmatprep.subr.mxu0 0.0
  %7712 = vmatpush2.msra.mxu0 0.0
  %7713 = vmatprep.subr.mxu0 0.0
  %7714 = vmatpush2.msra.mxu0 0.0
  %7715 = vmatprep.subr.mxu0 0.0
  %7716 = vmatpush2.msra.mxu0 0.0
  %7717 = vmatprep.subr.mxu0 0.0
  %7718 = vmatpush2.msra.mxu0 0.0
  %7719 = vmatprep.subr.mxu0 0.0
  %7720 = vmatpush2.msra.mxu0 0.0
  %7721 = vmatprep.subr.mxu0 0.0
  %7722 = vmatpush2.msra.mxu0 0.0
  %7723 = vmatprep.subr.mxu0 0.0
  %7724 = vmatpush2.msra.mxu0 0.0
  %7725 = vmatprep.subr.mxu0 0.0
  %7726 = vmatpush2.msra.mxu0 0.0
  %7727 = vmatprep.mubr.f32.mxu0 0.0
  %7728 = vmatmul.mubr.f32.gmra.mxu0 %v6097
  %v7729 = vpop.f32.mrf.mxu0
  %v7730 = vadd.f32 %v7662, %v7729
  %v7731 = vpop.f32.mrf.mxu0
  %7732 = vdwg.mxu0
  %v7734 = vsel %vm317, %v7582, 0
  %v7737 = vsel %vm317, %v7656, 0
  %7739 = vmatprep.subr.mxu0 0.0
  %7740 = vmatpush1.xpose.msra.mxu0 0.0
  %7741 = vmatprep.subr.mxu0 0.0
  %7742 = vmatpush1.xpose.msra.mxu0 0.0
  %7743 = vmatprep.subr.mxu0 0.0
  %7744 = vmatpush1.xpose.msra.mxu0 0.0
  %7745 = vmatprep.subr.mxu0 0.0
  %7746 = vmatpush1.xpose.msra.mxu0 0.0
  %7747 = vmatprep.subr.mxu0 0.0
  %7748 = vmatpush1.xpose.msra.mxu0 0.0
  %7749 = vmatprep.subr.mxu0 0.0
  %7750 = vmatpush1.xpose.msra.mxu0 0.0
  %7751 = vmatprep.subr.mxu0 0.0
  %7752 = vmatpush1.xpose.msra.mxu0 0.0
  %7753 = vmatprep.subr.mxu0 0.0
  %7754 = vmatpush1.xpose.msra.mxu0 0.0
  %7755 = vmatprep.subr.mxu0 0.0
  %7756 = vmatpush1.xpose.msra.mxu0 0.0
  %7757 = vmatprep.subr.mxu0 0.0
  %7758 = vmatpush1.xpose.msra.mxu0 0.0
  %7759 = vmatprep.subr.mxu0 0.0
  %7760 = vmatpush1.xpose.msra.mxu0 0.0
  %7761 = vmatprep.subr.mxu0 0.0
  %7762 = vmatpush1.xpose.msra.mxu0 0.0
  %7763 = vmatprep.subr.mxu0 0.0
  %7764 = vmatpush1.xpose.msra.mxu0 0.0
  %7765 = vmatprep.subr.mxu0 0.0
  %7766 = vmatpush1.xpose.msra.mxu0 0.0
  %7767 = vmatprep.subr.mxu0 0.0
  %7768 = vmatpush1.xpose.msra.mxu0 0.0
  %7769 = vmatprep.subr.mxu0 0.0
  %7770 = vmatpush1.xpose.msra.mxu0 %v7737
  %7771 = vmatprep.subr.mxu0 0.0
  %7772 = vmatpush2.xpose.msra.mxu0 0.0
  %7773 = vmatprep.subr.mxu0 0.0
  %7774 = vmatpush2.xpose.msra.mxu0 0.0
  %7775 = vmatprep.subr.mxu0 0.0
  %7776 = vmatpush2.xpose.msra.mxu0 0.0
  %7777 = vmatprep.subr.mxu0 0.0
  %7778 = vmatpush2.xpose.msra.mxu0 0.0
  %7779 = vmatprep.subr.mxu0 0.0
  %7780 = vmatpush2.xpose.msra.mxu0 0.0
  %7781 = vmatprep.subr.mxu0 0.0
  %7782 = vmatpush2.xpose.msra.mxu0 0.0
  %7783 = vmatprep.subr.mxu0 0.0
  %7784 = vmatpush2.xpose.msra.mxu0 0.0
  %7785 = vmatprep.subr.mxu0 0.0
  %7786 = vmatpush2.xpose.msra.mxu0 0.0
  %7787 = vmatprep.subr.mxu0 0.0
  %7788 = vmatpush2.xpose.msra.mxu0 0.0
  %7789 = vmatprep.subr.mxu0 0.0
  %7790 = vmatpush2.xpose.msra.mxu0 0.0
  %7791 = vmatprep.subr.mxu0 0.0
  %7792 = vmatpush2.xpose.msra.mxu0 0.0
  %7793 = vmatprep.subr.mxu0 0.0
  %7794 = vmatpush2.xpose.msra.mxu0 0.0
  %7795 = vmatprep.subr.mxu0 0.0
  %7796 = vmatpush2.xpose.msra.mxu0 0.0
  %7797 = vmatprep.subr.mxu0 0.0
  %7798 = vmatpush2.xpose.msra.mxu0 0.0
  %7799 = vmatprep.subr.mxu0 0.0
  %7800 = vmatpush2.xpose.msra.mxu0 0.0
  %7801 = vmatprep.subr.mxu0 0.0
  %7802 = vmatpush2.xpose.msra.mxu0 0.0
  %7803 = vmatprep.mubr.f32.mxu0 0.0
  %7804 = vmatmul.mubr.f32.gmra.mxu0 %v7734
  %v7805 = vpop.f32.mrf.mxu0
  %v7806 = vadd.f32 %v2226, %v7805
  %v7807 = vpop.f32.mrf.mxu0
  %7808 = vdwg.mxu0
  %v7809 = vsel %vm317, %v7806, -inf
  %7810 = vmax.xlane.f32.xlu0 %v7809
  %v7811 = vpop.xlane.xlu0 %7810
  %v7812 = vsub.f32 %v7806, %v7811
  %v7813 = vmul.f32 %v7812, 1.442695
  %v7814 = vpow.pop %v7813
  %v7815 = vsel %vm317, %v7814, 0.0
  %7816 = vadd.xlane.f32.xlu0 %v7815
  %v7817 = vpop.xlane.xlu0 %7816
  %v7818 = vrcp.pop %v7817
  %v7819 = vmul.f32 %v7814, %v7818
  %v7821 = vsel %vm317, %v7819, 0
  %7823 = vmatprep.subr.mxu0 0.0
  %7824 = vmatpush1.msra.mxu0 0.0
  %7825 = vmatprep.subr.mxu0 0.0
  %7826 = vmatpush1.msra.mxu0 0.0
  %7827 = vmatprep.subr.mxu0 0.0
  %7828 = vmatpush1.msra.mxu0 0.0
  %7829 = vmatprep.subr.mxu0 0.0
  %7830 = vmatpush1.msra.mxu0 0.0
  %7831 = vmatprep.subr.mxu0 0.0
  %7832 = vmatpush1.msra.mxu0 0.0
  %7833 = vmatprep.subr.mxu0 0.0
  %7834 = vmatpush1.msra.mxu0 0.0
  %7835 = vmatprep.subr.mxu0 0.0
  %7836 = vmatpush1.msra.mxu0 0.0
  %7837 = vmatprep.subr.mxu0 0.0
  %7838 = vmatpush1.msra.mxu0 0.0
  %7839 = vmatprep.subr.mxu0 0.0
  %7840 = vmatpush1.msra.mxu0 0.0
  %7841 = vmatprep.subr.mxu0 0.0
  %7842 = vmatpush1.msra.mxu0 0.0
  %7843 = vmatprep.subr.mxu0 0.0
  %7844 = vmatpush1.msra.mxu0 0.0
  %7845 = vmatprep.subr.mxu0 0.0
  %7846 = vmatpush1.msra.mxu0 0.0
  %7847 = vmatprep.subr.mxu0 0.0
  %7848 = vmatpush1.msra.mxu0 0.0
  %7849 = vmatprep.subr.mxu0 0.0
  %7850 = vmatpush1.msra.mxu0 0.0
  %7851 = vmatprep.subr.mxu0 0.0
  %7852 = vmatpush1.msra.mxu0 0.0
  %7853 = vmatprep.subr.mxu0 0.0
  %7854 = vmatpush1.msra.mxu0 %v7730
  %7855 = vmatprep.subr.mxu0 0.0
  %7856 = vmatpush2.msra.mxu0 0.0
  %7857 = vmatprep.subr.mxu0 0.0
  %7858 = vmatpush2.msra.mxu0 0.0
  %7859 = vmatprep.subr.mxu0 0.0
  %7860 = vmatpush2.msra.mxu0 0.0
  %7861 = vmatprep.subr.mxu0 0.0
  %7862 = vmatpush2.msra.mxu0 0.0
  %7863 = vmatprep.subr.mxu0 0.0
  %7864 = vmatpush2.msra.mxu0 0.0
  %7865 = vmatprep.subr.mxu0 0.0
  %7866 = vmatpush2.msra.mxu0 0.0
  %7867 = vmatprep.subr.mxu0 0.0
  %7868 = vmatpush2.msra.mxu0 0.0
  %7869 = vmatprep.subr.mxu0 0.0
  %7870 = vmatpush2.msra.mxu0 0.0
  %7871 = vmatprep.subr.mxu0 0.0
  %7872 = vmatpush2.msra.mxu0 0.0
  %7873 = vmatprep.subr.mxu0 0.0
  %7874 = vmatpush2.msra.mxu0 0.0
  %7875 = vmatprep.subr.mxu0 0.0
  %7876 = vmatpush2.msra.mxu0 0.0
  %7877 = vmatprep.subr.mxu0 0.0
  %7878 = vmatpush2.msra.mxu0 0.0
  %7879 = vmatprep.subr.mxu0 0.0
  %7880 = vmatpush2.msra.mxu0 0.0
  %7881 = vmatprep.subr.mxu0 0.0
  %7882 = vmatpush2.msra.mxu0 0.0
  %7883 = vmatprep.subr.mxu0 0.0
  %7884 = vmatpush2.msra.mxu0 0.0
  %7885 = vmatprep.subr.mxu0 0.0
  %7886 = vmatpush2.msra.mxu0 0.0
  %7887 = vmatprep.mubr.f32.mxu0 0.0
  %7888 = vmatmul.mubr.f32.gmra.mxu0 %v7821
  %v7889 = vpop.f32.mrf.mxu0
  %v7890 = vadd.f32 0.0, %v7889
  %v7891 = vpop.f32.mrf.mxu0
  %7892 = vdwg.mxu0
  %v7893 = vld [vmem:[%s3 + $0x78] sm:$0xff]
  %v7895 = vsel %vm317, %v7890, 0
  %7897 = vmatprep.subr.mxu0 0.0
  %7898 = vmatpush1.msra.mxu0 0.0
  %7899 = vmatprep.subr.mxu0 0.0
  %7900 = vmatpush1.msra.mxu0 0.0
  %7901 = vmatprep.subr.mxu0 0.0
  %7902 = vmatpush1.msra.mxu0 0.0
  %7903 = vmatprep.subr.mxu0 0.0
  %7904 = vmatpush1.msra.mxu0 0.0
  %7905 = vmatprep.subr.mxu0 0.0
  %7906 = vmatpush1.msra.mxu0 0.0
  %7907 = vmatprep.subr.mxu0 0.0
  %7908 = vmatpush1.msra.mxu0 0.0
  %7909 = vmatprep.subr.mxu0 0.0
  %7910 = vmatpush1.msra.mxu0 0.0
  %7911 = vmatprep.subr.mxu0 0.0
  %7912 = vmatpush1.msra.mxu0 0.0
  %7913 = vmatprep.subr.mxu0 0.0
  %7914 = vmatpush1.msra.mxu0 0.0
  %7915 = vmatprep.subr.mxu0 0.0
  %7916 = vmatpush1.msra.mxu0 0.0
  %7917 = vmatprep.subr.mxu0 0.0
  %7918 = vmatpush1.msra.mxu0 0.0
  %7919 = vmatprep.subr.mxu0 0.0
  %7920 = vmatpush1.msra.mxu0 0.0
  %7921 = vmatprep.subr.mxu0 0.0
  %7922 = vmatpush1.msra.mxu0 0.0
  %7923 = vmatprep.subr.mxu0 0.0
  %7924 = vmatpush1.msra.mxu0 0.0
  %7925 = vmatprep.subr.mxu0 0.0
  %7926 = vmatpush1.msra.mxu0 0.0
  %7927 = vmatprep.subr.mxu0 0.0
  %7928 = vmatpush1.msra.mxu0 %v7893
  %7929 = vmatprep.subr.mxu0 0.0
  %7930 = vmatpush2.msra.mxu0 0.0
  %7931 = vmatprep.subr.mxu0 0.0
  %7932 = vmatpush2.msra.mxu0 0.0
  %7933 = vmatprep.subr.mxu0 0.0
  %7934 = vmatpush2.msra.mxu0 0.0
  %7935 = vmatprep.subr.mxu0 0.0
  %7936 = vmatpush2.msra.mxu0 0.0
  %7937 = vmatprep.subr.mxu0 0.0
  %7938 = vmatpush2.msra.mxu0 0.0
  %7939 = vmatprep.subr.mxu0 0.0
  %7940 = vmatpush2.msra.mxu0 0.0
  %7941 = vmatprep.subr.mxu0 0.0
  %7942 = vmatpush2.msra.mxu0 0.0
  %7943 = vmatprep.subr.mxu0 0.0
  %7944 = vmatpush2.msra.mxu0 0.0
  %7945 = vmatprep.subr.mxu0 0.0
  %7946 = vmatpush2.msra.mxu0 0.0
  %7947 = vmatprep.subr.mxu0 0.0
  %7948 = vmatpush2.msra.mxu0 0.0
  %7949 = vmatprep.subr.mxu0 0.0
  %7950 = vmatpush2.msra.mxu0 0.0
  %7951 = vmatprep.subr.mxu0 0.0
  %7952 = vmatpush2.msra.mxu0 0.0
  %7953 = vmatprep.subr.mxu0 0.0
  %7954 = vmatpush2.msra.mxu0 0.0
  %7955 = vmatprep.subr.mxu0 0.0
  %7956 = vmatpush2.msra.mxu0 0.0
  %7957 = vmatprep.subr.mxu0 0.0
  %7958 = vmatpush2.msra.mxu0 0.0
  %7959 = vmatprep.subr.mxu0 0.0
  %7960 = vmatpush2.msra.mxu0 0.0
  %7961 = vmatprep.mubr.f32.mxu0 0.0
  %7962 = vmatmul.mubr.f32.gmra.mxu0 %v7895
  %v7963 = vpop.f32.mrf.mxu0
  %v7964 = vadd.f32 0.0, %v7963
  %v7965 = vpop.f32.mrf.mxu0
  %7966 = vdwg.mxu0
  %v7967 = vadd.f32 %v7495, %v7964
  %7968 = vst.msk [vmem:[#allocation2 + $0x8] sm:$0xff] %vm30, %v7967
  %v7969 = vld [vmem:[#allocation2] sm:$0xff]
  %v7970 = vld [vmem:[#allocation2 + $0x8] sm:$0xff]
  %v7971 = vadd.f32 %v7969, %v4166
  %v7972 = vadd.f32 %v7970, %v4167
  %v7973 = vld [vmem:[%s3 + $0xc9] sm:$0x1]
  %v7974 = vld [vmem:[%s3 + $0xca] sm:$0x1]
  %v7975 = vsel %vm30, %v7971, 0.0
  %7976 = vadd.xlane.f32.xlu0 %v7975
  %v7977 = vpop.xlane.xlu0 %7976
  %v7978 = vsel %vm30, %v7972, 0.0
  %7979 = vadd.xlane.f32.xlu0 %v7978
  %v7980 = vpop.xlane.xlu0 %7979
  %v7981 = vmul.f32 %v7977, %v37
  %v7982 = vmul.f32 %v7980, %v37
  %v7983 = vsub.f32 %v7971, %v7981
  %v7984 = vsub.f32 %v7972, %v7982
  %v7985 = vmul.f32 %v7983, %v7983
  %v7986 = vmul.f32 %v7984, %v7984
  %v7987 = vsel %vm30, %v7985, 0.0
  %7988 = vadd.xlane.f32.xlu0 %v7987
  %v7989 = vpop.xlane.xlu0 %7988
  %v7990 = vsel %vm30, %v7986, 0.0
  %7991 = vadd.xlane.f32.xlu0 %v7990
  %v7992 = vpop.xlane.xlu0 %7991
  %v7993 = vmul.f32 %v7989, %v37
  %v7994 = vmul.f32 %v7992, %v37
  %v7995 = vadd.f32 %v7993, 1e-12
  %v7996 = vadd.f32 %v7994, 1e-12
  %v7997 = vrsqrt.pop %v7995
  %v7998 = vrsqrt.pop %v7996
  %v7999 = vmul.f32 %v7983, %v7997
  %v8000 = vmul.f32 %v7984, %v7998
  %v8001 = vlaneseq
  %v8002 = vshrl.u32 %v8001, 7
  %v8003 = vsub.s32 0, %v8002
  %v8004 = vrot.slane %v7973, %v8003
  %v8005 = vmul.f32 %v7999, %v8004
  %v8006 = vmul.f32 %v8000, %v8004
  %v8007 = vlaneseq
  %v8008 = vshrl.u32 %v8007, 7
  %v8009 = vsub.s32 0, %v8008
  %v8010 = vrot.slane %v7974, %v8009
  %v8011 = vadd.f32 %v8005, %v8010
  %v8012 = vadd.f32 %v8006, %v8010
  %v8013 = vld [vmem:[%s4 + $0x20] sm:$0xff]
  %v8014 = vld [vmem:[%s4 + $0x28] sm:$0xff]
  %v8015 = vld [vmem:[%s4 + $0x30] sm:$0xff]
  %v8016 = vld [vmem:[%s4 + $0x38] sm:$0xff]
  %v8017 = vld [vmem:[%s4 + $0x41] sm:$0x1]
  %v8018 = vlaneseq
  %v8019 = vshrl.u32 %v8018, 7
  %v8020 = vsub.s32 0, %v8019
  %v8021 = vrot.slane %v8017, %v8020
  %v8023 = vsel %vm30, %v8011, 0
  %v8026 = vsel %vm30, %v8012, 0
  %8028 = vmatprep.subr.mxu0 0.0
  %8029 = vmatpush1.msra.mxu0 0.0
  %8030 = vmatprep.subr.mxu0 0.0
  %8031 = vmatpush1.msra.mxu0 0.0
  %8032 = vmatprep.subr.mxu0 0.0
  %8033 = vmatpush1.msra.mxu0 0.0
  %8034 = vmatprep.subr.mxu0 0.0
  %8035 = vmatpush1.msra.mxu0 0.0
  %8036 = vmatprep.subr.mxu0 0.0
  %8037 = vmatpush1.msra.mxu0 0.0
  %8038 = vmatprep.subr.mxu0 0.0
  %8039 = vmatpush1.msra.mxu0 0.0
  %8040 = vmatprep.subr.mxu0 0.0
  %8041 = vmatpush1.msra.mxu0 0.0
  %8042 = vmatprep.subr.mxu0 0.0
  %8043 = vmatpush1.msra.mxu0 0.0
  %8044 = vmatprep.subr.mxu0 0.0
  %8045 = vmatpush1.msra.mxu0 0.0
  %8046 = vmatprep.subr.mxu0 0.0
  %8047 = vmatpush1.msra.mxu0 0.0
  %8048 = vmatprep.subr.mxu0 0.0
  %8049 = vmatpush1.msra.mxu0 0.0
  %8050 = vmatprep.subr.mxu0 0.0
  %8051 = vmatpush1.msra.mxu0 0.0
  %8052 = vmatprep.subr.mxu0 0.0
  %8053 = vmatpush1.msra.mxu0 %v8016
  %8054 = vmatprep.subr.mxu0 0.0
  %8055 = vmatpush1.msra.mxu0 %v8015
  %8056 = vmatprep.subr.mxu0 0.0
  %8057 = vmatpush1.msra.mxu0 %v8014
  %8058 = vmatprep.subr.mxu0 0.0
  %8059 = vmatpush1.msra.mxu0 %v8013
  %8060 = vmatprep.subr.mxu0 0.0
  %8061 = vmatpush2.msra.mxu0 0.0
  %8062 = vmatprep.subr.mxu0 0.0
  %8063 = vmatpush2.msra.mxu0 0.0
  %8064 = vmatprep.subr.mxu0 0.0
  %8065 = vmatpush2.msra.mxu0 0.0
  %8066 = vmatprep.subr.mxu0 0.0
  %8067 = vmatpush2.msra.mxu0 0.0
  %8068 = vmatprep.subr.mxu0 0.0
  %8069 = vmatpush2.msra.mxu0 0.0
  %8070 = vmatprep.subr.mxu0 0.0
  %8071 = vmatpush2.msra.mxu0 0.0
  %8072 = vmatprep.subr.mxu0 0.0
  %8073 = vmatpush2.msra.mxu0 0.0
  %8074 = vmatprep.subr.mxu0 0.0
  %8075 = vmatpush2.msra.mxu0 0.0
  %8076 = vmatprep.subr.mxu0 0.0
  %8077 = vmatpush2.msra.mxu0 0.0
  %8078 = vmatprep.subr.mxu0 0.0
  %8079 = vmatpush2.msra.mxu0 0.0
  %8080 = vmatprep.subr.mxu0 0.0
  %8081 = vmatpush2.msra.mxu0 0.0
  %8082 = vmatprep.subr.mxu0 0.0
  %8083 = vmatpush2.msra.mxu0 0.0
  %8084 = vmatprep.subr.mxu0 0.0
  %8085 = vmatpush2.msra.mxu0 0.0
  %8086 = vmatprep.subr.mxu0 0.0
  %8087 = vmatpush2.msra.mxu0 0.0
  %8088 = vmatprep.subr.mxu0 0.0
  %8089 = vmatpush2.msra.mxu0 0.0
  %8090 = vmatprep.subr.mxu0 0.0
  %8091 = vmatpush2.msra.mxu0 0.0
  %8092 = vmatprep.mubr.f32.mxu0 0.0
  %8093 = vmatmul.mubr.f32.gmra.mxu0 %v8023
  %v8094 = vpop.f32.mrf.mxu0
  %v8095 = vadd.f32 %v8021, %v8094
  %v8096 = vpop.f32.mrf.mxu0
  %8097 = vmatprep.mubr.f32.mxu0 0.0
  %8098 = vmatmul.mubr.f32.gmra.mxu0 %v8026
  %v8099 = vpop.f32.mrf.mxu0
  %v8100 = vadd.f32 %v8021, %v8099
  %v8101 = vpop.f32.mrf.mxu0
  %8102 = vdwg.mxu0
  %v8103 = vmul.f32 %v8095, 0.5
  %v8104 = vmul.f32 %v8100, 0.5
  %v8105 = vmul.f32 %v8095, 0.044715
  %v8106 = vmul.f32 %v8100, 0.044715
  %v8107 = vmul.f32 %v8105, %v8095
  %v8108 = vmul.f32 %v8106, %v8100
  %v8109 = vmul.f32 %v8107, %v8095
  %v8110 = vmul.f32 %v8108, %v8100
  %v8111 = vadd.f32 %v8095, %v8109
  %v8112 = vadd.f32 %v8100, %v8110
  %v8113 = vmul.f32 %v8111, 0.7978846
  %v8114 = vmul.f32 %v8112, 0.7978846
  %v8115 = vtanh.pop %v8113
  %v8116 = vtanh.pop %v8114
  %v8117 = vadd.f32 %v8115, 1.0
  %v8118 = vadd.f32 %v8116, 1.0
  %v8119 = vmul.f32 %v8103, %v8117
  %v8120 = vmul.f32 %v8104, %v8118
  %v8121 = vld [vmem:[%s3 + $0x80] sm:$0xff]
  %v8122 = vld [vmem:[%s3 + $0x88] sm:$0xff]
  %v8123 = vld [vmem:[%s3 + $0x90] sm:$0xff]
  %v8124 = vld [vmem:[%s3 + $0x98] sm:$0xff]
  %v8125 = vld [vmem:[%s3 + $0xa0] sm:$0xff]
  %v8126 = vld [vmem:[%s3 + $0xa8] sm:$0xff]
  %v8127 = vld [vmem:[%s3 + $0xb0] sm:$0xff]
  %v8128 = vld [vmem:[%s3 + $0xb8] sm:$0xff]
  %v8129 = vld [vmem:[%s3 + $0xcb] sm:$0x1]
  %v8130 = vlaneseq
  %v8131 = vshrl.u32 %v8130, 7
  %v8132 = vsub.s32 0, %v8131
  %v8133 = vrot.slane %v8129, %v8132
  %v8135 = vsel %vm4044, %v8119, 0
  %v8138 = vsel %vm4044, %v8120, 0
  %8140 = vmatprep.subr.mxu0 0.0
  %8141 = vmatpush1.msra.mxu0 0.0
  %8142 = vmatprep.subr.mxu0 0.0
  %8143 = vmatpush1.msra.mxu0 0.0
  %8144 = vmatprep.subr.mxu0 0.0
  %8145 = vmatpush1.msra.mxu0 0.0
  %8146 = vmatprep.subr.mxu0 0.0
  %8147 = vmatpush1.msra.mxu0 0.0
  %8148 = vmatprep.subr.mxu0 0.0
  %8149 = vmatpush1.msra.mxu0 0.0
  %8150 = vmatprep.subr.mxu0 0.0
  %8151 = vmatpush1.msra.mxu0 0.0
  %8152 = vmatprep.subr.mxu0 0.0
  %8153 = vmatpush1.msra.mxu0 0.0
  %8154 = vmatprep.subr.mxu0 0.0
  %8155 = vmatpush1.msra.mxu0 0.0
  %8156 = vmatprep.subr.mxu0 0.0
  %8157 = vmatpush1.msra.mxu0 %v8128
  %8158 = vmatprep.subr.mxu0 0.0
  %8159 = vmatpush1.msra.mxu0 %v8127
  %8160 = vmatprep.subr.mxu0 0.0
  %8161 = vmatpush1.msra.mxu0 %v8126
  %8162 = vmatprep.subr.mxu0 0.0
  %8163 = vmatpush1.msra.mxu0 %v8125
  %8164 = vmatprep.subr.mxu0 0.0
  %8165 = vmatpush1.msra.mxu0 %v8124
  %8166 = vmatprep.subr.mxu0 0.0
  %8167 = vmatpush1.msra.mxu0 %v8123
  %8168 = vmatprep.subr.mxu0 0.0
  %8169 = vmatpush1.msra.mxu0 %v8122
  %8170 = vmatprep.subr.mxu0 0.0
  %8171 = vmatpush1.msra.mxu0 %v8121
  %8172 = vmatprep.subr.mxu0 0.0
  %8173 = vmatpush2.msra.mxu0 0.0
  %8174 = vmatprep.subr.mxu0 0.0
  %8175 = vmatpush2.msra.mxu0 0.0
  %8176 = vmatprep.subr.mxu0 0.0
  %8177 = vmatpush2.msra.mxu0 0.0
  %8178 = vmatprep.subr.mxu0 0.0
  %8179 = vmatpush2.msra.mxu0 0.0
  %8180 = vmatprep.subr.mxu0 0.0
  %8181 = vmatpush2.msra.mxu0 0.0
  %8182 = vmatprep.subr.mxu0 0.0
  %8183 = vmatpush2.msra.mxu0 0.0
  %8184 = vmatprep.subr.mxu0 0.0
  %8185 = vmatpush2.msra.mxu0 0.0
  %8186 = vmatprep.subr.mxu0 0.0
  %8187 = vmatpush2.msra.mxu0 0.0
  %8188 = vmatprep.subr.mxu0 0.0
  %8189 = vmatpush2.msra.mxu0 0.0
  %8190 = vmatprep.subr.mxu0 0.0
  %8191 = vmatpush2.msra.mxu0 0.0
  %8192 = vmatprep.subr.mxu0 0.0
  %8193 = vmatpush2.msra.mxu0 0.0
  %8194 = vmatprep.subr.mxu0 0.0
  %8195 = vmatpush2.msra.mxu0 0.0
  %8196 = vmatprep.subr.mxu0 0.0
  %8197 = vmatpush2.msra.mxu0 0.0
  %8198 = vmatprep.subr.mxu0 0.0
  %8199 = vmatpush2.msra.mxu0 0.0
  %8200 = vmatprep.subr.mxu0 0.0
  %8201 = vmatpush2.msra.mxu0 0.0
  %8202 = vmatprep.subr.mxu0 0.0
  %8203 = vmatpush2.msra.mxu0 0.0
  %8204 = vmatprep.mubr.f32.mxu0 0.0
  %8205 = vmatmul.mubr.f32.gmra.mxu0 %v8135
  %v8206 = vpop.f32.mrf.mxu0
  %v8207 = vadd.f32 %v8133, %v8206
  %v8208 = vpop.f32.mrf.mxu0
  %8209 = vmatprep.mubr.f32.mxu0 0.0
  %8210 = vmatmul.mubr.f32.gmra.mxu0 %v8138
  %v8211 = vpop.f32.mrf.mxu0
  %v8212 = vadd.f32 %v8133, %v8211
  %v8213 = vpop.f32.mrf.mxu0
  %8214 = vdwg.mxu0
  %v8215 = vadd.f32 %v8207, %v8011
  %v8216 = vadd.f32 %v8212, %v8012
  %v8217 = vld [vmem:[%s3 + $0xcc] sm:$0x1]
  %v8218 = vld [vmem:[%s3 + $0xcd] sm:$0x1]
  %v8219 = vsel %vm30, %v8215, 0.0
  %8220 = vadd.xlane.f32.xlu0 %v8219
  %v8221 = vpop.xlane.xlu0 %8220
  %v8222 = vsel %vm30, %v8216, 0.0
  %8223 = vadd.xlane.f32.xlu0 %v8222
  %v8224 = vpop.xlane.xlu0 %8223
  %v8225 = vmul.f32 %v8221, %v37
  %v8226 = vmul.f32 %v8224, %v37
  %v8227 = vsub.f32 %v8215, %v8225
  %v8228 = vsub.f32 %v8216, %v8226
  %v8229 = vmul.f32 %v8227, %v8227
  %v8230 = vmul.f32 %v8228, %v8228
  %v8231 = vsel %vm30, %v8229, 0.0
  %8232 = vadd.xlane.f32.xlu0 %v8231
  %v8233 = vpop.xlane.xlu0 %8232
  %v8234 = vsel %vm30, %v8230, 0.0
  %8235 = vadd.xlane.f32.xlu0 %v8234
  %v8236 = vpop.xlane.xlu0 %8235
  %v8237 = vmul.f32 %v8233, %v37
  %v8238 = vmul.f32 %v8236, %v37
  %v8239 = vadd.f32 %v8237, 1e-12
  %v8240 = vadd.f32 %v8238, 1e-12
  %v8241 = vrsqrt.pop %v8239
  %v8242 = vrsqrt.pop %v8240
  %v8243 = vmul.f32 %v8227, %v8241
  %v8244 = vmul.f32 %v8228, %v8242
  %v8245 = vlaneseq
  %v8246 = vshrl.u32 %v8245, 7
  %v8247 = vsub.s32 0, %v8246
  %v8248 = vrot.slane %v8217, %v8247
  %v8249 = vmul.f32 %v8243, %v8248
  %v8250 = vmul.f32 %v8244, %v8248
  %v8251 = vlaneseq
  %v8252 = vshrl.u32 %v8251, 7
  %v8253 = vsub.s32 0, %v8252
  %v8254 = vrot.slane %v8218, %v8253
  %v8255 = vadd.f32 %v8249, %v8254
  %v8256 = vadd.f32 %v8250, %v8254
  %v8257 = vld [vmem:[%s5] sm:$0xff]
  %v8258 = vld [vmem:[%s5 + $0x8] sm:$0xff]
  %v8259 = vld [vmem:[%s5 + $0x10] sm:$0xff]
  %v8260 = vld [vmem:[%s5 + $0x18] sm:$0xff]
  %v8261 = vld [vmem:[%s5 + $0x40] sm:$0x1]
  %v8262 = vlaneseq
  %v8263 = vshrl.u32 %v8262, 7
  %v8264 = vsub.s32 0, %v8263
  %v8265 = vrot.slane %v8261, %v8264
  %v8267 = vsel %vm30, %v8255, 0
  %v8270 = vsel %vm30, %v8256, 0
  %8272 = vmatprep.subr.mxu0 0.0
  %8273 = vmatpush1.msra.mxu0 0.0
  %8274 = vmatprep.subr.mxu0 0.0
  %8275 = vmatpush1.msra.mxu0 0.0
  %8276 = vmatprep.subr.mxu0 0.0
  %8277 = vmatpush1.msra.mxu0 0.0
  %8278 = vmatprep.subr.mxu0 0.0
  %8279 = vmatpush1.msra.mxu0 0.0
  %8280 = vmatprep.subr.mxu0 0.0
  %8281 = vmatpush1.msra.mxu0 0.0
  %8282 = vmatprep.subr.mxu0 0.0
  %8283 = vmatpush1.msra.mxu0 0.0
  %8284 = vmatprep.subr.mxu0 0.0
  %8285 = vmatpush1.msra.mxu0 0.0
  %8286 = vmatprep.subr.mxu0 0.0
  %8287 = vmatpush1.msra.mxu0 0.0
  %8288 = vmatprep.subr.mxu0 0.0
  %8289 = vmatpush1.msra.mxu0 0.0
  %8290 = vmatprep.subr.mxu0 0.0
  %8291 = vmatpush1.msra.mxu0 0.0
  %8292 = vmatprep.subr.mxu0 0.0
  %8293 = vmatpush1.msra.mxu0 0.0
  %8294 = vmatprep.subr.mxu0 0.0
  %8295 = vmatpush1.msra.mxu0 0.0
  %8296 = vmatprep.subr.mxu0 0.0
  %8297 = vmatpush1.msra.mxu0 %v8260
  %8298 = vmatprep.subr.mxu0 0.0
  %8299 = vmatpush1.msra.mxu0 %v8259
  %8300 = vmatprep.subr.mxu0 0.0
  %8301 = vmatpush1.msra.mxu0 %v8258
  %8302 = vmatprep.subr.mxu0 0.0
  %8303 = vmatpush1.msra.mxu0 %v8257
  %8304 = vmatprep.subr.mxu0 0.0
  %8305 = vmatpush2.msra.mxu0 0.0
  %8306 = vmatprep.subr.mxu0 0.0
  %8307 = vmatpush2.msra.mxu0 0.0
  %8308 = vmatprep.subr.mxu0 0.0
  %8309 = vmatpush2.msra.mxu0 0.0
  %8310 = vmatprep.subr.mxu0 0.0
  %8311 = vmatpush2.msra.mxu0 0.0
  %8312 = vmatprep.subr.mxu0 0.0
  %8313 = vmatpush2.msra.mxu0 0.0
  %8314 = vmatprep.subr.mxu0 0.0
  %8315 = vmatpush2.msra.mxu0 0.0
  %8316 = vmatprep.subr.mxu0 0.0
  %8317 = vmatpush2.msra.mxu0 0.0
  %8318 = vmatprep.subr.mxu0 0.0
  %8319 = vmatpush2.msra.mxu0 0.0
  %8320 = vmatprep.subr.mxu0 0.0
  %8321 = vmatpush2.msra.mxu0 0.0
  %8322 = vmatprep.subr.mxu0 0.0
  %8323 = vmatpush2.msra.mxu0 0.0
  %8324 = vmatprep.subr.mxu0 0.0
  %8325 = vmatpush2.msra.mxu0 0.0
  %8326 = vmatprep.subr.mxu0 0.0
  %8327 = vmatpush2.msra.mxu0 0.0
  %8328 = vmatprep.subr.mxu0 0.0
  %8329 = vmatpush2.msra.mxu0 0.0
  %8330 = vmatprep.subr.mxu0 0.0
  %8331 = vmatpush2.msra.mxu0 0.0
  %8332 = vmatprep.subr.mxu0 0.0
  %8333 = vmatpush2.msra.mxu0 0.0
  %8334 = vmatprep.subr.mxu0 0.0
  %8335 = vmatpush2.msra.mxu0 0.0
  %8336 = vmatprep.mubr.f32.mxu0 0.0
  %8337 = vmatmul.mubr.f32.gmra.mxu0 %v8267
  %v8338 = vpop.f32.mrf.mxu0
  %v8339 = vadd.f32 %v8265, %v8338
  %v8340 = vpop.f32.mrf.mxu0
  %8341 = vmatprep.mubr.f32.mxu0 0.0
  %8342 = vmatmul.mubr.f32.gmra.mxu0 %v8270
  %v8343 = vpop.f32.mrf.mxu0
  %v8344 = vadd.f32 %v8265, %v8343
  %v8345 = vpop.f32.mrf.mxu0
  %8346 = vdwg.mxu0
  %8347 = vst [vmem:[%s6] sm:$0xff] %v8339
  %8348 = vst [vmem:[%s6 + $0x8] sm:$0xff] %v8344
  %v8349 = vlaneseq
  %v8350 = vshrl.u32 %v8349, 7
  %v8351 = vlaneseq
  %v8352 = vand.u32 %v8351, 127
  %v8353 = vmul.u32 %v8350, 8
  %vm8354 = vcmp.eq.s32.totalorder %v8352, %v8353
  %v8355 = vsel %vm8354, 1, 0
  %v8356 = vcvt.s32.f32 %v8355
  %vm8357 = vcmask 130048
  %v8359 = vsel %vm8357, %v8356, 0
  %8361 = vmatprep.subr.mxu0 0.0
  %8362 = vmatpush1.msra.mxu0 0.0
  %8363 = vmatprep.subr.mxu0 0.0
  %8364 = vmatpush1.msra.mxu0 0.0
  %8365 = vmatprep.subr.mxu0 0.0
  %8366 = vmatpush1.msra.mxu0 0.0
  %8367 = vmatprep.subr.mxu0 0.0
  %8368 = vmatpush1.msra.mxu0 0.0
  %8369 = vmatprep.subr.mxu0 0.0
  %8370 = vmatpush1.msra.mxu0 0.0
  %8371 = vmatprep.subr.mxu0 0.0
  %8372 = vmatpush1.msra.mxu0 0.0
  %8373 = vmatprep.subr.mxu0 0.0
  %8374 = vmatpush1.msra.mxu0 0.0
  %8375 = vmatprep.subr.mxu0 0.0
  %8376 = vmatpush1.msra.mxu0 0.0
  %8377 = vmatprep.subr.mxu0 0.0
  %8378 = vmatpush1.msra.mxu0 0.0
  %8379 = vmatprep.subr.mxu0 0.0
  %8380 = vmatpush1.msra.mxu0 0.0
  %8381 = vmatprep.subr.mxu0 0.0
  %8382 = vmatpush1.msra.mxu0 0.0
  %8383 = vmatprep.subr.mxu0 0.0
  %8384 = vmatpush1.msra.mxu0 0.0
  %8385 = vmatprep.subr.mxu0 0.0
  %8386 = vmatpush1.msra.mxu0 0.0
  %8387 = vmatprep.subr.mxu0 0.0
  %8388 = vmatpush1.msra.mxu0 0.0
  %8389 = vmatprep.subr.mxu0 0.0
  %8390 = vmatpush1.msra.mxu0 %v8344
  %8391 = vmatprep.subr.mxu0 0.0
  %8392 = vmatpush1.msra.mxu0 %v8339
  %8393 = vmatprep.subr.mxu0 0.0
  %8394 = vmatpush2.msra.mxu0 0.0
  %8395 = vmatprep.subr.mxu0 0.0
  %8396 = vmatpush2.msra.mxu0 0.0
  %8397 = vmatprep.subr.mxu0 0.0
  %8398 = vmatpush2.msra.mxu0 0.0
  %8399 = vmatprep.subr.mxu0 0.0
  %8400 = vmatpush2.msra.mxu0 0.0
  %8401 = vmatprep.subr.mxu0 0.0
  %8402 = vmatpush2.msra.mxu0 0.0
  %8403 = vmatprep.subr.mxu0 0.0
  %8404 = vmatpush2.msra.mxu0 0.0
  %8405 = vmatprep.subr.mxu0 0.0
  %8406 = vmatpush2.msra.mxu0 0.0
  %8407 = vmatprep.subr.mxu0 0.0
  %8408 = vmatpush2.msra.mxu0 0.0
  %8409 = vmatprep.subr.mxu0 0.0
  %8410 = vmatpush2.msra.mxu0 0.0
  %8411 = vmatprep.subr.mxu0 0.0
  %8412 = vmatpush2.msra.mxu0 0.0
  %8413 = vmatprep.subr.mxu0 0.0
  %8414 = vmatpush2.msra.mxu0 0.0
  %8415 = vmatprep.subr.mxu0 0.0
  %8416 = vmatpush2.msra.mxu0 0.0
  %8417 = vmatprep.subr.mxu0 0.0
  %8418 = vmatpush2.msra.mxu0 0.0
  %8419 = vmatprep.subr.mxu0 0.0
  %8420 = vmatpush2.msra.mxu0 0.0
  %8421 = vmatprep.subr.mxu0 0.0
  %8422 = vmatpush2.msra.mxu0 0.0
  %8423 = vmatprep.subr.mxu0 0.0
  %8424 = vmatpush2.msra.mxu0 0.0
  %8425 = vmatprep.mubr.f32.mxu0 0.0
  %8426 = vmatmul.mubr.f32.gmra.mxu0 %v8359
  %v8427 = vpop.f32.mrf.mxu0
  %v8428 = vadd.f32 0.0, %v8427
  %v8429 = vpop.f32.mrf.mxu0
  %8430 = vdwg.mxu0
  %v8431 = vtanh.pop %v8428
  %v8432 = vld [vmem:[%s5 + $0x20] sm:$0xff]
  %v8433 = vld [vmem:[%s5 + $0x28] sm:$0xff]
  %v8434 = vld [vmem:[%s5 + $0x30] sm:$0xff]
  %v8435 = vld [vmem:[%s5 + $0x38] sm:$0xff]
  %v8436 = vld [vmem:[%s5 + $0x41] sm:$0x1]
  %v8437 = vlaneseq
  %v8438 = vshrl.u32 %v8437, 7
  %v8439 = vsub.s32 0, %v8438
  %v8440 = vrot.slane %v8436, %v8439
  %v8442 = vsel %vm30, %v8431, 0
  %8444 = vmatprep.subr.mxu0 0.0
  %8445 = vmatpush1.msra.mxu0 0.0
  %8446 = vmatprep.subr.mxu0 0.0
  %8447 = vmatpush1.msra.mxu0 0.0
  %8448 = vmatprep.subr.mxu0 0.0
  %8449 = vmatpush1.msra.mxu0 0.0
  %8450 = vmatprep.subr.mxu0 0.0
  %8451 = vmatpush1.msra.mxu0 0.0
  %8452 = vmatprep.subr.mxu0 0.0
  %8453 = vmatpush1.msra.mxu0 0.0
  %8454 = vmatprep.subr.mxu0 0.0
  %8455 = vmatpush1.msra.mxu0 0.0
  %8456 = vmatprep.subr.mxu0 0.0
  %8457 = vmatpush1.msra.mxu0 0.0
  %8458 = vmatprep.subr.mxu0 0.0
  %8459 = vmatpush1.msra.mxu0 0.0
  %8460 = vmatprep.subr.mxu0 0.0
  %8461 = vmatpush1.msra.mxu0 0.0
  %8462 = vmatprep.subr.mxu0 0.0
  %8463 = vmatpush1.msra.mxu0 0.0
  %8464 = vmatprep.subr.mxu0 0.0
  %8465 = vmatpush1.msra.mxu0 0.0
  %8466 = vmatprep.subr.mxu0 0.0
  %8467 = vmatpush1.msra.mxu0 0.0
  %8468 = vmatprep.subr.mxu0 0.0
  %8469 = vmatpush1.msra.mxu0 %v8435
  %8470 = vmatprep.subr.mxu0 0.0
  %8471 = vmatpush1.msra.mxu0 %v8434
  %8472 = vmatprep.subr.mxu0 0.0
  %8473 = vmatpush1.msra.mxu0 %v8433
  %8474 = vmatprep.subr.mxu0 0.0
  %8475 = vmatpush1.msra.mxu0 %v8432
  %8476 = vmatprep.subr.mxu0 0.0
  %8477 = vmatpush2.msra.mxu0 0.0
  %8478 = vmatprep.subr.mxu0 0.0
  %8479 = vmatpush2.msra.mxu0 0.0
  %8480 = vmatprep.subr.mxu0 0.0
  %8481 = vmatpush2.msra.mxu0 0.0
  %8482 = vmatprep.subr.mxu0 0.0
  %8483 = vmatpush2.msra.mxu0 0.0
  %8484 = vmatprep.subr.mxu0 0.0
  %8485 = vmatpush2.msra.mxu0 0.0
  %8486 = vmatprep.subr.mxu0 0.0
  %8487 = vmatpush2.msra.mxu0 0.0
  %8488 = vmatprep.subr.mxu0 0.0
  %8489 = vmatpush2.msra.mxu0 0.0
  %8490 = vmatprep.subr.mxu0 0.0
  %8491 = vmatpush2.msra.mxu0 0.0
  %8492 = vmatprep.subr.mxu0 0.0
  %8493 = vmatpush2.msra.mxu0 0.0
  %8494 = vmatprep.subr.mxu0 0.0
  %8495 = vmatpush2.msra.mxu0 0.0
  %8496 = vmatprep.subr.mxu0 0.0
  %8497 = vmatpush2.msra.mxu0 0.0
  %8498 = vmatprep.subr.mxu0 0.0
  %8499 = vmatpush2.msra.mxu0 0.0
  %8500 = vmatprep.subr.mxu0 0.0
  %8501 = vmatpush2.msra.mxu0 0.0
  %8502 = vmatprep.subr.mxu0 0.0
  %8503 = vmatpush2.msra.mxu0 0.0
  %8504 = vmatprep.subr.mxu0 0.0
  %8505 = vmatpush2.msra.mxu0 0.0
  %8506 = vmatprep.subr.mxu0 0.0
  %8507 = vmatpush2.msra.mxu0 0.0
  %8508 = vmatprep.mubr.f32.mxu0 0.0
  %8509 = vmatmul.mubr.f32.gmra.mxu0 %v8442
  %v8510 = vpop.f32.mrf.mxu0
  %v8511 = vadd.f32 %v8440, %v8510
  %v8512 = vpop.f32.mrf.mxu0
  %8513 = vdwg.mxu0
  %8514 = vst [vmem:[%s7] sm:$0x3] %v8511
  // Predicated region
  $region26: #{hate_speech_detector_forward.1} parent=0 // pred_check
    _
  $region27: #{hate_speech_detector_forward.1} parent=0 // pred_check_branch
    %8516 = sbr.rel (0) target = $region29
  $region28: #{hate_speech_detector_forward.1} parent=0 // pred_region
    _
  $region29: #{hate_speech_detector_forward.1} parent=0 // pred_fallthru
    _
  // Predicated region
  $region30: #{hate_speech_detector_forward.1} parent=0 // pred_check
    _
  $region31: #{hate_speech_detector_forward.1} parent=0 // pred_check_branch
    %8518 = sbr.rel (0) target = $region33
  $region32: #{hate_speech_detector_forward.1} parent=0 // pred_region
    _
  $region33: #{hate_speech_detector_forward.1} parent=0 // pred_fallthru
    _
  // Predicated region
  $region34: #{hate_speech_detector_forward.1} parent=0 // pred_check
    _
  $region35: #{hate_speech_detector_forward.1} parent=0 // pred_check_branch
    %8520 = sbr.rel (0) target = $region37
  $region36: #{hate_speech_detector_forward.1} parent=0 // pred_region
    _
  $region37: #{hate_speech_detector_forward.1} parent=0 // pred_fallthru
    _
  // Predicated region
  $region38: #{hate_speech_detector_forward.1} parent=0 // pred_check
    _
  $region39: #{hate_speech_detector_forward.1} parent=0 // pred_check_branch
    %8522 = sbr.rel (0) target = $region41
  $region40: #{hate_speech_detector_forward.1} parent=0 // pred_region
    _
  $region41: #{hate_speech_detector_forward.1} parent=0 // pred_fallthru
    _

</llo_original>
